<compile_context>
chip_gen: v7x
topology: tpu7x:2x2x1
jax: 0.10.0
libtpu: 0.0.40
codegen_flags: <defaults>
</compile_context>

<pallas_src>
import functools

import jax
import jax.numpy as jnp
import numpy as np
from jax import lax
from jax.experimental import pallas as pl
from jax.experimental.pallas import tpu as pltpu


# -----------------------------------------------------------------------------
# Fused kernel: [conv3x3+ReLU] * num_convs -> deconv2x2(s=2)+ReLU -> conv1x1
# -----------------------------------------------------------------------------
def _fused_head_kernel(num_convs, x_ref, *refs):
    """Fused FCNMaskHead forward for one tile of B ROIs (looped one ROI at a time).

    refs layout:
      refs[0 : 2*num_convs]  : (w_l, b_l) per conv layer,
                               w: (9*Cin, Cout) bf16 (tap-major packed), b: (1, Cout) f32
      refs[2*num_convs : +4] : wd (2,2,Cup,Cd) bf16, bd (1,Cd) f32,
                               wl (Cd,Kp) bf16,      bl (1,Kp) f32
      refs[-4]               : o_ref   (B, H, 2, W, 2*Kp) f32   (output)
      refs[-3]               : pad_ref (H+2, W+2, Cmax) bf16    (padded activation)
      refs[-2]               : col_ref (H*W, 9*Cmax_in) bf16    (im2col staging)
      refs[-1]               : feat_ref (H*W, Cup) bf16         (deconv input)
    """
    conv_refs = refs[:2 * num_convs]
    (wd_ref, bd_ref, wl_ref, bl_ref,
     o_ref, pad_ref, col_ref, feat_ref) = refs[2 * num_convs:]

    B, H, W, cin0 = x_ref.shape
    HW = H * W
    Kp = o_ref.shape[4] // 2
    c_up = feat_ref.shape[1]
    Cmax = pad_ref.shape[2]

    if num_convs > 0:
        # Zero ONLY the 1-pixel border (review item: border-only zeroing).
        # The interior is fully overwritten per layer / per ROI, and the
        # border is never written by compute.  Re-done every grid step so it
        # is safe under megacore 'parallel' sharding.
        zrow = jnp.zeros((1, W + 2, Cmax), pad_ref.dtype)
        zcol = jnp.zeros((H + 2, 1, Cmax), pad_ref.dtype)
        pad_ref[0:1, :, :] = zrow
        pad_ref[H + 1:H + 2, :, :] = zrow
        pad_ref[:, 0:1, :] = zcol
        pad_ref[:, W + 1:W + 2, :] = zcol

    def roi_body(b, carry):
        # -------------------- conv stack (per ROI) --------------------
        if num_convs > 0:
            pad_ref[1:H + 1, 1:W + 1, 0:cin0] = (
                x_ref[pl.ds(b, 1)].reshape(H, W, cin0))
            for l in range(num_convs):
                w_ref = conv_refs[2 * l]          # (9*cin, cout) bf16
                bias_ref = conv_refs[2 * l + 1]   # (1, cout)    f32
                kdim, cout = w_ref.shape
                cin = kdim // 9
                # im2col: write the 9 taps into one (HW, 9*cin) VMEM operand.
                for dy in range(3):
                    for dx in range(3):
                        t = dy * 3 + dx
                        patch = pad_ref[dy:dy + H, dx:dx + W, 0:cin]
                        col_ref[:, t * cin:(t + 1) * cin] = (
                            patch.reshape(HW, cin))
                # ONE long-K matmul per layer (replaces 9 dots + 8 f32 VALU
                # accumulate passes); bf16 operands, f32 accumulation.
                y = jnp.dot(col_ref[:, 0:9 * cin], w_ref[...],
                            preferred_element_type=jnp.float32)
                act = jnp.maximum(y + bias_ref[...], 0.0)
                if l + 1 < num_convs:
                    pad_ref[1:H + 1, 1:W + 1, 0:cout] = (
                        act.astype(pad_ref.dtype).reshape(H, W, cout))
                else:
                    feat_ref[...] = act.astype(feat_ref.dtype)
        else:
            feat_ref[...] = (
                x_ref[pl.ds(b, 1)].reshape(HW, cin0).astype(feat_ref.dtype))

        # ---- deconv(k=2, s=2) + ReLU + 1x1 conv_logits, fused (per ROI) ----
        # stride == kernel_size, so output pixel (2h+dy, 2w+dx) depends on
        # input pixel (h, w) only through weight tap (dy, dx): 4 pointwise
        # matmuls.  feat is re-read from VMEM per tap so nothing big stays
        # live across the 4 matmuls; each dx half is stored straight to o_ref.
        for dy in range(2):
            for dx in range(2):
                f = feat_ref[...]
                yd = jnp.dot(f, wd_ref[dy, dx],
                             preferred_element_type=jnp.float32)
                yd = jnp.maximum(yd + bd_ref[...], 0.0).astype(wl_ref.dtype)
                logit = jnp.dot(yd, wl_ref[...],
                                preferred_element_type=jnp.float32) + bl_ref[...]
                o_ref[pl.ds(b, 1), :, dy:dy + 1, :, dx * Kp:(dx + 1) * Kp] = (
                    logit.reshape(1, H, 1, W, Kp).astype(o_ref.dtype))
        return carry

    lax.fori_loop(0, B, roi_body, 0)


# -----------------------------------------------------------------------------
# Wrapper (layout plumbing only: NCHW<->NHWC, weight packing, batch tiling)
# -----------------------------------------------------------------------------
def fcn_mask_head_forward(x_nchw, params, *, b_tile=4):
    """x_nchw: (N, Cin, H, W) -> mask_pred (N, num_classes, 2H, 2W).

    b_tile tuning (ROIs per grid step): 8-16 on v5e/v6e (128 MiB VMEM),
    4-8 on v7x (64 MiB VMEM); keep Np // b_tile >= 2 (and even) on v7x so the
    'parallel' grid axis gives both TensorCores equal work.
    """
    x = jnp.transpose(x_nchw, (0, 2, 3, 1)).astype(jnp.bfloat16)  # NCHW->NHWC
    N, H, W, Cin = x.shape

    # Pack each 3x3 conv weight tap-major: (3,3,cin,cout) -> (9*cin, cout),
    # matching the kernel's im2col column order (t = dy*3 + dx).
    convs = []
    conv_cins, conv_couts = [], []
    for (w, b) in params["convs"]:
        ci, co = int(w.shape[2]), int(w.shape[3])
        conv_cins.append(ci)
        conv_couts.append(co)
        convs.append((w.reshape(9 * ci, co).astype(jnp.bfloat16),
                      b.astype(jnp.float32)))
    num_convs = len(convs)

    wd = params["deconv_w"].astype(jnp.bfloat16)          # (2,2,Cup,Cd)
    bd = params["deconv_b"].astype(jnp.float32)           # (1,Cd)
    Cd = int(wd.shape[3])
    K = int(params["logits_w"].shape[1])
    # Lane-dense logits channel dim.  (If the downstream sigmoid/paste
    # consumer can take NHWC bf16, the Kp padding + wrapper slice/transpose
    # passes could be dropped; kept f32/NCHW here for module parity.)
    Kp = ((K + 127) // 128) * 128
    wl = jnp.pad(params["logits_w"], ((0, 0), (0, Kp - K))).astype(jnp.bfloat16)
    bl = jnp.pad(params["logits_b"], ((0, 0), (0, Kp - K))).astype(jnp.float32)

    c_up = conv_couts[-1] if num_convs else Cin
    Cmax = max([Cin] + conv_couts) if num_convs else max(Cin, 8)
    col_k = 9 * max(conv_cins) if num_convs else 128

    # Pad the ROI batch to a multiple of the per-step tile.
    n_pad = (-N) % b_tile
    if n_pad:
        x = jnp.pad(x, ((0, n_pad), (0, 0), (0, 0), (0, 0)))
    Np = N + n_pad

    in_specs = [pl.BlockSpec((b_tile, H, W, Cin), lambda n: (n, 0, 0, 0))]
    inputs = [x]
    # Weights/biases: constant index_map -> fetched once, never re-DMA'd.
    for (w, b) in convs:
        in_specs.append(pl.BlockSpec(w.shape, lambda n: (0, 0)))
        in_specs.append(pl.BlockSpec(b.shape, lambda n: (0, 0)))
        inputs += [w, b]
    in_specs += [pl.BlockSpec(wd.shape, lambda n: (0, 0, 0, 0)),
                 pl.BlockSpec(bd.shape, lambda n: (0, 0)),
                 pl.BlockSpec(wl.shape, lambda n: (0, 0)),
                 pl.BlockSpec(bl.shape, lambda n: (0, 0))]
    inputs += [wd, bd, wl, bl]

    out_shape = jax.ShapeDtypeStruct((Np, H, 2, W, 2 * Kp), jnp.float32)
    out_spec = pl.BlockSpec((b_tile, H, 2, W, 2 * Kp),
                            lambda n: (n, 0, 0, 0, 0))

    scratch_shapes = [
        pltpu.VMEM((H + 2, W + 2, Cmax), jnp.bfloat16),   # padded activation
        pltpu.VMEM((H * W, col_k), jnp.bfloat16),         # im2col staging
        pltpu.VMEM((H * W, c_up), jnp.bfloat16),          # deconv input
    ]

    # Advisory cost estimate for the XLA scheduler.
    flops = 0
    for (w, _) in convs:
        flops += 2 * Np * H * W * w.shape[0] * w.shape[1]
    flops += 2 * Np * H * W * 4 * c_up * Cd   # deconv taps
    flops += 2 * Np * H * W * 4 * Cd * Kp     # 1x1 logits
    bytes_accessed = sum(int(a.size) * a.dtype.itemsize for a in inputs)
    bytes_accessed += int(np.prod(out_shape.shape)) * 4

    out = pl.pallas_call(
        functools.partial(_fused_head_kernel, num_convs),
        out_shape=out_shape,
        grid=(Np // b_tile,),
        in_specs=in_specs,
        out_specs=out_spec,
        scratch_shapes=scratch_shapes,
        compiler_params=pltpu.CompilerParams(
            dimension_semantics=("parallel",),            # megacore ROI tiles
            vmem_limit_bytes=56 * 1024 * 1024),           # > scoped default, < v7x 64 MiB
        cost_estimate=pl.CostEstimate(
            flops=int(flops), transcendentals=0,
            bytes_accessed=int(bytes_accessed)),
    )(*inputs)

    # (Np, H, 2, W, 2*Kp) -> (Np, 2H, 2W, Kp) is a pure row-major reinterpret;
    # slice off padded classes/ROIs, then NHWC -> NCHW.
    y = out.reshape(Np, 2 * H, 2 * W, Kp)[:N, :, :, :K]
    return jnp.transpose(y, (0, 3, 1, 2))


# -----------------------------------------------------------------------------
# Pure-JAX reference (bf16 casts mirrored at the same points as the kernel)
# -----------------------------------------------------------------------------
def reference_forward(x_nchw, params):
    x = jnp.transpose(x_nchw, (0, 2, 3, 1)).astype(jnp.bfloat16)
    for (w, b) in params["convs"]:
        y = jax.lax.conv_general_dilated(
            x, w.astype(jnp.bfloat16), (1, 1), "SAME",
            dimension_numbers=("NHWC", "HWIO", "NHWC"),
            preferred_element_type=jnp.float32)
        x = jnp.maximum(y + b[0], 0.0).astype(jnp.bfloat16)
    wd = params["deconv_w"].astype(jnp.bfloat16)
    wl = params["logits_w"].astype(jnp.bfloat16)
    bd, bl = params["deconv_b"], params["logits_b"]
    N, H, W, _ = x.shape
    # out[n, 2h+dy, 2w+dx, d] = sum_c x[n,h,w,c] * wd[dy,dx,c,d]
    t = jnp.einsum("nhwc,yxcd->nhywxd", x, wd,
                   preferred_element_type=jnp.float32)
    t = t.reshape(N, 2 * H, 2 * W, wd.shape[3]) + bd[0]
    t = jnp.maximum(t, 0.0).astype(jnp.bfloat16)
    logits = jnp.einsum("nhwc,ck->nhwk", t, wl,
                        preferred_element_type=jnp.float32) + bl[0]
    return jnp.transpose(logits, (0, 3, 1, 2))


# -----------------------------------------------------------------------------
# Deterministic synthetic parameters (HWIO conv layout, tap-major deconv)
# -----------------------------------------------------------------------------
def make_params(key, num_convs, in_channels, conv_out_channels, num_classes):
    params = {"convs": []}
    cin = in_channels
    for _ in range(num_convs):
        key, kw, kb = jax.random.split(key, 3)
        w = jax.random.normal(kw, (3, 3, cin, conv_out_channels),
                              jnp.float32) * 0.1
        b = jax.random.normal(kb, (1, conv_out_channels), jnp.float32) * 0.1
        params["convs"].append((w, b))
        cin = conv_out_channels
    key, k1, k2, k3, k4 = jax.random.split(key, 5)
    params["deconv_w"] = jax.random.normal(
        k1, (2, 2, conv_out_channels, conv_out_channels), jnp.float32) * 0.1
    params["deconv_b"] = jax.random.normal(
        k2, (1, conv_out_channels), jnp.float32) * 0.1
    params["logits_w"] = jax.random.normal(
        k3, (conv_out_channels, num_classes), jnp.float32) * 0.1
    params["logits_b"] = jax.random.normal(
        k4, (1, num_classes), jnp.float32) * 0.1
    return params


if __name__ == "__main__":
    # Small synthetic config (module defaults scaled down):
    # num_convs=4, in_channels=32, conv_out_channels=32, num_classes=8,
    # roi feat 8x8, batch of 8 ROIs, 4 ROIs per fused grid step (grid=2).
    N, C, H, W = 8, 32, 8, 8
    NUM_CONVS, COUT, NUM_CLASSES = 4, 32, 8

    key = jax.random.PRNGKey(0)
    key, kx = jax.random.split(key)
    x = jax.random.normal(kx, (N, C, H, W), jnp.float32)
    params = make_params(key, NUM_CONVS, C, COUT, NUM_CLASSES)

    fwd = jax.jit(fcn_mask_head_forward)
    mask_pred = jax.block_until_ready(fwd(x, params))
    ref = jax.block_until_ready(reference_forward(x, params))

    assert mask_pred.shape == (N, NUM_CLASSES, 2 * H, 2 * W), mask_pred.shape
    np.testing.assert_allclose(np.asarray(mask_pred), np.asarray(ref),
                               rtol=2e-2, atol=2e-2)

    # TODO(synk): get_seg_masks / _do_paste_mask (grid_sample mask paste) and
    # the loss / fisher-update paths are not part of forward() and are omitted.
    print("KERNEL_OK")
</pallas_src>

<mosaic_0001>
module attributes {stable_mosaic.version = 11 : i64} {
  func.func @_fused_head_kernel(%arg0: i32, %arg1: memref<4x8x8x32xbf16, #tpu.memory_space<vmem>>, %arg2: memref<288x32xbf16, #tpu.memory_space<vmem>>, %arg3: memref<1x32xf32, #tpu.memory_space<vmem>>, %arg4: memref<288x32xbf16, #tpu.memory_space<vmem>>, %arg5: memref<1x32xf32, #tpu.memory_space<vmem>>, %arg6: memref<288x32xbf16, #tpu.memory_space<vmem>>, %arg7: memref<1x32xf32, #tpu.memory_space<vmem>>, %arg8: memref<288x32xbf16, #tpu.memory_space<vmem>>, %arg9: memref<1x32xf32, #tpu.memory_space<vmem>>, %arg10: memref<2x2x32x32xbf16, #tpu.memory_space<vmem>>, %arg11: memref<1x32xf32, #tpu.memory_space<vmem>>, %arg12: memref<32x128xbf16, #tpu.memory_space<vmem>>, %arg13: memref<1x128xf32, #tpu.memory_space<vmem>>, %arg14: memref<4x8x2x8x256xf32, #tpu.memory_space<vmem>>, %arg15: memref<10x10x32xbf16, #tpu.memory_space<vmem>>, %arg16: memref<64x288xbf16, #tpu.memory_space<vmem>>, %arg17: memref<64x32xbf16, #tpu.memory_space<vmem>>) attributes {dimension_semantics = [#tpu.dimension_semantics<parallel>], iteration_bounds = array<i64: 2>, scalar_prefetch = 0 : i64, scratch_operands = 3 : i64, tpu.core_type = #tpu.core_type<tc>, window_params = [{transform_indices = @transform_0, window_bounds = array<i64: 4, 8, 8, 32>}, {pipeline_mode = #tpu.pipeline_mode<synchronous>, transform_indices = @transform_1, window_bounds = array<i64: 288, 32>}, {pipeline_mode = #tpu.pipeline_mode<synchronous>, transform_indices = @transform_2, window_bounds = array<i64: 1, 32>}, {pipeline_mode = #tpu.pipeline_mode<synchronous>, transform_indices = @transform_3, window_bounds = array<i64: 288, 32>}, {pipeline_mode = #tpu.pipeline_mode<synchronous>, transform_indices = @transform_4, window_bounds = array<i64: 1, 32>}, {pipeline_mode = #tpu.pipeline_mode<synchronous>, transform_indices = @transform_5, window_bounds = array<i64: 288, 32>}, {pipeline_mode = #tpu.pipeline_mode<synchronous>, transform_indices = @transform_6, window_bounds = array<i64: 1, 32>}, {pipeline_mode = #tpu.pipeline_mode<synchronous>, transform_indices = @transform_7, window_bounds = array<i64: 288, 32>}, {pipeline_mode = #tpu.pipeline_mode<synchronous>, transform_indices = @transform_8, window_bounds = array<i64: 1, 32>}, {pipeline_mode = #tpu.pipeline_mode<synchronous>, transform_indices = @transform_9, window_bounds = array<i64: 2, 2, 32, 32>}, {pipeline_mode = #tpu.pipeline_mode<synchronous>, transform_indices = @transform_10, window_bounds = array<i64: 1, 32>}, {pipeline_mode = #tpu.pipeline_mode<synchronous>, transform_indices = @transform_11, window_bounds = array<i64: 32, 128>}, {pipeline_mode = #tpu.pipeline_mode<synchronous>, transform_indices = @transform_12, window_bounds = array<i64: 1, 128>}, {transform_indices = @transform_13, window_bounds = array<i64: 4, 8, 2, 8, 256>}]} {
    %cst = arith.constant 0.000000e+00 : bf16
    %0 = vector.broadcast %cst : bf16 to vector<1x10x32xbf16>
    %cst_0 = arith.constant 0.000000e+00 : bf16
    %1 = vector.broadcast %cst_0 : bf16 to vector<10x1x32xbf16>
    %c0 = arith.constant 0 : index
    %c0_1 = arith.constant 0 : index
    %c0_2 = arith.constant 0 : index
    %2 = vector.load %arg15[%c0, %c0_1, %c0_2] : memref<10x10x32xbf16, #tpu.memory_space<vmem>>, vector<1x10x32xbf16>
    tpu.vector_store %arg15[%c0, %c0_1, %c0_2], %0 {strides = array<i32>} : memref<10x10x32xbf16, #tpu.memory_space<vmem>>, vector<1x10x32xbf16>,
    %c9 = arith.constant 9 : index
    %c0_3 = arith.constant 0 : index
    %c0_4 = arith.constant 0 : index
    %3 = vector.load %arg15[%c9, %c0_3, %c0_4] : memref<10x10x32xbf16, #tpu.memory_space<vmem>>, vector<1x10x32xbf16>
    tpu.vector_store %arg15[%c9, %c0_3, %c0_4], %0 {strides = array<i32>} : memref<10x10x32xbf16, #tpu.memory_space<vmem>>, vector<1x10x32xbf16>,
    %c0_5 = arith.constant 0 : index
    %c0_6 = arith.constant 0 : index
    %c0_7 = arith.constant 0 : index
    %4 = vector.load %arg15[%c0_5, %c0_6, %c0_7] : memref<10x10x32xbf16, #tpu.memory_space<vmem>>, vector<10x1x32xbf16>
    tpu.vector_store %arg15[%c0_5, %c0_6, %c0_7], %1 {strides = array<i32>} : memref<10x10x32xbf16, #tpu.memory_space<vmem>>, vector<10x1x32xbf16>,
    %c0_8 = arith.constant 0 : index
    %c9_9 = arith.constant 9 : index
    %c0_10 = arith.constant 0 : index
    %5 = vector.load %arg15[%c0_8, %c9_9, %c0_10] : memref<10x10x32xbf16, #tpu.memory_space<vmem>>, vector<10x1x32xbf16>
    tpu.vector_store %arg15[%c0_8, %c9_9, %c0_10], %1 {strides = array<i32>} : memref<10x10x32xbf16, #tpu.memory_space<vmem>>, vector<10x1x32xbf16>,
    %c0_i32 = arith.constant 0 : i32
    %c4_i32 = arith.constant 4 : i32
    %6 = arith.addi %c0_i32, %c4_i32 : i32
    %c1_i32 = arith.constant 1 : i32
    scf.for %arg18 = %c0_i32 to %6 step %c1_i32  : i32 {
      %7 = arith.index_cast %arg18 : i32 to index
      %c0_12 = arith.constant 0 : index
      %c0_13 = arith.constant 0 : index
      %c0_14 = arith.constant 0 : index
      %8 = vector.load %arg1[%7, %c0_12, %c0_13, %c0_14] : memref<4x8x8x32xbf16, #tpu.memory_space<vmem>>, vector<1x8x8x32xbf16>
      %9 = vector.shape_cast %8 : vector<1x8x8x32xbf16> to vector<8x8x32xbf16>
      %c1 = arith.constant 1 : index
      %c1_15 = arith.constant 1 : index
      %c0_16 = arith.constant 0 : index
      %10 = vector.load %arg15[%c1, %c1_15, %c0_16] : memref<10x10x32xbf16, #tpu.memory_space<vmem>>, vector<8x8x32xbf16>
      tpu.vector_store %arg15[%c1, %c1_15, %c0_16], %9 {strides = array<i32>} : memref<10x10x32xbf16, #tpu.memory_space<vmem>>, vector<8x8x32xbf16>,
      %c0_17 = arith.constant 0 : index
      %c0_18 = arith.constant 0 : index
      %c0_19 = arith.constant 0 : index
      %11 = vector.load %arg15[%c0_17, %c0_18, %c0_19] : memref<10x10x32xbf16, #tpu.memory_space<vmem>>, vector<8x8x32xbf16>
      %12 = vector.shape_cast %11 : vector<8x8x32xbf16> to vector<64x32xbf16>
      %c0_20 = arith.constant 0 : index
      %c0_21 = arith.constant 0 : index
      %13 = vector.load %arg16[%c0_20, %c0_21] : memref<64x288xbf16, #tpu.memory_space<vmem>>, vector<64x32xbf16>
      tpu.vector_store %arg16[%c0_20, %c0_21], %12 {strides = array<i32>} : memref<64x288xbf16, #tpu.memory_space<vmem>>, vector<64x32xbf16>,
      %c0_22 = arith.constant 0 : index
      %c1_23 = arith.constant 1 : index
      %c0_24 = arith.constant 0 : index
      %14 = vector.load %arg15[%c0_22, %c1_23, %c0_24] : memref<10x10x32xbf16, #tpu.memory_space<vmem>>, vector<8x8x32xbf16>
      %15 = vector.shape_cast %14 : vector<8x8x32xbf16> to vector<64x32xbf16>
      %c0_25 = arith.constant 0 : index
      %c32 = arith.constant 32 : index
      %16 = vector.load %arg16[%c0_25, %c32] : memref<64x288xbf16, #tpu.memory_space<vmem>>, vector<64x32xbf16>
      tpu.vector_store %arg16[%c0_25, %c32], %15 {strides = array<i32>} : memref<64x288xbf16, #tpu.memory_space<vmem>>, vector<64x32xbf16>,
      %c0_26 = arith.constant 0 : index
      %c2 = arith.constant 2 : index
      %c0_27 = arith.constant 0 : index
      %17 = vector.load %arg15[%c0_26, %c2, %c0_27] : memref<10x10x32xbf16, #tpu.memory_space<vmem>>, vector<8x8x32xbf16>
      %18 = vector.shape_cast %17 : vector<8x8x32xbf16> to vector<64x32xbf16>
      %c0_28 = arith.constant 0 : index
      %c64 = arith.constant 64 : index
      %19 = vector.load %arg16[%c0_28, %c64] : memref<64x288xbf16, #tpu.memory_space<vmem>>, vector<64x32xbf16>
      tpu.vector_store %arg16[%c0_28, %c64], %18 {strides = array<i32>} : memref<64x288xbf16, #tpu.memory_space<vmem>>, vector<64x32xbf16>,
      %c1_29 = arith.constant 1 : index
      %c0_30 = arith.constant 0 : index
      %c0_31 = arith.constant 0 : index
      %20 = vector.load %arg15[%c1_29, %c0_30, %c0_31] : memref<10x10x32xbf16, #tpu.memory_space<vmem>>, vector<8x8x32xbf16>
      %21 = vector.shape_cast %20 : vector<8x8x32xbf16> to vector<64x32xbf16>
      %c0_32 = arith.constant 0 : index
      %c96 = arith.constant 96 : index
      %22 = vector.load %arg16[%c0_32, %c96] : memref<64x288xbf16, #tpu.memory_space<vmem>>, vector<64x32xbf16>
      tpu.vector_store %arg16[%c0_32, %c96], %21 {strides = array<i32>} : memref<64x288xbf16, #tpu.memory_space<vmem>>, vector<64x32xbf16>,
      %c1_33 = arith.constant 1 : index
      %c1_34 = arith.constant 1 : index
      %c0_35 = arith.constant 0 : index
      %23 = vector.load %arg15[%c1_33, %c1_34, %c0_35] : memref<10x10x32xbf16, #tpu.memory_space<vmem>>, vector<8x8x32xbf16>
      %24 = vector.shape_cast %23 : vector<8x8x32xbf16> to vector<64x32xbf16>
      %c0_36 = arith.constant 0 : index
      %c128 = arith.constant 128 : index
      %25 = vector.load %arg16[%c0_36, %c128] : memref<64x288xbf16, #tpu.memory_space<vmem>>, vector<64x32xbf16>
      tpu.vector_store %arg16[%c0_36, %c128], %24 {strides = array<i32>} : memref<64x288xbf16, #tpu.memory_space<vmem>>, vector<64x32xbf16>,
      %c1_37 = arith.constant 1 : index
      %c2_38 = arith.constant 2 : index
      %c0_39 = arith.constant 0 : index
      %26 = vector.load %arg15[%c1_37, %c2_38, %c0_39] : memref<10x10x32xbf16, #tpu.memory_space<vmem>>, vector<8x8x32xbf16>
      %27 = vector.shape_cast %26 : vector<8x8x32xbf16> to vector<64x32xbf16>
      %c0_40 = arith.constant 0 : index
      %c160 = arith.constant 160 : index
      %28 = vector.load %arg16[%c0_40, %c160] : memref<64x288xbf16, #tpu.memory_space<vmem>>, vector<64x32xbf16>
      tpu.vector_store %arg16[%c0_40, %c160], %27 {strides = array<i32>} : memref<64x288xbf16, #tpu.memory_space<vmem>>, vector<64x32xbf16>,
      %c2_41 = arith.constant 2 : index
      %c0_42 = arith.constant 0 : index
      %c0_43 = arith.constant 0 : index
      %29 = vector.load %arg15[%c2_41, %c0_42, %c0_43] : memref<10x10x32xbf16, #tpu.memory_space<vmem>>, vector<8x8x32xbf16>
      %30 = vector.shape_cast %29 : vector<8x8x32xbf16> to vector<64x32xbf16>
      %c0_44 = arith.constant 0 : index
      %c192 = arith.constant 192 : index
      %31 = vector.load %arg16[%c0_44, %c192] : memref<64x288xbf16, #tpu.memory_space<vmem>>, vector<64x32xbf16>
      tpu.vector_store %arg16[%c0_44, %c192], %30 {strides = array<i32>} : memref<64x288xbf16, #tpu.memory_space<vmem>>, vector<64x32xbf16>,
      %c2_45 = arith.constant 2 : index
      %c1_46 = arith.constant 1 : index
      %c0_47 = arith.constant 0 : index
      %32 = vector.load %arg15[%c2_45, %c1_46, %c0_47] : memref<10x10x32xbf16, #tpu.memory_space<vmem>>, vector<8x8x32xbf16>
      %33 = vector.shape_cast %32 : vector<8x8x32xbf16> to vector<64x32xbf16>
      %c0_48 = arith.constant 0 : index
      %c224 = arith.constant 224 : index
      %34 = vector.load %arg16[%c0_48, %c224] : memref<64x288xbf16, #tpu.memory_space<vmem>>, vector<64x32xbf16>
      tpu.vector_store %arg16[%c0_48, %c224], %33 {strides = array<i32>} : memref<64x288xbf16, #tpu.memory_space<vmem>>, vector<64x32xbf16>,
      %c2_49 = arith.constant 2 : index
      %c2_50 = arith.constant 2 : index
      %c0_51 = arith.constant 0 : index
      %35 = vector.load %arg15[%c2_49, %c2_50, %c0_51] : memref<10x10x32xbf16, #tpu.memory_space<vmem>>, vector<8x8x32xbf16>
      %36 = vector.shape_cast %35 : vector<8x8x32xbf16> to vector<64x32xbf16>
      %c0_52 = arith.constant 0 : index
      %c256 = arith.constant 256 : index
      %37 = vector.load %arg16[%c0_52, %c256] : memref<64x288xbf16, #tpu.memory_space<vmem>>, vector<64x32xbf16>
      tpu.vector_store %arg16[%c0_52, %c256], %36 {strides = array<i32>} : memref<64x288xbf16, #tpu.memory_space<vmem>>, vector<64x32xbf16>,
      %c0_53 = arith.constant 0 : index
      %c0_54 = arith.constant 0 : index
      %38 = vector.load %arg16[%c0_53, %c0_54] : memref<64x288xbf16, #tpu.memory_space<vmem>>, vector<64x288xbf16>
      %c0_55 = arith.constant 0 : index
      %c0_56 = arith.constant 0 : index
      %39 = vector.load %arg2[%c0_55, %c0_56] : memref<288x32xbf16, #tpu.memory_space<vmem>>, vector<288x32xbf16>
      %cst_57 = arith.constant dense<0.000000e+00> : vector<64x32xf32>
      %40 = tpu.matmul %38, %39, %cst_57 {dimension_numbers = #tpu.dot_dimension_numbers<[1], [0], [0], [1], [0, 0, 1, 1], [], []>} : vector<64x288xbf16>, vector<288x32xbf16>, vector<64x32xf32> -> vector<64x32xf32>
      %c0_58 = arith.constant 0 : index
      %c0_59 = arith.constant 0 : index
      %41 = vector.load %arg3[%c0_58, %c0_59] : memref<1x32xf32, #tpu.memory_space<vmem>>, vector<1x32xf32>
      %42 = vector.broadcast %41 : vector<1x32xf32> to vector<64x32xf32>
      %43 = arith.addf %40, %42 : vector<64x32xf32>
      %cst_60 = arith.constant 0.000000e+00 : f32
      %44 = vector.broadcast %cst_60 : f32 to vector<64x32xf32>
      %45 = arith.maximumf %43, %44 : vector<64x32xf32>
      %46 = arith.truncf %45 : vector<64x32xf32> to vector<64x32xbf16>
      %47 = vector.shape_cast %46 : vector<64x32xbf16> to vector<8x8x32xbf16>
      %c1_61 = arith.constant 1 : index
      %c1_62 = arith.constant 1 : index
      %c0_63 = arith.constant 0 : index
      %48 = vector.load %arg15[%c1_61, %c1_62, %c0_63] : memref<10x10x32xbf16, #tpu.memory_space<vmem>>, vector<8x8x32xbf16>
      tpu.vector_store %arg15[%c1_61, %c1_62, %c0_63], %47 {strides = array<i32>} : memref<10x10x32xbf16, #tpu.memory_space<vmem>>, vector<8x8x32xbf16>,
      %c0_64 = arith.constant 0 : index
      %c0_65 = arith.constant 0 : index
      %c0_66 = arith.constant 0 : index
      %49 = vector.load %arg15[%c0_64, %c0_65, %c0_66] : memref<10x10x32xbf16, #tpu.memory_space<vmem>>, vector<8x8x32xbf16>
      %50 = vector.shape_cast %49 : vector<8x8x32xbf16> to vector<64x32xbf16>
      %c0_67 = arith.constant 0 : index
      %c0_68 = arith.constant 0 : index
      %51 = vector.load %arg16[%c0_67, %c0_68] : memref<64x288xbf16, #tpu.memory_space<vmem>>, vector<64x32xbf16>
      tpu.vector_store %arg16[%c0_67, %c0_68], %50 {strides = array<i32>} : memref<64x288xbf16, #tpu.memory_space<vmem>>, vector<64x32xbf16>,
      %c0_69 = arith.constant 0 : index
      %c1_70 = arith.constant 1 : index
      %c0_71 = arith.constant 0 : index
      %52 = vector.load %arg15[%c0_69, %c1_70, %c0_71] : memref<10x10x32xbf16, #tpu.memory_space<vmem>>, vector<8x8x32xbf16>
      %53 = vector.shape_cast %52 : vector<8x8x32xbf16> to vector<64x32xbf16>
      %c0_72 = arith.constant 0 : index
      %c32_73 = arith.constant 32 : index
      %54 = vector.load %arg16[%c0_72, %c32_73] : memref<64x288xbf16, #tpu.memory_space<vmem>>, vector<64x32xbf16>
      tpu.vector_store %arg16[%c0_72, %c32_73], %53 {strides = array<i32>} : memref<64x288xbf16, #tpu.memory_space<vmem>>, vector<64x32xbf16>,
      %c0_74 = arith.constant 0 : index
      %c2_75 = arith.constant 2 : index
      %c0_76 = arith.constant 0 : index
      %55 = vector.load %arg15[%c0_74, %c2_75, %c0_76] : memref<10x10x32xbf16, #tpu.memory_space<vmem>>, vector<8x8x32xbf16>
      %56 = vector.shape_cast %55 : vector<8x8x32xbf16> to vector<64x32xbf16>
      %c0_77 = arith.constant 0 : index
      %c64_78 = arith.constant 64 : index
      %57 = vector.load %arg16[%c0_77, %c64_78] : memref<64x288xbf16, #tpu.memory_space<vmem>>, vector<64x32xbf16>
      tpu.vector_store %arg16[%c0_77, %c64_78], %56 {strides = array<i32>} : memref<64x288xbf16, #tpu.memory_space<vmem>>, vector<64x32xbf16>,
      %c1_79 = arith.constant 1 : index
      %c0_80 = arith.constant 0 : index
      %c0_81 = arith.constant 0 : index
      %58 = vector.load %arg15[%c1_79, %c0_80, %c0_81] : memref<10x10x32xbf16, #tpu.memory_space<vmem>>, vector<8x8x32xbf16>
      %59 = vector.shape_cast %58 : vector<8x8x32xbf16> to vector<64x32xbf16>
      %c0_82 = arith.constant 0 : index
      %c96_83 = arith.constant 96 : index
      %60 = vector.load %arg16[%c0_82, %c96_83] : memref<64x288xbf16, #tpu.memory_space<vmem>>, vector<64x32xbf16>
      tpu.vector_store %arg16[%c0_82, %c96_83], %59 {strides = array<i32>} : memref<64x288xbf16, #tpu.memory_space<vmem>>, vector<64x32xbf16>,
      %c1_84 = arith.constant 1 : index
      %c1_85 = arith.constant 1 : index
      %c0_86 = arith.constant 0 : index
      %61 = vector.load %arg15[%c1_84, %c1_85, %c0_86] : memref<10x10x32xbf16, #tpu.memory_space<vmem>>, vector<8x8x32xbf16>
      %62 = vector.shape_cast %61 : vector<8x8x32xbf16> to vector<64x32xbf16>
      %c0_87 = arith.constant 0 : index
      %c128_88 = arith.constant 128 : index
      %63 = vector.load %arg16[%c0_87, %c128_88] : memref<64x288xbf16, #tpu.memory_space<vmem>>, vector<64x32xbf16>
      tpu.vector_store %arg16[%c0_87, %c128_88], %62 {strides = array<i32>} : memref<64x288xbf16, #tpu.memory_space<vmem>>, vector<64x32xbf16>,
      %c1_89 = arith.constant 1 : index
      %c2_90 = arith.constant 2 : index
      %c0_91 = arith.constant 0 : index
      %64 = vector.load %arg15[%c1_89, %c2_90, %c0_91] : memref<10x10x32xbf16, #tpu.memory_space<vmem>>, vector<8x8x32xbf16>
      %65 = vector.shape_cast %64 : vector<8x8x32xbf16> to vector<64x32xbf16>
      %c0_92 = arith.constant 0 : index
      %c160_93 = arith.constant 160 : index
      %66 = vector.load %arg16[%c0_92, %c160_93] : memref<64x288xbf16, #tpu.memory_space<vmem>>, vector<64x32xbf16>
      tpu.vector_store %arg16[%c0_92, %c160_93], %65 {strides = array<i32>} : memref<64x288xbf16, #tpu.memory_space<vmem>>, vector<64x32xbf16>,
      %c2_94 = arith.constant 2 : index
      %c0_95 = arith.constant 0 : index
      %c0_96 = arith.constant 0 : index
      %67 = vector.load %arg15[%c2_94, %c0_95, %c0_96] : memref<10x10x32xbf16, #tpu.memory_space<vmem>>, vector<8x8x32xbf16>
      %68 = vector.shape_cast %67 : vector<8x8x32xbf16> to vector<64x32xbf16>
      %c0_97 = arith.constant 0 : index
      %c192_98 = arith.constant 192 : index
      %69 = vector.load %arg16[%c0_97, %c192_98] : memref<64x288xbf16, #tpu.memory_space<vmem>>, vector<64x32xbf16>
      tpu.vector_store %arg16[%c0_97, %c192_98], %68 {strides = array<i32>} : memref<64x288xbf16, #tpu.memory_space<vmem>>, vector<64x32xbf16>,
      %c2_99 = arith.constant 2 : index
      %c1_100 = arith.constant 1 : index
      %c0_101 = arith.constant 0 : index
      %70 = vector.load %arg15[%c2_99, %c1_100, %c0_101] : memref<10x10x32xbf16, #tpu.memory_space<vmem>>, vector<8x8x32xbf16>
      %71 = vector.shape_cast %70 : vector<8x8x32xbf16> to vector<64x32xbf16>
      %c0_102 = arith.constant 0 : index
      %c224_103 = arith.constant 224 : index
      %72 = vector.load %arg16[%c0_102, %c224_103] : memref<64x288xbf16, #tpu.memory_space<vmem>>, vector<64x32xbf16>
      tpu.vector_store %arg16[%c0_102, %c224_103], %71 {strides = array<i32>} : memref<64x288xbf16, #tpu.memory_space<vmem>>, vector<64x32xbf16>,
      %c2_104 = arith.constant 2 : index
      %c2_105 = arith.constant 2 : index
      %c0_106 = arith.constant 0 : index
      %73 = vector.load %arg15[%c2_104, %c2_105, %c0_106] : memref<10x10x32xbf16, #tpu.memory_space<vmem>>, vector<8x8x32xbf16>
      %74 = vector.shape_cast %73 : vector<8x8x32xbf16> to vector<64x32xbf16>
      %c0_107 = arith.constant 0 : index
      %c256_108 = arith.constant 256 : index
      %75 = vector.load %arg16[%c0_107, %c256_108] : memref<64x288xbf16, #tpu.memory_space<vmem>>, vector<64x32xbf16>
      tpu.vector_store %arg16[%c0_107, %c256_108], %74 {strides = array<i32>} : memref<64x288xbf16, #tpu.memory_space<vmem>>, vector<64x32xbf16>,
      %c0_109 = arith.constant 0 : index
      %c0_110 = arith.constant 0 : index
      %76 = vector.load %arg16[%c0_109, %c0_110] : memref<64x288xbf16, #tpu.memory_space<vmem>>, vector<64x288xbf16>
      %c0_111 = arith.constant 0 : index
      %c0_112 = arith.constant 0 : index
      %77 = vector.load %arg4[%c0_111, %c0_112] : memref<288x32xbf16, #tpu.memory_space<vmem>>, vector<288x32xbf16>
      %cst_113 = arith.constant dense<0.000000e+00> : vector<64x32xf32>
      %78 = tpu.matmul %76, %77, %cst_113 {dimension_numbers = #tpu.dot_dimension_numbers<[1], [0], [0], [1], [0, 0, 1, 1], [], []>} : vector<64x288xbf16>, vector<288x32xbf16>, vector<64x32xf32> -> vector<64x32xf32>
      %c0_114 = arith.constant 0 : index
      %c0_115 = arith.constant 0 : index
      %79 = vector.load %arg5[%c0_114, %c0_115] : memref<1x32xf32, #tpu.memory_space<vmem>>, vector<1x32xf32>
      %80 = vector.broadcast %79 : vector<1x32xf32> to vector<64x32xf32>
      %81 = arith.addf %78, %80 : vector<64x32xf32>
      %cst_116 = arith.constant 0.000000e+00 : f32
      %82 = vector.broadcast %cst_116 : f32 to vector<64x32xf32>
      %83 = arith.maximumf %81, %82 : vector<64x32xf32>
      %84 = arith.truncf %83 : vector<64x32xf32> to vector<64x32xbf16>
      %85 = vector.shape_cast %84 : vector<64x32xbf16> to vector<8x8x32xbf16>
      %c1_117 = arith.constant 1 : index
      %c1_118 = arith.constant 1 : index
      %c0_119 = arith.constant 0 : index
      %86 = vector.load %arg15[%c1_117, %c1_118, %c0_119] : memref<10x10x32xbf16, #tpu.memory_space<vmem>>, vector<8x8x32xbf16>
      tpu.vector_store %arg15[%c1_117, %c1_118, %c0_119], %85 {strides = array<i32>} : memref<10x10x32xbf16, #tpu.memory_space<vmem>>, vector<8x8x32xbf16>,
      %c0_120 = arith.constant 0 : index
      %c0_121 = arith.constant 0 : index
      %c0_122 = arith.constant 0 : index
      %87 = vector.load %arg15[%c0_120, %c0_121, %c0_122] : memref<10x10x32xbf16, #tpu.memory_space<vmem>>, vector<8x8x32xbf16>
      %88 = vector.shape_cast %87 : vector<8x8x32xbf16> to vector<64x32xbf16>
      %c0_123 = arith.constant 0 : index
      %c0_124 = arith.constant 0 : index
      %89 = vector.load %arg16[%c0_123, %c0_124] : memref<64x288xbf16, #tpu.memory_space<vmem>>, vector<64x32xbf16>
      tpu.vector_store %arg16[%c0_123, %c0_124], %88 {strides = array<i32>} : memref<64x288xbf16, #tpu.memory_space<vmem>>, vector<64x32xbf16>,
      %c0_125 = arith.constant 0 : index
      %c1_126 = arith.constant 1 : index
      %c0_127 = arith.constant 0 : index
      %90 = vector.load %arg15[%c0_125, %c1_126, %c0_127] : memref<10x10x32xbf16, #tpu.memory_space<vmem>>, vector<8x8x32xbf16>
      %91 = vector.shape_cast %90 : vector<8x8x32xbf16> to vector<64x32xbf16>
      %c0_128 = arith.constant 0 : index
      %c32_129 = arith.constant 32 : index
      %92 = vector.load %arg16[%c0_128, %c32_129] : memref<64x288xbf16, #tpu.memory_space<vmem>>, vector<64x32xbf16>
      tpu.vector_store %arg16[%c0_128, %c32_129], %91 {strides = array<i32>} : memref<64x288xbf16, #tpu.memory_space<vmem>>, vector<64x32xbf16>,
      %c0_130 = arith.constant 0 : index
      %c2_131 = arith.constant 2 : index
      %c0_132 = arith.constant 0 : index
      %93 = vector.load %arg15[%c0_130, %c2_131, %c0_132] : memref<10x10x32xbf16, #tpu.memory_space<vmem>>, vector<8x8x32xbf16>
      %94 = vector.shape_cast %93 : vector<8x8x32xbf16> to vector<64x32xbf16>
      %c0_133 = arith.constant 0 : index
      %c64_134 = arith.constant 64 : index
      %95 = vector.load %arg16[%c0_133, %c64_134] : memref<64x288xbf16, #tpu.memory_space<vmem>>, vector<64x32xbf16>
      tpu.vector_store %arg16[%c0_133, %c64_134], %94 {strides = array<i32>} : memref<64x288xbf16, #tpu.memory_space<vmem>>, vector<64x32xbf16>,
      %c1_135 = arith.constant 1 : index
      %c0_136 = arith.constant 0 : index
      %c0_137 = arith.constant 0 : index
      %96 = vector.load %arg15[%c1_135, %c0_136, %c0_137] : memref<10x10x32xbf16, #tpu.memory_space<vmem>>, vector<8x8x32xbf16>
      %97 = vector.shape_cast %96 : vector<8x8x32xbf16> to vector<64x32xbf16>
      %c0_138 = arith.constant 0 : index
      %c96_139 = arith.constant 96 : index
      %98 = vector.load %arg16[%c0_138, %c96_139] : memref<64x288xbf16, #tpu.memory_space<vmem>>, vector<64x32xbf16>
      tpu.vector_store %arg16[%c0_138, %c96_139], %97 {strides = array<i32>} : memref<64x288xbf16, #tpu.memory_space<vmem>>, vector<64x32xbf16>,
      %c1_140 = arith.constant 1 : index
      %c1_141 = arith.constant 1 : index
      %c0_142 = arith.constant 0 : index
      %99 = vector.load %arg15[%c1_140, %c1_141, %c0_142] : memref<10x10x32xbf16, #tpu.memory_space<vmem>>, vector<8x8x32xbf16>
      %100 = vector.shape_cast %99 : vector<8x8x32xbf16> to vector<64x32xbf16>
      %c0_143 = arith.constant 0 : index
      %c128_144 = arith.constant 128 : index
      %101 = vector.load %arg16[%c0_143, %c128_144] : memref<64x288xbf16, #tpu.memory_space<vmem>>, vector<64x32xbf16>
      tpu.vector_store %arg16[%c0_143, %c128_144], %100 {strides = array<i32>} : memref<64x288xbf16, #tpu.memory_space<vmem>>, vector<64x32xbf16>,
      %c1_145 = arith.constant 1 : index
      %c2_146 = arith.constant 2 : index
      %c0_147 = arith.constant 0 : index
      %102 = vector.load %arg15[%c1_145, %c2_146, %c0_147] : memref<10x10x32xbf16, #tpu.memory_space<vmem>>, vector<8x8x32xbf16>
      %103 = vector.shape_cast %102 : vector<8x8x32xbf16> to vector<64x32xbf16>
      %c0_148 = arith.constant 0 : index
      %c160_149 = arith.constant 160 : index
      %104 = vector.load %arg16[%c0_148, %c160_149] : memref<64x288xbf16, #tpu.memory_space<vmem>>, vector<64x32xbf16>
      tpu.vector_store %arg16[%c0_148, %c160_149], %103 {strides = array<i32>} : memref<64x288xbf16, #tpu.memory_space<vmem>>, vector<64x32xbf16>,
      %c2_150 = arith.constant 2 : index
      %c0_151 = arith.constant 0 : index
      %c0_152 = arith.constant 0 : index
      %105 = vector.load %arg15[%c2_150, %c0_151, %c0_152] : memref<10x10x32xbf16, #tpu.memory_space<vmem>>, vector<8x8x32xbf16>
      %106 = vector.shape_cast %105 : vector<8x8x32xbf16> to vector<64x32xbf16>
      %c0_153 = arith.constant 0 : index
      %c192_154 = arith.constant 192 : index
      %107 = vector.load %arg16[%c0_153, %c192_154] : memref<64x288xbf16, #tpu.memory_space<vmem>>, vector<64x32xbf16>
      tpu.vector_store %arg16[%c0_153, %c192_154], %106 {strides = array<i32>} : memref<64x288xbf16, #tpu.memory_space<vmem>>, vector<64x32xbf16>,
      %c2_155 = arith.constant 2 : index
      %c1_156 = arith.constant 1 : index
      %c0_157 = arith.constant 0 : index
      %108 = vector.load %arg15[%c2_155, %c1_156, %c0_157] : memref<10x10x32xbf16, #tpu.memory_space<vmem>>, vector<8x8x32xbf16>
      %109 = vector.shape_cast %108 : vector<8x8x32xbf16> to vector<64x32xbf16>
      %c0_158 = arith.constant 0 : index
      %c224_159 = arith.constant 224 : index
      %110 = vector.load %arg16[%c0_158, %c224_159] : memref<64x288xbf16, #tpu.memory_space<vmem>>, vector<64x32xbf16>
      tpu.vector_store %arg16[%c0_158, %c224_159], %109 {strides = array<i32>} : memref<64x288xbf16, #tpu.memory_space<vmem>>, vector<64x32xbf16>,
      %c2_160 = arith.constant 2 : index
      %c2_161 = arith.constant 2 : index
      %c0_162 = arith.constant 0 : index
      %111 = vector.load %arg15[%c2_160, %c2_161, %c0_162] : memref<10x10x32xbf16, #tpu.memory_space<vmem>>, vector<8x8x32xbf16>
      %112 = vector.shape_cast %111 : vector<8x8x32xbf16> to vector<64x32xbf16>
      %c0_163 = arith.constant 0 : index
      %c256_164 = arith.constant 256 : index
      %113 = vector.load %arg16[%c0_163, %c256_164] : memref<64x288xbf16, #tpu.memory_space<vmem>>, vector<64x32xbf16>
      tpu.vector_store %arg16[%c0_163, %c256_164], %112 {strides = array<i32>} : memref<64x288xbf16, #tpu.memory_space<vmem>>, vector<64x32xbf16>,
      %c0_165 = arith.constant 0 : index
      %c0_166 = arith.constant 0 : index
      %114 = vector.load %arg16[%c0_165, %c0_166] : memref<64x288xbf16, #tpu.memory_space<vmem>>, vector<64x288xbf16>
      %c0_167 = arith.constant 0 : index
      %c0_168 = arith.constant 0 : index
      %115 = vector.load %arg6[%c0_167, %c0_168] : memref<288x32xbf16, #tpu.memory_space<vmem>>, vector<288x32xbf16>
      %cst_169 = arith.constant dense<0.000000e+00> : vector<64x32xf32>
      %116 = tpu.matmul %114, %115, %cst_169 {dimension_numbers = #tpu.dot_dimension_numbers<[1], [0], [0], [1], [0, 0, 1, 1], [], []>} : vector<64x288xbf16>, vector<288x32xbf16>, vector<64x32xf32> -> vector<64x32xf32>
      %c0_170 = arith.constant 0 : index
      %c0_171 = arith.constant 0 : index
      %117 = vector.load %arg7[%c0_170, %c0_171] : memref<1x32xf32, #tpu.memory_space<vmem>>, vector<1x32xf32>
      %118 = vector.broadcast %117 : vector<1x32xf32> to vector<64x32xf32>
      %119 = arith.addf %116, %118 : vector<64x32xf32>
      %cst_172 = arith.constant 0.000000e+00 : f32
      %120 = vector.broadcast %cst_172 : f32 to vector<64x32xf32>
      %121 = arith.maximumf %119, %120 : vector<64x32xf32>
      %122 = arith.truncf %121 : vector<64x32xf32> to vector<64x32xbf16>
      %123 = vector.shape_cast %122 : vector<64x32xbf16> to vector<8x8x32xbf16>
      %c1_173 = arith.constant 1 : index
      %c1_174 = arith.constant 1 : index
      %c0_175 = arith.constant 0 : index
      %124 = vector.load %arg15[%c1_173, %c1_174, %c0_175] : memref<10x10x32xbf16, #tpu.memory_space<vmem>>, vector<8x8x32xbf16>
      tpu.vector_store %arg15[%c1_173, %c1_174, %c0_175], %123 {strides = array<i32>} : memref<10x10x32xbf16, #tpu.memory_space<vmem>>, vector<8x8x32xbf16>,
      %c0_176 = arith.constant 0 : index
      %c0_177 = arith.constant 0 : index
      %c0_178 = arith.constant 0 : index
      %125 = vector.load %arg15[%c0_176, %c0_177, %c0_178] : memref<10x10x32xbf16, #tpu.memory_space<vmem>>, vector<8x8x32xbf16>
      %126 = vector.shape_cast %125 : vector<8x8x32xbf16> to vector<64x32xbf16>
      %c0_179 = arith.constant 0 : index
      %c0_180 = arith.constant 0 : index
      %127 = vector.load %arg16[%c0_179, %c0_180] : memref<64x288xbf16, #tpu.memory_space<vmem>>, vector<64x32xbf16>
      tpu.vector_store %arg16[%c0_179, %c0_180], %126 {strides = array<i32>} : memref<64x288xbf16, #tpu.memory_space<vmem>>, vector<64x32xbf16>,
      %c0_181 = arith.constant 0 : index
      %c1_182 = arith.constant 1 : index
      %c0_183 = arith.constant 0 : index
      %128 = vector.load %arg15[%c0_181, %c1_182, %c0_183] : memref<10x10x32xbf16, #tpu.memory_space<vmem>>, vector<8x8x32xbf16>
      %129 = vector.shape_cast %128 : vector<8x8x32xbf16> to vector<64x32xbf16>
      %c0_184 = arith.constant 0 : index
      %c32_185 = arith.constant 32 : index
      %130 = vector.load %arg16[%c0_184, %c32_185] : memref<64x288xbf16, #tpu.memory_space<vmem>>, vector<64x32xbf16>
      tpu.vector_store %arg16[%c0_184, %c32_185], %129 {strides = array<i32>} : memref<64x288xbf16, #tpu.memory_space<vmem>>, vector<64x32xbf16>,
      %c0_186 = arith.constant 0 : index
      %c2_187 = arith.constant 2 : index
      %c0_188 = arith.constant 0 : index
      %131 = vector.load %arg15[%c0_186, %c2_187, %c0_188] : memref<10x10x32xbf16, #tpu.memory_space<vmem>>, vector<8x8x32xbf16>
      %132 = vector.shape_cast %131 : vector<8x8x32xbf16> to vector<64x32xbf16>
      %c0_189 = arith.constant 0 : index
      %c64_190 = arith.constant 64 : index
      %133 = vector.load %arg16[%c0_189, %c64_190] : memref<64x288xbf16, #tpu.memory_space<vmem>>, vector<64x32xbf16>
      tpu.vector_store %arg16[%c0_189, %c64_190], %132 {strides = array<i32>} : memref<64x288xbf16, #tpu.memory_space<vmem>>, vector<64x32xbf16>,
      %c1_191 = arith.constant 1 : index
      %c0_192 = arith.constant 0 : index
      %c0_193 = arith.constant 0 : index
      %134 = vector.load %arg15[%c1_191, %c0_192, %c0_193] : memref<10x10x32xbf16, #tpu.memory_space<vmem>>, vector<8x8x32xbf16>
      %135 = vector.shape_cast %134 : vector<8x8x32xbf16> to vector<64x32xbf16>
      %c0_194 = arith.constant 0 : index
      %c96_195 = arith.constant 96 : index
      %136 = vector.load %arg16[%c0_194, %c96_195] : memref<64x288xbf16, #tpu.memory_space<vmem>>, vector<64x32xbf16>
      tpu.vector_store %arg16[%c0_194, %c96_195], %135 {strides = array<i32>} : memref<64x288xbf16, #tpu.memory_space<vmem>>, vector<64x32xbf16>,
      %c1_196 = arith.constant 1 : index
      %c1_197 = arith.constant 1 : index
      %c0_198 = arith.constant 0 : index
      %137 = vector.load %arg15[%c1_196, %c1_197, %c0_198] : memref<10x10x32xbf16, #tpu.memory_space<vmem>>, vector<8x8x32xbf16>
      %138 = vector.shape_cast %137 : vector<8x8x32xbf16> to vector<64x32xbf16>
      %c0_199 = arith.constant 0 : index
      %c128_200 = arith.constant 128 : index
      %139 = vector.load %arg16[%c0_199, %c128_200] : memref<64x288xbf16, #tpu.memory_space<vmem>>, vector<64x32xbf16>
      tpu.vector_store %arg16[%c0_199, %c128_200], %138 {strides = array<i32>} : memref<64x288xbf16, #tpu.memory_space<vmem>>, vector<64x32xbf16>,
      %c1_201 = arith.constant 1 : index
      %c2_202 = arith.constant 2 : index
      %c0_203 = arith.constant 0 : index
      %140 = vector.load %arg15[%c1_201, %c2_202, %c0_203] : memref<10x10x32xbf16, #tpu.memory_space<vmem>>, vector<8x8x32xbf16>
      %141 = vector.shape_cast %140 : vector<8x8x32xbf16> to vector<64x32xbf16>
      %c0_204 = arith.constant 0 : index
      %c160_205 = arith.constant 160 : index
      %142 = vector.load %arg16[%c0_204, %c160_205] : memref<64x288xbf16, #tpu.memory_space<vmem>>, vector<64x32xbf16>
      tpu.vector_store %arg16[%c0_204, %c160_205], %141 {strides = array<i32>} : memref<64x288xbf16, #tpu.memory_space<vmem>>, vector<64x32xbf16>,
      %c2_206 = arith.constant 2 : index
      %c0_207 = arith.constant 0 : index
      %c0_208 = arith.constant 0 : index
      %143 = vector.load %arg15[%c2_206, %c0_207, %c0_208] : memref<10x10x32xbf16, #tpu.memory_space<vmem>>, vector<8x8x32xbf16>
      %144 = vector.shape_cast %143 : vector<8x8x32xbf16> to vector<64x32xbf16>
      %c0_209 = arith.constant 0 : index
      %c192_210 = arith.constant 192 : index
      %145 = vector.load %arg16[%c0_209, %c192_210] : memref<64x288xbf16, #tpu.memory_space<vmem>>, vector<64x32xbf16>
      tpu.vector_store %arg16[%c0_209, %c192_210], %144 {strides = array<i32>} : memref<64x288xbf16, #tpu.memory_space<vmem>>, vector<64x32xbf16>,
      %c2_211 = arith.constant 2 : index
      %c1_212 = arith.constant 1 : index
      %c0_213 = arith.constant 0 : index
      %146 = vector.load %arg15[%c2_211, %c1_212, %c0_213] : memref<10x10x32xbf16, #tpu.memory_space<vmem>>, vector<8x8x32xbf16>
      %147 = vector.shape_cast %146 : vector<8x8x32xbf16> to vector<64x32xbf16>
      %c0_214 = arith.constant 0 : index
      %c224_215 = arith.constant 224 : index
      %148 = vector.load %arg16[%c0_214, %c224_215] : memref<64x288xbf16, #tpu.memory_space<vmem>>, vector<64x32xbf16>
      tpu.vector_store %arg16[%c0_214, %c224_215], %147 {strides = array<i32>} : memref<64x288xbf16, #tpu.memory_space<vmem>>, vector<64x32xbf16>,
      %c2_216 = arith.constant 2 : index
      %c2_217 = arith.constant 2 : index
      %c0_218 = arith.constant 0 : index
      %149 = vector.load %arg15[%c2_216, %c2_217, %c0_218] : memref<10x10x32xbf16, #tpu.memory_space<vmem>>, vector<8x8x32xbf16>
      %150 = vector.shape_cast %149 : vector<8x8x32xbf16> to vector<64x32xbf16>
      %c0_219 = arith.constant 0 : index
      %c256_220 = arith.constant 256 : index
      %151 = vector.load %arg16[%c0_219, %c256_220] : memref<64x288xbf16, #tpu.memory_space<vmem>>, vector<64x32xbf16>
      tpu.vector_store %arg16[%c0_219, %c256_220], %150 {strides = array<i32>} : memref<64x288xbf16, #tpu.memory_space<vmem>>, vector<64x32xbf16>,
      %c0_221 = arith.constant 0 : index
      %c0_222 = arith.constant 0 : index
      %152 = vector.load %arg16[%c0_221, %c0_222] : memref<64x288xbf16, #tpu.memory_space<vmem>>, vector<64x288xbf16>
      %c0_223 = arith.constant 0 : index
      %c0_224 = arith.constant 0 : index
      %153 = vector.load %arg8[%c0_223, %c0_224] : memref<288x32xbf16, #tpu.memory_space<vmem>>, vector<288x32xbf16>
      %cst_225 = arith.constant dense<0.000000e+00> : vector<64x32xf32>
      %154 = tpu.matmul %152, %153, %cst_225 {dimension_numbers = #tpu.dot_dimension_numbers<[1], [0], [0], [1], [0, 0, 1, 1], [], []>} : vector<64x288xbf16>, vector<288x32xbf16>, vector<64x32xf32> -> vector<64x32xf32>
      %c0_226 = arith.constant 0 : index
      %c0_227 = arith.constant 0 : index
      %155 = vector.load %arg9[%c0_226, %c0_227] : memref<1x32xf32, #tpu.memory_space<vmem>>, vector<1x32xf32>
      %156 = vector.broadcast %155 : vector<1x32xf32> to vector<64x32xf32>
      %157 = arith.addf %154, %156 : vector<64x32xf32>
      %cst_228 = arith.constant 0.000000e+00 : f32
      %158 = vector.broadcast %cst_228 : f32 to vector<64x32xf32>
      %159 = arith.maximumf %157, %158 : vector<64x32xf32>
      %160 = arith.truncf %159 : vector<64x32xf32> to vector<64x32xbf16>
      %c0_229 = arith.constant 0 : index
      %c0_230 = arith.constant 0 : index
      %161 = vector.load %arg17[%c0_229, %c0_230] : memref<64x32xbf16, #tpu.memory_space<vmem>>, vector<64x32xbf16>
      tpu.vector_store %arg17[%c0_229, %c0_230], %160 {strides = array<i32>} : memref<64x32xbf16, #tpu.memory_space<vmem>>, vector<64x32xbf16>,
      %c0_231 = arith.constant 0 : index
      %c0_232 = arith.constant 0 : index
      %162 = vector.load %arg17[%c0_231, %c0_232] : memref<64x32xbf16, #tpu.memory_space<vmem>>, vector<64x32xbf16>
      %c0_233 = arith.constant 0 : index
      %c0_234 = arith.constant 0 : index
      %c0_235 = arith.constant 0 : index
      %c0_236 = arith.constant 0 : index
      %163 = vector.load %arg10[%c0_233, %c0_234, %c0_235, %c0_236] : memref<2x2x32x32xbf16, #tpu.memory_space<vmem>>, vector<1x1x32x32xbf16>
      %164 = vector.shape_cast %163 : vector<1x1x32x32xbf16> to vector<32x32xbf16>
      %cst_237 = arith.constant dense<0.000000e+00> : vector<64x32xf32>
      %165 = tpu.matmul %162, %164, %cst_237 {dimension_numbers = #tpu.dot_dimension_numbers<[1], [0], [0], [1], [0, 0, 1, 1], [], []>} : vector<64x32xbf16>, vector<32x32xbf16>, vector<64x32xf32> -> vector<64x32xf32>
      %c0_238 = arith.constant 0 : index
      %c0_239 = arith.constant 0 : index
      %166 = vector.load %arg11[%c0_238, %c0_239] : memref<1x32xf32, #tpu.memory_space<vmem>>, vector<1x32xf32>
      %167 = vector.broadcast %166 : vector<1x32xf32> to vector<64x32xf32>
      %168 = arith.addf %165, %167 : vector<64x32xf32>
      %cst_240 = arith.constant 0.000000e+00 : f32
      %169 = vector.broadcast %cst_240 : f32 to vector<64x32xf32>
      %170 = arith.maximumf %168, %169 : vector<64x32xf32>
      %171 = arith.truncf %170 : vector<64x32xf32> to vector<64x32xbf16>
      %c0_241 = arith.constant 0 : index
      %c0_242 = arith.constant 0 : index
      %172 = vector.load %arg12[%c0_241, %c0_242] : memref<32x128xbf16, #tpu.memory_space<vmem>>, vector<32x128xbf16>
      %cst_243 = arith.constant dense<0.000000e+00> : vector<64x128xf32>
      %173 = tpu.matmul %171, %172, %cst_243 {dimension_numbers = #tpu.dot_dimension_numbers<[1], [0], [0], [1], [0, 0, 1, 1], [], []>} : vector<64x32xbf16>, vector<32x128xbf16>, vector<64x128xf32> -> vector<64x128xf32>
      %c0_244 = arith.constant 0 : index
      %c0_245 = arith.constant 0 : index
      %174 = vector.load %arg13[%c0_244, %c0_245] : memref<1x128xf32, #tpu.memory_space<vmem>>, vector<1x128xf32>
      %175 = vector.broadcast %174 : vector<1x128xf32> to vector<64x128xf32>
      %176 = arith.addf %173, %175 : vector<64x128xf32>
      %177 = vector.shape_cast %176 : vector<64x128xf32> to vector<1x8x1x8x128xf32>
      %178 = arith.index_cast %arg18 : i32 to index
      %c0_246 = arith.constant 0 : index
      %c0_247 = arith.constant 0 : index
      %c0_248 = arith.constant 0 : index
      %c0_249 = arith.constant 0 : index
      %179 = vector.load %arg14[%178, %c0_246, %c0_247, %c0_248, %c0_249] : memref<4x8x2x8x256xf32, #tpu.memory_space<vmem>>, vector<1x8x1x8x128xf32>
      tpu.vector_store %arg14[%178, %c0_246, %c0_247, %c0_248, %c0_249], %177 {strides = array<i32>} : memref<4x8x2x8x256xf32, #tpu.memory_space<vmem>>, vector<1x8x1x8x128xf32>,
      %c0_250 = arith.constant 0 : index
      %c0_251 = arith.constant 0 : index
      %180 = vector.load %arg17[%c0_250, %c0_251] : memref<64x32xbf16, #tpu.memory_space<vmem>>, vector<64x32xbf16>
      %c0_252 = arith.constant 0 : index
      %c1_253 = arith.constant 1 : index
      %c0_254 = arith.constant 0 : index
      %c0_255 = arith.constant 0 : index
      %181 = vector.load %arg10[%c0_252, %c1_253, %c0_254, %c0_255] : memref<2x2x32x32xbf16, #tpu.memory_space<vmem>>, vector<1x1x32x32xbf16>
      %182 = vector.shape_cast %181 : vector<1x1x32x32xbf16> to vector<32x32xbf16>
      %cst_256 = arith.constant dense<0.000000e+00> : vector<64x32xf32>
      %183 = tpu.matmul %180, %182, %cst_256 {dimension_numbers = #tpu.dot_dimension_numbers<[1], [0], [0], [1], [0, 0, 1, 1], [], []>} : vector<64x32xbf16>, vector<32x32xbf16>, vector<64x32xf32> -> vector<64x32xf32>
      %c0_257 = arith.constant 0 : index
      %c0_258 = arith.constant 0 : index
      %184 = vector.load %arg11[%c0_257, %c0_258] : memref<1x32xf32, #tpu.memory_space<vmem>>, vector<1x32xf32>
      %185 = vector.broadcast %184 : vector<1x32xf32> to vector<64x32xf32>
      %186 = arith.addf %183, %185 : vector<64x32xf32>
      %cst_259 = arith.constant 0.000000e+00 : f32
      %187 = vector.broadcast %cst_259 : f32 to vector<64x32xf32>
      %188 = arith.maximumf %186, %187 : vector<64x32xf32>
      %189 = arith.truncf %188 : vector<64x32xf32> to vector<64x32xbf16>
      %c0_260 = arith.constant 0 : index
      %c0_261 = arith.constant 0 : index
      %190 = vector.load %arg12[%c0_260, %c0_261] : memref<32x128xbf16, #tpu.memory_space<vmem>>, vector<32x128xbf16>
      %cst_262 = arith.constant dense<0.000000e+00> : vector<64x128xf32>
      %191 = tpu.matmul %189, %190, %cst_262 {dimension_numbers = #tpu.dot_dimension_numbers<[1], [0], [0], [1], [0, 0, 1, 1], [], []>} : vector<64x32xbf16>, vector<32x128xbf16>, vector<64x128xf32> -> vector<64x128xf32>
      %c0_263 = arith.constant 0 : index
      %c0_264 = arith.constant 0 : index
      %192 = vector.load %arg13[%c0_263, %c0_264] : memref<1x128xf32, #tpu.memory_space<vmem>>, vector<1x128xf32>
      %193 = vector.broadcast %192 : vector<1x128xf32> to vector<64x128xf32>
      %194 = arith.addf %191, %193 : vector<64x128xf32>
      %195 = vector.shape_cast %194 : vector<64x128xf32> to vector<1x8x1x8x128xf32>
      %196 = arith.index_cast %arg18 : i32 to index
      %c0_265 = arith.constant 0 : index
      %c0_266 = arith.constant 0 : index
      %c0_267 = arith.constant 0 : index
      %c128_268 = arith.constant 128 : index
      %197 = vector.load %arg14[%196, %c0_265, %c0_266, %c0_267, %c128_268] : memref<4x8x2x8x256xf32, #tpu.memory_space<vmem>>, vector<1x8x1x8x128xf32>
      tpu.vector_store %arg14[%196, %c0_265, %c0_266, %c0_267, %c128_268], %195 {strides = array<i32>} : memref<4x8x2x8x256xf32, #tpu.memory_space<vmem>>, vector<1x8x1x8x128xf32>,
      %c0_269 = arith.constant 0 : index
      %c0_270 = arith.constant 0 : index
      %198 = vector.load %arg17[%c0_269, %c0_270] : memref<64x32xbf16, #tpu.memory_space<vmem>>, vector<64x32xbf16>
      %c1_271 = arith.constant 1 : index
      %c0_272 = arith.constant 0 : index
      %c0_273 = arith.constant 0 : index
      %c0_274 = arith.constant 0 : index
      %199 = vector.load %arg10[%c1_271, %c0_272, %c0_273, %c0_274] : memref<2x2x32x32xbf16, #tpu.memory_space<vmem>>, vector<1x1x32x32xbf16>
      %200 = vector.shape_cast %199 : vector<1x1x32x32xbf16> to vector<32x32xbf16>
      %cst_275 = arith.constant dense<0.000000e+00> : vector<64x32xf32>
      %201 = tpu.matmul %198, %200, %cst_275 {dimension_numbers = #tpu.dot_dimension_numbers<[1], [0], [0], [1], [0, 0, 1, 1], [], []>} : vector<64x32xbf16>, vector<32x32xbf16>, vector<64x32xf32> -> vector<64x32xf32>
      %c0_276 = arith.constant 0 : index
      %c0_277 = arith.constant 0 : index
      %202 = vector.load %arg11[%c0_276, %c0_277] : memref<1x32xf32, #tpu.memory_space<vmem>>, vector<1x32xf32>
      %203 = vector.broadcast %202 : vector<1x32xf32> to vector<64x32xf32>
      %204 = arith.addf %201, %203 : vector<64x32xf32>
      %cst_278 = arith.constant 0.000000e+00 : f32
      %205 = vector.broadcast %cst_278 : f32 to vector<64x32xf32>
      %206 = arith.maximumf %204, %205 : vector<64x32xf32>
      %207 = arith.truncf %206 : vector<64x32xf32> to vector<64x32xbf16>
      %c0_279 = arith.constant 0 : index
      %c0_280 = arith.constant 0 : index
      %208 = vector.load %arg12[%c0_279, %c0_280] : memref<32x128xbf16, #tpu.memory_space<vmem>>, vector<32x128xbf16>
      %cst_281 = arith.constant dense<0.000000e+00> : vector<64x128xf32>
      %209 = tpu.matmul %207, %208, %cst_281 {dimension_numbers = #tpu.dot_dimension_numbers<[1], [0], [0], [1], [0, 0, 1, 1], [], []>} : vector<64x32xbf16>, vector<32x128xbf16>, vector<64x128xf32> -> vector<64x128xf32>
      %c0_282 = arith.constant 0 : index
      %c0_283 = arith.constant 0 : index
      %210 = vector.load %arg13[%c0_282, %c0_283] : memref<1x128xf32, #tpu.memory_space<vmem>>, vector<1x128xf32>
      %211 = vector.broadcast %210 : vector<1x128xf32> to vector<64x128xf32>
      %212 = arith.addf %209, %211 : vector<64x128xf32>
      %213 = vector.shape_cast %212 : vector<64x128xf32> to vector<1x8x1x8x128xf32>
      %214 = arith.index_cast %arg18 : i32 to index
      %c0_284 = arith.constant 0 : index
      %c1_285 = arith.constant 1 : index
      %c0_286 = arith.constant 0 : index
      %c0_287 = arith.constant 0 : index
      %215 = vector.load %arg14[%214, %c0_284, %c1_285, %c0_286, %c0_287] : memref<4x8x2x8x256xf32, #tpu.memory_space<vmem>>, vector<1x8x1x8x128xf32>
      tpu.vector_store %arg14[%214, %c0_284, %c1_285, %c0_286, %c0_287], %213 {strides = array<i32>} : memref<4x8x2x8x256xf32, #tpu.memory_space<vmem>>, vector<1x8x1x8x128xf32>,
      %c0_288 = arith.constant 0 : index
      %c0_289 = arith.constant 0 : index
      %216 = vector.load %arg17[%c0_288, %c0_289] : memref<64x32xbf16, #tpu.memory_space<vmem>>, vector<64x32xbf16>
      %c1_290 = arith.constant 1 : index
      %c1_291 = arith.constant 1 : index
      %c0_292 = arith.constant 0 : index
      %c0_293 = arith.constant 0 : index
      %217 = vector.load %arg10[%c1_290, %c1_291, %c0_292, %c0_293] : memref<2x2x32x32xbf16, #tpu.memory_space<vmem>>, vector<1x1x32x32xbf16>
      %218 = vector.shape_cast %217 : vector<1x1x32x32xbf16> to vector<32x32xbf16>
      %cst_294 = arith.constant dense<0.000000e+00> : vector<64x32xf32>
      %219 = tpu.matmul %216, %218, %cst_294 {dimension_numbers = #tpu.dot_dimension_numbers<[1], [0], [0], [1], [0, 0, 1, 1], [], []>} : vector<64x32xbf16>, vector<32x32xbf16>, vector<64x32xf32> -> vector<64x32xf32>
      %c0_295 = arith.constant 0 : index
      %c0_296 = arith.constant 0 : index
      %220 = vector.load %arg11[%c0_295, %c0_296] : memref<1x32xf32, #tpu.memory_space<vmem>>, vector<1x32xf32>
      %221 = vector.broadcast %220 : vector<1x32xf32> to vector<64x32xf32>
      %222 = arith.addf %219, %221 : vector<64x32xf32>
      %cst_297 = arith.constant 0.000000e+00 : f32
      %223 = vector.broadcast %cst_297 : f32 to vector<64x32xf32>
      %224 = arith.maximumf %222, %223 : vector<64x32xf32>
      %225 = arith.truncf %224 : vector<64x32xf32> to vector<64x32xbf16>
      %c0_298 = arith.constant 0 : index
      %c0_299 = arith.constant 0 : index
      %226 = vector.load %arg12[%c0_298, %c0_299] : memref<32x128xbf16, #tpu.memory_space<vmem>>, vector<32x128xbf16>
      %cst_300 = arith.constant dense<0.000000e+00> : vector<64x128xf32>
      %227 = tpu.matmul %225, %226, %cst_300 {dimension_numbers = #tpu.dot_dimension_numbers<[1], [0], [0], [1], [0, 0, 1, 1], [], []>} : vector<64x32xbf16>, vector<32x128xbf16>, vector<64x128xf32> -> vector<64x128xf32>
      %c0_301 = arith.constant 0 : index
      %c0_302 = arith.constant 0 : index
      %228 = vector.load %arg13[%c0_301, %c0_302] : memref<1x128xf32, #tpu.memory_space<vmem>>, vector<1x128xf32>
      %229 = vector.broadcast %228 : vector<1x128xf32> to vector<64x128xf32>
      %230 = arith.addf %227, %229 : vector<64x128xf32>
      %231 = vector.shape_cast %230 : vector<64x128xf32> to vector<1x8x1x8x128xf32>
      %232 = arith.index_cast %arg18 : i32 to index
      %c0_303 = arith.constant 0 : index
      %c1_304 = arith.constant 1 : index
      %c0_305 = arith.constant 0 : index
      %c128_306 = arith.constant 128 : index
      %233 = vector.load %arg14[%232, %c0_303, %c1_304, %c0_305, %c128_306] : memref<4x8x2x8x256xf32, #tpu.memory_space<vmem>>, vector<1x8x1x8x128xf32>
      tpu.vector_store %arg14[%232, %c0_303, %c1_304, %c0_305, %c128_306], %231 {strides = array<i32>} : memref<4x8x2x8x256xf32, #tpu.memory_space<vmem>>, vector<1x8x1x8x128xf32>,
    }
    %c4_i32_11 = arith.constant 4 : i32
    return
  }
  func.func @transform_0(%arg0: i32) -> (i32, i32, i32, i32) {
    %c0_i32 = arith.constant 0 : i32
    %c0_i32_0 = arith.constant 0 : i32
    %c0_i32_1 = arith.constant 0 : i32
    %c0_i32_2 = arith.constant 0 : i32
    return %arg0, %c0_i32, %c0_i32_0, %c0_i32_1 : i32, i32, i32, i32
  }
  func.func @transform_1(%arg0: i32) -> (i32, i32) {
    %c0_i32 = arith.constant 0 : i32
    %c0_i32_0 = arith.constant 0 : i32
    %c0_i32_1 = arith.constant 0 : i32
    return %c0_i32, %c0_i32_0 : i32, i32
  }
  func.func @transform_2(%arg0: i32) -> (i32, i32) {
    %c0_i32 = arith.constant 0 : i32
    %c0_i32_0 = arith.constant 0 : i32
    %c0_i32_1 = arith.constant 0 : i32
    return %c0_i32, %c0_i32_0 : i32, i32
  }
  func.func @transform_3(%arg0: i32) -> (i32, i32) {
    %c0_i32 = arith.constant 0 : i32
    %c0_i32_0 = arith.constant 0 : i32
    %c0_i32_1 = arith.constant 0 : i32
    return %c0_i32, %c0_i32_0 : i32, i32
  }
  func.func @transform_4(%arg0: i32) -> (i32, i32) {
    %c0_i32 = arith.constant 0 : i32
    %c0_i32_0 = arith.constant 0 : i32
    %c0_i32_1 = arith.constant 0 : i32
    return %c0_i32, %c0_i32_0 : i32, i32
  }
  func.func @transform_5(%arg0: i32) -> (i32, i32) {
    %c0_i32 = arith.constant 0 : i32
    %c0_i32_0 = arith.constant 0 : i32
    %c0_i32_1 = arith.constant 0 : i32
    return %c0_i32, %c0_i32_0 : i32, i32
  }
  func.func @transform_6(%arg0: i32) -> (i32, i32) {
    %c0_i32 = arith.constant 0 : i32
    %c0_i32_0 = arith.constant 0 : i32
    %c0_i32_1 = arith.constant 0 : i32
    return %c0_i32, %c0_i32_0 : i32, i32
  }
  func.func @transform_7(%arg0: i32) -> (i32, i32) {
    %c0_i32 = arith.constant 0 : i32
    %c0_i32_0 = arith.constant 0 : i32
    %c0_i32_1 = arith.constant 0 : i32
    return %c0_i32, %c0_i32_0 : i32, i32
  }
  func.func @transform_8(%arg0: i32) -> (i32, i32) {
    %c0_i32 = arith.constant 0 : i32
    %c0_i32_0 = arith.constant 0 : i32
    %c0_i32_1 = arith.constant 0 : i32
    return %c0_i32, %c0_i32_0 : i32, i32
  }
  func.func @transform_9(%arg0: i32) -> (i32, i32, i32, i32) {
    %c0_i32 = arith.constant 0 : i32
    %c0_i32_0 = arith.constant 0 : i32
    %c0_i32_1 = arith.constant 0 : i32
    %c0_i32_2 = arith.constant 0 : i32
    %c0_i32_3 = arith.constant 0 : i32
    return %c0_i32, %c0_i32_0, %c0_i32_1, %c0_i32_2 : i32, i32, i32, i32
  }
  func.func @transform_10(%arg0: i32) -> (i32, i32) {
    %c0_i32 = arith.constant 0 : i32
    %c0_i32_0 = arith.constant 0 : i32
    %c0_i32_1 = arith.constant 0 : i32
    return %c0_i32, %c0_i32_0 : i32, i32
  }
  func.func @transform_11(%arg0: i32) -> (i32, i32) {
    %c0_i32 = arith.constant 0 : i32
    %c0_i32_0 = arith.constant 0 : i32
    %c0_i32_1 = arith.constant 0 : i32
    return %c0_i32, %c0_i32_0 : i32, i32
  }
  func.func @transform_12(%arg0: i32) -> (i32, i32) {
    %c0_i32 = arith.constant 0 : i32
    %c0_i32_0 = arith.constant 0 : i32
    %c0_i32_1 = arith.constant 0 : i32
    return %c0_i32, %c0_i32_0 : i32, i32
  }
  func.func @transform_13(%arg0: i32) -> (i32, i32, i32, i32, i32) {
    %c0_i32 = arith.constant 0 : i32
    %c0_i32_0 = arith.constant 0 : i32
    %c0_i32_1 = arith.constant 0 : i32
    %c0_i32_2 = arith.constant 0 : i32
    %c0_i32_3 = arith.constant 0 : i32
    return %arg0, %c0_i32, %c0_i32_0, %c0_i32_1, %c0_i32_2 : i32, i32, i32, i32, i32
  }
}

</mosaic_0001>

<llo_original>
// kernel: fcn_mask_head_forward.1
$region0: #{fcn_mask_head_forward.1}
  #allocation0 [shape = 'u32[]', space=smem, size = 0x4, offset = 0x4, fixed_abs, tag = 'smem constant byte address 0x4 - core index']
  #allocation1 [shape = 'u32[144,128]{1,0:T(1,128)}', space=vmem, size = 0x12000, scoped, tag = 'internal scratch']
  #allocation2 [shape = 'bf16[10,10,32]{2,1,0:T(8,128)(2,1)}', space=vmem, size = 0xa000, scoped, tag = 'scratch operand']
  #allocation3 [shape = 'bf16[64,288]{1,0:T(16,128)(2,1)}', space=vmem, size = 0xc000, scoped, tag = 'scratch operand']
  #allocation4 [shape = 'bf16[64,32]{1,0:T(16,128)(2,1)}', space=vmem, size = 0x4000, scoped, tag = 'scratch operand']
  %s0 = inlined_call_operand.vmem [shape: bf16[8,8,8,32], index: 0, kind: input, shape index: {}]
  %s1 = inlined_call_operand.vmem [shape: bf16[288,32], index: 1, kind: input, shape index: {}]
  %s2 = inlined_call_operand.vmem [shape: f32[1,32], index: 2, kind: input, shape index: {}]
  %s3 = inlined_call_operand.vmem [shape: bf16[288,32], index: 3, kind: input, shape index: {}]
  %s4 = inlined_call_operand.vmem [shape: f32[1,32], index: 4, kind: input, shape index: {}]
  %s5 = inlined_call_operand.vmem [shape: bf16[288,32], index: 5, kind: input, shape index: {}]
  %s6 = inlined_call_operand.vmem [shape: f32[1,32], index: 6, kind: input, shape index: {}]
  %s7 = inlined_call_operand.vmem [shape: bf16[288,32], index: 7, kind: input, shape index: {}]
  %s8 = inlined_call_operand.vmem [shape: f32[1,32], index: 8, kind: input, shape index: {}]
  %s9 = inlined_call_operand.vmem [shape: bf16[2,2,32,32], index: 9, kind: input, shape index: {}]
  %s10 = inlined_call_operand.vmem [shape: f32[1,32], index: 10, kind: input, shape index: {}]
  %s11 = inlined_call_operand.vmem [shape: bf16[32,128], index: 11, kind: input, shape index: {}]
  %s12 = inlined_call_operand.vmem [shape: f32[1,128], index: 12, kind: input, shape index: {}]
  %s13 = inlined_call_operand.vmem [shape: f32[8,8,2,8,256], index: 13, kind: output, shape index: {}]
  %s14 = sld [smem:[#allocation0]]
  $region92: #{fcn_mask_head_forward.1} parent=0
    _
  %s16 = ssub.s32 1, %s14
  %s17 = scalar_select 0, %s16, %s14
  loop: start=0, step=1, limit=4
  $region2: #{fcn_mask_head_forward.1} parent=0 // loop_pre_header
    _
  $region3: #{fcn_mask_head_forward.1} parent=0 // loop_header
    %s19 = sphi 0, %s23
    %p20 = scmp.ge.s32.totalorder %s19, 4
    %s29 = sphi 0, %s31
    %s32 = sphi 0, %s29
    %s33 = sphi 0, %s32
    %s49 = sphi 0, %s33
    %s53 = sphi 0, %s53
    %s55 = sphi 0, %s53
    %s56 = sphi 0, %s55
    %s70 = sphi 0, %s56
    %s74 = sphi 0, %s74
    %s76 = sphi 0, %s74
    %s77 = sphi 0, %s76
    %s91 = sphi 0, %s77
    %s95 = sphi 0, %s95
    %s97 = sphi 0, %s95
    %s98 = sphi 0, %s97
    %s112 = sphi 0, %s98
    %s116 = sphi 0, %s116
    %s118 = sphi 0, %s116
    %s119 = sphi 0, %s118
    %s133 = sphi 0, %s119
    %s137 = sphi 0, %s137
    %s139 = sphi 0, %s137
    %s140 = sphi 0, %s139
    %s154 = sphi 0, %s140
    %s158 = sphi 0, %s158
    %s160 = sphi 0, %s158
    %s161 = sphi 0, %s160
    %s175 = sphi 0, %s161
    %s179 = sphi 0, %s179
    %s181 = sphi 0, %s179
    %s182 = sphi 0, %s181
    %s196 = sphi 0, %s182
    %s200 = sphi 0, %s200
    %s202 = sphi 0, %s200
    %s203 = sphi 0, %s202
    %s217 = sphi 0, %s203
    %s221 = sphi 0, %s221
    %s223 = sphi 0, %s221
    %s224 = sphi 0, %s223
    %s238 = sphi 0, %s224
    %s242 = sphi 0, %s242
    %s244 = sphi 0, %s242
    %s245 = sphi 0, %s244
    %s259 = sphi 0, %s245
    %s263 = sphi 0, %s263
    %s265 = sphi 0, %s263
    %s266 = sphi 0, %s265
    %s280 = sphi 0, %s266
    %s284 = sphi 0, %s284
    %s286 = sphi 0, %s284
    %s287 = sphi 0, %s286
    %s301 = sphi 0, %s287
    %s307 = sphi 0, %s309
    %s310 = sphi 0, %s307
    %s311 = sphi 0, %s310
    %s327 = sphi 0, %s311
  $region4: #{fcn_mask_head_forward.1} parent=0 // loop_header_branch
    %22 = sbr.rel (%p20) target = $region8
  $region5: #{fcn_mask_head_forward.1} parent=0 // loop_body
    %s24 = ssub.s32 %s19, 1
    %s25 = ssub.s32 %s19, 2
    %s26 = sadd.s32 %s19, 1
    %s27 = ssub.s32 %s19, %s26
    %p28 = scmp.eq.s32.totalorder %s27, 0
    %s30 = sadd.s32 %s29, 1
    %s31 = scalar_select %p28, %s29, %s30
    %p34 = pneg %p28
    %p35 = scmp.eq.s32.totalorder %s19, 1
    %p36 = por %p34, %p35
    %p37 = scmp.ne.s32.totalorder %s29, %s32
    %p38 = scmp.eq.s32.totalorder %s19, 0
    %p39 = por %p37, %p38
    %p40 = scmp.ne.s32.totalorder %s29, %s32
    %p41 = scmp.eq.s32.totalorder %s24, 1
    %p42 = por %p40, %p41
    %p43 = scmp.ne.s32.totalorder %s32, %s33
    %p44 = scmp.eq.s32.totalorder %s24, 0
    %p45 = por %p43, %p44
    %p46 = scmp.ne.s32.totalorder %s32, %s33
    %p47 = scmp.eq.s32.totalorder %s25, 1
    %p48 = por %p46, %p47
    %p50 = scmp.ne.s32.totalorder %s33, %s49
    %p51 = scmp.eq.s32.totalorder %s25, 0
    %p52 = por %p50, %p51
    %s54 = sadd.s32 %s53, 1
    %p57 = scmp.eq.s32.totalorder %s19, 1
    %p58 = scmp.ne.s32.totalorder %s53, %s55
    %p59 = scmp.eq.s32.totalorder %s19, 0
    %p60 = por %p58, %p59
    %p61 = scmp.ne.s32.totalorder %s53, %s55
    %p62 = scmp.eq.s32.totalorder %s24, 1
    %p63 = por %p61, %p62
    %p64 = scmp.ne.s32.totalorder %s55, %s56
    %p65 = scmp.eq.s32.totalorder %s24, 0
    %p66 = por %p64, %p65
    %p67 = scmp.ne.s32.totalorder %s55, %s56
    %p68 = scmp.eq.s32.totalorder %s25, 1
    %p69 = por %p67, %p68
    %p71 = scmp.ne.s32.totalorder %s56, %s70
    %p72 = scmp.eq.s32.totalorder %s25, 0
    %p73 = por %p71, %p72
    %s75 = sadd.s32 %s74, 1
    %p78 = scmp.eq.s32.totalorder %s19, 1
    %p79 = scmp.ne.s32.totalorder %s74, %s76
    %p80 = scmp.eq.s32.totalorder %s19, 0
    %p81 = por %p79, %p80
    %p82 = scmp.ne.s32.totalorder %s74, %s76
    %p83 = scmp.eq.s32.totalorder %s24, 1
    %p84 = por %p82, %p83
    %p85 = scmp.ne.s32.totalorder %s76, %s77
    %p86 = scmp.eq.s32.totalorder %s24, 0
    %p87 = por %p85, %p86
    %p88 = scmp.ne.s32.totalorder %s76, %s77
    %p89 = scmp.eq.s32.totalorder %s25, 1
    %p90 = por %p88, %p89
    %p92 = scmp.ne.s32.totalorder %s77, %s91
    %p93 = scmp.eq.s32.totalorder %s25, 0
    %p94 = por %p92, %p93
    %s96 = sadd.s32 %s95, 1
    %p99 = scmp.eq.s32.totalorder %s19, 1
    %p100 = scmp.ne.s32.totalorder %s95, %s97
    %p101 = scmp.eq.s32.totalorder %s19, 0
    %p102 = por %p100, %p101
    %p103 = scmp.ne.s32.totalorder %s95, %s97
    %p104 = scmp.eq.s32.totalorder %s24, 1
    %p105 = por %p103, %p104
    %p106 = scmp.ne.s32.totalorder %s97, %s98
    %p107 = scmp.eq.s32.totalorder %s24, 0
    %p108 = por %p106, %p107
    %p109 = scmp.ne.s32.totalorder %s97, %s98
    %p110 = scmp.eq.s32.totalorder %s25, 1
    %p111 = por %p109, %p110
    %p113 = scmp.ne.s32.totalorder %s98, %s112
    %p114 = scmp.eq.s32.totalorder %s25, 0
    %p115 = por %p113, %p114
    %s117 = sadd.s32 %s116, 1
    %p120 = scmp.eq.s32.totalorder %s19, 1
    %p121 = scmp.ne.s32.totalorder %s116, %s118
    %p122 = scmp.eq.s32.totalorder %s19, 0
    %p123 = por %p121, %p122
    %p124 = scmp.ne.s32.totalorder %s116, %s118
    %p125 = scmp.eq.s32.totalorder %s24, 1
    %p126 = por %p124, %p125
    %p127 = scmp.ne.s32.totalorder %s118, %s119
    %p128 = scmp.eq.s32.totalorder %s24, 0
    %p129 = por %p127, %p128
    %p130 = scmp.ne.s32.totalorder %s118, %s119
    %p131 = scmp.eq.s32.totalorder %s25, 1
    %p132 = por %p130, %p131
    %p134 = scmp.ne.s32.totalorder %s119, %s133
    %p135 = scmp.eq.s32.totalorder %s25, 0
    %p136 = por %p134, %p135
    %s138 = sadd.s32 %s137, 1
    %p141 = scmp.eq.s32.totalorder %s19, 1
    %p142 = scmp.ne.s32.totalorder %s137, %s139
    %p143 = scmp.eq.s32.totalorder %s19, 0
    %p144 = por %p142, %p143
    %p145 = scmp.ne.s32.totalorder %s137, %s139
    %p146 = scmp.eq.s32.totalorder %s24, 1
    %p147 = por %p145, %p146
    %p148 = scmp.ne.s32.totalorder %s139, %s140
    %p149 = scmp.eq.s32.totalorder %s24, 0
    %p150 = por %p148, %p149
    %p151 = scmp.ne.s32.totalorder %s139, %s140
    %p152 = scmp.eq.s32.totalorder %s25, 1
    %p153 = por %p151, %p152
    %p155 = scmp.ne.s32.totalorder %s140, %s154
    %p156 = scmp.eq.s32.totalorder %s25, 0
    %p157 = por %p155, %p156
    %s159 = sadd.s32 %s158, 1
    %p162 = scmp.eq.s32.totalorder %s19, 1
    %p163 = scmp.ne.s32.totalorder %s158, %s160
    %p164 = scmp.eq.s32.totalorder %s19, 0
    %p165 = por %p163, %p164
    %p166 = scmp.ne.s32.totalorder %s158, %s160
    %p167 = scmp.eq.s32.totalorder %s24, 1
    %p168 = por %p166, %p167
    %p169 = scmp.ne.s32.totalorder %s160, %s161
    %p170 = scmp.eq.s32.totalorder %s24, 0
    %p171 = por %p169, %p170
    %p172 = scmp.ne.s32.totalorder %s160, %s161
    %p173 = scmp.eq.s32.totalorder %s25, 1
    %p174 = por %p172, %p173
    %p176 = scmp.ne.s32.totalorder %s161, %s175
    %p177 = scmp.eq.s32.totalorder %s25, 0
    %p178 = por %p176, %p177
    %s180 = sadd.s32 %s179, 1
    %p183 = scmp.eq.s32.totalorder %s19, 1
    %p184 = scmp.ne.s32.totalorder %s179, %s181
    %p185 = scmp.eq.s32.totalorder %s19, 0
    %p186 = por %p184, %p185
    %p187 = scmp.ne.s32.totalorder %s179, %s181
    %p188 = scmp.eq.s32.totalorder %s24, 1
    %p189 = por %p187, %p188
    %p190 = scmp.ne.s32.totalorder %s181, %s182
    %p191 = scmp.eq.s32.totalorder %s24, 0
    %p192 = por %p190, %p191
    %p193 = scmp.ne.s32.totalorder %s181, %s182
    %p194 = scmp.eq.s32.totalorder %s25, 1
    %p195 = por %p193, %p194
    %p197 = scmp.ne.s32.totalorder %s182, %s196
    %p198 = scmp.eq.s32.totalorder %s25, 0
    %p199 = por %p197, %p198
    %s201 = sadd.s32 %s200, 1
    %p204 = scmp.eq.s32.totalorder %s19, 1
    %p205 = scmp.ne.s32.totalorder %s200, %s202
    %p206 = scmp.eq.s32.totalorder %s19, 0
    %p207 = por %p205, %p206
    %p208 = scmp.ne.s32.totalorder %s200, %s202
    %p209 = scmp.eq.s32.totalorder %s24, 1
    %p210 = por %p208, %p209
    %p211 = scmp.ne.s32.totalorder %s202, %s203
    %p212 = scmp.eq.s32.totalorder %s24, 0
    %p213 = por %p211, %p212
    %p214 = scmp.ne.s32.totalorder %s202, %s203
    %p215 = scmp.eq.s32.totalorder %s25, 1
    %p216 = por %p214, %p215
    %p218 = scmp.ne.s32.totalorder %s203, %s217
    %p219 = scmp.eq.s32.totalorder %s25, 0
    %p220 = por %p218, %p219
    %s222 = sadd.s32 %s221, 1
    %p225 = scmp.eq.s32.totalorder %s19, 1
    %p226 = scmp.ne.s32.totalorder %s221, %s223
    %p227 = scmp.eq.s32.totalorder %s19, 0
    %p228 = por %p226, %p227
    %p229 = scmp.ne.s32.totalorder %s221, %s223
    %p230 = scmp.eq.s32.totalorder %s24, 1
    %p231 = por %p229, %p230
    %p232 = scmp.ne.s32.totalorder %s223, %s224
    %p233 = scmp.eq.s32.totalorder %s24, 0
    %p234 = por %p232, %p233
    %p235 = scmp.ne.s32.totalorder %s223, %s224
    %p236 = scmp.eq.s32.totalorder %s25, 1
    %p237 = por %p235, %p236
    %p239 = scmp.ne.s32.totalorder %s224, %s238
    %p240 = scmp.eq.s32.totalorder %s25, 0
    %p241 = por %p239, %p240
    %s243 = sadd.s32 %s242, 1
    %p246 = scmp.eq.s32.totalorder %s19, 1
    %p247 = scmp.ne.s32.totalorder %s242, %s244
    %p248 = scmp.eq.s32.totalorder %s19, 0
    %p249 = por %p247, %p248
    %p250 = scmp.ne.s32.totalorder %s242, %s244
    %p251 = scmp.eq.s32.totalorder %s24, 1
    %p252 = por %p250, %p251
    %p253 = scmp.ne.s32.totalorder %s244, %s245
    %p254 = scmp.eq.s32.totalorder %s24, 0
    %p255 = por %p253, %p254
    %p256 = scmp.ne.s32.totalorder %s244, %s245
    %p257 = scmp.eq.s32.totalorder %s25, 1
    %p258 = por %p256, %p257
    %p260 = scmp.ne.s32.totalorder %s245, %s259
    %p261 = scmp.eq.s32.totalorder %s25, 0
    %p262 = por %p260, %p261
    %s264 = sadd.s32 %s263, 1
    %p267 = scmp.eq.s32.totalorder %s19, 1
    %p268 = scmp.ne.s32.totalorder %s263, %s265
    %p269 = scmp.eq.s32.totalorder %s19, 0
    %p270 = por %p268, %p269
    %p271 = scmp.ne.s32.totalorder %s263, %s265
    %p272 = scmp.eq.s32.totalorder %s24, 1
    %p273 = por %p271, %p272
    %p274 = scmp.ne.s32.totalorder %s265, %s266
    %p275 = scmp.eq.s32.totalorder %s24, 0
    %p276 = por %p274, %p275
    %p277 = scmp.ne.s32.totalorder %s265, %s266
    %p278 = scmp.eq.s32.totalorder %s25, 1
    %p279 = por %p277, %p278
    %p281 = scmp.ne.s32.totalorder %s266, %s280
    %p282 = scmp.eq.s32.totalorder %s25, 0
    %p283 = por %p281, %p282
    %s285 = sadd.s32 %s284, 1
    %p288 = scmp.eq.s32.totalorder %s19, 1
    %p289 = scmp.ne.s32.totalorder %s284, %s286
    %p290 = scmp.eq.s32.totalorder %s19, 0
    %p291 = por %p289, %p290
    %p292 = scmp.ne.s32.totalorder %s284, %s286
    %p293 = scmp.eq.s32.totalorder %s24, 1
    %p294 = por %p292, %p293
    %p295 = scmp.ne.s32.totalorder %s286, %s287
    %p296 = scmp.eq.s32.totalorder %s24, 0
    %p297 = por %p295, %p296
    %p298 = scmp.ne.s32.totalorder %s286, %s287
    %p299 = scmp.eq.s32.totalorder %s25, 1
    %p300 = por %p298, %p299
    %p302 = scmp.ne.s32.totalorder %s287, %s301
    %p303 = scmp.eq.s32.totalorder %s25, 0
    %p304 = por %p302, %p303
    %s305 = ssub.s32 %s19, %s26
    %p306 = scmp.eq.s32.totalorder %s305, 0
    %s308 = sadd.s32 %s307, 1
    %s309 = scalar_select %p306, %s307, %s308
    %p312 = pneg %p306
    %p313 = scmp.eq.s32.totalorder %s19, 1
    %p314 = por %p312, %p313
    %p315 = scmp.ne.s32.totalorder %s307, %s310
    %p316 = scmp.eq.s32.totalorder %s19, 0
    %p317 = por %p315, %p316
    %p318 = scmp.ne.s32.totalorder %s307, %s310
    %p319 = scmp.eq.s32.totalorder %s24, 1
    %p320 = por %p318, %p319
    %p321 = scmp.ne.s32.totalorder %s310, %s311
    %p322 = scmp.eq.s32.totalorder %s24, 0
    %p323 = por %p321, %p322
    %p324 = scmp.ne.s32.totalorder %s310, %s311
    %p325 = scmp.eq.s32.totalorder %s25, 1
    %p326 = por %p324, %p325
    %p328 = scmp.ne.s32.totalorder %s311, %s327
    %p329 = scmp.eq.s32.totalorder %s25, 0
    %p330 = por %p328, %p329
    %p331 = scmp.le.s32.totalorder 1, %s19
    %p332 = scmp.lt.s32.totalorder %s19, 3
    %p333 = pnand %p331, %p332
    %p334 = pneg %p333
    // Predicated region
    $region9: #{fcn_mask_head_forward.1} parent=5 // pred_check
      _
    $region10: #{fcn_mask_head_forward.1} parent=5 // pred_check_branch
      %336 = sbr.rel (%p333) target = $region12
    $region11: #{fcn_mask_head_forward.1} parent=5 // pred_region
      %s337 = ssub.s32 %s19, 1
      // Predicated region
      $region13: #{fcn_mask_head_forward.1} parent=11 // pred_check
        %p338 = pneg %p66
      $region14: #{fcn_mask_head_forward.1} parent=11 // pred_check_branch
        %340 = sbr.rel (%p338) target = $region16
      $region15: #{fcn_mask_head_forward.1} parent=11 // pred_region
        _
      $region16: #{fcn_mask_head_forward.1} parent=11 // pred_fallthru
        _
      // Predicated region
      $region17: #{fcn_mask_head_forward.1} parent=11 // pred_check
        %p341 = pneg %p87
      $region18: #{fcn_mask_head_forward.1} parent=11 // pred_check_branch
        %343 = sbr.rel (%p341) target = $region20
      $region19: #{fcn_mask_head_forward.1} parent=11 // pred_region
        _
      $region20: #{fcn_mask_head_forward.1} parent=11 // pred_fallthru
        _
      // Predicated region
      $region21: #{fcn_mask_head_forward.1} parent=11 // pred_check
        %p344 = pneg %p108
      $region22: #{fcn_mask_head_forward.1} parent=11 // pred_check_branch
        %346 = sbr.rel (%p344) target = $region24
      $region23: #{fcn_mask_head_forward.1} parent=11 // pred_region
        _
      $region24: #{fcn_mask_head_forward.1} parent=11 // pred_fallthru
        _
      // Predicated region
      $region25: #{fcn_mask_head_forward.1} parent=11 // pred_check
        %p347 = pneg %p129
      $region26: #{fcn_mask_head_forward.1} parent=11 // pred_check_branch
        %349 = sbr.rel (%p347) target = $region28
      $region27: #{fcn_mask_head_forward.1} parent=11 // pred_region
        _
      $region28: #{fcn_mask_head_forward.1} parent=11 // pred_fallthru
        _
      // Predicated region
      $region29: #{fcn_mask_head_forward.1} parent=11 // pred_check
        %p350 = pneg %p150
      $region30: #{fcn_mask_head_forward.1} parent=11 // pred_check_branch
        %352 = sbr.rel (%p350) target = $region32
      $region31: #{fcn_mask_head_forward.1} parent=11 // pred_region
        _
      $region32: #{fcn_mask_head_forward.1} parent=11 // pred_fallthru
        _
      // Predicated region
      $region33: #{fcn_mask_head_forward.1} parent=11 // pred_check
        %p353 = pneg %p171
      $region34: #{fcn_mask_head_forward.1} parent=11 // pred_check_branch
        %355 = sbr.rel (%p353) target = $region36
      $region35: #{fcn_mask_head_forward.1} parent=11 // pred_region
        _
      $region36: #{fcn_mask_head_forward.1} parent=11 // pred_fallthru
        _
      // Predicated region
      $region37: #{fcn_mask_head_forward.1} parent=11 // pred_check
        %p356 = pneg %p192
      $region38: #{fcn_mask_head_forward.1} parent=11 // pred_check_branch
        %358 = sbr.rel (%p356) target = $region40
      $region39: #{fcn_mask_head_forward.1} parent=11 // pred_region
        _
      $region40: #{fcn_mask_head_forward.1} parent=11 // pred_fallthru
        _
      // Predicated region
      $region41: #{fcn_mask_head_forward.1} parent=11 // pred_check
        %p359 = pneg %p213
      $region42: #{fcn_mask_head_forward.1} parent=11 // pred_check_branch
        %361 = sbr.rel (%p359) target = $region44
      $region43: #{fcn_mask_head_forward.1} parent=11 // pred_region
        _
      $region44: #{fcn_mask_head_forward.1} parent=11 // pred_fallthru
        _
      // Predicated region
      $region45: #{fcn_mask_head_forward.1} parent=11 // pred_check
        %p362 = pneg %p234
      $region46: #{fcn_mask_head_forward.1} parent=11 // pred_check_branch
        %364 = sbr.rel (%p362) target = $region48
      $region47: #{fcn_mask_head_forward.1} parent=11 // pred_region
        _
      $region48: #{fcn_mask_head_forward.1} parent=11 // pred_fallthru
        _
      // Predicated region
      $region49: #{fcn_mask_head_forward.1} parent=11 // pred_check
        %p365 = pneg %p255
      $region50: #{fcn_mask_head_forward.1} parent=11 // pred_check_branch
        %367 = sbr.rel (%p365) target = $region52
      $region51: #{fcn_mask_head_forward.1} parent=11 // pred_region
        _
      $region52: #{fcn_mask_head_forward.1} parent=11 // pred_fallthru
        _
      // Predicated region
      $region53: #{fcn_mask_head_forward.1} parent=11 // pred_check
        %p368 = pneg %p276
      $region54: #{fcn_mask_head_forward.1} parent=11 // pred_check_branch
        %370 = sbr.rel (%p368) target = $region56
      $region55: #{fcn_mask_head_forward.1} parent=11 // pred_region
        _
      $region56: #{fcn_mask_head_forward.1} parent=11 // pred_fallthru
        _
      // Predicated region
      $region57: #{fcn_mask_head_forward.1} parent=11 // pred_check
        %p371 = pneg %p297
      $region58: #{fcn_mask_head_forward.1} parent=11 // pred_check_branch
        %373 = sbr.rel (%p371) target = $region60
      $region59: #{fcn_mask_head_forward.1} parent=11 // pred_region
        _
      $region60: #{fcn_mask_head_forward.1} parent=11 // pred_fallthru
        _
    $region12: #{fcn_mask_head_forward.1} parent=5 // pred_fallthru
      _
    %p374 = scmp.lt.s32.totalorder %s19, 2
    // Predicated region
    $region61: #{fcn_mask_head_forward.1} parent=5 // pred_check
      %p375 = pneg %p374
    $region62: #{fcn_mask_head_forward.1} parent=5 // pred_check_branch
      %377 = sbr.rel (%p375) target = $region64
    $region63: #{fcn_mask_head_forward.1} parent=5 // pred_region
      // Predicated region
      $region65: #{fcn_mask_head_forward.1} parent=63 // pred_check
        %p378 = pneg %p39
      $region66: #{fcn_mask_head_forward.1} parent=63 // pred_check_branch
        %380 = sbr.rel (%p378) target = $region68
      $region67: #{fcn_mask_head_forward.1} parent=63 // pred_region
        %s381 = smul.u32 4, %s19
        %p382 = scmp.lt.s32.totalorder %s381, 7
        %s383 = scalar_select %p382, %s381, 7
        %s384 = smul.addr %s383, 8
        %s385 = smul.addr %s384, 4
        %s386 = scalar_lea.vmem %s0, %s385
        %s387 = smul.u32 4, %s19
      $region68: #{fcn_mask_head_forward.1} parent=63 // pred_fallthru
        _
    $region64: #{fcn_mask_head_forward.1} parent=5 // pred_fallthru
      _
    %p388 = scmp.le.s32.totalorder 1, %s19
    %p389 = scmp.lt.s32.totalorder %s19, 3
    %p390 = pnand %p388, %p389
    %p391 = pneg %p390
    // Predicated region
    $region69: #{fcn_mask_head_forward.1} parent=5 // pred_check
      _
    $region70: #{fcn_mask_head_forward.1} parent=5 // pred_check_branch
      %393 = sbr.rel (%p390) target = $region72
    $region71: #{fcn_mask_head_forward.1} parent=5 // pred_region
      %s394 = ssub.s32 %s19, 1
      %s395 = smul.u32 4, %s24
      %p396 = scmp.lt.s32.totalorder %s395, 7
      %s397 = scalar_select %p396, %s395, 7
      %s398 = smul.addr %s397, 8
      %s399 = smul.addr %s398, 4
      %s400 = scalar_lea.vmem %s0, %s399
      %p401 = pneg %p45
      %p402 = pneg %p42
      %p403 = pneg %p66
      %p404 = pneg %p63
      %p405 = pneg %p87
      %p406 = pneg %p84
      %p407 = pneg %p108
      %p408 = pneg %p105
      %p409 = pneg %p129
      %p410 = pneg %p126
      %p411 = pneg %p150
      %p412 = pneg %p147
      %p413 = pneg %p171
      %p414 = pneg %p168
      %p415 = pneg %p192
      %p416 = pneg %p189
      %p417 = pneg %p213
      %p418 = pneg %p210
      %p419 = pneg %p234
      %p420 = pneg %p231
      %p421 = pneg %p255
      %p422 = pneg %p252
      %p423 = pneg %p276
      %p424 = pneg %p273
      %p425 = pneg %p297
      %p426 = pneg %p294
      %p427 = pneg %p323
      %p428 = pneg %p320
      %s429 = smul.u32 4, %s24
      %p430 = scmp.lt.s32.totalorder %s429, 7
      %s431 = scalar_select %p430, %s429, 7
      %s432 = smul.addr %s431, 32
      %s433 = smul.addr %s432, 8
      %s434 = scalar_lea.vmem %s13, %s433
      %s435 = smul.u32 4, %s24
      %p436 = scmp.lt.s32.totalorder %s435, 7
      %s437 = scalar_select %p436, %s435, 7
      %s438 = smul.addr %s437, 8
      %s439 = smul.addr %s438, 4
      %s440 = scalar_lea.vmem %s0, %s439
      %s441 = smul.u32 4, %s24
      %s442 = smul.u32 4, %s24
      %p443 = scmp.lt.s32.totalorder %s442, 7
      %s444 = scalar_select %p443, %s442, 7
      %s445 = smul.addr %s444, 32
      %s446 = smul.addr %s445, 8
      %s447 = scalar_lea.vmem %s13, %s446
      %s448 = smul.u32 4, %s24
      %vm450 = vcmask 257024
      %451 = vst.msk [vmem:[#allocation2] sm:$0xf] %vm450, 0
      %vm452 = vcmask 253952
      %453 = vst.msk [vmem:[#allocation2 + $0x4] sm:$0x1] %vm452, 0
      %s454 = scalar_lea.vmem [#allocation2], 72
      %455 = vst.msk [vmem:[%s454] sm:$0xf] %vm450, 0
      %456 = vst.msk [vmem:[%s454 + $0x4] sm:$0x1] %vm452, 0
      %vm457 = vcmask 253952
      %vm458 = vsmask.f32 256
      %vm459 = vmand %vm457, %vm458
      %v460 = vld [vmem:[#allocation2] sm:$0x1]
      %v461 = vsel %vm459, 0, %v460
      %462 = vst [vmem:[#allocation2] sm:$0x1] %v461
      %v463 = vld [vmem:[#allocation2 + $0x8] sm:$0x1]
      %v464 = vsel %vm459, 0, %v463
      %465 = vst [vmem:[#allocation2 + $0x8] sm:$0x1] %v464
      %v466 = vld [vmem:[#allocation2 + $0x10] sm:$0x1]
      %v467 = vsel %vm459, 0, %v466
      %468 = vst [vmem:[#allocation2 + $0x10] sm:$0x1] %v467
      %v469 = vld [vmem:[#allocation2 + $0x18] sm:$0x1]
      %v470 = vsel %vm459, 0, %v469
      %471 = vst [vmem:[#allocation2 + $0x18] sm:$0x1] %v470
      %v472 = vld [vmem:[#allocation2 + $0x20] sm:$0x1]
      %v473 = vsel %vm459, 0, %v472
      %474 = vst [vmem:[#allocation2 + $0x20] sm:$0x1] %v473
      %v475 = vld [vmem:[#allocation2 + $0x28] sm:$0x1]
      %v476 = vsel %vm459, 0, %v475
      %477 = vst [vmem:[#allocation2 + $0x28] sm:$0x1] %v476
      %v478 = vld [vmem:[#allocation2 + $0x30] sm:$0x1]
      %v479 = vsel %vm459, 0, %v478
      %480 = vst [vmem:[#allocation2 + $0x30] sm:$0x1] %v479
      %v481 = vld [vmem:[#allocation2 + $0x38] sm:$0x1]
      %v482 = vsel %vm459, 0, %v481
      %483 = vst [vmem:[#allocation2 + $0x38] sm:$0x1] %v482
      %v484 = vld [vmem:[#allocation2 + $0x40] sm:$0x1]
      %v485 = vsel %vm459, 0, %v484
      %486 = vst [vmem:[#allocation2 + $0x40] sm:$0x1] %v485
      %v487 = vld [vmem:[#allocation2 + $0x48] sm:$0x1]
      %v488 = vsel %vm459, 0, %v487
      %489 = vst [vmem:[#allocation2 + $0x48] sm:$0x1] %v488
      %vm490 = vsmask.f32 7938
      %vm491 = vmand %vm457, %vm490
      %v492 = vld [vmem:[#allocation2 + $0x4] sm:$0x1]
      %v493 = vsel %vm491, 0, %v492
      %494 = vst [vmem:[#allocation2 + $0x4] sm:$0x1] %v493
      %v495 = vld [vmem:[#allocation2 + $0xc] sm:$0x1]
      %v496 = vsel %vm491, 0, %v495
      %497 = vst [vmem:[#allocation2 + $0xc] sm:$0x1] %v496
      %v498 = vld [vmem:[#allocation2 + $0x14] sm:$0x1]
      %v499 = vsel %vm491, 0, %v498
      %500 = vst [vmem:[#allocation2 + $0x14] sm:$0x1] %v499
      %v501 = vld [vmem:[#allocation2 + $0x1c] sm:$0x1]
      %v502 = vsel %vm491, 0, %v501
      %503 = vst [vmem:[#allocation2 + $0x1c] sm:$0x1] %v502
      %v504 = vld [vmem:[#allocation2 + $0x24] sm:$0x1]
      %v505 = vsel %vm491, 0, %v504
      %506 = vst [vmem:[#allocation2 + $0x24] sm:$0x1] %v505
      %v507 = vld [vmem:[#allocation2 + $0x2c] sm:$0x1]
      %v508 = vsel %vm491, 0, %v507
      %509 = vst [vmem:[#allocation2 + $0x2c] sm:$0x1] %v508
      %v510 = vld [vmem:[#allocation2 + $0x34] sm:$0x1]
      %v511 = vsel %vm491, 0, %v510
      %512 = vst [vmem:[#allocation2 + $0x34] sm:$0x1] %v511
      %v513 = vld [vmem:[#allocation2 + $0x3c] sm:$0x1]
      %v514 = vsel %vm491, 0, %v513
      %515 = vst [vmem:[#allocation2 + $0x3c] sm:$0x1] %v514
      %v516 = vld [vmem:[#allocation2 + $0x44] sm:$0x1]
      %v517 = vsel %vm491, 0, %v516
      %518 = vst [vmem:[#allocation2 + $0x44] sm:$0x1] %v517
      %v519 = vld [vmem:[#allocation2 + $0x4c] sm:$0x1]
      %v520 = vsel %vm491, 0, %v519
      %521 = vst [vmem:[#allocation2 + $0x4c] sm:$0x1] %v520
      loop: start=0, step=1, limit=4
      $region73: #{fcn_mask_head_forward.1} parent=71 // loop_pre_header
        _
      $region74: #{fcn_mask_head_forward.1} parent=71 // loop_header
        %s523 = sphi 0, %s527
        %p524 = scmp.ge.s32.totalorder %s523, 4
      $region75: #{fcn_mask_head_forward.1} parent=71 // loop_header_branch
        %526 = sbr.rel (%p524) target = $region79
      $region76: #{fcn_mask_head_forward.1} parent=71 // loop_body
        %s528 = smul.u32 %s523, 8
        %s529 = smul.addr %s528, 4
        %s530 = scalar_lea.vmem %s440, %s529
        %v531 = vld [vmem:[%s530] sm:$0xf]
        %v532 = vld [vmem:[%s530 + $0x4] sm:$0xf]
        %v533 = vld [vmem:[%s530 + $0x8] sm:$0xf]
        %v534 = vld [vmem:[%s530 + $0xc] sm:$0xf]
        %v535 = vld [vmem:[%s530 + $0x10] sm:$0xf]
        %v536 = vld [vmem:[%s530 + $0x14] sm:$0xf]
        %v537 = vld [vmem:[%s530 + $0x18] sm:$0xf]
        %v538 = vld [vmem:[%s530 + $0x1c] sm:$0xf]
        %v540 = vshrl.u32 %v531, 16
        %v542 = vrot.slane %v540, 7
        %v543 = vshll.u32 %v531, 16
        %v545 = vor.u32 %v542, %v543
        %v546 = vrot.slane %v542, 4
        %v548 = vshrl.u32 %v532, 16
        %v550 = vrot.slane %v548, 7
        %v551 = vshll.u32 %v532, 16
        %v553 = vor.u32 %v550, %v551
        %v554 = vrot.slane %v550, 4
        %v556 = vshrl.u32 %v533, 16
        %v558 = vrot.slane %v556, 7
        %v559 = vshll.u32 %v533, 16
        %v561 = vor.u32 %v558, %v559
        %v562 = vrot.slane %v558, 4
        %v564 = vshrl.u32 %v534, 16
        %v566 = vrot.slane %v564, 7
        %v567 = vshll.u32 %v534, 16
        %v569 = vor.u32 %v566, %v567
        %v570 = vrot.slane %v566, 4
        %v572 = vshrl.u32 %v535, 16
        %v574 = vrot.slane %v572, 7
        %v575 = vshll.u32 %v535, 16
        %v577 = vor.u32 %v574, %v575
        %v578 = vrot.slane %v574, 4
        %v580 = vshrl.u32 %v536, 16
        %v582 = vrot.slane %v580, 7
        %v583 = vshll.u32 %v536, 16
        %v585 = vor.u32 %v582, %v583
        %v586 = vrot.slane %v582, 4
        %v588 = vshrl.u32 %v537, 16
        %v590 = vrot.slane %v588, 7
        %v591 = vshll.u32 %v537, 16
        %v593 = vor.u32 %v590, %v591
        %v594 = vrot.slane %v590, 4
        %v596 = vshrl.u32 %v538, 16
        %v598 = vrot.slane %v596, 7
        %v599 = vshll.u32 %v538, 16
        %v601 = vor.u32 %v598, %v599
        %v602 = vrot.slane %v598, 4
        %s619 = scalar_lea.vmem [#allocation2], 8
        %vm620 = vcmask 257024
        %vm621 = vmand %vm620, %vm490
        %v622 = vld [vmem:[%s619] sm:$0xf]
        %v623 = vsel %vm621, %v545, %v622
        %624 = vst [vmem:[%s619] sm:$0xf] %v623
        %v625 = vld [vmem:[%s619 + $0x4] sm:$0x1]
        %v626 = vsel %vm459, %v546, %v625
        %627 = vst [vmem:[%s619 + $0x4] sm:$0x1] %v626
        %v628 = vld [vmem:[%s619 + $0x8] sm:$0xf]
        %v629 = vsel %vm621, %v553, %v628
        %630 = vst [vmem:[%s619 + $0x8] sm:$0xf] %v629
        %v631 = vld [vmem:[%s619 + $0xc] sm:$0x1]
        %v632 = vsel %vm459, %v554, %v631
        %633 = vst [vmem:[%s619 + $0xc] sm:$0x1] %v632
        %v634 = vld [vmem:[%s619 + $0x10] sm:$0xf]
        %v635 = vsel %vm621, %v561, %v634
        %636 = vst [vmem:[%s619 + $0x10] sm:$0xf] %v635
        %v637 = vld [vmem:[%s619 + $0x14] sm:$0x1]
        %v638 = vsel %vm459, %v562, %v637
        %639 = vst [vmem:[%s619 + $0x14] sm:$0x1] %v638
        %v640 = vld [vmem:[%s619 + $0x18] sm:$0xf]
        %v641 = vsel %vm621, %v569, %v640
        %642 = vst [vmem:[%s619 + $0x18] sm:$0xf] %v641
        %v643 = vld [vmem:[%s619 + $0x1c] sm:$0x1]
        %v644 = vsel %vm459, %v570, %v643
        %645 = vst [vmem:[%s619 + $0x1c] sm:$0x1] %v644
        %v646 = vld [vmem:[%s619 + $0x20] sm:$0xf]
        %v647 = vsel %vm621, %v577, %v646
        %648 = vst [vmem:[%s619 + $0x20] sm:$0xf] %v647
        %v649 = vld [vmem:[%s619 + $0x24] sm:$0x1]
        %v650 = vsel %vm459, %v578, %v649
        %651 = vst [vmem:[%s619 + $0x24] sm:$0x1] %v650
        %v652 = vld [vmem:[%s619 + $0x28] sm:$0xf]
        %v653 = vsel %vm621, %v585, %v652
        %654 = vst [vmem:[%s619 + $0x28] sm:$0xf] %v653
        %v655 = vld [vmem:[%s619 + $0x2c] sm:$0x1]
        %v656 = vsel %vm459, %v586, %v655
        %657 = vst [vmem:[%s619 + $0x2c] sm:$0x1] %v656
        %v658 = vld [vmem:[%s619 + $0x30] sm:$0xf]
        %v659 = vsel %vm621, %v593, %v658
        %660 = vst [vmem:[%s619 + $0x30] sm:$0xf] %v659
        %v661 = vld [vmem:[%s619 + $0x34] sm:$0x1]
        %v662 = vsel %vm459, %v594, %v661
        %663 = vst [vmem:[%s619 + $0x34] sm:$0x1] %v662
        %v664 = vld [vmem:[%s619 + $0x38] sm:$0xf]
        %v665 = vsel %vm621, %v601, %v664
        %666 = vst [vmem:[%s619 + $0x38] sm:$0xf] %v665
        %v667 = vld [vmem:[%s619 + $0x3c] sm:$0x1]
        %v668 = vsel %vm459, %v602, %v667
        %669 = vst [vmem:[%s619 + $0x3c] sm:$0x1] %v668
        %v670 = vld [vmem:[#allocation2] sm:$0xf]
        %v671 = vld [vmem:[#allocation2 + $0x8] sm:$0xf]
        %v672 = vld [vmem:[#allocation2 + $0x10] sm:$0xf]
        %v673 = vld [vmem:[#allocation2 + $0x18] sm:$0xf]
        %v674 = vld [vmem:[#allocation2 + $0x20] sm:$0xf]
        %v675 = vld [vmem:[#allocation2 + $0x28] sm:$0xf]
        %v676 = vld [vmem:[#allocation2 + $0x30] sm:$0xf]
        %v677 = vld [vmem:[#allocation2 + $0x38] sm:$0xf]
        %v686 = vunpack.c.l.b16 %v670
        %v687 = vunpack.c.l.b16 %v671
        %v688 = vunpack.c.l.b16 %v672
        %v689 = vunpack.c.l.b16 %v673
        %v690 = vunpack.c.l.b16 %v674
        %v691 = vunpack.c.l.b16 %v675
        %v692 = vunpack.c.l.b16 %v676
        %v693 = vunpack.c.l.b16 %v677
        %v694 = vpack.c.b16 %v687, %v686
        %v695 = vpack.c.b16 %v689, %v688
        %v696 = vpack.c.b16 %v691, %v690
        %v697 = vpack.c.b16 %v693, %v692
        %vm702 = vcmask 261120
        %703 = vst.msk [vmem:[#allocation3] sm:$0xff] %vm702, %v694
        %704 = vst.msk [vmem:[#allocation3 + $0x18] sm:$0xff] %vm702, %v695
        %705 = vst.msk [vmem:[#allocation3 + $0x30] sm:$0xff] %vm702, %v696
        %706 = vst.msk [vmem:[#allocation3 + $0x48] sm:$0xff] %vm702, %v697
        %v707 = vld [vmem:[#allocation2] sm:$0xf]
        %v708 = vld [vmem:[#allocation2 + $0x4] sm:$0x1]
        %v709 = vld [vmem:[#allocation2 + $0x8] sm:$0xf]
        %v710 = vld [vmem:[#allocation2 + $0xc] sm:$0x1]
        %v711 = vld [vmem:[#allocation2 + $0x10] sm:$0xf]
        %v712 = vld [vmem:[#allocation2 + $0x14] sm:$0x1]
        %v713 = vld [vmem:[#allocation2 + $0x18] sm:$0xf]
        %v714 = vld [vmem:[#allocation2 + $0x1c] sm:$0x1]
        %v715 = vld [vmem:[#allocation2 + $0x20] sm:$0xf]
        %v716 = vld [vmem:[#allocation2 + $0x24] sm:$0x1]
        %v717 = vld [vmem:[#allocation2 + $0x28] sm:$0xf]
        %v718 = vld [vmem:[#allocation2 + $0x2c] sm:$0x1]
        %v719 = vld [vmem:[#allocation2 + $0x30] sm:$0xf]
        %v720 = vld [vmem:[#allocation2 + $0x34] sm:$0x1]
        %v721 = vld [vmem:[#allocation2 + $0x38] sm:$0xf]
        %v722 = vld [vmem:[#allocation2 + $0x3c] sm:$0x1]
        %vm723 = vsmask.f32 3328
        %vm724 = vsmask.f32 7440
        %vm725 = vmor %vm723, %vm724
        %v727 = vshrl.u32 %v707, 16
        %v729 = vrot.slane %v727, 4
        %v730 = vshll.u32 %v707, 16
        %v732 = vrot.slane %v730, 5
        %v733 = vor.u32 %v729, %v732
        %v734 = vrot.slane %v733, 4
        %v736 = vshll.u32 %v708, 16
        %v738 = vrot.slane %v736, 5
        %v739 = vsel %vm725, %v734, %v738
        %v741 = vshrl.u32 %v709, 16
        %v743 = vrot.slane %v741, 4
        %v744 = vshll.u32 %v709, 16
        %v746 = vrot.slane %v744, 5
        %v747 = vor.u32 %v743, %v746
        %v748 = vrot.slane %v747, 4
        %v750 = vshll.u32 %v710, 16
        %v752 = vrot.slane %v750, 5
        %v753 = vsel %vm725, %v748, %v752
        %v755 = vshrl.u32 %v711, 16
        %v757 = vrot.slane %v755, 4
        %v758 = vshll.u32 %v711, 16
        %v760 = vrot.slane %v758, 5
        %v761 = vor.u32 %v757, %v760
        %v762 = vrot.slane %v761, 4
        %v764 = vshll.u32 %v712, 16
        %v766 = vrot.slane %v764, 5
        %v767 = vsel %vm725, %v762, %v766
        %v769 = vshrl.u32 %v713, 16
        %v771 = vrot.slane %v769, 4
        %v772 = vshll.u32 %v713, 16
        %v774 = vrot.slane %v772, 5
        %v775 = vor.u32 %v771, %v774
        %v776 = vrot.slane %v775, 4
        %v778 = vshll.u32 %v714, 16
        %v780 = vrot.slane %v778, 5
        %v781 = vsel %vm725, %v776, %v780
        %v783 = vshrl.u32 %v715, 16
        %v785 = vrot.slane %v783, 4
        %v786 = vshll.u32 %v715, 16
        %v788 = vrot.slane %v786, 5
        %v789 = vor.u32 %v785, %v788
        %v790 = vrot.slane %v789, 4
        %v792 = vshll.u32 %v716, 16
        %v794 = vrot.slane %v792, 5
        %v795 = vsel %vm725, %v790, %v794
        %v797 = vshrl.u32 %v717, 16
        %v799 = vrot.slane %v797, 4
        %v800 = vshll.u32 %v717, 16
        %v802 = vrot.slane %v800, 5
        %v803 = vor.u32 %v799, %v802
        %v804 = vrot.slane %v803, 4
        %v806 = vshll.u32 %v718, 16
        %v808 = vrot.slane %v806, 5
        %v809 = vsel %vm725, %v804, %v808
        %v811 = vshrl.u32 %v719, 16
        %v813 = vrot.slane %v811, 4
        %v814 = vshll.u32 %v719, 16
        %v816 = vrot.slane %v814, 5
        %v817 = vor.u32 %v813, %v816
        %v818 = vrot.slane %v817, 4
        %v820 = vshll.u32 %v720, 16
        %v822 = vrot.slane %v820, 5
        %v823 = vsel %vm725, %v818, %v822
        %v825 = vshrl.u32 %v721, 16
        %v827 = vrot.slane %v825, 4
        %v828 = vshll.u32 %v721, 16
        %v830 = vrot.slane %v828, 5
        %v831 = vor.u32 %v827, %v830
        %v832 = vrot.slane %v831, 4
        %v834 = vshll.u32 %v722, 16
        %v836 = vrot.slane %v834, 5
        %v837 = vsel %vm725, %v832, %v836
        %v838 = vunpack.c.l.b16 %v739
        %v839 = vunpack.c.l.b16 %v753
        %v840 = vunpack.c.l.b16 %v767
        %v841 = vunpack.c.l.b16 %v781
        %v842 = vunpack.c.l.b16 %v795
        %v843 = vunpack.c.l.b16 %v809
        %v844 = vunpack.c.l.b16 %v823
        %v845 = vunpack.c.l.b16 %v837
        %v846 = vpack.c.b16 %v839, %v838
        %v847 = vpack.c.b16 %v841, %v840
        %v848 = vpack.c.b16 %v843, %v842
        %v849 = vpack.c.b16 %v845, %v844
        %850 = vrot.lane.b32.xlu0 %v846, 32
        %v851 = vpop.permute.xlu0 %850
        %852 = vrot.lane.b32.xlu0 %v847, 32
        %v853 = vpop.permute.xlu0 %852
        %854 = vrot.lane.b32.xlu0 %v848, 32
        %v855 = vpop.permute.xlu0 %854
        %856 = vrot.lane.b32.xlu0 %v849, 32
        %v857 = vpop.permute.xlu0 %856
        %vm862 = vcmask 523520
        %863 = vst.msk [vmem:[#allocation3] sm:$0xff] %vm862, %v851
        %864 = vst.msk [vmem:[#allocation3 + $0x18] sm:$0xff] %vm862, %v853
        %865 = vst.msk [vmem:[#allocation3 + $0x30] sm:$0xff] %vm862, %v855
        %866 = vst.msk [vmem:[#allocation3 + $0x48] sm:$0xff] %vm862, %v857
        %v867 = vld [vmem:[#allocation2] sm:$0xe]
        %v868 = vld [vmem:[#allocation2 + $0x4] sm:$0x1]
        %v869 = vld [vmem:[#allocation2 + $0x8] sm:$0xe]
        %v870 = vld [vmem:[#allocation2 + $0xc] sm:$0x1]
        %v871 = vld [vmem:[#allocation2 + $0x10] sm:$0xe]
        %v872 = vld [vmem:[#allocation2 + $0x14] sm:$0x1]
        %v873 = vld [vmem:[#allocation2 + $0x18] sm:$0xe]
        %v874 = vld [vmem:[#allocation2 + $0x1c] sm:$0x1]
        %v875 = vld [vmem:[#allocation2 + $0x20] sm:$0xe]
        %v876 = vld [vmem:[#allocation2 + $0x24] sm:$0x1]
        %v877 = vld [vmem:[#allocation2 + $0x28] sm:$0xe]
        %v878 = vld [vmem:[#allocation2 + $0x2c] sm:$0x1]
        %v879 = vld [vmem:[#allocation2 + $0x30] sm:$0xe]
        %v880 = vld [vmem:[#allocation2 + $0x34] sm:$0x1]
        %v881 = vld [vmem:[#allocation2 + $0x38] sm:$0xe]
        %v882 = vld [vmem:[#allocation2 + $0x3c] sm:$0x1]
        %vm899 = vcmask 1042432
        %vm900 = vcmask 1046532
        %vm901 = vmor %vm899, %vm900
        %v902 = vrot.slane %v867, 5
        %v903 = vrot.slane %v902, 4
        %v904 = vrot.slane %v868, 5
        %v905 = vsel %vm901, %v903, %v904
        %v906 = vrot.slane %v869, 5
        %v907 = vrot.slane %v906, 4
        %v908 = vrot.slane %v870, 5
        %v909 = vsel %vm901, %v907, %v908
        %v910 = vrot.slane %v871, 5
        %v911 = vrot.slane %v910, 4
        %v912 = vrot.slane %v872, 5
        %v913 = vsel %vm901, %v911, %v912
        %v914 = vrot.slane %v873, 5
        %v915 = vrot.slane %v914, 4
        %v916 = vrot.slane %v874, 5
        %v917 = vsel %vm901, %v915, %v916
        %v918 = vrot.slane %v875, 5
        %v919 = vrot.slane %v918, 4
        %v920 = vrot.slane %v876, 5
        %v921 = vsel %vm901, %v919, %v920
        %v922 = vrot.slane %v877, 5
        %v923 = vrot.slane %v922, 4
        %v924 = vrot.slane %v878, 5
        %v925 = vsel %vm901, %v923, %v924
        %v926 = vrot.slane %v879, 5
        %v927 = vrot.slane %v926, 4
        %v928 = vrot.slane %v880, 5
        %v929 = vsel %vm901, %v927, %v928
        %v930 = vrot.slane %v881, 5
        %v931 = vrot.slane %v930, 4
        %v932 = vrot.slane %v882, 5
        %v933 = vsel %vm901, %v931, %v932
        %v934 = vunpack.c.l.b16 %v905
        %v935 = vunpack.c.l.b16 %v909
        %v936 = vunpack.c.l.b16 %v913
        %v937 = vunpack.c.l.b16 %v917
        %v938 = vunpack.c.l.b16 %v921
        %v939 = vunpack.c.l.b16 %v925
        %v940 = vunpack.c.l.b16 %v929
        %v941 = vunpack.c.l.b16 %v933
        %v942 = vpack.c.b16 %v935, %v934
        %v943 = vpack.c.b16 %v937, %v936
        %v944 = vpack.c.b16 %v939, %v938
        %v945 = vpack.c.b16 %v941, %v940
        %946 = vrot.lane.b32.xlu0 %v942, 64
        %v947 = vpop.permute.xlu0 %946
        %948 = vrot.lane.b32.xlu0 %v943, 64
        %v949 = vpop.permute.xlu0 %948
        %950 = vrot.lane.b32.xlu0 %v944, 64
        %v951 = vpop.permute.xlu0 %950
        %952 = vrot.lane.b32.xlu0 %v945, 64
        %v953 = vpop.permute.xlu0 %952
        %vm958 = vcmask 785920
        %959 = vst.msk [vmem:[#allocation3] sm:$0xff] %vm958, %v947
        %960 = vst.msk [vmem:[#allocation3 + $0x18] sm:$0xff] %vm958, %v949
        %961 = vst.msk [vmem:[#allocation3 + $0x30] sm:$0xff] %vm958, %v951
        %962 = vst.msk [vmem:[#allocation3 + $0x48] sm:$0xff] %vm958, %v953
        %v963 = vld [vmem:[%s619] sm:$0xf]
        %v964 = vld [vmem:[%s619 + $0x8] sm:$0xf]
        %v965 = vld [vmem:[%s619 + $0x10] sm:$0xf]
        %v966 = vld [vmem:[%s619 + $0x18] sm:$0xf]
        %v967 = vld [vmem:[%s619 + $0x20] sm:$0xf]
        %v968 = vld [vmem:[%s619 + $0x28] sm:$0xf]
        %v969 = vld [vmem:[%s619 + $0x30] sm:$0xf]
        %v970 = vld [vmem:[%s619 + $0x38] sm:$0xf]
        %v979 = vunpack.c.l.b16 %v963
        %v980 = vunpack.c.l.b16 %v964
        %v981 = vunpack.c.l.b16 %v965
        %v982 = vunpack.c.l.b16 %v966
        %v983 = vunpack.c.l.b16 %v967
        %v984 = vunpack.c.l.b16 %v968
        %v985 = vunpack.c.l.b16 %v969
        %v986 = vunpack.c.l.b16 %v970
        %v987 = vpack.c.b16 %v980, %v979
        %v988 = vpack.c.b16 %v982, %v981
        %v989 = vpack.c.b16 %v984, %v983
        %v990 = vpack.c.b16 %v986, %v985
        %991 = vrot.lane.b32.xlu0 %v987, 96
        %v992 = vpop.permute.xlu0 %991
        %993 = vrot.lane.b32.xlu0 %v988, 96
        %v994 = vpop.permute.xlu0 %993
        %995 = vrot.lane.b32.xlu0 %v989, 96
        %v996 = vpop.permute.xlu0 %995
        %997 = vrot.lane.b32.xlu0 %v990, 96
        %v998 = vpop.permute.xlu0 %997
        %vm1003 = vcmask 1048320
        %1004 = vst.msk [vmem:[#allocation3] sm:$0xff] %vm1003, %v992
        %1005 = vst.msk [vmem:[#allocation3 + $0x18] sm:$0xff] %vm1003, %v994
        %1006 = vst.msk [vmem:[#allocation3 + $0x30] sm:$0xff] %vm1003, %v996
        %1007 = vst.msk [vmem:[#allocation3 + $0x48] sm:$0xff] %vm1003, %v998
        %v1008 = vld [vmem:[%s619] sm:$0xf]
        %v1009 = vld [vmem:[%s619 + $0x4] sm:$0x1]
        %v1010 = vld [vmem:[%s619 + $0x8] sm:$0xf]
        %v1011 = vld [vmem:[%s619 + $0xc] sm:$0x1]
        %v1012 = vld [vmem:[%s619 + $0x10] sm:$0xf]
        %v1013 = vld [vmem:[%s619 + $0x14] sm:$0x1]
        %v1014 = vld [vmem:[%s619 + $0x18] sm:$0xf]
        %v1015 = vld [vmem:[%s619 + $0x1c] sm:$0x1]
        %v1016 = vld [vmem:[%s619 + $0x20] sm:$0xf]
        %v1017 = vld [vmem:[%s619 + $0x24] sm:$0x1]
        %v1018 = vld [vmem:[%s619 + $0x28] sm:$0xf]
        %v1019 = vld [vmem:[%s619 + $0x2c] sm:$0x1]
        %v1020 = vld [vmem:[%s619 + $0x30] sm:$0xf]
        %v1021 = vld [vmem:[%s619 + $0x34] sm:$0x1]
        %v1022 = vld [vmem:[%s619 + $0x38] sm:$0xf]
        %v1023 = vld [vmem:[%s619 + $0x3c] sm:$0x1]
        %v1025 = vshrl.u32 %v1008, 16
        %v1027 = vrot.slane %v1025, 4
        %v1028 = vshll.u32 %v1008, 16
        %v1030 = vrot.slane %v1028, 5
        %v1031 = vor.u32 %v1027, %v1030
        %v1032 = vrot.slane %v1031, 4
        %v1034 = vshll.u32 %v1009, 16
        %v1036 = vrot.slane %v1034, 5
        %v1037 = vsel %vm725, %v1032, %v1036
        %v1039 = vshrl.u32 %v1010, 16
        %v1041 = vrot.slane %v1039, 4
        %v1042 = vshll.u32 %v1010, 16
        %v1044 = vrot.slane %v1042, 5
        %v1045 = vor.u32 %v1041, %v1044
        %v1046 = vrot.slane %v1045, 4
        %v1048 = vshll.u32 %v1011, 16
        %v1050 = vrot.slane %v1048, 5
        %v1051 = vsel %vm725, %v1046, %v1050
        %v1053 = vshrl.u32 %v1012, 16
        %v1055 = vrot.slane %v1053, 4
        %v1056 = vshll.u32 %v1012, 16
        %v1058 = vrot.slane %v1056, 5
        %v1059 = vor.u32 %v1055, %v1058
        %v1060 = vrot.slane %v1059, 4
        %v1062 = vshll.u32 %v1013, 16
        %v1064 = vrot.slane %v1062, 5
        %v1065 = vsel %vm725, %v1060, %v1064
        %v1067 = vshrl.u32 %v1014, 16
        %v1069 = vrot.slane %v1067, 4
        %v1070 = vshll.u32 %v1014, 16
        %v1072 = vrot.slane %v1070, 5
        %v1073 = vor.u32 %v1069, %v1072
        %v1074 = vrot.slane %v1073, 4
        %v1076 = vshll.u32 %v1015, 16
        %v1078 = vrot.slane %v1076, 5
        %v1079 = vsel %vm725, %v1074, %v1078
        %v1081 = vshrl.u32 %v1016, 16
        %v1083 = vrot.slane %v1081, 4
        %v1084 = vshll.u32 %v1016, 16
        %v1086 = vrot.slane %v1084, 5
        %v1087 = vor.u32 %v1083, %v1086
        %v1088 = vrot.slane %v1087, 4
        %v1090 = vshll.u32 %v1017, 16
        %v1092 = vrot.slane %v1090, 5
        %v1093 = vsel %vm725, %v1088, %v1092
        %v1095 = vshrl.u32 %v1018, 16
        %v1097 = vrot.slane %v1095, 4
        %v1098 = vshll.u32 %v1018, 16
        %v1100 = vrot.slane %v1098, 5
        %v1101 = vor.u32 %v1097, %v1100
        %v1102 = vrot.slane %v1101, 4
        %v1104 = vshll.u32 %v1019, 16
        %v1106 = vrot.slane %v1104, 5
        %v1107 = vsel %vm725, %v1102, %v1106
        %v1109 = vshrl.u32 %v1020, 16
        %v1111 = vrot.slane %v1109, 4
        %v1112 = vshll.u32 %v1020, 16
        %v1114 = vrot.slane %v1112, 5
        %v1115 = vor.u32 %v1111, %v1114
        %v1116 = vrot.slane %v1115, 4
        %v1118 = vshll.u32 %v1021, 16
        %v1120 = vrot.slane %v1118, 5
        %v1121 = vsel %vm725, %v1116, %v1120
        %v1123 = vshrl.u32 %v1022, 16
        %v1125 = vrot.slane %v1123, 4
        %v1126 = vshll.u32 %v1022, 16
        %v1128 = vrot.slane %v1126, 5
        %v1129 = vor.u32 %v1125, %v1128
        %v1130 = vrot.slane %v1129, 4
        %v1132 = vshll.u32 %v1023, 16
        %v1134 = vrot.slane %v1132, 5
        %v1135 = vsel %vm725, %v1130, %v1134
        %v1136 = vunpack.c.l.b16 %v1037
        %v1137 = vunpack.c.l.b16 %v1051
        %v1138 = vunpack.c.l.b16 %v1065
        %v1139 = vunpack.c.l.b16 %v1079
        %v1140 = vunpack.c.l.b16 %v1093
        %v1141 = vunpack.c.l.b16 %v1107
        %v1142 = vunpack.c.l.b16 %v1121
        %v1143 = vunpack.c.l.b16 %v1135
        %v1144 = vpack.c.b16 %v1137, %v1136
        %v1145 = vpack.c.b16 %v1139, %v1138
        %v1146 = vpack.c.b16 %v1141, %v1140
        %v1147 = vpack.c.b16 %v1143, %v1142
        %1152 = vst.msk [vmem:[#allocation3 + $0x8] sm:$0xff] %vm702, %v1144
        %1153 = vst.msk [vmem:[#allocation3 + $0x20] sm:$0xff] %vm702, %v1145
        %1154 = vst.msk [vmem:[#allocation3 + $0x38] sm:$0xff] %vm702, %v1146
        %1155 = vst.msk [vmem:[#allocation3 + $0x50] sm:$0xff] %vm702, %v1147
        %v1156 = vld [vmem:[%s619] sm:$0xe]
        %v1157 = vld [vmem:[%s619 + $0x4] sm:$0x1]
        %v1158 = vld [vmem:[%s619 + $0x8] sm:$0xe]
        %v1159 = vld [vmem:[%s619 + $0xc] sm:$0x1]
        %v1160 = vld [vmem:[%s619 + $0x10] sm:$0xe]
        %v1161 = vld [vmem:[%s619 + $0x14] sm:$0x1]
        %v1162 = vld [vmem:[%s619 + $0x18] sm:$0xe]
        %v1163 = vld [vmem:[%s619 + $0x1c] sm:$0x1]
        %v1164 = vld [vmem:[%s619 + $0x20] sm:$0xe]
        %v1165 = vld [vmem:[%s619 + $0x24] sm:$0x1]
        %v1166 = vld [vmem:[%s619 + $0x28] sm:$0xe]
        %v1167 = vld [vmem:[%s619 + $0x2c] sm:$0x1]
        %v1168 = vld [vmem:[%s619 + $0x30] sm:$0xe]
        %v1169 = vld [vmem:[%s619 + $0x34] sm:$0x1]
        %v1170 = vld [vmem:[%s619 + $0x38] sm:$0xe]
        %v1171 = vld [vmem:[%s619 + $0x3c] sm:$0x1]
        %v1188 = vrot.slane %v1156, 5
        %v1189 = vrot.slane %v1188, 4
        %v1190 = vrot.slane %v1157, 5
        %v1191 = vsel %vm901, %v1189, %v1190
        %v1192 = vrot.slane %v1158, 5
        %v1193 = vrot.slane %v1192, 4
        %v1194 = vrot.slane %v1159, 5
        %v1195 = vsel %vm901, %v1193, %v1194
        %v1196 = vrot.slane %v1160, 5
        %v1197 = vrot.slane %v1196, 4
        %v1198 = vrot.slane %v1161, 5
        %v1199 = vsel %vm901, %v1197, %v1198
        %v1200 = vrot.slane %v1162, 5
        %v1201 = vrot.slane %v1200, 4
        %v1202 = vrot.slane %v1163, 5
        %v1203 = vsel %vm901, %v1201, %v1202
        %v1204 = vrot.slane %v1164, 5
        %v1205 = vrot.slane %v1204, 4
        %v1206 = vrot.slane %v1165, 5
        %v1207 = vsel %vm901, %v1205, %v1206
        %v1208 = vrot.slane %v1166, 5
        %v1209 = vrot.slane %v1208, 4
        %v1210 = vrot.slane %v1167, 5
        %v1211 = vsel %vm901, %v1209, %v1210
        %v1212 = vrot.slane %v1168, 5
        %v1213 = vrot.slane %v1212, 4
        %v1214 = vrot.slane %v1169, 5
        %v1215 = vsel %vm901, %v1213, %v1214
        %v1216 = vrot.slane %v1170, 5
        %v1217 = vrot.slane %v1216, 4
        %v1218 = vrot.slane %v1171, 5
        %v1219 = vsel %vm901, %v1217, %v1218
        %v1220 = vunpack.c.l.b16 %v1191
        %v1221 = vunpack.c.l.b16 %v1195
        %v1222 = vunpack.c.l.b16 %v1199
        %v1223 = vunpack.c.l.b16 %v1203
        %v1224 = vunpack.c.l.b16 %v1207
        %v1225 = vunpack.c.l.b16 %v1211
        %v1226 = vunpack.c.l.b16 %v1215
        %v1227 = vunpack.c.l.b16 %v1219
        %v1228 = vpack.c.b16 %v1221, %v1220
        %v1229 = vpack.c.b16 %v1223, %v1222
        %v1230 = vpack.c.b16 %v1225, %v1224
        %v1231 = vpack.c.b16 %v1227, %v1226
        %1232 = vrot.lane.b32.xlu0 %v1228, 32
        %v1233 = vpop.permute.xlu0 %1232
        %1234 = vrot.lane.b32.xlu0 %v1229, 32
        %v1235 = vpop.permute.xlu0 %1234
        %1236 = vrot.lane.b32.xlu0 %v1230, 32
        %v1237 = vpop.permute.xlu0 %1236
        %1238 = vrot.lane.b32.xlu0 %v1231, 32
        %v1239 = vpop.permute.xlu0 %1238
        %1244 = vst.msk [vmem:[#allocation3 + $0x8] sm:$0xff] %vm862, %v1233
        %1245 = vst.msk [vmem:[#allocation3 + $0x20] sm:$0xff] %vm862, %v1235
        %1246 = vst.msk [vmem:[#allocation3 + $0x38] sm:$0xff] %vm862, %v1237
        %1247 = vst.msk [vmem:[#allocation3 + $0x50] sm:$0xff] %vm862, %v1239
        %s1248 = scalar_lea.vmem [#allocation2], 16
        %v1249 = vld [vmem:[%s1248] sm:$0xf]
        %v1250 = vld [vmem:[%s1248 + $0x8] sm:$0xf]
        %v1251 = vld [vmem:[%s1248 + $0x10] sm:$0xf]
        %v1252 = vld [vmem:[%s1248 + $0x18] sm:$0xf]
        %v1253 = vld [vmem:[%s1248 + $0x20] sm:$0xf]
        %v1254 = vld [vmem:[%s1248 + $0x28] sm:$0xf]
        %v1255 = vld [vmem:[%s1248 + $0x30] sm:$0xf]
        %v1256 = vld [vmem:[%s1248 + $0x38] sm:$0xf]
        %v1265 = vunpack.c.l.b16 %v1249
        %v1266 = vunpack.c.l.b16 %v1250
        %v1267 = vunpack.c.l.b16 %v1251
        %v1268 = vunpack.c.l.b16 %v1252
        %v1269 = vunpack.c.l.b16 %v1253
        %v1270 = vunpack.c.l.b16 %v1254
        %v1271 = vunpack.c.l.b16 %v1255
        %v1272 = vunpack.c.l.b16 %v1256
        %v1273 = vpack.c.b16 %v1266, %v1265
        %v1274 = vpack.c.b16 %v1268, %v1267
        %v1275 = vpack.c.b16 %v1270, %v1269
        %v1276 = vpack.c.b16 %v1272, %v1271
        %1277 = vrot.lane.b32.xlu0 %v1273, 64
        %v1278 = vpop.permute.xlu0 %1277
        %1279 = vrot.lane.b32.xlu0 %v1274, 64
        %v1280 = vpop.permute.xlu0 %1279
        %1281 = vrot.lane.b32.xlu0 %v1275, 64
        %v1282 = vpop.permute.xlu0 %1281
        %1283 = vrot.lane.b32.xlu0 %v1276, 64
        %v1284 = vpop.permute.xlu0 %1283
        %1289 = vst.msk [vmem:[#allocation3 + $0x8] sm:$0xff] %vm958, %v1278
        %1290 = vst.msk [vmem:[#allocation3 + $0x20] sm:$0xff] %vm958, %v1280
        %1291 = vst.msk [vmem:[#allocation3 + $0x38] sm:$0xff] %vm958, %v1282
        %1292 = vst.msk [vmem:[#allocation3 + $0x50] sm:$0xff] %vm958, %v1284
        %v1293 = vld [vmem:[%s1248] sm:$0xf]
        %v1294 = vld [vmem:[%s1248 + $0x4] sm:$0x1]
        %v1295 = vld [vmem:[%s1248 + $0x8] sm:$0xf]
        %v1296 = vld [vmem:[%s1248 + $0xc] sm:$0x1]
        %v1297 = vld [vmem:[%s1248 + $0x10] sm:$0xf]
        %v1298 = vld [vmem:[%s1248 + $0x14] sm:$0x1]
        %v1299 = vld [vmem:[%s1248 + $0x18] sm:$0xf]
        %v1300 = vld [vmem:[%s1248 + $0x1c] sm:$0x1]
        %v1301 = vld [vmem:[%s1248 + $0x20] sm:$0xf]
        %v1302 = vld [vmem:[%s1248 + $0x24] sm:$0x1]
        %v1303 = vld [vmem:[%s1248 + $0x28] sm:$0xf]
        %v1304 = vld [vmem:[%s1248 + $0x2c] sm:$0x1]
        %v1305 = vld [vmem:[%s1248 + $0x30] sm:$0xf]
        %v1306 = vld [vmem:[%s1248 + $0x34] sm:$0x1]
        %v1307 = vld [vmem:[%s1248 + $0x38] sm:$0xf]
        %v1308 = vld [vmem:[%s1248 + $0x3c] sm:$0x1]
        %v1310 = vshrl.u32 %v1293, 16
        %v1312 = vrot.slane %v1310, 4
        %v1313 = vshll.u32 %v1293, 16
        %v1315 = vrot.slane %v1313, 5
        %v1316 = vor.u32 %v1312, %v1315
        %v1317 = vrot.slane %v1316, 4
        %v1319 = vshll.u32 %v1294, 16
        %v1321 = vrot.slane %v1319, 5
        %v1322 = vsel %vm725, %v1317, %v1321
        %v1324 = vshrl.u32 %v1295, 16
        %v1326 = vrot.slane %v1324, 4
        %v1327 = vshll.u32 %v1295, 16
        %v1329 = vrot.slane %v1327, 5
        %v1330 = vor.u32 %v1326, %v1329
        %v1331 = vrot.slane %v1330, 4
        %v1333 = vshll.u32 %v1296, 16
        %v1335 = vrot.slane %v1333, 5
        %v1336 = vsel %vm725, %v1331, %v1335
        %v1338 = vshrl.u32 %v1297, 16
        %v1340 = vrot.slane %v1338, 4
        %v1341 = vshll.u32 %v1297, 16
        %v1343 = vrot.slane %v1341, 5
        %v1344 = vor.u32 %v1340, %v1343
        %v1345 = vrot.slane %v1344, 4
        %v1347 = vshll.u32 %v1298, 16
        %v1349 = vrot.slane %v1347, 5
        %v1350 = vsel %vm725, %v1345, %v1349
        %v1352 = vshrl.u32 %v1299, 16
        %v1354 = vrot.slane %v1352, 4
        %v1355 = vshll.u32 %v1299, 16
        %v1357 = vrot.slane %v1355, 5
        %v1358 = vor.u32 %v1354, %v1357
        %v1359 = vrot.slane %v1358, 4
        %v1361 = vshll.u32 %v1300, 16
        %v1363 = vrot.slane %v1361, 5
        %v1364 = vsel %vm725, %v1359, %v1363
        %v1366 = vshrl.u32 %v1301, 16
        %v1368 = vrot.slane %v1366, 4
        %v1369 = vshll.u32 %v1301, 16
        %v1371 = vrot.slane %v1369, 5
        %v1372 = vor.u32 %v1368, %v1371
        %v1373 = vrot.slane %v1372, 4
        %v1375 = vshll.u32 %v1302, 16
        %v1377 = vrot.slane %v1375, 5
        %v1378 = vsel %vm725, %v1373, %v1377
        %v1380 = vshrl.u32 %v1303, 16
        %v1382 = vrot.slane %v1380, 4
        %v1383 = vshll.u32 %v1303, 16
        %v1385 = vrot.slane %v1383, 5
        %v1386 = vor.u32 %v1382, %v1385
        %v1387 = vrot.slane %v1386, 4
        %v1389 = vshll.u32 %v1304, 16
        %v1391 = vrot.slane %v1389, 5
        %v1392 = vsel %vm725, %v1387, %v1391
        %v1394 = vshrl.u32 %v1305, 16
        %v1396 = vrot.slane %v1394, 4
        %v1397 = vshll.u32 %v1305, 16
        %v1399 = vrot.slane %v1397, 5
        %v1400 = vor.u32 %v1396, %v1399
        %v1401 = vrot.slane %v1400, 4
        %v1403 = vshll.u32 %v1306, 16
        %v1405 = vrot.slane %v1403, 5
        %v1406 = vsel %vm725, %v1401, %v1405
        %v1408 = vshrl.u32 %v1307, 16
        %v1410 = vrot.slane %v1408, 4
        %v1411 = vshll.u32 %v1307, 16
        %v1413 = vrot.slane %v1411, 5
        %v1414 = vor.u32 %v1410, %v1413
        %v1415 = vrot.slane %v1414, 4
        %v1417 = vshll.u32 %v1308, 16
        %v1419 = vrot.slane %v1417, 5
        %v1420 = vsel %vm725, %v1415, %v1419
        %v1421 = vunpack.c.l.b16 %v1322
        %v1422 = vunpack.c.l.b16 %v1336
        %v1423 = vunpack.c.l.b16 %v1350
        %v1424 = vunpack.c.l.b16 %v1364
        %v1425 = vunpack.c.l.b16 %v1378
        %v1426 = vunpack.c.l.b16 %v1392
        %v1427 = vunpack.c.l.b16 %v1406
        %v1428 = vunpack.c.l.b16 %v1420
        %v1429 = vpack.c.b16 %v1422, %v1421
        %v1430 = vpack.c.b16 %v1424, %v1423
        %v1431 = vpack.c.b16 %v1426, %v1425
        %v1432 = vpack.c.b16 %v1428, %v1427
        %1433 = vrot.lane.b32.xlu0 %v1429, 96
        %v1434 = vpop.permute.xlu0 %1433
        %1435 = vrot.lane.b32.xlu0 %v1430, 96
        %v1436 = vpop.permute.xlu0 %1435
        %1437 = vrot.lane.b32.xlu0 %v1431, 96
        %v1438 = vpop.permute.xlu0 %1437
        %1439 = vrot.lane.b32.xlu0 %v1432, 96
        %v1440 = vpop.permute.xlu0 %1439
        %1445 = vst.msk [vmem:[#allocation3 + $0x8] sm:$0xff] %vm1003, %v1434
        %1446 = vst.msk [vmem:[#allocation3 + $0x20] sm:$0xff] %vm1003, %v1436
        %1447 = vst.msk [vmem:[#allocation3 + $0x38] sm:$0xff] %vm1003, %v1438
        %1448 = vst.msk [vmem:[#allocation3 + $0x50] sm:$0xff] %vm1003, %v1440
        %v1449 = vld [vmem:[%s1248] sm:$0xe]
        %v1450 = vld [vmem:[%s1248 + $0x4] sm:$0x1]
        %v1451 = vld [vmem:[%s1248 + $0x8] sm:$0xe]
        %v1452 = vld [vmem:[%s1248 + $0xc] sm:$0x1]
        %v1453 = vld [vmem:[%s1248 + $0x10] sm:$0xe]
        %v1454 = vld [vmem:[%s1248 + $0x14] sm:$0x1]
        %v1455 = vld [vmem:[%s1248 + $0x18] sm:$0xe]
        %v1456 = vld [vmem:[%s1248 + $0x1c] sm:$0x1]
        %v1457 = vld [vmem:[%s1248 + $0x20] sm:$0xe]
        %v1458 = vld [vmem:[%s1248 + $0x24] sm:$0x1]
        %v1459 = vld [vmem:[%s1248 + $0x28] sm:$0xe]
        %v1460 = vld [vmem:[%s1248 + $0x2c] sm:$0x1]
        %v1461 = vld [vmem:[%s1248 + $0x30] sm:$0xe]
        %v1462 = vld [vmem:[%s1248 + $0x34] sm:$0x1]
        %v1463 = vld [vmem:[%s1248 + $0x38] sm:$0xe]
        %v1464 = vld [vmem:[%s1248 + $0x3c] sm:$0x1]
        %v1481 = vrot.slane %v1449, 5
        %v1482 = vrot.slane %v1481, 4
        %v1483 = vrot.slane %v1450, 5
        %v1484 = vsel %vm901, %v1482, %v1483
        %v1485 = vrot.slane %v1451, 5
        %v1486 = vrot.slane %v1485, 4
        %v1487 = vrot.slane %v1452, 5
        %v1488 = vsel %vm901, %v1486, %v1487
        %v1489 = vrot.slane %v1453, 5
        %v1490 = vrot.slane %v1489, 4
        %v1491 = vrot.slane %v1454, 5
        %v1492 = vsel %vm901, %v1490, %v1491
        %v1493 = vrot.slane %v1455, 5
        %v1494 = vrot.slane %v1493, 4
        %v1495 = vrot.slane %v1456, 5
        %v1496 = vsel %vm901, %v1494, %v1495
        %v1497 = vrot.slane %v1457, 5
        %v1498 = vrot.slane %v1497, 4
        %v1499 = vrot.slane %v1458, 5
        %v1500 = vsel %vm901, %v1498, %v1499
        %v1501 = vrot.slane %v1459, 5
        %v1502 = vrot.slane %v1501, 4
        %v1503 = vrot.slane %v1460, 5
        %v1504 = vsel %vm901, %v1502, %v1503
        %v1505 = vrot.slane %v1461, 5
        %v1506 = vrot.slane %v1505, 4
        %v1507 = vrot.slane %v1462, 5
        %v1508 = vsel %vm901, %v1506, %v1507
        %v1509 = vrot.slane %v1463, 5
        %v1510 = vrot.slane %v1509, 4
        %v1511 = vrot.slane %v1464, 5
        %v1512 = vsel %vm901, %v1510, %v1511
        %v1513 = vunpack.c.l.b16 %v1484
        %v1514 = vunpack.c.l.b16 %v1488
        %v1515 = vunpack.c.l.b16 %v1492
        %v1516 = vunpack.c.l.b16 %v1496
        %v1517 = vunpack.c.l.b16 %v1500
        %v1518 = vunpack.c.l.b16 %v1504
        %v1519 = vunpack.c.l.b16 %v1508
        %v1520 = vunpack.c.l.b16 %v1512
        %v1521 = vpack.c.b16 %v1514, %v1513
        %v1522 = vpack.c.b16 %v1516, %v1515
        %v1523 = vpack.c.b16 %v1518, %v1517
        %v1524 = vpack.c.b16 %v1520, %v1519
        %1529 = vst.msk [vmem:[#allocation3 + $0x10] sm:$0xff] %vm702, %v1521
        %1530 = vst.msk [vmem:[#allocation3 + $0x28] sm:$0xff] %vm702, %v1522
        %1531 = vst.msk [vmem:[#allocation3 + $0x40] sm:$0xff] %vm702, %v1523
        %1532 = vst.msk [vmem:[#allocation3 + $0x58] sm:$0xff] %vm702, %v1524
        %v1533 = vld [vmem:[#allocation3] sm:$0xff]
        %v1534 = vld [vmem:[#allocation3 + $0x8] sm:$0xff]
        %v1535 = vld [vmem:[#allocation3 + $0x10] sm:$0xff]
        %v1536 = vld [vmem:[#allocation3 + $0x18] sm:$0xff]
        %v1537 = vld [vmem:[#allocation3 + $0x20] sm:$0xff]
        %v1538 = vld [vmem:[#allocation3 + $0x28] sm:$0xff]
        %v1539 = vld [vmem:[#allocation3 + $0x30] sm:$0xff]
        %v1540 = vld [vmem:[#allocation3 + $0x38] sm:$0xff]
        %v1541 = vld [vmem:[#allocation3 + $0x40] sm:$0xff]
        %v1542 = vld [vmem:[#allocation3 + $0x48] sm:$0xff]
        %v1543 = vld [vmem:[#allocation3 + $0x50] sm:$0xff]
        %v1544 = vld [vmem:[#allocation3 + $0x58] sm:$0xff]
        %v1545 = vld [vmem:[%s1] sm:$0xf]
        %v1546 = vld [vmem:[%s1 + $0x4] sm:$0xf]
        %v1547 = vld [vmem:[%s1 + $0x8] sm:$0xf]
        %v1548 = vld [vmem:[%s1 + $0xc] sm:$0xf]
        %v1549 = vld [vmem:[%s1 + $0x10] sm:$0xf]
        %v1550 = vld [vmem:[%s1 + $0x14] sm:$0xf]
        %v1551 = vld [vmem:[%s1 + $0x18] sm:$0xf]
        %v1552 = vld [vmem:[%s1 + $0x1c] sm:$0xf]
        %v1553 = vld [vmem:[%s1 + $0x20] sm:$0xf]
        %v1554 = vld [vmem:[%s1 + $0x24] sm:$0xf]
        %v1555 = vld [vmem:[%s1 + $0x28] sm:$0xf]
        %v1556 = vld [vmem:[%s1 + $0x2c] sm:$0xf]
        %v1557 = vld [vmem:[%s1 + $0x30] sm:$0xf]
        %v1558 = vld [vmem:[%s1 + $0x34] sm:$0xf]
        %v1559 = vld [vmem:[%s1 + $0x38] sm:$0xf]
        %v1560 = vld [vmem:[%s1 + $0x3c] sm:$0xf]
        %v1561 = vld [vmem:[%s1 + $0x40] sm:$0xf]
        %v1562 = vld [vmem:[%s1 + $0x44] sm:$0xf]
        %v1563 = vld [vmem:[%s1 + $0x48] sm:$0xf]
        %v1564 = vld [vmem:[%s1 + $0x4c] sm:$0xf]
        %v1565 = vld [vmem:[%s1 + $0x50] sm:$0xf]
        %v1566 = vld [vmem:[%s1 + $0x54] sm:$0xf]
        %v1567 = vld [vmem:[%s1 + $0x58] sm:$0xf]
        %v1568 = vld [vmem:[%s1 + $0x5c] sm:$0xf]
        %v1569 = vld [vmem:[%s1 + $0x60] sm:$0xf]
        %v1570 = vld [vmem:[%s1 + $0x64] sm:$0xf]
        %v1571 = vld [vmem:[%s1 + $0x68] sm:$0xf]
        %v1572 = vld [vmem:[%s1 + $0x6c] sm:$0xf]
        %v1573 = vld [vmem:[%s1 + $0x70] sm:$0xf]
        %v1574 = vld [vmem:[%s1 + $0x74] sm:$0xf]
        %v1575 = vld [vmem:[%s1 + $0x78] sm:$0xf]
        %v1576 = vld [vmem:[%s1 + $0x7c] sm:$0xf]
        %v1577 = vld [vmem:[%s1 + $0x80] sm:$0xf]
        %v1578 = vld [vmem:[%s1 + $0x84] sm:$0xf]
        %v1579 = vld [vmem:[%s1 + $0x88] sm:$0xf]
        %v1580 = vld [vmem:[%s1 + $0x8c] sm:$0xf]
        %v1581 = vld [vmem:[%s2] sm:$0x1]
        %v1583 = vlaneseq
        %v1584 = vshrl.u32 %v1583, 7
        %v1585 = vsub.s32 0, %v1584
        %v1586 = vrot.slane %v1581, %v1585
        %v1624 = vunpack.c.l.b16 %v1545
        %v1625 = vunpack.c.l.b16 %v1546
        %v1626 = vunpack.c.l.b16 %v1547
        %v1627 = vunpack.c.l.b16 %v1548
        %v1628 = vunpack.c.l.b16 %v1549
        %v1629 = vunpack.c.l.b16 %v1550
        %v1630 = vunpack.c.l.b16 %v1551
        %v1631 = vunpack.c.l.b16 %v1552
        %v1632 = vunpack.c.l.b16 %v1553
        %v1633 = vunpack.c.l.b16 %v1554
        %v1634 = vunpack.c.l.b16 %v1555
        %v1635 = vunpack.c.l.b16 %v1556
        %v1636 = vunpack.c.l.b16 %v1557
        %v1637 = vunpack.c.l.b16 %v1558
        %v1638 = vunpack.c.l.b16 %v1559
        %v1639 = vunpack.c.l.b16 %v1560
        %v1640 = vunpack.c.l.b16 %v1561
        %v1641 = vunpack.c.l.b16 %v1562
        %v1642 = vunpack.c.l.b16 %v1563
        %v1643 = vunpack.c.l.b16 %v1564
        %v1644 = vunpack.c.l.b16 %v1565
        %v1645 = vunpack.c.l.b16 %v1566
        %v1646 = vunpack.c.l.b16 %v1567
        %v1647 = vunpack.c.l.b16 %v1568
        %v1648 = vunpack.c.l.b16 %v1569
        %v1649 = vunpack.c.l.b16 %v1570
        %v1650 = vunpack.c.l.b16 %v1571
        %v1651 = vunpack.c.l.b16 %v1572
        %v1652 = vunpack.c.l.b16 %v1573
        %v1653 = vunpack.c.l.b16 %v1574
        %v1654 = vunpack.c.l.b16 %v1575
        %v1655 = vunpack.c.l.b16 %v1576
        %v1656 = vunpack.c.l.b16 %v1577
        %v1657 = vunpack.c.l.b16 %v1578
        %v1658 = vunpack.c.l.b16 %v1579
        %v1659 = vunpack.c.l.b16 %v1580
        %v1660 = vpack.c.b16 %v1625, %v1624
        %v1661 = vpack.c.b16 %v1627, %v1626
        %v1662 = vpack.c.b16 %v1629, %v1628
        %v1663 = vpack.c.b16 %v1631, %v1630
        %v1664 = vpack.c.b16 %v1633, %v1632
        %v1665 = vpack.c.b16 %v1635, %v1634
        %v1666 = vpack.c.b16 %v1637, %v1636
        %v1667 = vpack.c.b16 %v1639, %v1638
        %v1668 = vpack.c.b16 %v1641, %v1640
        %v1669 = vpack.c.b16 %v1643, %v1642
        %v1670 = vpack.c.b16 %v1645, %v1644
        %v1671 = vpack.c.b16 %v1647, %v1646
        %v1672 = vpack.c.b16 %v1649, %v1648
        %v1673 = vpack.c.b16 %v1651, %v1650
        %v1674 = vpack.c.b16 %v1653, %v1652
        %v1675 = vpack.c.b16 %v1655, %v1654
        %v1676 = vpack.c.b16 %v1657, %v1656
        %v1677 = vpack.c.b16 %v1659, %v1658
        %v1697 = vsel %vm702, %v1535, 0
        %v1700 = vsel %vm702, %v1538, 0
        %v1703 = vsel %vm702, %v1541, 0
        %v1706 = vsel %vm702, %v1544, 0
        %1708 = vmatprep.subr.bf16.mxu0 0
        %1709 = vmatpush1.bf16.msra.mxu0 %v1660
        %1710 = vmatprep.subr.bf16.mxu0 0
        %1711 = vmatpush1.bf16.msra.mxu0 %v1661
        %1712 = vmatprep.subr.bf16.mxu0 0
        %1713 = vmatpush1.bf16.msra.mxu0 %v1662
        %1714 = vmatprep.subr.bf16.mxu0 0
        %1715 = vmatpush1.bf16.msra.mxu0 %v1663
        %1716 = vmatprep.subr.bf16.mxu0 0
        %1717 = vmatpush1.bf16.msra.mxu0 %v1664
        %1718 = vmatprep.subr.bf16.mxu0 0
        %1719 = vmatpush1.bf16.msra.mxu0 %v1665
        %1720 = vmatprep.subr.bf16.mxu0 0
        %1721 = vmatpush1.bf16.msra.mxu0 %v1666
        %1722 = vmatprep.subr.bf16.mxu0 0
        %1723 = vmatpush1.bf16.msra.mxu0 %v1667
        %1724 = vmatprep.subr.bf16.mxu0 0
        %1725 = vmatpush1.bf16.msra.mxu0 %v1668
        %1726 = vmatprep.subr.bf16.mxu0 0
        %1727 = vmatpush1.bf16.msra.mxu0 %v1669
        %1728 = vmatprep.subr.bf16.mxu0 0
        %1729 = vmatpush1.bf16.msra.mxu0 %v1670
        %1730 = vmatprep.subr.bf16.mxu0 0
        %1731 = vmatpush1.bf16.msra.mxu0 %v1671
        %1732 = vmatprep.subr.bf16.mxu0 0
        %1733 = vmatpush1.bf16.msra.mxu0 %v1672
        %1734 = vmatprep.subr.bf16.mxu0 0
        %1735 = vmatpush1.bf16.msra.mxu0 %v1673
        %1736 = vmatprep.subr.bf16.mxu0 0
        %1737 = vmatpush1.bf16.msra.mxu0 %v1674
        %1738 = vmatprep.subr.bf16.mxu0 0
        %1739 = vmatpush1.bf16.msra.mxu0 %v1675
        %1740 = vmatprep.mubr.bf16.mxu0 %v1534
        %1741 = vmatmul.mubr.bf16.gmra.mrb[0].mxu0 %v1533
        %v1742 = vpop.f32.mrb[0].mxu0
        %v1743 = vadd.f32 %v1586, %v1742
        %v1744 = vpop.f32.mrb[0].mxu0
        %v1745 = vpop.f32.mrb[0].mxu0
        %v1746 = vadd.f32 %v1586, %v1745
        %v1747 = vpop.f32.mrb[0].mxu0
        %1748 = vmatprep.mubr.bf16.mxu0 %v1537
        %1749 = vmatmul.mubr.bf16.gmra.mrb[0].mxu0 %v1536
        %v1750 = vpop.f32.mrb[0].mxu0
        %v1751 = vadd.f32 %v1586, %v1750
        %v1752 = vpop.f32.mrb[0].mxu0
        %v1753 = vpop.f32.mrb[0].mxu0
        %v1754 = vadd.f32 %v1586, %v1753
        %v1755 = vpop.f32.mrb[0].mxu0
        %1756 = vmatprep.mubr.bf16.mxu0 %v1540
        %1757 = vmatmul.mubr.bf16.gmra.mrb[0].mxu0 %v1539
        %v1758 = vpop.f32.mrb[0].mxu0
        %v1759 = vadd.f32 %v1586, %v1758
        %v1760 = vpop.f32.mrb[0].mxu0
        %v1761 = vpop.f32.mrb[0].mxu0
        %v1762 = vadd.f32 %v1586, %v1761
        %v1763 = vpop.f32.mrb[0].mxu0
        %1764 = vmatprep.mubr.bf16.mxu0 %v1543
        %1765 = vmatmul.mubr.bf16.gmra.mrb[0].mxu0 %v1542
        %v1766 = vpop.f32.mrb[0].mxu0
        %v1767 = vadd.f32 %v1586, %v1766
        %v1768 = vpop.f32.mrb[0].mxu0
        %v1769 = vpop.f32.mrb[0].mxu0
        %v1770 = vadd.f32 %v1586, %v1769
        %v1771 = vpop.f32.mrb[0].mxu0
        %1772 = vdwg.mxu0
        %1773 = vmatprep.subr.bf16.mxu0 0
        %1774 = vmatpush1.bf16.msra.mxu0 %v1676
        %1775 = vmatprep.subr.bf16.mxu0 0
        %1776 = vmatpush1.bf16.msra.mxu0 %v1677
        %1777 = vmatprep.subr.bf16.mxu0 0
        %1778 = vmatpush1.bf16.msra.mxu0 0
        %1779 = vmatprep.subr.bf16.mxu0 0
        %1780 = vmatpush1.bf16.msra.mxu0 0
        %1781 = vmatprep.subr.bf16.mxu0 0
        %1782 = vmatpush1.bf16.msra.mxu0 0
        %1783 = vmatprep.subr.bf16.mxu0 0
        %1784 = vmatpush1.bf16.msra.mxu0 0
        %1785 = vmatprep.subr.bf16.mxu0 0
        %1786 = vmatpush1.bf16.msra.mxu0 0
        %1787 = vmatprep.subr.bf16.mxu0 0
        %1788 = vmatpush1.bf16.msra.mxu0 0
        %1789 = vmatprep.subr.bf16.mxu0 0
        %1790 = vmatpush1.bf16.msra.mxu0 0
        %1791 = vmatprep.subr.bf16.mxu0 0
        %1792 = vmatpush1.bf16.msra.mxu0 0
        %1793 = vmatprep.subr.bf16.mxu0 0
        %1794 = vmatpush1.bf16.msra.mxu0 0
        %1795 = vmatprep.subr.bf16.mxu0 0
        %1796 = vmatpush1.bf16.msra.mxu0 0
        %1797 = vmatprep.subr.bf16.mxu0 0
        %1798 = vmatpush1.bf16.msra.mxu0 0
        %1799 = vmatprep.subr.bf16.mxu0 0
        %1800 = vmatpush1.bf16.msra.mxu0 0
        %1801 = vmatprep.subr.bf16.mxu0 0
        %1802 = vmatpush1.bf16.msra.mxu0 0
        %1803 = vmatprep.subr.bf16.mxu0 0
        %1804 = vmatpush1.bf16.msra.mxu0 0
        %1805 = vmatprep.mubr.bf16.mxu0 0
        %1806 = vmatmul.mubr.bf16.gmra.mrb[0].mxu0 %v1697
        %v1807 = vpop.f32.mrb[0].mxu0
        %v1808 = vadd.f32 %v1743, %v1807
        %v1809 = vpop.f32.mrb[0].mxu0
        %v1810 = vpop.f32.mrb[0].mxu0
        %v1811 = vadd.f32 %v1746, %v1810
        %v1812 = vpop.f32.mrb[0].mxu0
        %1813 = vmatprep.mubr.bf16.mxu0 0
        %1814 = vmatmul.mubr.bf16.gmra.mrb[0].mxu0 %v1700
        %v1815 = vpop.f32.mrb[0].mxu0
        %v1816 = vadd.f32 %v1751, %v1815
        %v1817 = vpop.f32.mrb[0].mxu0
        %v1818 = vpop.f32.mrb[0].mxu0
        %v1819 = vadd.f32 %v1754, %v1818
        %v1820 = vpop.f32.mrb[0].mxu0
        %1821 = vmatprep.mubr.bf16.mxu0 0
        %1822 = vmatmul.mubr.bf16.gmra.mrb[0].mxu0 %v1703
        %v1823 = vpop.f32.mrb[0].mxu0
        %v1824 = vadd.f32 %v1759, %v1823
        %v1825 = vpop.f32.mrb[0].mxu0
        %v1826 = vpop.f32.mrb[0].mxu0
        %v1827 = vadd.f32 %v1762, %v1826
        %v1828 = vpop.f32.mrb[0].mxu0
        %1829 = vmatprep.mubr.bf16.mxu0 0
        %1830 = vmatmul.mubr.bf16.gmra.mrb[0].mxu0 %v1706
        %v1831 = vpop.f32.mrb[0].mxu0
        %v1832 = vadd.f32 %v1767, %v1831
        %v1833 = vpop.f32.mrb[0].mxu0
        %v1834 = vpop.f32.mrb[0].mxu0
        %v1835 = vadd.f32 %v1770, %v1834
        %v1836 = vpop.f32.mrb[0].mxu0
        %1837 = vdwg.mxu0
        %v1838 = vmax.f32 %v1808, 0.0
        %v1839 = vmax.f32 %v1811, 0.0
        %v1840 = vmax.f32 %v1816, 0.0
        %v1841 = vmax.f32 %v1819, 0.0
        %v1842 = vmax.f32 %v1824, 0.0
        %v1843 = vmax.f32 %v1827, 0.0
        %v1844 = vmax.f32 %v1832, 0.0
        %v1845 = vmax.f32 %v1835, 0.0
        %v1846 = vpack.c.bf16 %v1839, %v1838
        %v1847 = vpack.c.bf16 %v1841, %v1840
        %v1848 = vpack.c.bf16 %v1843, %v1842
        %v1849 = vpack.c.bf16 %v1845, %v1844
        %v1854 = vunpack.c.l.b16 %v1846
        %v1855 = vunpack.c.h.b16 %v1846
        %v1856 = vunpack.c.l.b16 %v1847
        %v1857 = vunpack.c.h.b16 %v1847
        %v1858 = vunpack.c.l.b16 %v1848
        %v1859 = vunpack.c.h.b16 %v1848
        %v1860 = vunpack.c.l.b16 %v1849
        %v1861 = vunpack.c.h.b16 %v1849
        %v1862 = vpack.c.b16 %v1854, %v1854
        %v1863 = vpack.c.b16 %v1855, %v1855
        %v1864 = vpack.c.b16 %v1856, %v1856
        %v1865 = vpack.c.b16 %v1857, %v1857
        %v1866 = vpack.c.b16 %v1858, %v1858
        %v1867 = vpack.c.b16 %v1859, %v1859
        %v1868 = vpack.c.b16 %v1860, %v1860
        %v1869 = vpack.c.b16 %v1861, %v1861
        %v1871 = vshrl.u32 %v1862, 16
        %v1873 = vrot.slane %v1871, 7
        %v1874 = vshll.u32 %v1862, 16
        %v1876 = vor.u32 %v1873, %v1874
        %v1877 = vrot.slane %v1873, 4
        %v1879 = vshrl.u32 %v1863, 16
        %v1881 = vrot.slane %v1879, 7
        %v1882 = vshll.u32 %v1863, 16
        %v1884 = vor.u32 %v1881, %v1882
        %v1885 = vrot.slane %v1881, 4
        %v1887 = vshrl.u32 %v1864, 16
        %v1889 = vrot.slane %v1887, 7
        %v1890 = vshll.u32 %v1864, 16
        %v1892 = vor.u32 %v1889, %v1890
        %v1893 = vrot.slane %v1889, 4
        %v1895 = vshrl.u32 %v1865, 16
        %v1897 = vrot.slane %v1895, 7
        %v1898 = vshll.u32 %v1865, 16
        %v1900 = vor.u32 %v1897, %v1898
        %v1901 = vrot.slane %v1897, 4
        %v1903 = vshrl.u32 %v1866, 16
        %v1905 = vrot.slane %v1903, 7
        %v1906 = vshll.u32 %v1866, 16
        %v1908 = vor.u32 %v1905, %v1906
        %v1909 = vrot.slane %v1905, 4
        %v1911 = vshrl.u32 %v1867, 16
        %v1913 = vrot.slane %v1911, 7
        %v1914 = vshll.u32 %v1867, 16
        %v1916 = vor.u32 %v1913, %v1914
        %v1917 = vrot.slane %v1913, 4
        %v1919 = vshrl.u32 %v1868, 16
        %v1921 = vrot.slane %v1919, 7
        %v1922 = vshll.u32 %v1868, 16
        %v1924 = vor.u32 %v1921, %v1922
        %v1925 = vrot.slane %v1921, 4
        %v1927 = vshrl.u32 %v1869, 16
        %v1929 = vrot.slane %v1927, 7
        %v1930 = vshll.u32 %v1869, 16
        %v1932 = vor.u32 %v1929, %v1930
        %v1933 = vrot.slane %v1929, 4
        %v1950 = vld [vmem:[%s619] sm:$0xf]
        %v1951 = vsel %vm621, %v1876, %v1950
        %1952 = vst [vmem:[%s619] sm:$0xf] %v1951
        %v1953 = vld [vmem:[%s619 + $0x4] sm:$0x1]
        %v1954 = vsel %vm459, %v1877, %v1953
        %1955 = vst [vmem:[%s619 + $0x4] sm:$0x1] %v1954
        %v1956 = vld [vmem:[%s619 + $0x8] sm:$0xf]
        %v1957 = vsel %vm621, %v1884, %v1956
        %1958 = vst [vmem:[%s619 + $0x8] sm:$0xf] %v1957
        %v1959 = vld [vmem:[%s619 + $0xc] sm:$0x1]
        %v1960 = vsel %vm459, %v1885, %v1959
        %1961 = vst [vmem:[%s619 + $0xc] sm:$0x1] %v1960
        %v1962 = vld [vmem:[%s619 + $0x10] sm:$0xf]
        %v1963 = vsel %vm621, %v1892, %v1962
        %1964 = vst [vmem:[%s619 + $0x10] sm:$0xf] %v1963
        %v1965 = vld [vmem:[%s619 + $0x14] sm:$0x1]
        %v1966 = vsel %vm459, %v1893, %v1965
        %1967 = vst [vmem:[%s619 + $0x14] sm:$0x1] %v1966
        %v1968 = vld [vmem:[%s619 + $0x18] sm:$0xf]
        %v1969 = vsel %vm621, %v1900, %v1968
        %1970 = vst [vmem:[%s619 + $0x18] sm:$0xf] %v1969
        %v1971 = vld [vmem:[%s619 + $0x1c] sm:$0x1]
        %v1972 = vsel %vm459, %v1901, %v1971
        %1973 = vst [vmem:[%s619 + $0x1c] sm:$0x1] %v1972
        %v1974 = vld [vmem:[%s619 + $0x20] sm:$0xf]
        %v1975 = vsel %vm621, %v1908, %v1974
        %1976 = vst [vmem:[%s619 + $0x20] sm:$0xf] %v1975
        %v1977 = vld [vmem:[%s619 + $0x24] sm:$0x1]
        %v1978 = vsel %vm459, %v1909, %v1977
        %1979 = vst [vmem:[%s619 + $0x24] sm:$0x1] %v1978
        %v1980 = vld [vmem:[%s619 + $0x28] sm:$0xf]
        %v1981 = vsel %vm621, %v1916, %v1980
        %1982 = vst [vmem:[%s619 + $0x28] sm:$0xf] %v1981
        %v1983 = vld [vmem:[%s619 + $0x2c] sm:$0x1]
        %v1984 = vsel %vm459, %v1917, %v1983
        %1985 = vst [vmem:[%s619 + $0x2c] sm:$0x1] %v1984
        %v1986 = vld [vmem:[%s619 + $0x30] sm:$0xf]
        %v1987 = vsel %vm621, %v1924, %v1986
        %1988 = vst [vmem:[%s619 + $0x30] sm:$0xf] %v1987
        %v1989 = vld [vmem:[%s619 + $0x34] sm:$0x1]
        %v1990 = vsel %vm459, %v1925, %v1989
        %1991 = vst [vmem:[%s619 + $0x34] sm:$0x1] %v1990
        %v1992 = vld [vmem:[%s619 + $0x38] sm:$0xf]
        %v1993 = vsel %vm621, %v1932, %v1992
        %1994 = vst [vmem:[%s619 + $0x38] sm:$0xf] %v1993
        %v1995 = vld [vmem:[%s619 + $0x3c] sm:$0x1]
        %v1996 = vsel %vm459, %v1933, %v1995
        %1997 = vst [vmem:[%s619 + $0x3c] sm:$0x1] %v1996
        %v1998 = vld [vmem:[#allocation2] sm:$0xf]
        %v1999 = vld [vmem:[#allocation2 + $0x8] sm:$0xf]
        %v2000 = vld [vmem:[#allocation2 + $0x10] sm:$0xf]
        %v2001 = vld [vmem:[#allocation2 + $0x18] sm:$0xf]
        %v2002 = vld [vmem:[#allocation2 + $0x20] sm:$0xf]
        %v2003 = vld [vmem:[#allocation2 + $0x28] sm:$0xf]
        %v2004 = vld [vmem:[#allocation2 + $0x30] sm:$0xf]
        %v2005 = vld [vmem:[#allocation2 + $0x38] sm:$0xf]
        %v2014 = vunpack.c.l.b16 %v1998
        %v2015 = vunpack.c.l.b16 %v1999
        %v2016 = vunpack.c.l.b16 %v2000
        %v2017 = vunpack.c.l.b16 %v2001
        %v2018 = vunpack.c.l.b16 %v2002
        %v2019 = vunpack.c.l.b16 %v2003
        %v2020 = vunpack.c.l.b16 %v2004
        %v2021 = vunpack.c.l.b16 %v2005
        %v2022 = vpack.c.b16 %v2015, %v2014
        %v2023 = vpack.c.b16 %v2017, %v2016
        %v2024 = vpack.c.b16 %v2019, %v2018
        %v2025 = vpack.c.b16 %v2021, %v2020
        %2030 = vst.msk [vmem:[#allocation3] sm:$0xff] %vm702, %v2022
        %2031 = vst.msk [vmem:[#allocation3 + $0x18] sm:$0xff] %vm702, %v2023
        %2032 = vst.msk [vmem:[#allocation3 + $0x30] sm:$0xff] %vm702, %v2024
        %2033 = vst.msk [vmem:[#allocation3 + $0x48] sm:$0xff] %vm702, %v2025
        %v2034 = vld [vmem:[#allocation2] sm:$0xf]
        %v2035 = vld [vmem:[#allocation2 + $0x4] sm:$0x1]
        %v2036 = vld [vmem:[#allocation2 + $0x8] sm:$0xf]
        %v2037 = vld [vmem:[#allocation2 + $0xc] sm:$0x1]
        %v2038 = vld [vmem:[#allocation2 + $0x10] sm:$0xf]
        %v2039 = vld [vmem:[#allocation2 + $0x14] sm:$0x1]
        %v2040 = vld [vmem:[#allocation2 + $0x18] sm:$0xf]
        %v2041 = vld [vmem:[#allocation2 + $0x1c] sm:$0x1]
        %v2042 = vld [vmem:[#allocation2 + $0x20] sm:$0xf]
        %v2043 = vld [vmem:[#allocation2 + $0x24] sm:$0x1]
        %v2044 = vld [vmem:[#allocation2 + $0x28] sm:$0xf]
        %v2045 = vld [vmem:[#allocation2 + $0x2c] sm:$0x1]
        %v2046 = vld [vmem:[#allocation2 + $0x30] sm:$0xf]
        %v2047 = vld [vmem:[#allocation2 + $0x34] sm:$0x1]
        %v2048 = vld [vmem:[#allocation2 + $0x38] sm:$0xf]
        %v2049 = vld [vmem:[#allocation2 + $0x3c] sm:$0x1]
        %v2051 = vshrl.u32 %v2034, 16
        %v2053 = vrot.slane %v2051, 4
        %v2054 = vshll.u32 %v2034, 16
        %v2056 = vrot.slane %v2054, 5
        %v2057 = vor.u32 %v2053, %v2056
        %v2058 = vrot.slane %v2057, 4
        %v2060 = vshll.u32 %v2035, 16
        %v2062 = vrot.slane %v2060, 5
        %v2063 = vsel %vm725, %v2058, %v2062
        %v2065 = vshrl.u32 %v2036, 16
        %v2067 = vrot.slane %v2065, 4
        %v2068 = vshll.u32 %v2036, 16
        %v2070 = vrot.slane %v2068, 5
        %v2071 = vor.u32 %v2067, %v2070
        %v2072 = vrot.slane %v2071, 4
        %v2074 = vshll.u32 %v2037, 16
        %v2076 = vrot.slane %v2074, 5
        %v2077 = vsel %vm725, %v2072, %v2076
        %v2079 = vshrl.u32 %v2038, 16
        %v2081 = vrot.slane %v2079, 4
        %v2082 = vshll.u32 %v2038, 16
        %v2084 = vrot.slane %v2082, 5
        %v2085 = vor.u32 %v2081, %v2084
        %v2086 = vrot.slane %v2085, 4
        %v2088 = vshll.u32 %v2039, 16
        %v2090 = vrot.slane %v2088, 5
        %v2091 = vsel %vm725, %v2086, %v2090
        %v2093 = vshrl.u32 %v2040, 16
        %v2095 = vrot.slane %v2093, 4
        %v2096 = vshll.u32 %v2040, 16
        %v2098 = vrot.slane %v2096, 5
        %v2099 = vor.u32 %v2095, %v2098
        %v2100 = vrot.slane %v2099, 4
        %v2102 = vshll.u32 %v2041, 16
        %v2104 = vrot.slane %v2102, 5
        %v2105 = vsel %vm725, %v2100, %v2104
        %v2107 = vshrl.u32 %v2042, 16
        %v2109 = vrot.slane %v2107, 4
        %v2110 = vshll.u32 %v2042, 16
        %v2112 = vrot.slane %v2110, 5
        %v2113 = vor.u32 %v2109, %v2112
        %v2114 = vrot.slane %v2113, 4
        %v2116 = vshll.u32 %v2043, 16
        %v2118 = vrot.slane %v2116, 5
        %v2119 = vsel %vm725, %v2114, %v2118
        %v2121 = vshrl.u32 %v2044, 16
        %v2123 = vrot.slane %v2121, 4
        %v2124 = vshll.u32 %v2044, 16
        %v2126 = vrot.slane %v2124, 5
        %v2127 = vor.u32 %v2123, %v2126
        %v2128 = vrot.slane %v2127, 4
        %v2130 = vshll.u32 %v2045, 16
        %v2132 = vrot.slane %v2130, 5
        %v2133 = vsel %vm725, %v2128, %v2132
        %v2135 = vshrl.u32 %v2046, 16
        %v2137 = vrot.slane %v2135, 4
        %v2138 = vshll.u32 %v2046, 16
        %v2140 = vrot.slane %v2138, 5
        %v2141 = vor.u32 %v2137, %v2140
        %v2142 = vrot.slane %v2141, 4
        %v2144 = vshll.u32 %v2047, 16
        %v2146 = vrot.slane %v2144, 5
        %v2147 = vsel %vm725, %v2142, %v2146
        %v2149 = vshrl.u32 %v2048, 16
        %v2151 = vrot.slane %v2149, 4
        %v2152 = vshll.u32 %v2048, 16
        %v2154 = vrot.slane %v2152, 5
        %v2155 = vor.u32 %v2151, %v2154
        %v2156 = vrot.slane %v2155, 4
        %v2158 = vshll.u32 %v2049, 16
        %v2160 = vrot.slane %v2158, 5
        %v2161 = vsel %vm725, %v2156, %v2160
        %v2162 = vunpack.c.l.b16 %v2063
        %v2163 = vunpack.c.l.b16 %v2077
        %v2164 = vunpack.c.l.b16 %v2091
        %v2165 = vunpack.c.l.b16 %v2105
        %v2166 = vunpack.c.l.b16 %v2119
        %v2167 = vunpack.c.l.b16 %v2133
        %v2168 = vunpack.c.l.b16 %v2147
        %v2169 = vunpack.c.l.b16 %v2161
        %v2170 = vpack.c.b16 %v2163, %v2162
        %v2171 = vpack.c.b16 %v2165, %v2164
        %v2172 = vpack.c.b16 %v2167, %v2166
        %v2173 = vpack.c.b16 %v2169, %v2168
        %2174 = vrot.lane.b32.xlu0 %v2170, 32
        %v2175 = vpop.permute.xlu0 %2174
        %2176 = vrot.lane.b32.xlu0 %v2171, 32
        %v2177 = vpop.permute.xlu0 %2176
        %2178 = vrot.lane.b32.xlu0 %v2172, 32
        %v2179 = vpop.permute.xlu0 %2178
        %2180 = vrot.lane.b32.xlu0 %v2173, 32
        %v2181 = vpop.permute.xlu0 %2180
        %2186 = vst.msk [vmem:[#allocation3] sm:$0xff] %vm862, %v2175
        %2187 = vst.msk [vmem:[#allocation3 + $0x18] sm:$0xff] %vm862, %v2177
        %2188 = vst.msk [vmem:[#allocation3 + $0x30] sm:$0xff] %vm862, %v2179
        %2189 = vst.msk [vmem:[#allocation3 + $0x48] sm:$0xff] %vm862, %v2181
        %v2190 = vld [vmem:[#allocation2] sm:$0xe]
        %v2191 = vld [vmem:[#allocation2 + $0x4] sm:$0x1]
        %v2192 = vld [vmem:[#allocation2 + $0x8] sm:$0xe]
        %v2193 = vld [vmem:[#allocation2 + $0xc] sm:$0x1]
        %v2194 = vld [vmem:[#allocation2 + $0x10] sm:$0xe]
        %v2195 = vld [vmem:[#allocation2 + $0x14] sm:$0x1]
        %v2196 = vld [vmem:[#allocation2 + $0x18] sm:$0xe]
        %v2197 = vld [vmem:[#allocation2 + $0x1c] sm:$0x1]
        %v2198 = vld [vmem:[#allocation2 + $0x20] sm:$0xe]
        %v2199 = vld [vmem:[#allocation2 + $0x24] sm:$0x1]
        %v2200 = vld [vmem:[#allocation2 + $0x28] sm:$0xe]
        %v2201 = vld [vmem:[#allocation2 + $0x2c] sm:$0x1]
        %v2202 = vld [vmem:[#allocation2 + $0x30] sm:$0xe]
        %v2203 = vld [vmem:[#allocation2 + $0x34] sm:$0x1]
        %v2204 = vld [vmem:[#allocation2 + $0x38] sm:$0xe]
        %v2205 = vld [vmem:[#allocation2 + $0x3c] sm:$0x1]
        %v2222 = vrot.slane %v2190, 5
        %v2223 = vrot.slane %v2222, 4
        %v2224 = vrot.slane %v2191, 5
        %v2225 = vsel %vm901, %v2223, %v2224
        %v2226 = vrot.slane %v2192, 5
        %v2227 = vrot.slane %v2226, 4
        %v2228 = vrot.slane %v2193, 5
        %v2229 = vsel %vm901, %v2227, %v2228
        %v2230 = vrot.slane %v2194, 5
        %v2231 = vrot.slane %v2230, 4
        %v2232 = vrot.slane %v2195, 5
        %v2233 = vsel %vm901, %v2231, %v2232
        %v2234 = vrot.slane %v2196, 5
        %v2235 = vrot.slane %v2234, 4
        %v2236 = vrot.slane %v2197, 5
        %v2237 = vsel %vm901, %v2235, %v2236
        %v2238 = vrot.slane %v2198, 5
        %v2239 = vrot.slane %v2238, 4
        %v2240 = vrot.slane %v2199, 5
        %v2241 = vsel %vm901, %v2239, %v2240
        %v2242 = vrot.slane %v2200, 5
        %v2243 = vrot.slane %v2242, 4
        %v2244 = vrot.slane %v2201, 5
        %v2245 = vsel %vm901, %v2243, %v2244
        %v2246 = vrot.slane %v2202, 5
        %v2247 = vrot.slane %v2246, 4
        %v2248 = vrot.slane %v2203, 5
        %v2249 = vsel %vm901, %v2247, %v2248
        %v2250 = vrot.slane %v2204, 5
        %v2251 = vrot.slane %v2250, 4
        %v2252 = vrot.slane %v2205, 5
        %v2253 = vsel %vm901, %v2251, %v2252
        %v2254 = vunpack.c.l.b16 %v2225
        %v2255 = vunpack.c.l.b16 %v2229
        %v2256 = vunpack.c.l.b16 %v2233
        %v2257 = vunpack.c.l.b16 %v2237
        %v2258 = vunpack.c.l.b16 %v2241
        %v2259 = vunpack.c.l.b16 %v2245
        %v2260 = vunpack.c.l.b16 %v2249
        %v2261 = vunpack.c.l.b16 %v2253
        %v2262 = vpack.c.b16 %v2255, %v2254
        %v2263 = vpack.c.b16 %v2257, %v2256
        %v2264 = vpack.c.b16 %v2259, %v2258
        %v2265 = vpack.c.b16 %v2261, %v2260
        %2266 = vrot.lane.b32.xlu0 %v2262, 64
        %v2267 = vpop.permute.xlu0 %2266
        %2268 = vrot.lane.b32.xlu0 %v2263, 64
        %v2269 = vpop.permute.xlu0 %2268
        %2270 = vrot.lane.b32.xlu0 %v2264, 64
        %v2271 = vpop.permute.xlu0 %2270
        %2272 = vrot.lane.b32.xlu0 %v2265, 64
        %v2273 = vpop.permute.xlu0 %2272
        %2278 = vst.msk [vmem:[#allocation3] sm:$0xff] %vm958, %v2267
        %2279 = vst.msk [vmem:[#allocation3 + $0x18] sm:$0xff] %vm958, %v2269
        %2280 = vst.msk [vmem:[#allocation3 + $0x30] sm:$0xff] %vm958, %v2271
        %2281 = vst.msk [vmem:[#allocation3 + $0x48] sm:$0xff] %vm958, %v2273
        %v2282 = vld [vmem:[%s619] sm:$0xf]
        %v2283 = vld [vmem:[%s619 + $0x8] sm:$0xf]
        %v2284 = vld [vmem:[%s619 + $0x10] sm:$0xf]
        %v2285 = vld [vmem:[%s619 + $0x18] sm:$0xf]
        %v2286 = vld [vmem:[%s619 + $0x20] sm:$0xf]
        %v2287 = vld [vmem:[%s619 + $0x28] sm:$0xf]
        %v2288 = vld [vmem:[%s619 + $0x30] sm:$0xf]
        %v2289 = vld [vmem:[%s619 + $0x38] sm:$0xf]
        %v2298 = vunpack.c.l.b16 %v2282
        %v2299 = vunpack.c.l.b16 %v2283
        %v2300 = vunpack.c.l.b16 %v2284
        %v2301 = vunpack.c.l.b16 %v2285
        %v2302 = vunpack.c.l.b16 %v2286
        %v2303 = vunpack.c.l.b16 %v2287
        %v2304 = vunpack.c.l.b16 %v2288
        %v2305 = vunpack.c.l.b16 %v2289
        %v2306 = vpack.c.b16 %v2299, %v2298
        %v2307 = vpack.c.b16 %v2301, %v2300
        %v2308 = vpack.c.b16 %v2303, %v2302
        %v2309 = vpack.c.b16 %v2305, %v2304
        %2310 = vrot.lane.b32.xlu0 %v2306, 96
        %v2311 = vpop.permute.xlu0 %2310
        %2312 = vrot.lane.b32.xlu0 %v2307, 96
        %v2313 = vpop.permute.xlu0 %2312
        %2314 = vrot.lane.b32.xlu0 %v2308, 96
        %v2315 = vpop.permute.xlu0 %2314
        %2316 = vrot.lane.b32.xlu0 %v2309, 96
        %v2317 = vpop.permute.xlu0 %2316
        %2322 = vst.msk [vmem:[#allocation3] sm:$0xff] %vm1003, %v2311
        %2323 = vst.msk [vmem:[#allocation3 + $0x18] sm:$0xff] %vm1003, %v2313
        %2324 = vst.msk [vmem:[#allocation3 + $0x30] sm:$0xff] %vm1003, %v2315
        %2325 = vst.msk [vmem:[#allocation3 + $0x48] sm:$0xff] %vm1003, %v2317
        %v2326 = vld [vmem:[%s619] sm:$0xf]
        %v2327 = vld [vmem:[%s619 + $0x4] sm:$0x1]
        %v2328 = vld [vmem:[%s619 + $0x8] sm:$0xf]
        %v2329 = vld [vmem:[%s619 + $0xc] sm:$0x1]
        %v2330 = vld [vmem:[%s619 + $0x10] sm:$0xf]
        %v2331 = vld [vmem:[%s619 + $0x14] sm:$0x1]
        %v2332 = vld [vmem:[%s619 + $0x18] sm:$0xf]
        %v2333 = vld [vmem:[%s619 + $0x1c] sm:$0x1]
        %v2334 = vld [vmem:[%s619 + $0x20] sm:$0xf]
        %v2335 = vld [vmem:[%s619 + $0x24] sm:$0x1]
        %v2336 = vld [vmem:[%s619 + $0x28] sm:$0xf]
        %v2337 = vld [vmem:[%s619 + $0x2c] sm:$0x1]
        %v2338 = vld [vmem:[%s619 + $0x30] sm:$0xf]
        %v2339 = vld [vmem:[%s619 + $0x34] sm:$0x1]
        %v2340 = vld [vmem:[%s619 + $0x38] sm:$0xf]
        %v2341 = vld [vmem:[%s619 + $0x3c] sm:$0x1]
        %v2343 = vshrl.u32 %v2326, 16
        %v2345 = vrot.slane %v2343, 4
        %v2346 = vshll.u32 %v2326, 16
        %v2348 = vrot.slane %v2346, 5
        %v2349 = vor.u32 %v2345, %v2348
        %v2350 = vrot.slane %v2349, 4
        %v2352 = vshll.u32 %v2327, 16
        %v2354 = vrot.slane %v2352, 5
        %v2355 = vsel %vm725, %v2350, %v2354
        %v2357 = vshrl.u32 %v2328, 16
        %v2359 = vrot.slane %v2357, 4
        %v2360 = vshll.u32 %v2328, 16
        %v2362 = vrot.slane %v2360, 5
        %v2363 = vor.u32 %v2359, %v2362
        %v2364 = vrot.slane %v2363, 4
        %v2366 = vshll.u32 %v2329, 16
        %v2368 = vrot.slane %v2366, 5
        %v2369 = vsel %vm725, %v2364, %v2368
        %v2371 = vshrl.u32 %v2330, 16
        %v2373 = vrot.slane %v2371, 4
        %v2374 = vshll.u32 %v2330, 16
        %v2376 = vrot.slane %v2374, 5
        %v2377 = vor.u32 %v2373, %v2376
        %v2378 = vrot.slane %v2377, 4
        %v2380 = vshll.u32 %v2331, 16
        %v2382 = vrot.slane %v2380, 5
        %v2383 = vsel %vm725, %v2378, %v2382
        %v2385 = vshrl.u32 %v2332, 16
        %v2387 = vrot.slane %v2385, 4
        %v2388 = vshll.u32 %v2332, 16
        %v2390 = vrot.slane %v2388, 5
        %v2391 = vor.u32 %v2387, %v2390
        %v2392 = vrot.slane %v2391, 4
        %v2394 = vshll.u32 %v2333, 16
        %v2396 = vrot.slane %v2394, 5
        %v2397 = vsel %vm725, %v2392, %v2396
        %v2399 = vshrl.u32 %v2334, 16
        %v2401 = vrot.slane %v2399, 4
        %v2402 = vshll.u32 %v2334, 16
        %v2404 = vrot.slane %v2402, 5
        %v2405 = vor.u32 %v2401, %v2404
        %v2406 = vrot.slane %v2405, 4
        %v2408 = vshll.u32 %v2335, 16
        %v2410 = vrot.slane %v2408, 5
        %v2411 = vsel %vm725, %v2406, %v2410
        %v2413 = vshrl.u32 %v2336, 16
        %v2415 = vrot.slane %v2413, 4
        %v2416 = vshll.u32 %v2336, 16
        %v2418 = vrot.slane %v2416, 5
        %v2419 = vor.u32 %v2415, %v2418
        %v2420 = vrot.slane %v2419, 4
        %v2422 = vshll.u32 %v2337, 16
        %v2424 = vrot.slane %v2422, 5
        %v2425 = vsel %vm725, %v2420, %v2424
        %v2427 = vshrl.u32 %v2338, 16
        %v2429 = vrot.slane %v2427, 4
        %v2430 = vshll.u32 %v2338, 16
        %v2432 = vrot.slane %v2430, 5
        %v2433 = vor.u32 %v2429, %v2432
        %v2434 = vrot.slane %v2433, 4
        %v2436 = vshll.u32 %v2339, 16
        %v2438 = vrot.slane %v2436, 5
        %v2439 = vsel %vm725, %v2434, %v2438
        %v2441 = vshrl.u32 %v2340, 16
        %v2443 = vrot.slane %v2441, 4
        %v2444 = vshll.u32 %v2340, 16
        %v2446 = vrot.slane %v2444, 5
        %v2447 = vor.u32 %v2443, %v2446
        %v2448 = vrot.slane %v2447, 4
        %v2450 = vshll.u32 %v2341, 16
        %v2452 = vrot.slane %v2450, 5
        %v2453 = vsel %vm725, %v2448, %v2452
        %v2454 = vunpack.c.l.b16 %v2355
        %v2455 = vunpack.c.l.b16 %v2369
        %v2456 = vunpack.c.l.b16 %v2383
        %v2457 = vunpack.c.l.b16 %v2397
        %v2458 = vunpack.c.l.b16 %v2411
        %v2459 = vunpack.c.l.b16 %v2425
        %v2460 = vunpack.c.l.b16 %v2439
        %v2461 = vunpack.c.l.b16 %v2453
        %v2462 = vpack.c.b16 %v2455, %v2454
        %v2463 = vpack.c.b16 %v2457, %v2456
        %v2464 = vpack.c.b16 %v2459, %v2458
        %v2465 = vpack.c.b16 %v2461, %v2460
        %2470 = vst.msk [vmem:[#allocation3 + $0x8] sm:$0xff] %vm702, %v2462
        %2471 = vst.msk [vmem:[#allocation3 + $0x20] sm:$0xff] %vm702, %v2463
        %2472 = vst.msk [vmem:[#allocation3 + $0x38] sm:$0xff] %vm702, %v2464
        %2473 = vst.msk [vmem:[#allocation3 + $0x50] sm:$0xff] %vm702, %v2465
        %v2474 = vld [vmem:[%s619] sm:$0xe]
        %v2475 = vld [vmem:[%s619 + $0x4] sm:$0x1]
        %v2476 = vld [vmem:[%s619 + $0x8] sm:$0xe]
        %v2477 = vld [vmem:[%s619 + $0xc] sm:$0x1]
        %v2478 = vld [vmem:[%s619 + $0x10] sm:$0xe]
        %v2479 = vld [vmem:[%s619 + $0x14] sm:$0x1]
        %v2480 = vld [vmem:[%s619 + $0x18] sm:$0xe]
        %v2481 = vld [vmem:[%s619 + $0x1c] sm:$0x1]
        %v2482 = vld [vmem:[%s619 + $0x20] sm:$0xe]
        %v2483 = vld [vmem:[%s619 + $0x24] sm:$0x1]
        %v2484 = vld [vmem:[%s619 + $0x28] sm:$0xe]
        %v2485 = vld [vmem:[%s619 + $0x2c] sm:$0x1]
        %v2486 = vld [vmem:[%s619 + $0x30] sm:$0xe]
        %v2487 = vld [vmem:[%s619 + $0x34] sm:$0x1]
        %v2488 = vld [vmem:[%s619 + $0x38] sm:$0xe]
        %v2489 = vld [vmem:[%s619 + $0x3c] sm:$0x1]
        %v2506 = vrot.slane %v2474, 5
        %v2507 = vrot.slane %v2506, 4
        %v2508 = vrot.slane %v2475, 5
        %v2509 = vsel %vm901, %v2507, %v2508
        %v2510 = vrot.slane %v2476, 5
        %v2511 = vrot.slane %v2510, 4
        %v2512 = vrot.slane %v2477, 5
        %v2513 = vsel %vm901, %v2511, %v2512
        %v2514 = vrot.slane %v2478, 5
        %v2515 = vrot.slane %v2514, 4
        %v2516 = vrot.slane %v2479, 5
        %v2517 = vsel %vm901, %v2515, %v2516
        %v2518 = vrot.slane %v2480, 5
        %v2519 = vrot.slane %v2518, 4
        %v2520 = vrot.slane %v2481, 5
        %v2521 = vsel %vm901, %v2519, %v2520
        %v2522 = vrot.slane %v2482, 5
        %v2523 = vrot.slane %v2522, 4
        %v2524 = vrot.slane %v2483, 5
        %v2525 = vsel %vm901, %v2523, %v2524
        %v2526 = vrot.slane %v2484, 5
        %v2527 = vrot.slane %v2526, 4
        %v2528 = vrot.slane %v2485, 5
        %v2529 = vsel %vm901, %v2527, %v2528
        %v2530 = vrot.slane %v2486, 5
        %v2531 = vrot.slane %v2530, 4
        %v2532 = vrot.slane %v2487, 5
        %v2533 = vsel %vm901, %v2531, %v2532
        %v2534 = vrot.slane %v2488, 5
        %v2535 = vrot.slane %v2534, 4
        %v2536 = vrot.slane %v2489, 5
        %v2537 = vsel %vm901, %v2535, %v2536
        %v2538 = vunpack.c.l.b16 %v2509
        %v2539 = vunpack.c.l.b16 %v2513
        %v2540 = vunpack.c.l.b16 %v2517
        %v2541 = vunpack.c.l.b16 %v2521
        %v2542 = vunpack.c.l.b16 %v2525
        %v2543 = vunpack.c.l.b16 %v2529
        %v2544 = vunpack.c.l.b16 %v2533
        %v2545 = vunpack.c.l.b16 %v2537
        %v2546 = vpack.c.b16 %v2539, %v2538
        %v2547 = vpack.c.b16 %v2541, %v2540
        %v2548 = vpack.c.b16 %v2543, %v2542
        %v2549 = vpack.c.b16 %v2545, %v2544
        %2550 = vrot.lane.b32.xlu0 %v2546, 32
        %v2551 = vpop.permute.xlu0 %2550
        %2552 = vrot.lane.b32.xlu0 %v2547, 32
        %v2553 = vpop.permute.xlu0 %2552
        %2554 = vrot.lane.b32.xlu0 %v2548, 32
        %v2555 = vpop.permute.xlu0 %2554
        %2556 = vrot.lane.b32.xlu0 %v2549, 32
        %v2557 = vpop.permute.xlu0 %2556
        %2562 = vst.msk [vmem:[#allocation3 + $0x8] sm:$0xff] %vm862, %v2551
        %2563 = vst.msk [vmem:[#allocation3 + $0x20] sm:$0xff] %vm862, %v2553
        %2564 = vst.msk [vmem:[#allocation3 + $0x38] sm:$0xff] %vm862, %v2555
        %2565 = vst.msk [vmem:[#allocation3 + $0x50] sm:$0xff] %vm862, %v2557
        %v2566 = vld [vmem:[%s1248] sm:$0xf]
        %v2567 = vld [vmem:[%s1248 + $0x8] sm:$0xf]
        %v2568 = vld [vmem:[%s1248 + $0x10] sm:$0xf]
        %v2569 = vld [vmem:[%s1248 + $0x18] sm:$0xf]
        %v2570 = vld [vmem:[%s1248 + $0x20] sm:$0xf]
        %v2571 = vld [vmem:[%s1248 + $0x28] sm:$0xf]
        %v2572 = vld [vmem:[%s1248 + $0x30] sm:$0xf]
        %v2573 = vld [vmem:[%s1248 + $0x38] sm:$0xf]
        %v2582 = vunpack.c.l.b16 %v2566
        %v2583 = vunpack.c.l.b16 %v2567
        %v2584 = vunpack.c.l.b16 %v2568
        %v2585 = vunpack.c.l.b16 %v2569
        %v2586 = vunpack.c.l.b16 %v2570
        %v2587 = vunpack.c.l.b16 %v2571
        %v2588 = vunpack.c.l.b16 %v2572
        %v2589 = vunpack.c.l.b16 %v2573
        %v2590 = vpack.c.b16 %v2583, %v2582
        %v2591 = vpack.c.b16 %v2585, %v2584
        %v2592 = vpack.c.b16 %v2587, %v2586
        %v2593 = vpack.c.b16 %v2589, %v2588
        %2594 = vrot.lane.b32.xlu0 %v2590, 64
        %v2595 = vpop.permute.xlu0 %2594
        %2596 = vrot.lane.b32.xlu0 %v2591, 64
        %v2597 = vpop.permute.xlu0 %2596
        %2598 = vrot.lane.b32.xlu0 %v2592, 64
        %v2599 = vpop.permute.xlu0 %2598
        %2600 = vrot.lane.b32.xlu0 %v2593, 64
        %v2601 = vpop.permute.xlu0 %2600
        %2606 = vst.msk [vmem:[#allocation3 + $0x8] sm:$0xff] %vm958, %v2595
        %2607 = vst.msk [vmem:[#allocation3 + $0x20] sm:$0xff] %vm958, %v2597
        %2608 = vst.msk [vmem:[#allocation3 + $0x38] sm:$0xff] %vm958, %v2599
        %2609 = vst.msk [vmem:[#allocation3 + $0x50] sm:$0xff] %vm958, %v2601
        %v2610 = vld [vmem:[%s1248] sm:$0xf]
        %v2611 = vld [vmem:[%s1248 + $0x4] sm:$0x1]
        %v2612 = vld [vmem:[%s1248 + $0x8] sm:$0xf]
        %v2613 = vld [vmem:[%s1248 + $0xc] sm:$0x1]
        %v2614 = vld [vmem:[%s1248 + $0x10] sm:$0xf]
        %v2615 = vld [vmem:[%s1248 + $0x14] sm:$0x1]
        %v2616 = vld [vmem:[%s1248 + $0x18] sm:$0xf]
        %v2617 = vld [vmem:[%s1248 + $0x1c] sm:$0x1]
        %v2618 = vld [vmem:[%s1248 + $0x20] sm:$0xf]
        %v2619 = vld [vmem:[%s1248 + $0x24] sm:$0x1]
        %v2620 = vld [vmem:[%s1248 + $0x28] sm:$0xf]
        %v2621 = vld [vmem:[%s1248 + $0x2c] sm:$0x1]
        %v2622 = vld [vmem:[%s1248 + $0x30] sm:$0xf]
        %v2623 = vld [vmem:[%s1248 + $0x34] sm:$0x1]
        %v2624 = vld [vmem:[%s1248 + $0x38] sm:$0xf]
        %v2625 = vld [vmem:[%s1248 + $0x3c] sm:$0x1]
        %v2627 = vshrl.u32 %v2610, 16
        %v2629 = vrot.slane %v2627, 4
        %v2630 = vshll.u32 %v2610, 16
        %v2632 = vrot.slane %v2630, 5
        %v2633 = vor.u32 %v2629, %v2632
        %v2634 = vrot.slane %v2633, 4
        %v2636 = vshll.u32 %v2611, 16
        %v2638 = vrot.slane %v2636, 5
        %v2639 = vsel %vm725, %v2634, %v2638
        %v2641 = vshrl.u32 %v2612, 16
        %v2643 = vrot.slane %v2641, 4
        %v2644 = vshll.u32 %v2612, 16
        %v2646 = vrot.slane %v2644, 5
        %v2647 = vor.u32 %v2643, %v2646
        %v2648 = vrot.slane %v2647, 4
        %v2650 = vshll.u32 %v2613, 16
        %v2652 = vrot.slane %v2650, 5
        %v2653 = vsel %vm725, %v2648, %v2652
        %v2655 = vshrl.u32 %v2614, 16
        %v2657 = vrot.slane %v2655, 4
        %v2658 = vshll.u32 %v2614, 16
        %v2660 = vrot.slane %v2658, 5
        %v2661 = vor.u32 %v2657, %v2660
        %v2662 = vrot.slane %v2661, 4
        %v2664 = vshll.u32 %v2615, 16
        %v2666 = vrot.slane %v2664, 5
        %v2667 = vsel %vm725, %v2662, %v2666
        %v2669 = vshrl.u32 %v2616, 16
        %v2671 = vrot.slane %v2669, 4
        %v2672 = vshll.u32 %v2616, 16
        %v2674 = vrot.slane %v2672, 5
        %v2675 = vor.u32 %v2671, %v2674
        %v2676 = vrot.slane %v2675, 4
        %v2678 = vshll.u32 %v2617, 16
        %v2680 = vrot.slane %v2678, 5
        %v2681 = vsel %vm725, %v2676, %v2680
        %v2683 = vshrl.u32 %v2618, 16
        %v2685 = vrot.slane %v2683, 4
        %v2686 = vshll.u32 %v2618, 16
        %v2688 = vrot.slane %v2686, 5
        %v2689 = vor.u32 %v2685, %v2688
        %v2690 = vrot.slane %v2689, 4
        %v2692 = vshll.u32 %v2619, 16
        %v2694 = vrot.slane %v2692, 5
        %v2695 = vsel %vm725, %v2690, %v2694
        %v2697 = vshrl.u32 %v2620, 16
        %v2699 = vrot.slane %v2697, 4
        %v2700 = vshll.u32 %v2620, 16
        %v2702 = vrot.slane %v2700, 5
        %v2703 = vor.u32 %v2699, %v2702
        %v2704 = vrot.slane %v2703, 4
        %v2706 = vshll.u32 %v2621, 16
        %v2708 = vrot.slane %v2706, 5
        %v2709 = vsel %vm725, %v2704, %v2708
        %v2711 = vshrl.u32 %v2622, 16
        %v2713 = vrot.slane %v2711, 4
        %v2714 = vshll.u32 %v2622, 16
        %v2716 = vrot.slane %v2714, 5
        %v2717 = vor.u32 %v2713, %v2716
        %v2718 = vrot.slane %v2717, 4
        %v2720 = vshll.u32 %v2623, 16
        %v2722 = vrot.slane %v2720, 5
        %v2723 = vsel %vm725, %v2718, %v2722
        %v2725 = vshrl.u32 %v2624, 16
        %v2727 = vrot.slane %v2725, 4
        %v2728 = vshll.u32 %v2624, 16
        %v2730 = vrot.slane %v2728, 5
        %v2731 = vor.u32 %v2727, %v2730
        %v2732 = vrot.slane %v2731, 4
        %v2734 = vshll.u32 %v2625, 16
        %v2736 = vrot.slane %v2734, 5
        %v2737 = vsel %vm725, %v2732, %v2736
        %v2738 = vunpack.c.l.b16 %v2639
        %v2739 = vunpack.c.l.b16 %v2653
        %v2740 = vunpack.c.l.b16 %v2667
        %v2741 = vunpack.c.l.b16 %v2681
        %v2742 = vunpack.c.l.b16 %v2695
        %v2743 = vunpack.c.l.b16 %v2709
        %v2744 = vunpack.c.l.b16 %v2723
        %v2745 = vunpack.c.l.b16 %v2737
        %v2746 = vpack.c.b16 %v2739, %v2738
        %v2747 = vpack.c.b16 %v2741, %v2740
        %v2748 = vpack.c.b16 %v2743, %v2742
        %v2749 = vpack.c.b16 %v2745, %v2744
        %2750 = vrot.lane.b32.xlu0 %v2746, 96
        %v2751 = vpop.permute.xlu0 %2750
        %2752 = vrot.lane.b32.xlu0 %v2747, 96
        %v2753 = vpop.permute.xlu0 %2752
        %2754 = vrot.lane.b32.xlu0 %v2748, 96
        %v2755 = vpop.permute.xlu0 %2754
        %2756 = vrot.lane.b32.xlu0 %v2749, 96
        %v2757 = vpop.permute.xlu0 %2756
        %2762 = vst.msk [vmem:[#allocation3 + $0x8] sm:$0xff] %vm1003, %v2751
        %2763 = vst.msk [vmem:[#allocation3 + $0x20] sm:$0xff] %vm1003, %v2753
        %2764 = vst.msk [vmem:[#allocation3 + $0x38] sm:$0xff] %vm1003, %v2755
        %2765 = vst.msk [vmem:[#allocation3 + $0x50] sm:$0xff] %vm1003, %v2757
        %v2766 = vld [vmem:[%s1248] sm:$0xe]
        %v2767 = vld [vmem:[%s1248 + $0x4] sm:$0x1]
        %v2768 = vld [vmem:[%s1248 + $0x8] sm:$0xe]
        %v2769 = vld [vmem:[%s1248 + $0xc] sm:$0x1]
        %v2770 = vld [vmem:[%s1248 + $0x10] sm:$0xe]
        %v2771 = vld [vmem:[%s1248 + $0x14] sm:$0x1]
        %v2772 = vld [vmem:[%s1248 + $0x18] sm:$0xe]
        %v2773 = vld [vmem:[%s1248 + $0x1c] sm:$0x1]
        %v2774 = vld [vmem:[%s1248 + $0x20] sm:$0xe]
        %v2775 = vld [vmem:[%s1248 + $0x24] sm:$0x1]
        %v2776 = vld [vmem:[%s1248 + $0x28] sm:$0xe]
        %v2777 = vld [vmem:[%s1248 + $0x2c] sm:$0x1]
        %v2778 = vld [vmem:[%s1248 + $0x30] sm:$0xe]
        %v2779 = vld [vmem:[%s1248 + $0x34] sm:$0x1]
        %v2780 = vld [vmem:[%s1248 + $0x38] sm:$0xe]
        %v2781 = vld [vmem:[%s1248 + $0x3c] sm:$0x1]
        %v2798 = vrot.slane %v2766, 5
        %v2799 = vrot.slane %v2798, 4
        %v2800 = vrot.slane %v2767, 5
        %v2801 = vsel %vm901, %v2799, %v2800
        %v2802 = vrot.slane %v2768, 5
        %v2803 = vrot.slane %v2802, 4
        %v2804 = vrot.slane %v2769, 5
        %v2805 = vsel %vm901, %v2803, %v2804
        %v2806 = vrot.slane %v2770, 5
        %v2807 = vrot.slane %v2806, 4
        %v2808 = vrot.slane %v2771, 5
        %v2809 = vsel %vm901, %v2807, %v2808
        %v2810 = vrot.slane %v2772, 5
        %v2811 = vrot.slane %v2810, 4
        %v2812 = vrot.slane %v2773, 5
        %v2813 = vsel %vm901, %v2811, %v2812
        %v2814 = vrot.slane %v2774, 5
        %v2815 = vrot.slane %v2814, 4
        %v2816 = vrot.slane %v2775, 5
        %v2817 = vsel %vm901, %v2815, %v2816
        %v2818 = vrot.slane %v2776, 5
        %v2819 = vrot.slane %v2818, 4
        %v2820 = vrot.slane %v2777, 5
        %v2821 = vsel %vm901, %v2819, %v2820
        %v2822 = vrot.slane %v2778, 5
        %v2823 = vrot.slane %v2822, 4
        %v2824 = vrot.slane %v2779, 5
        %v2825 = vsel %vm901, %v2823, %v2824
        %v2826 = vrot.slane %v2780, 5
        %v2827 = vrot.slane %v2826, 4
        %v2828 = vrot.slane %v2781, 5
        %v2829 = vsel %vm901, %v2827, %v2828
        %v2830 = vunpack.c.l.b16 %v2801
        %v2831 = vunpack.c.l.b16 %v2805
        %v2832 = vunpack.c.l.b16 %v2809
        %v2833 = vunpack.c.l.b16 %v2813
        %v2834 = vunpack.c.l.b16 %v2817
        %v2835 = vunpack.c.l.b16 %v2821
        %v2836 = vunpack.c.l.b16 %v2825
        %v2837 = vunpack.c.l.b16 %v2829
        %v2838 = vpack.c.b16 %v2831, %v2830
        %v2839 = vpack.c.b16 %v2833, %v2832
        %v2840 = vpack.c.b16 %v2835, %v2834
        %v2841 = vpack.c.b16 %v2837, %v2836
        %2846 = vst.msk [vmem:[#allocation3 + $0x10] sm:$0xff] %vm702, %v2838
        %2847 = vst.msk [vmem:[#allocation3 + $0x28] sm:$0xff] %vm702, %v2839
        %2848 = vst.msk [vmem:[#allocation3 + $0x40] sm:$0xff] %vm702, %v2840
        %2849 = vst.msk [vmem:[#allocation3 + $0x58] sm:$0xff] %vm702, %v2841
        %v2850 = vld [vmem:[#allocation3] sm:$0xff]
        %v2851 = vld [vmem:[#allocation3 + $0x8] sm:$0xff]
        %v2852 = vld [vmem:[#allocation3 + $0x10] sm:$0xff]
        %v2853 = vld [vmem:[#allocation3 + $0x18] sm:$0xff]
        %v2854 = vld [vmem:[#allocation3 + $0x20] sm:$0xff]
        %v2855 = vld [vmem:[#allocation3 + $0x28] sm:$0xff]
        %v2856 = vld [vmem:[#allocation3 + $0x30] sm:$0xff]
        %v2857 = vld [vmem:[#allocation3 + $0x38] sm:$0xff]
        %v2858 = vld [vmem:[#allocation3 + $0x40] sm:$0xff]
        %v2859 = vld [vmem:[#allocation3 + $0x48] sm:$0xff]
        %v2860 = vld [vmem:[#allocation3 + $0x50] sm:$0xff]
        %v2861 = vld [vmem:[#allocation3 + $0x58] sm:$0xff]
        %v2862 = vld [vmem:[%s3] sm:$0xf]
        %v2863 = vld [vmem:[%s3 + $0x4] sm:$0xf]
        %v2864 = vld [vmem:[%s3 + $0x8] sm:$0xf]
        %v2865 = vld [vmem:[%s3 + $0xc] sm:$0xf]
        %v2866 = vld [vmem:[%s3 + $0x10] sm:$0xf]
        %v2867 = vld [vmem:[%s3 + $0x14] sm:$0xf]
        %v2868 = vld [vmem:[%s3 + $0x18] sm:$0xf]
        %v2869 = vld [vmem:[%s3 + $0x1c] sm:$0xf]
        %v2870 = vld [vmem:[%s3 + $0x20] sm:$0xf]
        %v2871 = vld [vmem:[%s3 + $0x24] sm:$0xf]
        %v2872 = vld [vmem:[%s3 + $0x28] sm:$0xf]
        %v2873 = vld [vmem:[%s3 + $0x2c] sm:$0xf]
        %v2874 = vld [vmem:[%s3 + $0x30] sm:$0xf]
        %v2875 = vld [vmem:[%s3 + $0x34] sm:$0xf]
        %v2876 = vld [vmem:[%s3 + $0x38] sm:$0xf]
        %v2877 = vld [vmem:[%s3 + $0x3c] sm:$0xf]
        %v2878 = vld [vmem:[%s3 + $0x40] sm:$0xf]
        %v2879 = vld [vmem:[%s3 + $0x44] sm:$0xf]
        %v2880 = vld [vmem:[%s3 + $0x48] sm:$0xf]
        %v2881 = vld [vmem:[%s3 + $0x4c] sm:$0xf]
        %v2882 = vld [vmem:[%s3 + $0x50] sm:$0xf]
        %v2883 = vld [vmem:[%s3 + $0x54] sm:$0xf]
        %v2884 = vld [vmem:[%s3 + $0x58] sm:$0xf]
        %v2885 = vld [vmem:[%s3 + $0x5c] sm:$0xf]
        %v2886 = vld [vmem:[%s3 + $0x60] sm:$0xf]
        %v2887 = vld [vmem:[%s3 + $0x64] sm:$0xf]
        %v2888 = vld [vmem:[%s3 + $0x68] sm:$0xf]
        %v2889 = vld [vmem:[%s3 + $0x6c] sm:$0xf]
        %v2890 = vld [vmem:[%s3 + $0x70] sm:$0xf]
        %v2891 = vld [vmem:[%s3 + $0x74] sm:$0xf]
        %v2892 = vld [vmem:[%s3 + $0x78] sm:$0xf]
        %v2893 = vld [vmem:[%s3 + $0x7c] sm:$0xf]
        %v2894 = vld [vmem:[%s3 + $0x80] sm:$0xf]
        %v2895 = vld [vmem:[%s3 + $0x84] sm:$0xf]
        %v2896 = vld [vmem:[%s3 + $0x88] sm:$0xf]
        %v2897 = vld [vmem:[%s3 + $0x8c] sm:$0xf]
        %v2898 = vld [vmem:[%s4] sm:$0x1]
        %v2900 = vlaneseq
        %v2901 = vshrl.u32 %v2900, 7
        %v2902 = vsub.s32 0, %v2901
        %v2903 = vrot.slane %v2898, %v2902
        %v2941 = vunpack.c.l.b16 %v2862
        %v2942 = vunpack.c.l.b16 %v2863
        %v2943 = vunpack.c.l.b16 %v2864
        %v2944 = vunpack.c.l.b16 %v2865
        %v2945 = vunpack.c.l.b16 %v2866
        %v2946 = vunpack.c.l.b16 %v2867
        %v2947 = vunpack.c.l.b16 %v2868
        %v2948 = vunpack.c.l.b16 %v2869
        %v2949 = vunpack.c.l.b16 %v2870
        %v2950 = vunpack.c.l.b16 %v2871
        %v2951 = vunpack.c.l.b16 %v2872
        %v2952 = vunpack.c.l.b16 %v2873
        %v2953 = vunpack.c.l.b16 %v2874
        %v2954 = vunpack.c.l.b16 %v2875
        %v2955 = vunpack.c.l.b16 %v2876
        %v2956 = vunpack.c.l.b16 %v2877
        %v2957 = vunpack.c.l.b16 %v2878
        %v2958 = vunpack.c.l.b16 %v2879
        %v2959 = vunpack.c.l.b16 %v2880
        %v2960 = vunpack.c.l.b16 %v2881
        %v2961 = vunpack.c.l.b16 %v2882
        %v2962 = vunpack.c.l.b16 %v2883
        %v2963 = vunpack.c.l.b16 %v2884
        %v2964 = vunpack.c.l.b16 %v2885
        %v2965 = vunpack.c.l.b16 %v2886
        %v2966 = vunpack.c.l.b16 %v2887
        %v2967 = vunpack.c.l.b16 %v2888
        %v2968 = vunpack.c.l.b16 %v2889
        %v2969 = vunpack.c.l.b16 %v2890
        %v2970 = vunpack.c.l.b16 %v2891
        %v2971 = vunpack.c.l.b16 %v2892
        %v2972 = vunpack.c.l.b16 %v2893
        %v2973 = vunpack.c.l.b16 %v2894
        %v2974 = vunpack.c.l.b16 %v2895
        %v2975 = vunpack.c.l.b16 %v2896
        %v2976 = vunpack.c.l.b16 %v2897
        %v2977 = vpack.c.b16 %v2942, %v2941
        %v2978 = vpack.c.b16 %v2944, %v2943
        %v2979 = vpack.c.b16 %v2946, %v2945
        %v2980 = vpack.c.b16 %v2948, %v2947
        %v2981 = vpack.c.b16 %v2950, %v2949
        %v2982 = vpack.c.b16 %v2952, %v2951
        %v2983 = vpack.c.b16 %v2954, %v2953
        %v2984 = vpack.c.b16 %v2956, %v2955
        %v2985 = vpack.c.b16 %v2958, %v2957
        %v2986 = vpack.c.b16 %v2960, %v2959
        %v2987 = vpack.c.b16 %v2962, %v2961
        %v2988 = vpack.c.b16 %v2964, %v2963
        %v2989 = vpack.c.b16 %v2966, %v2965
        %v2990 = vpack.c.b16 %v2968, %v2967
        %v2991 = vpack.c.b16 %v2970, %v2969
        %v2992 = vpack.c.b16 %v2972, %v2971
        %v2993 = vpack.c.b16 %v2974, %v2973
        %v2994 = vpack.c.b16 %v2976, %v2975
        %v3014 = vsel %vm702, %v2852, 0
        %v3017 = vsel %vm702, %v2855, 0
        %v3020 = vsel %vm702, %v2858, 0
        %v3023 = vsel %vm702, %v2861, 0
        %3025 = vmatprep.subr.bf16.mxu0 0
        %3026 = vmatpush1.bf16.msra.mxu0 %v2977
        %3027 = vmatprep.subr.bf16.mxu0 0
        %3028 = vmatpush1.bf16.msra.mxu0 %v2978
        %3029 = vmatprep.subr.bf16.mxu0 0
        %3030 = vmatpush1.bf16.msra.mxu0 %v2979
        %3031 = vmatprep.subr.bf16.mxu0 0
        %3032 = vmatpush1.bf16.msra.mxu0 %v2980
        %3033 = vmatprep.subr.bf16.mxu0 0
        %3034 = vmatpush1.bf16.msra.mxu0 %v2981
        %3035 = vmatprep.subr.bf16.mxu0 0
        %3036 = vmatpush1.bf16.msra.mxu0 %v2982
        %3037 = vmatprep.subr.bf16.mxu0 0
        %3038 = vmatpush1.bf16.msra.mxu0 %v2983
        %3039 = vmatprep.subr.bf16.mxu0 0
        %3040 = vmatpush1.bf16.msra.mxu0 %v2984
        %3041 = vmatprep.subr.bf16.mxu0 0
        %3042 = vmatpush1.bf16.msra.mxu0 %v2985
        %3043 = vmatprep.subr.bf16.mxu0 0
        %3044 = vmatpush1.bf16.msra.mxu0 %v2986
        %3045 = vmatprep.subr.bf16.mxu0 0
        %3046 = vmatpush1.bf16.msra.mxu0 %v2987
        %3047 = vmatprep.subr.bf16.mxu0 0
        %3048 = vmatpush1.bf16.msra.mxu0 %v2988
        %3049 = vmatprep.subr.bf16.mxu0 0
        %3050 = vmatpush1.bf16.msra.mxu0 %v2989
        %3051 = vmatprep.subr.bf16.mxu0 0
        %3052 = vmatpush1.bf16.msra.mxu0 %v2990
        %3053 = vmatprep.subr.bf16.mxu0 0
        %3054 = vmatpush1.bf16.msra.mxu0 %v2991
        %3055 = vmatprep.subr.bf16.mxu0 0
        %3056 = vmatpush1.bf16.msra.mxu0 %v2992
        %3057 = vmatprep.mubr.bf16.mxu0 %v2851
        %3058 = vmatmul.mubr.bf16.gmra.mrb[0].mxu0 %v2850
        %v3059 = vpop.f32.mrb[0].mxu0
        %v3060 = vadd.f32 %v2903, %v3059
        %v3061 = vpop.f32.mrb[0].mxu0
        %v3062 = vpop.f32.mrb[0].mxu0
        %v3063 = vadd.f32 %v2903, %v3062
        %v3064 = vpop.f32.mrb[0].mxu0
        %3065 = vmatprep.mubr.bf16.mxu0 %v2854
        %3066 = vmatmul.mubr.bf16.gmra.mrb[0].mxu0 %v2853
        %v3067 = vpop.f32.mrb[0].mxu0
        %v3068 = vadd.f32 %v2903, %v3067
        %v3069 = vpop.f32.mrb[0].mxu0
        %v3070 = vpop.f32.mrb[0].mxu0
        %v3071 = vadd.f32 %v2903, %v3070
        %v3072 = vpop.f32.mrb[0].mxu0
        %3073 = vmatprep.mubr.bf16.mxu0 %v2857
        %3074 = vmatmul.mubr.bf16.gmra.mrb[0].mxu0 %v2856
        %v3075 = vpop.f32.mrb[0].mxu0
        %v3076 = vadd.f32 %v2903, %v3075
        %v3077 = vpop.f32.mrb[0].mxu0
        %v3078 = vpop.f32.mrb[0].mxu0
        %v3079 = vadd.f32 %v2903, %v3078
        %v3080 = vpop.f32.mrb[0].mxu0
        %3081 = vmatprep.mubr.bf16.mxu0 %v2860
        %3082 = vmatmul.mubr.bf16.gmra.mrb[0].mxu0 %v2859
        %v3083 = vpop.f32.mrb[0].mxu0
        %v3084 = vadd.f32 %v2903, %v3083
        %v3085 = vpop.f32.mrb[0].mxu0
        %v3086 = vpop.f32.mrb[0].mxu0
        %v3087 = vadd.f32 %v2903, %v3086
        %v3088 = vpop.f32.mrb[0].mxu0
        %3089 = vdwg.mxu0
        %3090 = vmatprep.subr.bf16.mxu0 0
        %3091 = vmatpush1.bf16.msra.mxu0 %v2993
        %3092 = vmatprep.subr.bf16.mxu0 0
        %3093 = vmatpush1.bf16.msra.mxu0 %v2994
        %3094 = vmatprep.subr.bf16.mxu0 0
        %3095 = vmatpush1.bf16.msra.mxu0 0
        %3096 = vmatprep.subr.bf16.mxu0 0
        %3097 = vmatpush1.bf16.msra.mxu0 0
        %3098 = vmatprep.subr.bf16.mxu0 0
        %3099 = vmatpush1.bf16.msra.mxu0 0
        %3100 = vmatprep.subr.bf16.mxu0 0
        %3101 = vmatpush1.bf16.msra.mxu0 0
        %3102 = vmatprep.subr.bf16.mxu0 0
        %3103 = vmatpush1.bf16.msra.mxu0 0
        %3104 = vmatprep.subr.bf16.mxu0 0
        %3105 = vmatpush1.bf16.msra.mxu0 0
        %3106 = vmatprep.subr.bf16.mxu0 0
        %3107 = vmatpush1.bf16.msra.mxu0 0
        %3108 = vmatprep.subr.bf16.mxu0 0
        %3109 = vmatpush1.bf16.msra.mxu0 0
        %3110 = vmatprep.subr.bf16.mxu0 0
        %3111 = vmatpush1.bf16.msra.mxu0 0
        %3112 = vmatprep.subr.bf16.mxu0 0
        %3113 = vmatpush1.bf16.msra.mxu0 0
        %3114 = vmatprep.subr.bf16.mxu0 0
        %3115 = vmatpush1.bf16.msra.mxu0 0
        %3116 = vmatprep.subr.bf16.mxu0 0
        %3117 = vmatpush1.bf16.msra.mxu0 0
        %3118 = vmatprep.subr.bf16.mxu0 0
        %3119 = vmatpush1.bf16.msra.mxu0 0
        %3120 = vmatprep.subr.bf16.mxu0 0
        %3121 = vmatpush1.bf16.msra.mxu0 0
        %3122 = vmatprep.mubr.bf16.mxu0 0
        %3123 = vmatmul.mubr.bf16.gmra.mrb[0].mxu0 %v3014
        %v3124 = vpop.f32.mrb[0].mxu0
        %v3125 = vadd.f32 %v3060, %v3124
        %v3126 = vpop.f32.mrb[0].mxu0
        %v3127 = vpop.f32.mrb[0].mxu0
        %v3128 = vadd.f32 %v3063, %v3127
        %v3129 = vpop.f32.mrb[0].mxu0
        %3130 = vmatprep.mubr.bf16.mxu0 0
        %3131 = vmatmul.mubr.bf16.gmra.mrb[0].mxu0 %v3017
        %v3132 = vpop.f32.mrb[0].mxu0
        %v3133 = vadd.f32 %v3068, %v3132
        %v3134 = vpop.f32.mrb[0].mxu0
        %v3135 = vpop.f32.mrb[0].mxu0
        %v3136 = vadd.f32 %v3071, %v3135
        %v3137 = vpop.f32.mrb[0].mxu0
        %3138 = vmatprep.mubr.bf16.mxu0 0
        %3139 = vmatmul.mubr.bf16.gmra.mrb[0].mxu0 %v3020
        %v3140 = vpop.f32.mrb[0].mxu0
        %v3141 = vadd.f32 %v3076, %v3140
        %v3142 = vpop.f32.mrb[0].mxu0
        %v3143 = vpop.f32.mrb[0].mxu0
        %v3144 = vadd.f32 %v3079, %v3143
        %v3145 = vpop.f32.mrb[0].mxu0
        %3146 = vmatprep.mubr.bf16.mxu0 0
        %3147 = vmatmul.mubr.bf16.gmra.mrb[0].mxu0 %v3023
        %v3148 = vpop.f32.mrb[0].mxu0
        %v3149 = vadd.f32 %v3084, %v3148
        %v3150 = vpop.f32.mrb[0].mxu0
        %v3151 = vpop.f32.mrb[0].mxu0
        %v3152 = vadd.f32 %v3087, %v3151
        %v3153 = vpop.f32.mrb[0].mxu0
        %3154 = vdwg.mxu0
        %v3155 = vmax.f32 %v3125, 0.0
        %v3156 = vmax.f32 %v3128, 0.0
        %v3157 = vmax.f32 %v3133, 0.0
        %v3158 = vmax.f32 %v3136, 0.0
        %v3159 = vmax.f32 %v3141, 0.0
        %v3160 = vmax.f32 %v3144, 0.0
        %v3161 = vmax.f32 %v3149, 0.0
        %v3162 = vmax.f32 %v3152, 0.0
        %v3163 = vpack.c.bf16 %v3156, %v3155
        %v3164 = vpack.c.bf16 %v3158, %v3157
        %v3165 = vpack.c.bf16 %v3160, %v3159
        %v3166 = vpack.c.bf16 %v3162, %v3161
        %v3171 = vunpack.c.l.b16 %v3163
        %v3172 = vunpack.c.h.b16 %v3163
        %v3173 = vunpack.c.l.b16 %v3164
        %v3174 = vunpack.c.h.b16 %v3164
        %v3175 = vunpack.c.l.b16 %v3165
        %v3176 = vunpack.c.h.b16 %v3165
        %v3177 = vunpack.c.l.b16 %v3166
        %v3178 = vunpack.c.h.b16 %v3166
        %v3179 = vpack.c.b16 %v3171, %v3171
        %v3180 = vpack.c.b16 %v3172, %v3172
        %v3181 = vpack.c.b16 %v3173, %v3173
        %v3182 = vpack.c.b16 %v3174, %v3174
        %v3183 = vpack.c.b16 %v3175, %v3175
        %v3184 = vpack.c.b16 %v3176, %v3176
        %v3185 = vpack.c.b16 %v3177, %v3177
        %v3186 = vpack.c.b16 %v3178, %v3178
        %v3188 = vshrl.u32 %v3179, 16
        %v3190 = vrot.slane %v3188, 7
        %v3191 = vshll.u32 %v3179, 16
        %v3193 = vor.u32 %v3190, %v3191
        %v3194 = vrot.slane %v3190, 4
        %v3196 = vshrl.u32 %v3180, 16
        %v3198 = vrot.slane %v3196, 7
        %v3199 = vshll.u32 %v3180, 16
        %v3201 = vor.u32 %v3198, %v3199
        %v3202 = vrot.slane %v3198, 4
        %v3204 = vshrl.u32 %v3181, 16
        %v3206 = vrot.slane %v3204, 7
        %v3207 = vshll.u32 %v3181, 16
        %v3209 = vor.u32 %v3206, %v3207
        %v3210 = vrot.slane %v3206, 4
        %v3212 = vshrl.u32 %v3182, 16
        %v3214 = vrot.slane %v3212, 7
        %v3215 = vshll.u32 %v3182, 16
        %v3217 = vor.u32 %v3214, %v3215
        %v3218 = vrot.slane %v3214, 4
        %v3220 = vshrl.u32 %v3183, 16
        %v3222 = vrot.slane %v3220, 7
        %v3223 = vshll.u32 %v3183, 16
        %v3225 = vor.u32 %v3222, %v3223
        %v3226 = vrot.slane %v3222, 4
        %v3228 = vshrl.u32 %v3184, 16
        %v3230 = vrot.slane %v3228, 7
        %v3231 = vshll.u32 %v3184, 16
        %v3233 = vor.u32 %v3230, %v3231
        %v3234 = vrot.slane %v3230, 4
        %v3236 = vshrl.u32 %v3185, 16
        %v3238 = vrot.slane %v3236, 7
        %v3239 = vshll.u32 %v3185, 16
        %v3241 = vor.u32 %v3238, %v3239
        %v3242 = vrot.slane %v3238, 4
        %v3244 = vshrl.u32 %v3186, 16
        %v3246 = vrot.slane %v3244, 7
        %v3247 = vshll.u32 %v3186, 16
        %v3249 = vor.u32 %v3246, %v3247
        %v3250 = vrot.slane %v3246, 4
        %v3267 = vld [vmem:[%s619] sm:$0xf]
        %v3268 = vsel %vm621, %v3193, %v3267
        %3269 = vst [vmem:[%s619] sm:$0xf] %v3268
        %v3270 = vld [vmem:[%s619 + $0x4] sm:$0x1]
        %v3271 = vsel %vm459, %v3194, %v3270
        %3272 = vst [vmem:[%s619 + $0x4] sm:$0x1] %v3271
        %v3273 = vld [vmem:[%s619 + $0x8] sm:$0xf]
        %v3274 = vsel %vm621, %v3201, %v3273
        %3275 = vst [vmem:[%s619 + $0x8] sm:$0xf] %v3274
        %v3276 = vld [vmem:[%s619 + $0xc] sm:$0x1]
        %v3277 = vsel %vm459, %v3202, %v3276
        %3278 = vst [vmem:[%s619 + $0xc] sm:$0x1] %v3277
        %v3279 = vld [vmem:[%s619 + $0x10] sm:$0xf]
        %v3280 = vsel %vm621, %v3209, %v3279
        %3281 = vst [vmem:[%s619 + $0x10] sm:$0xf] %v3280
        %v3282 = vld [vmem:[%s619 + $0x14] sm:$0x1]
        %v3283 = vsel %vm459, %v3210, %v3282
        %3284 = vst [vmem:[%s619 + $0x14] sm:$0x1] %v3283
        %v3285 = vld [vmem:[%s619 + $0x18] sm:$0xf]
        %v3286 = vsel %vm621, %v3217, %v3285
        %3287 = vst [vmem:[%s619 + $0x18] sm:$0xf] %v3286
        %v3288 = vld [vmem:[%s619 + $0x1c] sm:$0x1]
        %v3289 = vsel %vm459, %v3218, %v3288
        %3290 = vst [vmem:[%s619 + $0x1c] sm:$0x1] %v3289
        %v3291 = vld [vmem:[%s619 + $0x20] sm:$0xf]
        %v3292 = vsel %vm621, %v3225, %v3291
        %3293 = vst [vmem:[%s619 + $0x20] sm:$0xf] %v3292
        %v3294 = vld [vmem:[%s619 + $0x24] sm:$0x1]
        %v3295 = vsel %vm459, %v3226, %v3294
        %3296 = vst [vmem:[%s619 + $0x24] sm:$0x1] %v3295
        %v3297 = vld [vmem:[%s619 + $0x28] sm:$0xf]
        %v3298 = vsel %vm621, %v3233, %v3297
        %3299 = vst [vmem:[%s619 + $0x28] sm:$0xf] %v3298
        %v3300 = vld [vmem:[%s619 + $0x2c] sm:$0x1]
        %v3301 = vsel %vm459, %v3234, %v3300
        %3302 = vst [vmem:[%s619 + $0x2c] sm:$0x1] %v3301
        %v3303 = vld [vmem:[%s619 + $0x30] sm:$0xf]
        %v3304 = vsel %vm621, %v3241, %v3303
        %3305 = vst [vmem:[%s619 + $0x30] sm:$0xf] %v3304
        %v3306 = vld [vmem:[%s619 + $0x34] sm:$0x1]
        %v3307 = vsel %vm459, %v3242, %v3306
        %3308 = vst [vmem:[%s619 + $0x34] sm:$0x1] %v3307
        %v3309 = vld [vmem:[%s619 + $0x38] sm:$0xf]
        %v3310 = vsel %vm621, %v3249, %v3309
        %3311 = vst [vmem:[%s619 + $0x38] sm:$0xf] %v3310
        %v3312 = vld [vmem:[%s619 + $0x3c] sm:$0x1]
        %v3313 = vsel %vm459, %v3250, %v3312
        %3314 = vst [vmem:[%s619 + $0x3c] sm:$0x1] %v3313
        %v3315 = vld [vmem:[#allocation2] sm:$0xf]
        %v3316 = vld [vmem:[#allocation2 + $0x8] sm:$0xf]
        %v3317 = vld [vmem:[#allocation2 + $0x10] sm:$0xf]
        %v3318 = vld [vmem:[#allocation2 + $0x18] sm:$0xf]
        %v3319 = vld [vmem:[#allocation2 + $0x20] sm:$0xf]
        %v3320 = vld [vmem:[#allocation2 + $0x28] sm:$0xf]
        %v3321 = vld [vmem:[#allocation2 + $0x30] sm:$0xf]
        %v3322 = vld [vmem:[#allocation2 + $0x38] sm:$0xf]
        %v3331 = vunpack.c.l.b16 %v3315
        %v3332 = vunpack.c.l.b16 %v3316
        %v3333 = vunpack.c.l.b16 %v3317
        %v3334 = vunpack.c.l.b16 %v3318
        %v3335 = vunpack.c.l.b16 %v3319
        %v3336 = vunpack.c.l.b16 %v3320
        %v3337 = vunpack.c.l.b16 %v3321
        %v3338 = vunpack.c.l.b16 %v3322
        %v3339 = vpack.c.b16 %v3332, %v3331
        %v3340 = vpack.c.b16 %v3334, %v3333
        %v3341 = vpack.c.b16 %v3336, %v3335
        %v3342 = vpack.c.b16 %v3338, %v3337
        %3347 = vst.msk [vmem:[#allocation3] sm:$0xff] %vm702, %v3339
        %3348 = vst.msk [vmem:[#allocation3 + $0x18] sm:$0xff] %vm702, %v3340
        %3349 = vst.msk [vmem:[#allocation3 + $0x30] sm:$0xff] %vm702, %v3341
        %3350 = vst.msk [vmem:[#allocation3 + $0x48] sm:$0xff] %vm702, %v3342
        %v3351 = vld [vmem:[#allocation2] sm:$0xf]
        %v3352 = vld [vmem:[#allocation2 + $0x4] sm:$0x1]
        %v3353 = vld [vmem:[#allocation2 + $0x8] sm:$0xf]
        %v3354 = vld [vmem:[#allocation2 + $0xc] sm:$0x1]
        %v3355 = vld [vmem:[#allocation2 + $0x10] sm:$0xf]
        %v3356 = vld [vmem:[#allocation2 + $0x14] sm:$0x1]
        %v3357 = vld [vmem:[#allocation2 + $0x18] sm:$0xf]
        %v3358 = vld [vmem:[#allocation2 + $0x1c] sm:$0x1]
        %v3359 = vld [vmem:[#allocation2 + $0x20] sm:$0xf]
        %v3360 = vld [vmem:[#allocation2 + $0x24] sm:$0x1]
        %v3361 = vld [vmem:[#allocation2 + $0x28] sm:$0xf]
        %v3362 = vld [vmem:[#allocation2 + $0x2c] sm:$0x1]
        %v3363 = vld [vmem:[#allocation2 + $0x30] sm:$0xf]
        %v3364 = vld [vmem:[#allocation2 + $0x34] sm:$0x1]
        %v3365 = vld [vmem:[#allocation2 + $0x38] sm:$0xf]
        %v3366 = vld [vmem:[#allocation2 + $0x3c] sm:$0x1]
        %v3368 = vshrl.u32 %v3351, 16
        %v3370 = vrot.slane %v3368, 4
        %v3371 = vshll.u32 %v3351, 16
        %v3373 = vrot.slane %v3371, 5
        %v3374 = vor.u32 %v3370, %v3373
        %v3375 = vrot.slane %v3374, 4
        %v3377 = vshll.u32 %v3352, 16
        %v3379 = vrot.slane %v3377, 5
        %v3380 = vsel %vm725, %v3375, %v3379
        %v3382 = vshrl.u32 %v3353, 16
        %v3384 = vrot.slane %v3382, 4
        %v3385 = vshll.u32 %v3353, 16
        %v3387 = vrot.slane %v3385, 5
        %v3388 = vor.u32 %v3384, %v3387
        %v3389 = vrot.slane %v3388, 4
        %v3391 = vshll.u32 %v3354, 16
        %v3393 = vrot.slane %v3391, 5
        %v3394 = vsel %vm725, %v3389, %v3393
        %v3396 = vshrl.u32 %v3355, 16
        %v3398 = vrot.slane %v3396, 4
        %v3399 = vshll.u32 %v3355, 16
        %v3401 = vrot.slane %v3399, 5
        %v3402 = vor.u32 %v3398, %v3401
        %v3403 = vrot.slane %v3402, 4
        %v3405 = vshll.u32 %v3356, 16
        %v3407 = vrot.slane %v3405, 5
        %v3408 = vsel %vm725, %v3403, %v3407
        %v3410 = vshrl.u32 %v3357, 16
        %v3412 = vrot.slane %v3410, 4
        %v3413 = vshll.u32 %v3357, 16
        %v3415 = vrot.slane %v3413, 5
        %v3416 = vor.u32 %v3412, %v3415
        %v3417 = vrot.slane %v3416, 4
        %v3419 = vshll.u32 %v3358, 16
        %v3421 = vrot.slane %v3419, 5
        %v3422 = vsel %vm725, %v3417, %v3421
        %v3424 = vshrl.u32 %v3359, 16
        %v3426 = vrot.slane %v3424, 4
        %v3427 = vshll.u32 %v3359, 16
        %v3429 = vrot.slane %v3427, 5
        %v3430 = vor.u32 %v3426, %v3429
        %v3431 = vrot.slane %v3430, 4
        %v3433 = vshll.u32 %v3360, 16
        %v3435 = vrot.slane %v3433, 5
        %v3436 = vsel %vm725, %v3431, %v3435
        %v3438 = vshrl.u32 %v3361, 16
        %v3440 = vrot.slane %v3438, 4
        %v3441 = vshll.u32 %v3361, 16
        %v3443 = vrot.slane %v3441, 5
        %v3444 = vor.u32 %v3440, %v3443
        %v3445 = vrot.slane %v3444, 4
        %v3447 = vshll.u32 %v3362, 16
        %v3449 = vrot.slane %v3447, 5
        %v3450 = vsel %vm725, %v3445, %v3449
        %v3452 = vshrl.u32 %v3363, 16
        %v3454 = vrot.slane %v3452, 4
        %v3455 = vshll.u32 %v3363, 16
        %v3457 = vrot.slane %v3455, 5
        %v3458 = vor.u32 %v3454, %v3457
        %v3459 = vrot.slane %v3458, 4
        %v3461 = vshll.u32 %v3364, 16
        %v3463 = vrot.slane %v3461, 5
        %v3464 = vsel %vm725, %v3459, %v3463
        %v3466 = vshrl.u32 %v3365, 16
        %v3468 = vrot.slane %v3466, 4
        %v3469 = vshll.u32 %v3365, 16
        %v3471 = vrot.slane %v3469, 5
        %v3472 = vor.u32 %v3468, %v3471
        %v3473 = vrot.slane %v3472, 4
        %v3475 = vshll.u32 %v3366, 16
        %v3477 = vrot.slane %v3475, 5
        %v3478 = vsel %vm725, %v3473, %v3477
        %v3479 = vunpack.c.l.b16 %v3380
        %v3480 = vunpack.c.l.b16 %v3394
        %v3481 = vunpack.c.l.b16 %v3408
        %v3482 = vunpack.c.l.b16 %v3422
        %v3483 = vunpack.c.l.b16 %v3436
        %v3484 = vunpack.c.l.b16 %v3450
        %v3485 = vunpack.c.l.b16 %v3464
        %v3486 = vunpack.c.l.b16 %v3478
        %v3487 = vpack.c.b16 %v3480, %v3479
        %v3488 = vpack.c.b16 %v3482, %v3481
        %v3489 = vpack.c.b16 %v3484, %v3483
        %v3490 = vpack.c.b16 %v3486, %v3485
        %3491 = vrot.lane.b32.xlu0 %v3487, 32
        %v3492 = vpop.permute.xlu0 %3491
        %3493 = vrot.lane.b32.xlu0 %v3488, 32
        %v3494 = vpop.permute.xlu0 %3493
        %3495 = vrot.lane.b32.xlu0 %v3489, 32
        %v3496 = vpop.permute.xlu0 %3495
        %3497 = vrot.lane.b32.xlu0 %v3490, 32
        %v3498 = vpop.permute.xlu0 %3497
        %3503 = vst.msk [vmem:[#allocation3] sm:$0xff] %vm862, %v3492
        %3504 = vst.msk [vmem:[#allocation3 + $0x18] sm:$0xff] %vm862, %v3494
        %3505 = vst.msk [vmem:[#allocation3 + $0x30] sm:$0xff] %vm862, %v3496
        %3506 = vst.msk [vmem:[#allocation3 + $0x48] sm:$0xff] %vm862, %v3498
        %v3507 = vld [vmem:[#allocation2] sm:$0xe]
        %v3508 = vld [vmem:[#allocation2 + $0x4] sm:$0x1]
        %v3509 = vld [vmem:[#allocation2 + $0x8] sm:$0xe]
        %v3510 = vld [vmem:[#allocation2 + $0xc] sm:$0x1]
        %v3511 = vld [vmem:[#allocation2 + $0x10] sm:$0xe]
        %v3512 = vld [vmem:[#allocation2 + $0x14] sm:$0x1]
        %v3513 = vld [vmem:[#allocation2 + $0x18] sm:$0xe]
        %v3514 = vld [vmem:[#allocation2 + $0x1c] sm:$0x1]
        %v3515 = vld [vmem:[#allocation2 + $0x20] sm:$0xe]
        %v3516 = vld [vmem:[#allocation2 + $0x24] sm:$0x1]
        %v3517 = vld [vmem:[#allocation2 + $0x28] sm:$0xe]
        %v3518 = vld [vmem:[#allocation2 + $0x2c] sm:$0x1]
        %v3519 = vld [vmem:[#allocation2 + $0x30] sm:$0xe]
        %v3520 = vld [vmem:[#allocation2 + $0x34] sm:$0x1]
        %v3521 = vld [vmem:[#allocation2 + $0x38] sm:$0xe]
        %v3522 = vld [vmem:[#allocation2 + $0x3c] sm:$0x1]
        %v3539 = vrot.slane %v3507, 5
        %v3540 = vrot.slane %v3539, 4
        %v3541 = vrot.slane %v3508, 5
        %v3542 = vsel %vm901, %v3540, %v3541
        %v3543 = vrot.slane %v3509, 5
        %v3544 = vrot.slane %v3543, 4
        %v3545 = vrot.slane %v3510, 5
        %v3546 = vsel %vm901, %v3544, %v3545
        %v3547 = vrot.slane %v3511, 5
        %v3548 = vrot.slane %v3547, 4
        %v3549 = vrot.slane %v3512, 5
        %v3550 = vsel %vm901, %v3548, %v3549
        %v3551 = vrot.slane %v3513, 5
        %v3552 = vrot.slane %v3551, 4
        %v3553 = vrot.slane %v3514, 5
        %v3554 = vsel %vm901, %v3552, %v3553
        %v3555 = vrot.slane %v3515, 5
        %v3556 = vrot.slane %v3555, 4
        %v3557 = vrot.slane %v3516, 5
        %v3558 = vsel %vm901, %v3556, %v3557
        %v3559 = vrot.slane %v3517, 5
        %v3560 = vrot.slane %v3559, 4
        %v3561 = vrot.slane %v3518, 5
        %v3562 = vsel %vm901, %v3560, %v3561
        %v3563 = vrot.slane %v3519, 5
        %v3564 = vrot.slane %v3563, 4
        %v3565 = vrot.slane %v3520, 5
        %v3566 = vsel %vm901, %v3564, %v3565
        %v3567 = vrot.slane %v3521, 5
        %v3568 = vrot.slane %v3567, 4
        %v3569 = vrot.slane %v3522, 5
        %v3570 = vsel %vm901, %v3568, %v3569
        %v3571 = vunpack.c.l.b16 %v3542
        %v3572 = vunpack.c.l.b16 %v3546
        %v3573 = vunpack.c.l.b16 %v3550
        %v3574 = vunpack.c.l.b16 %v3554
        %v3575 = vunpack.c.l.b16 %v3558
        %v3576 = vunpack.c.l.b16 %v3562
        %v3577 = vunpack.c.l.b16 %v3566
        %v3578 = vunpack.c.l.b16 %v3570
        %v3579 = vpack.c.b16 %v3572, %v3571
        %v3580 = vpack.c.b16 %v3574, %v3573
        %v3581 = vpack.c.b16 %v3576, %v3575
        %v3582 = vpack.c.b16 %v3578, %v3577
        %3583 = vrot.lane.b32.xlu0 %v3579, 64
        %v3584 = vpop.permute.xlu0 %3583
        %3585 = vrot.lane.b32.xlu0 %v3580, 64
        %v3586 = vpop.permute.xlu0 %3585
        %3587 = vrot.lane.b32.xlu0 %v3581, 64
        %v3588 = vpop.permute.xlu0 %3587
        %3589 = vrot.lane.b32.xlu0 %v3582, 64
        %v3590 = vpop.permute.xlu0 %3589
        %3595 = vst.msk [vmem:[#allocation3] sm:$0xff] %vm958, %v3584
        %3596 = vst.msk [vmem:[#allocation3 + $0x18] sm:$0xff] %vm958, %v3586
        %3597 = vst.msk [vmem:[#allocation3 + $0x30] sm:$0xff] %vm958, %v3588
        %3598 = vst.msk [vmem:[#allocation3 + $0x48] sm:$0xff] %vm958, %v3590
        %v3599 = vld [vmem:[%s619] sm:$0xf]
        %v3600 = vld [vmem:[%s619 + $0x8] sm:$0xf]
        %v3601 = vld [vmem:[%s619 + $0x10] sm:$0xf]
        %v3602 = vld [vmem:[%s619 + $0x18] sm:$0xf]
        %v3603 = vld [vmem:[%s619 + $0x20] sm:$0xf]
        %v3604 = vld [vmem:[%s619 + $0x28] sm:$0xf]
        %v3605 = vld [vmem:[%s619 + $0x30] sm:$0xf]
        %v3606 = vld [vmem:[%s619 + $0x38] sm:$0xf]
        %v3615 = vunpack.c.l.b16 %v3599
        %v3616 = vunpack.c.l.b16 %v3600
        %v3617 = vunpack.c.l.b16 %v3601
        %v3618 = vunpack.c.l.b16 %v3602
        %v3619 = vunpack.c.l.b16 %v3603
        %v3620 = vunpack.c.l.b16 %v3604
        %v3621 = vunpack.c.l.b16 %v3605
        %v3622 = vunpack.c.l.b16 %v3606
        %v3623 = vpack.c.b16 %v3616, %v3615
        %v3624 = vpack.c.b16 %v3618, %v3617
        %v3625 = vpack.c.b16 %v3620, %v3619
        %v3626 = vpack.c.b16 %v3622, %v3621
        %3627 = vrot.lane.b32.xlu0 %v3623, 96
        %v3628 = vpop.permute.xlu0 %3627
        %3629 = vrot.lane.b32.xlu0 %v3624, 96
        %v3630 = vpop.permute.xlu0 %3629
        %3631 = vrot.lane.b32.xlu0 %v3625, 96
        %v3632 = vpop.permute.xlu0 %3631
        %3633 = vrot.lane.b32.xlu0 %v3626, 96
        %v3634 = vpop.permute.xlu0 %3633
        %3639 = vst.msk [vmem:[#allocation3] sm:$0xff] %vm1003, %v3628
        %3640 = vst.msk [vmem:[#allocation3 + $0x18] sm:$0xff] %vm1003, %v3630
        %3641 = vst.msk [vmem:[#allocation3 + $0x30] sm:$0xff] %vm1003, %v3632
        %3642 = vst.msk [vmem:[#allocation3 + $0x48] sm:$0xff] %vm1003, %v3634
        %v3643 = vld [vmem:[%s619] sm:$0xf]
        %v3644 = vld [vmem:[%s619 + $0x4] sm:$0x1]
        %v3645 = vld [vmem:[%s619 + $0x8] sm:$0xf]
        %v3646 = vld [vmem:[%s619 + $0xc] sm:$0x1]
        %v3647 = vld [vmem:[%s619 + $0x10] sm:$0xf]
        %v3648 = vld [vmem:[%s619 + $0x14] sm:$0x1]
        %v3649 = vld [vmem:[%s619 + $0x18] sm:$0xf]
        %v3650 = vld [vmem:[%s619 + $0x1c] sm:$0x1]
        %v3651 = vld [vmem:[%s619 + $0x20] sm:$0xf]
        %v3652 = vld [vmem:[%s619 + $0x24] sm:$0x1]
        %v3653 = vld [vmem:[%s619 + $0x28] sm:$0xf]
        %v3654 = vld [vmem:[%s619 + $0x2c] sm:$0x1]
        %v3655 = vld [vmem:[%s619 + $0x30] sm:$0xf]
        %v3656 = vld [vmem:[%s619 + $0x34] sm:$0x1]
        %v3657 = vld [vmem:[%s619 + $0x38] sm:$0xf]
        %v3658 = vld [vmem:[%s619 + $0x3c] sm:$0x1]
        %v3660 = vshrl.u32 %v3643, 16
        %v3662 = vrot.slane %v3660, 4
        %v3663 = vshll.u32 %v3643, 16
        %v3665 = vrot.slane %v3663, 5
        %v3666 = vor.u32 %v3662, %v3665
        %v3667 = vrot.slane %v3666, 4
        %v3669 = vshll.u32 %v3644, 16
        %v3671 = vrot.slane %v3669, 5
        %v3672 = vsel %vm725, %v3667, %v3671
        %v3674 = vshrl.u32 %v3645, 16
        %v3676 = vrot.slane %v3674, 4
        %v3677 = vshll.u32 %v3645, 16
        %v3679 = vrot.slane %v3677, 5
        %v3680 = vor.u32 %v3676, %v3679
        %v3681 = vrot.slane %v3680, 4
        %v3683 = vshll.u32 %v3646, 16
        %v3685 = vrot.slane %v3683, 5
        %v3686 = vsel %vm725, %v3681, %v3685
        %v3688 = vshrl.u32 %v3647, 16
        %v3690 = vrot.slane %v3688, 4
        %v3691 = vshll.u32 %v3647, 16
        %v3693 = vrot.slane %v3691, 5
        %v3694 = vor.u32 %v3690, %v3693
        %v3695 = vrot.slane %v3694, 4
        %v3697 = vshll.u32 %v3648, 16
        %v3699 = vrot.slane %v3697, 5
        %v3700 = vsel %vm725, %v3695, %v3699
        %v3702 = vshrl.u32 %v3649, 16
        %v3704 = vrot.slane %v3702, 4
        %v3705 = vshll.u32 %v3649, 16
        %v3707 = vrot.slane %v3705, 5
        %v3708 = vor.u32 %v3704, %v3707
        %v3709 = vrot.slane %v3708, 4
        %v3711 = vshll.u32 %v3650, 16
        %v3713 = vrot.slane %v3711, 5
        %v3714 = vsel %vm725, %v3709, %v3713
        %v3716 = vshrl.u32 %v3651, 16
        %v3718 = vrot.slane %v3716, 4
        %v3719 = vshll.u32 %v3651, 16
        %v3721 = vrot.slane %v3719, 5
        %v3722 = vor.u32 %v3718, %v3721
        %v3723 = vrot.slane %v3722, 4
        %v3725 = vshll.u32 %v3652, 16
        %v3727 = vrot.slane %v3725, 5
        %v3728 = vsel %vm725, %v3723, %v3727
        %v3730 = vshrl.u32 %v3653, 16
        %v3732 = vrot.slane %v3730, 4
        %v3733 = vshll.u32 %v3653, 16
        %v3735 = vrot.slane %v3733, 5
        %v3736 = vor.u32 %v3732, %v3735
        %v3737 = vrot.slane %v3736, 4
        %v3739 = vshll.u32 %v3654, 16
        %v3741 = vrot.slane %v3739, 5
        %v3742 = vsel %vm725, %v3737, %v3741
        %v3744 = vshrl.u32 %v3655, 16
        %v3746 = vrot.slane %v3744, 4
        %v3747 = vshll.u32 %v3655, 16
        %v3749 = vrot.slane %v3747, 5
        %v3750 = vor.u32 %v3746, %v3749
        %v3751 = vrot.slane %v3750, 4
        %v3753 = vshll.u32 %v3656, 16
        %v3755 = vrot.slane %v3753, 5
        %v3756 = vsel %vm725, %v3751, %v3755
        %v3758 = vshrl.u32 %v3657, 16
        %v3760 = vrot.slane %v3758, 4
        %v3761 = vshll.u32 %v3657, 16
        %v3763 = vrot.slane %v3761, 5
        %v3764 = vor.u32 %v3760, %v3763
        %v3765 = vrot.slane %v3764, 4
        %v3767 = vshll.u32 %v3658, 16
        %v3769 = vrot.slane %v3767, 5
        %v3770 = vsel %vm725, %v3765, %v3769
        %v3771 = vunpack.c.l.b16 %v3672
        %v3772 = vunpack.c.l.b16 %v3686
        %v3773 = vunpack.c.l.b16 %v3700
        %v3774 = vunpack.c.l.b16 %v3714
        %v3775 = vunpack.c.l.b16 %v3728
        %v3776 = vunpack.c.l.b16 %v3742
        %v3777 = vunpack.c.l.b16 %v3756
        %v3778 = vunpack.c.l.b16 %v3770
        %v3779 = vpack.c.b16 %v3772, %v3771
        %v3780 = vpack.c.b16 %v3774, %v3773
        %v3781 = vpack.c.b16 %v3776, %v3775
        %v3782 = vpack.c.b16 %v3778, %v3777
        %3787 = vst.msk [vmem:[#allocation3 + $0x8] sm:$0xff] %vm702, %v3779
        %3788 = vst.msk [vmem:[#allocation3 + $0x20] sm:$0xff] %vm702, %v3780
        %3789 = vst.msk [vmem:[#allocation3 + $0x38] sm:$0xff] %vm702, %v3781
        %3790 = vst.msk [vmem:[#allocation3 + $0x50] sm:$0xff] %vm702, %v3782
        %v3791 = vld [vmem:[%s619] sm:$0xe]
        %v3792 = vld [vmem:[%s619 + $0x4] sm:$0x1]
        %v3793 = vld [vmem:[%s619 + $0x8] sm:$0xe]
        %v3794 = vld [vmem:[%s619 + $0xc] sm:$0x1]
        %v3795 = vld [vmem:[%s619 + $0x10] sm:$0xe]
        %v3796 = vld [vmem:[%s619 + $0x14] sm:$0x1]
        %v3797 = vld [vmem:[%s619 + $0x18] sm:$0xe]
        %v3798 = vld [vmem:[%s619 + $0x1c] sm:$0x1]
        %v3799 = vld [vmem:[%s619 + $0x20] sm:$0xe]
        %v3800 = vld [vmem:[%s619 + $0x24] sm:$0x1]
        %v3801 = vld [vmem:[%s619 + $0x28] sm:$0xe]
        %v3802 = vld [vmem:[%s619 + $0x2c] sm:$0x1]
        %v3803 = vld [vmem:[%s619 + $0x30] sm:$0xe]
        %v3804 = vld [vmem:[%s619 + $0x34] sm:$0x1]
        %v3805 = vld [vmem:[%s619 + $0x38] sm:$0xe]
        %v3806 = vld [vmem:[%s619 + $0x3c] sm:$0x1]
        %v3823 = vrot.slane %v3791, 5
        %v3824 = vrot.slane %v3823, 4
        %v3825 = vrot.slane %v3792, 5
        %v3826 = vsel %vm901, %v3824, %v3825
        %v3827 = vrot.slane %v3793, 5
        %v3828 = vrot.slane %v3827, 4
        %v3829 = vrot.slane %v3794, 5
        %v3830 = vsel %vm901, %v3828, %v3829
        %v3831 = vrot.slane %v3795, 5
        %v3832 = vrot.slane %v3831, 4
        %v3833 = vrot.slane %v3796, 5
        %v3834 = vsel %vm901, %v3832, %v3833
        %v3835 = vrot.slane %v3797, 5
        %v3836 = vrot.slane %v3835, 4
        %v3837 = vrot.slane %v3798, 5
        %v3838 = vsel %vm901, %v3836, %v3837
        %v3839 = vrot.slane %v3799, 5
        %v3840 = vrot.slane %v3839, 4
        %v3841 = vrot.slane %v3800, 5
        %v3842 = vsel %vm901, %v3840, %v3841
        %v3843 = vrot.slane %v3801, 5
        %v3844 = vrot.slane %v3843, 4
        %v3845 = vrot.slane %v3802, 5
        %v3846 = vsel %vm901, %v3844, %v3845
        %v3847 = vrot.slane %v3803, 5
        %v3848 = vrot.slane %v3847, 4
        %v3849 = vrot.slane %v3804, 5
        %v3850 = vsel %vm901, %v3848, %v3849
        %v3851 = vrot.slane %v3805, 5
        %v3852 = vrot.slane %v3851, 4
        %v3853 = vrot.slane %v3806, 5
        %v3854 = vsel %vm901, %v3852, %v3853
        %v3855 = vunpack.c.l.b16 %v3826
        %v3856 = vunpack.c.l.b16 %v3830
        %v3857 = vunpack.c.l.b16 %v3834
        %v3858 = vunpack.c.l.b16 %v3838
        %v3859 = vunpack.c.l.b16 %v3842
        %v3860 = vunpack.c.l.b16 %v3846
        %v3861 = vunpack.c.l.b16 %v3850
        %v3862 = vunpack.c.l.b16 %v3854
        %v3863 = vpack.c.b16 %v3856, %v3855
        %v3864 = vpack.c.b16 %v3858, %v3857
        %v3865 = vpack.c.b16 %v3860, %v3859
        %v3866 = vpack.c.b16 %v3862, %v3861
        %3867 = vrot.lane.b32.xlu0 %v3863, 32
        %v3868 = vpop.permute.xlu0 %3867
        %3869 = vrot.lane.b32.xlu0 %v3864, 32
        %v3870 = vpop.permute.xlu0 %3869
        %3871 = vrot.lane.b32.xlu0 %v3865, 32
        %v3872 = vpop.permute.xlu0 %3871
        %3873 = vrot.lane.b32.xlu0 %v3866, 32
        %v3874 = vpop.permute.xlu0 %3873
        %3879 = vst.msk [vmem:[#allocation3 + $0x8] sm:$0xff] %vm862, %v3868
        %3880 = vst.msk [vmem:[#allocation3 + $0x20] sm:$0xff] %vm862, %v3870
        %3881 = vst.msk [vmem:[#allocation3 + $0x38] sm:$0xff] %vm862, %v3872
        %3882 = vst.msk [vmem:[#allocation3 + $0x50] sm:$0xff] %vm862, %v3874
        %v3883 = vld [vmem:[%s1248] sm:$0xf]
        %v3884 = vld [vmem:[%s1248 + $0x8] sm:$0xf]
        %v3885 = vld [vmem:[%s1248 + $0x10] sm:$0xf]
        %v3886 = vld [vmem:[%s1248 + $0x18] sm:$0xf]
        %v3887 = vld [vmem:[%s1248 + $0x20] sm:$0xf]
        %v3888 = vld [vmem:[%s1248 + $0x28] sm:$0xf]
        %v3889 = vld [vmem:[%s1248 + $0x30] sm:$0xf]
        %v3890 = vld [vmem:[%s1248 + $0x38] sm:$0xf]
        %v3899 = vunpack.c.l.b16 %v3883
        %v3900 = vunpack.c.l.b16 %v3884
        %v3901 = vunpack.c.l.b16 %v3885
        %v3902 = vunpack.c.l.b16 %v3886
        %v3903 = vunpack.c.l.b16 %v3887
        %v3904 = vunpack.c.l.b16 %v3888
        %v3905 = vunpack.c.l.b16 %v3889
        %v3906 = vunpack.c.l.b16 %v3890
        %v3907 = vpack.c.b16 %v3900, %v3899
        %v3908 = vpack.c.b16 %v3902, %v3901
        %v3909 = vpack.c.b16 %v3904, %v3903
        %v3910 = vpack.c.b16 %v3906, %v3905
        %3911 = vrot.lane.b32.xlu0 %v3907, 64
        %v3912 = vpop.permute.xlu0 %3911
        %3913 = vrot.lane.b32.xlu0 %v3908, 64
        %v3914 = vpop.permute.xlu0 %3913
        %3915 = vrot.lane.b32.xlu0 %v3909, 64
        %v3916 = vpop.permute.xlu0 %3915
        %3917 = vrot.lane.b32.xlu0 %v3910, 64
        %v3918 = vpop.permute.xlu0 %3917
        %3923 = vst.msk [vmem:[#allocation3 + $0x8] sm:$0xff] %vm958, %v3912
        %3924 = vst.msk [vmem:[#allocation3 + $0x20] sm:$0xff] %vm958, %v3914
        %3925 = vst.msk [vmem:[#allocation3 + $0x38] sm:$0xff] %vm958, %v3916
        %3926 = vst.msk [vmem:[#allocation3 + $0x50] sm:$0xff] %vm958, %v3918
        %v3927 = vld [vmem:[%s1248] sm:$0xf]
        %v3928 = vld [vmem:[%s1248 + $0x4] sm:$0x1]
        %v3929 = vld [vmem:[%s1248 + $0x8] sm:$0xf]
        %v3930 = vld [vmem:[%s1248 + $0xc] sm:$0x1]
        %v3931 = vld [vmem:[%s1248 + $0x10] sm:$0xf]
        %v3932 = vld [vmem:[%s1248 + $0x14] sm:$0x1]
        %v3933 = vld [vmem:[%s1248 + $0x18] sm:$0xf]
        %v3934 = vld [vmem:[%s1248 + $0x1c] sm:$0x1]
        %v3935 = vld [vmem:[%s1248 + $0x20] sm:$0xf]
        %v3936 = vld [vmem:[%s1248 + $0x24] sm:$0x1]
        %v3937 = vld [vmem:[%s1248 + $0x28] sm:$0xf]
        %v3938 = vld [vmem:[%s1248 + $0x2c] sm:$0x1]
        %v3939 = vld [vmem:[%s1248 + $0x30] sm:$0xf]
        %v3940 = vld [vmem:[%s1248 + $0x34] sm:$0x1]
        %v3941 = vld [vmem:[%s1248 + $0x38] sm:$0xf]
        %v3942 = vld [vmem:[%s1248 + $0x3c] sm:$0x1]
        %v3944 = vshrl.u32 %v3927, 16
        %v3946 = vrot.slane %v3944, 4
        %v3947 = vshll.u32 %v3927, 16
        %v3949 = vrot.slane %v3947, 5
        %v3950 = vor.u32 %v3946, %v3949
        %v3951 = vrot.slane %v3950, 4
        %v3953 = vshll.u32 %v3928, 16
        %v3955 = vrot.slane %v3953, 5
        %v3956 = vsel %vm725, %v3951, %v3955
        %v3958 = vshrl.u32 %v3929, 16
        %v3960 = vrot.slane %v3958, 4
        %v3961 = vshll.u32 %v3929, 16
        %v3963 = vrot.slane %v3961, 5
        %v3964 = vor.u32 %v3960, %v3963
        %v3965 = vrot.slane %v3964, 4
        %v3967 = vshll.u32 %v3930, 16
        %v3969 = vrot.slane %v3967, 5
        %v3970 = vsel %vm725, %v3965, %v3969
        %v3972 = vshrl.u32 %v3931, 16
        %v3974 = vrot.slane %v3972, 4
        %v3975 = vshll.u32 %v3931, 16
        %v3977 = vrot.slane %v3975, 5
        %v3978 = vor.u32 %v3974, %v3977
        %v3979 = vrot.slane %v3978, 4
        %v3981 = vshll.u32 %v3932, 16
        %v3983 = vrot.slane %v3981, 5
        %v3984 = vsel %vm725, %v3979, %v3983
        %v3986 = vshrl.u32 %v3933, 16
        %v3988 = vrot.slane %v3986, 4
        %v3989 = vshll.u32 %v3933, 16
        %v3991 = vrot.slane %v3989, 5
        %v3992 = vor.u32 %v3988, %v3991
        %v3993 = vrot.slane %v3992, 4
        %v3995 = vshll.u32 %v3934, 16
        %v3997 = vrot.slane %v3995, 5
        %v3998 = vsel %vm725, %v3993, %v3997
        %v4000 = vshrl.u32 %v3935, 16
        %v4002 = vrot.slane %v4000, 4
        %v4003 = vshll.u32 %v3935, 16
        %v4005 = vrot.slane %v4003, 5
        %v4006 = vor.u32 %v4002, %v4005
        %v4007 = vrot.slane %v4006, 4
        %v4009 = vshll.u32 %v3936, 16
        %v4011 = vrot.slane %v4009, 5
        %v4012 = vsel %vm725, %v4007, %v4011
        %v4014 = vshrl.u32 %v3937, 16
        %v4016 = vrot.slane %v4014, 4
        %v4017 = vshll.u32 %v3937, 16
        %v4019 = vrot.slane %v4017, 5
        %v4020 = vor.u32 %v4016, %v4019
        %v4021 = vrot.slane %v4020, 4
        %v4023 = vshll.u32 %v3938, 16
        %v4025 = vrot.slane %v4023, 5
        %v4026 = vsel %vm725, %v4021, %v4025
        %v4028 = vshrl.u32 %v3939, 16
        %v4030 = vrot.slane %v4028, 4
        %v4031 = vshll.u32 %v3939, 16
        %v4033 = vrot.slane %v4031, 5
        %v4034 = vor.u32 %v4030, %v4033
        %v4035 = vrot.slane %v4034, 4
        %v4037 = vshll.u32 %v3940, 16
        %v4039 = vrot.slane %v4037, 5
        %v4040 = vsel %vm725, %v4035, %v4039
        %v4042 = vshrl.u32 %v3941, 16
        %v4044 = vrot.slane %v4042, 4
        %v4045 = vshll.u32 %v3941, 16
        %v4047 = vrot.slane %v4045, 5
        %v4048 = vor.u32 %v4044, %v4047
        %v4049 = vrot.slane %v4048, 4
        %v4051 = vshll.u32 %v3942, 16
        %v4053 = vrot.slane %v4051, 5
        %v4054 = vsel %vm725, %v4049, %v4053
        %v4055 = vunpack.c.l.b16 %v3956
        %v4056 = vunpack.c.l.b16 %v3970
        %v4057 = vunpack.c.l.b16 %v3984
        %v4058 = vunpack.c.l.b16 %v3998
        %v4059 = vunpack.c.l.b16 %v4012
        %v4060 = vunpack.c.l.b16 %v4026
        %v4061 = vunpack.c.l.b16 %v4040
        %v4062 = vunpack.c.l.b16 %v4054
        %v4063 = vpack.c.b16 %v4056, %v4055
        %v4064 = vpack.c.b16 %v4058, %v4057
        %v4065 = vpack.c.b16 %v4060, %v4059
        %v4066 = vpack.c.b16 %v4062, %v4061
        %4067 = vrot.lane.b32.xlu0 %v4063, 96
        %v4068 = vpop.permute.xlu0 %4067
        %4069 = vrot.lane.b32.xlu0 %v4064, 96
        %v4070 = vpop.permute.xlu0 %4069
        %4071 = vrot.lane.b32.xlu0 %v4065, 96
        %v4072 = vpop.permute.xlu0 %4071
        %4073 = vrot.lane.b32.xlu0 %v4066, 96
        %v4074 = vpop.permute.xlu0 %4073
        %4079 = vst.msk [vmem:[#allocation3 + $0x8] sm:$0xff] %vm1003, %v4068
        %4080 = vst.msk [vmem:[#allocation3 + $0x20] sm:$0xff] %vm1003, %v4070
        %4081 = vst.msk [vmem:[#allocation3 + $0x38] sm:$0xff] %vm1003, %v4072
        %4082 = vst.msk [vmem:[#allocation3 + $0x50] sm:$0xff] %vm1003, %v4074
        %v4083 = vld [vmem:[%s1248] sm:$0xe]
        %v4084 = vld [vmem:[%s1248 + $0x4] sm:$0x1]
        %v4085 = vld [vmem:[%s1248 + $0x8] sm:$0xe]
        %v4086 = vld [vmem:[%s1248 + $0xc] sm:$0x1]
        %v4087 = vld [vmem:[%s1248 + $0x10] sm:$0xe]
        %v4088 = vld [vmem:[%s1248 + $0x14] sm:$0x1]
        %v4089 = vld [vmem:[%s1248 + $0x18] sm:$0xe]
        %v4090 = vld [vmem:[%s1248 + $0x1c] sm:$0x1]
        %v4091 = vld [vmem:[%s1248 + $0x20] sm:$0xe]
        %v4092 = vld [vmem:[%s1248 + $0x24] sm:$0x1]
        %v4093 = vld [vmem:[%s1248 + $0x28] sm:$0xe]
        %v4094 = vld [vmem:[%s1248 + $0x2c] sm:$0x1]
        %v4095 = vld [vmem:[%s1248 + $0x30] sm:$0xe]
        %v4096 = vld [vmem:[%s1248 + $0x34] sm:$0x1]
        %v4097 = vld [vmem:[%s1248 + $0x38] sm:$0xe]
        %v4098 = vld [vmem:[%s1248 + $0x3c] sm:$0x1]
        %v4115 = vrot.slane %v4083, 5
        %v4116 = vrot.slane %v4115, 4
        %v4117 = vrot.slane %v4084, 5
        %v4118 = vsel %vm901, %v4116, %v4117
        %v4119 = vrot.slane %v4085, 5
        %v4120 = vrot.slane %v4119, 4
        %v4121 = vrot.slane %v4086, 5
        %v4122 = vsel %vm901, %v4120, %v4121
        %v4123 = vrot.slane %v4087, 5
        %v4124 = vrot.slane %v4123, 4
        %v4125 = vrot.slane %v4088, 5
        %v4126 = vsel %vm901, %v4124, %v4125
        %v4127 = vrot.slane %v4089, 5
        %v4128 = vrot.slane %v4127, 4
        %v4129 = vrot.slane %v4090, 5
        %v4130 = vsel %vm901, %v4128, %v4129
        %v4131 = vrot.slane %v4091, 5
        %v4132 = vrot.slane %v4131, 4
        %v4133 = vrot.slane %v4092, 5
        %v4134 = vsel %vm901, %v4132, %v4133
        %v4135 = vrot.slane %v4093, 5
        %v4136 = vrot.slane %v4135, 4
        %v4137 = vrot.slane %v4094, 5
        %v4138 = vsel %vm901, %v4136, %v4137
        %v4139 = vrot.slane %v4095, 5
        %v4140 = vrot.slane %v4139, 4
        %v4141 = vrot.slane %v4096, 5
        %v4142 = vsel %vm901, %v4140, %v4141
        %v4143 = vrot.slane %v4097, 5
        %v4144 = vrot.slane %v4143, 4
        %v4145 = vrot.slane %v4098, 5
        %v4146 = vsel %vm901, %v4144, %v4145
        %v4147 = vunpack.c.l.b16 %v4118
        %v4148 = vunpack.c.l.b16 %v4122
        %v4149 = vunpack.c.l.b16 %v4126
        %v4150 = vunpack.c.l.b16 %v4130
        %v4151 = vunpack.c.l.b16 %v4134
        %v4152 = vunpack.c.l.b16 %v4138
        %v4153 = vunpack.c.l.b16 %v4142
        %v4154 = vunpack.c.l.b16 %v4146
        %v4155 = vpack.c.b16 %v4148, %v4147
        %v4156 = vpack.c.b16 %v4150, %v4149
        %v4157 = vpack.c.b16 %v4152, %v4151
        %v4158 = vpack.c.b16 %v4154, %v4153
        %4163 = vst.msk [vmem:[#allocation3 + $0x10] sm:$0xff] %vm702, %v4155
        %4164 = vst.msk [vmem:[#allocation3 + $0x28] sm:$0xff] %vm702, %v4156
        %4165 = vst.msk [vmem:[#allocation3 + $0x40] sm:$0xff] %vm702, %v4157
        %4166 = vst.msk [vmem:[#allocation3 + $0x58] sm:$0xff] %vm702, %v4158
        %v4167 = vld [vmem:[#allocation3] sm:$0xff]
        %v4168 = vld [vmem:[#allocation3 + $0x8] sm:$0xff]
        %v4169 = vld [vmem:[#allocation3 + $0x10] sm:$0xff]
        %v4170 = vld [vmem:[#allocation3 + $0x18] sm:$0xff]
        %v4171 = vld [vmem:[#allocation3 + $0x20] sm:$0xff]
        %v4172 = vld [vmem:[#allocation3 + $0x28] sm:$0xff]
        %v4173 = vld [vmem:[#allocation3 + $0x30] sm:$0xff]
        %v4174 = vld [vmem:[#allocation3 + $0x38] sm:$0xff]
        %v4175 = vld [vmem:[#allocation3 + $0x40] sm:$0xff]
        %v4176 = vld [vmem:[#allocation3 + $0x48] sm:$0xff]
        %v4177 = vld [vmem:[#allocation3 + $0x50] sm:$0xff]
        %v4178 = vld [vmem:[#allocation3 + $0x58] sm:$0xff]
        %v4179 = vld [vmem:[%s5] sm:$0xf]
        %v4180 = vld [vmem:[%s5 + $0x4] sm:$0xf]
        %v4181 = vld [vmem:[%s5 + $0x8] sm:$0xf]
        %v4182 = vld [vmem:[%s5 + $0xc] sm:$0xf]
        %v4183 = vld [vmem:[%s5 + $0x10] sm:$0xf]
        %v4184 = vld [vmem:[%s5 + $0x14] sm:$0xf]
        %v4185 = vld [vmem:[%s5 + $0x18] sm:$0xf]
        %v4186 = vld [vmem:[%s5 + $0x1c] sm:$0xf]
        %v4187 = vld [vmem:[%s5 + $0x20] sm:$0xf]
        %v4188 = vld [vmem:[%s5 + $0x24] sm:$0xf]
        %v4189 = vld [vmem:[%s5 + $0x28] sm:$0xf]
        %v4190 = vld [vmem:[%s5 + $0x2c] sm:$0xf]
        %v4191 = vld [vmem:[%s5 + $0x30] sm:$0xf]
        %v4192 = vld [vmem:[%s5 + $0x34] sm:$0xf]
        %v4193 = vld [vmem:[%s5 + $0x38] sm:$0xf]
        %v4194 = vld [vmem:[%s5 + $0x3c] sm:$0xf]
        %v4195 = vld [vmem:[%s5 + $0x40] sm:$0xf]
        %v4196 = vld [vmem:[%s5 + $0x44] sm:$0xf]
        %v4197 = vld [vmem:[%s5 + $0x48] sm:$0xf]
        %v4198 = vld [vmem:[%s5 + $0x4c] sm:$0xf]
        %v4199 = vld [vmem:[%s5 + $0x50] sm:$0xf]
        %v4200 = vld [vmem:[%s5 + $0x54] sm:$0xf]
        %v4201 = vld [vmem:[%s5 + $0x58] sm:$0xf]
        %v4202 = vld [vmem:[%s5 + $0x5c] sm:$0xf]
        %v4203 = vld [vmem:[%s5 + $0x60] sm:$0xf]
        %v4204 = vld [vmem:[%s5 + $0x64] sm:$0xf]
        %v4205 = vld [vmem:[%s5 + $0x68] sm:$0xf]
        %v4206 = vld [vmem:[%s5 + $0x6c] sm:$0xf]
        %v4207 = vld [vmem:[%s5 + $0x70] sm:$0xf]
        %v4208 = vld [vmem:[%s5 + $0x74] sm:$0xf]
        %v4209 = vld [vmem:[%s5 + $0x78] sm:$0xf]
        %v4210 = vld [vmem:[%s5 + $0x7c] sm:$0xf]
        %v4211 = vld [vmem:[%s5 + $0x80] sm:$0xf]
        %v4212 = vld [vmem:[%s5 + $0x84] sm:$0xf]
        %v4213 = vld [vmem:[%s5 + $0x88] sm:$0xf]
        %v4214 = vld [vmem:[%s5 + $0x8c] sm:$0xf]
        %v4215 = vld [vmem:[%s6] sm:$0x1]
        %v4217 = vlaneseq
        %v4218 = vshrl.u32 %v4217, 7
        %v4219 = vsub.s32 0, %v4218
        %v4220 = vrot.slane %v4215, %v4219
        %v4258 = vunpack.c.l.b16 %v4179
        %v4259 = vunpack.c.l.b16 %v4180
        %v4260 = vunpack.c.l.b16 %v4181
        %v4261 = vunpack.c.l.b16 %v4182
        %v4262 = vunpack.c.l.b16 %v4183
        %v4263 = vunpack.c.l.b16 %v4184
        %v4264 = vunpack.c.l.b16 %v4185
        %v4265 = vunpack.c.l.b16 %v4186
        %v4266 = vunpack.c.l.b16 %v4187
        %v4267 = vunpack.c.l.b16 %v4188
        %v4268 = vunpack.c.l.b16 %v4189
        %v4269 = vunpack.c.l.b16 %v4190
        %v4270 = vunpack.c.l.b16 %v4191
        %v4271 = vunpack.c.l.b16 %v4192
        %v4272 = vunpack.c.l.b16 %v4193
        %v4273 = vunpack.c.l.b16 %v4194
        %v4274 = vunpack.c.l.b16 %v4195
        %v4275 = vunpack.c.l.b16 %v4196
        %v4276 = vunpack.c.l.b16 %v4197
        %v4277 = vunpack.c.l.b16 %v4198
        %v4278 = vunpack.c.l.b16 %v4199
        %v4279 = vunpack.c.l.b16 %v4200
        %v4280 = vunpack.c.l.b16 %v4201
        %v4281 = vunpack.c.l.b16 %v4202
        %v4282 = vunpack.c.l.b16 %v4203
        %v4283 = vunpack.c.l.b16 %v4204
        %v4284 = vunpack.c.l.b16 %v4205
        %v4285 = vunpack.c.l.b16 %v4206
        %v4286 = vunpack.c.l.b16 %v4207
        %v4287 = vunpack.c.l.b16 %v4208
        %v4288 = vunpack.c.l.b16 %v4209
        %v4289 = vunpack.c.l.b16 %v4210
        %v4290 = vunpack.c.l.b16 %v4211
        %v4291 = vunpack.c.l.b16 %v4212
        %v4292 = vunpack.c.l.b16 %v4213
        %v4293 = vunpack.c.l.b16 %v4214
        %v4294 = vpack.c.b16 %v4259, %v4258
        %v4295 = vpack.c.b16 %v4261, %v4260
        %v4296 = vpack.c.b16 %v4263, %v4262
        %v4297 = vpack.c.b16 %v4265, %v4264
        %v4298 = vpack.c.b16 %v4267, %v4266
        %v4299 = vpack.c.b16 %v4269, %v4268
        %v4300 = vpack.c.b16 %v4271, %v4270
        %v4301 = vpack.c.b16 %v4273, %v4272
        %v4302 = vpack.c.b16 %v4275, %v4274
        %v4303 = vpack.c.b16 %v4277, %v4276
        %v4304 = vpack.c.b16 %v4279, %v4278
        %v4305 = vpack.c.b16 %v4281, %v4280
        %v4306 = vpack.c.b16 %v4283, %v4282
        %v4307 = vpack.c.b16 %v4285, %v4284
        %v4308 = vpack.c.b16 %v4287, %v4286
        %v4309 = vpack.c.b16 %v4289, %v4288
        %v4310 = vpack.c.b16 %v4291, %v4290
        %v4311 = vpack.c.b16 %v4293, %v4292
        %v4331 = vsel %vm702, %v4169, 0
        %v4334 = vsel %vm702, %v4172, 0
        %v4337 = vsel %vm702, %v4175, 0
        %v4340 = vsel %vm702, %v4178, 0
        %4342 = vmatprep.subr.bf16.mxu0 0
        %4343 = vmatpush1.bf16.msra.mxu0 %v4294
        %4344 = vmatprep.subr.bf16.mxu0 0
        %4345 = vmatpush1.bf16.msra.mxu0 %v4295
        %4346 = vmatprep.subr.bf16.mxu0 0
        %4347 = vmatpush1.bf16.msra.mxu0 %v4296
        %4348 = vmatprep.subr.bf16.mxu0 0
        %4349 = vmatpush1.bf16.msra.mxu0 %v4297
        %4350 = vmatprep.subr.bf16.mxu0 0
        %4351 = vmatpush1.bf16.msra.mxu0 %v4298
        %4352 = vmatprep.subr.bf16.mxu0 0
        %4353 = vmatpush1.bf16.msra.mxu0 %v4299
        %4354 = vmatprep.subr.bf16.mxu0 0
        %4355 = vmatpush1.bf16.msra.mxu0 %v4300
        %4356 = vmatprep.subr.bf16.mxu0 0
        %4357 = vmatpush1.bf16.msra.mxu0 %v4301
        %4358 = vmatprep.subr.bf16.mxu0 0
        %4359 = vmatpush1.bf16.msra.mxu0 %v4302
        %4360 = vmatprep.subr.bf16.mxu0 0
        %4361 = vmatpush1.bf16.msra.mxu0 %v4303
        %4362 = vmatprep.subr.bf16.mxu0 0
        %4363 = vmatpush1.bf16.msra.mxu0 %v4304
        %4364 = vmatprep.subr.bf16.mxu0 0
        %4365 = vmatpush1.bf16.msra.mxu0 %v4305
        %4366 = vmatprep.subr.bf16.mxu0 0
        %4367 = vmatpush1.bf16.msra.mxu0 %v4306
        %4368 = vmatprep.subr.bf16.mxu0 0
        %4369 = vmatpush1.bf16.msra.mxu0 %v4307
        %4370 = vmatprep.subr.bf16.mxu0 0
        %4371 = vmatpush1.bf16.msra.mxu0 %v4308
        %4372 = vmatprep.subr.bf16.mxu0 0
        %4373 = vmatpush1.bf16.msra.mxu0 %v4309
        %4374 = vmatprep.mubr.bf16.mxu0 %v4168
        %4375 = vmatmul.mubr.bf16.gmra.mrb[0].mxu0 %v4167
        %v4376 = vpop.f32.mrb[0].mxu0
        %v4377 = vadd.f32 %v4220, %v4376
        %v4378 = vpop.f32.mrb[0].mxu0
        %v4379 = vpop.f32.mrb[0].mxu0
        %v4380 = vadd.f32 %v4220, %v4379
        %v4381 = vpop.f32.mrb[0].mxu0
        %4382 = vmatprep.mubr.bf16.mxu0 %v4171
        %4383 = vmatmul.mubr.bf16.gmra.mrb[0].mxu0 %v4170
        %v4384 = vpop.f32.mrb[0].mxu0
        %v4385 = vadd.f32 %v4220, %v4384
        %v4386 = vpop.f32.mrb[0].mxu0
        %v4387 = vpop.f32.mrb[0].mxu0
        %v4388 = vadd.f32 %v4220, %v4387
        %v4389 = vpop.f32.mrb[0].mxu0
        %4390 = vmatprep.mubr.bf16.mxu0 %v4174
        %4391 = vmatmul.mubr.bf16.gmra.mrb[0].mxu0 %v4173
        %v4392 = vpop.f32.mrb[0].mxu0
        %v4393 = vadd.f32 %v4220, %v4392
        %v4394 = vpop.f32.mrb[0].mxu0
        %v4395 = vpop.f32.mrb[0].mxu0
        %v4396 = vadd.f32 %v4220, %v4395
        %v4397 = vpop.f32.mrb[0].mxu0
        %4398 = vmatprep.mubr.bf16.mxu0 %v4177
        %4399 = vmatmul.mubr.bf16.gmra.mrb[0].mxu0 %v4176
        %v4400 = vpop.f32.mrb[0].mxu0
        %v4401 = vadd.f32 %v4220, %v4400
        %v4402 = vpop.f32.mrb[0].mxu0
        %v4403 = vpop.f32.mrb[0].mxu0
        %v4404 = vadd.f32 %v4220, %v4403
        %v4405 = vpop.f32.mrb[0].mxu0
        %4406 = vdwg.mxu0
        %4407 = vmatprep.subr.bf16.mxu0 0
        %4408 = vmatpush1.bf16.msra.mxu0 %v4310
        %4409 = vmatprep.subr.bf16.mxu0 0
        %4410 = vmatpush1.bf16.msra.mxu0 %v4311
        %4411 = vmatprep.subr.bf16.mxu0 0
        %4412 = vmatpush1.bf16.msra.mxu0 0
        %4413 = vmatprep.subr.bf16.mxu0 0
        %4414 = vmatpush1.bf16.msra.mxu0 0
        %4415 = vmatprep.subr.bf16.mxu0 0
        %4416 = vmatpush1.bf16.msra.mxu0 0
        %4417 = vmatprep.subr.bf16.mxu0 0
        %4418 = vmatpush1.bf16.msra.mxu0 0
        %4419 = vmatprep.subr.bf16.mxu0 0
        %4420 = vmatpush1.bf16.msra.mxu0 0
        %4421 = vmatprep.subr.bf16.mxu0 0
        %4422 = vmatpush1.bf16.msra.mxu0 0
        %4423 = vmatprep.subr.bf16.mxu0 0
        %4424 = vmatpush1.bf16.msra.mxu0 0
        %4425 = vmatprep.subr.bf16.mxu0 0
        %4426 = vmatpush1.bf16.msra.mxu0 0
        %4427 = vmatprep.subr.bf16.mxu0 0
        %4428 = vmatpush1.bf16.msra.mxu0 0
        %4429 = vmatprep.subr.bf16.mxu0 0
        %4430 = vmatpush1.bf16.msra.mxu0 0
        %4431 = vmatprep.subr.bf16.mxu0 0
        %4432 = vmatpush1.bf16.msra.mxu0 0
        %4433 = vmatprep.subr.bf16.mxu0 0
        %4434 = vmatpush1.bf16.msra.mxu0 0
        %4435 = vmatprep.subr.bf16.mxu0 0
        %4436 = vmatpush1.bf16.msra.mxu0 0
        %4437 = vmatprep.subr.bf16.mxu0 0
        %4438 = vmatpush1.bf16.msra.mxu0 0
        %4439 = vmatprep.mubr.bf16.mxu0 0
        %4440 = vmatmul.mubr.bf16.gmra.mrb[0].mxu0 %v4331
        %v4441 = vpop.f32.mrb[0].mxu0
        %v4442 = vadd.f32 %v4377, %v4441
        %v4443 = vpop.f32.mrb[0].mxu0
        %v4444 = vpop.f32.mrb[0].mxu0
        %v4445 = vadd.f32 %v4380, %v4444
        %v4446 = vpop.f32.mrb[0].mxu0
        %4447 = vmatprep.mubr.bf16.mxu0 0
        %4448 = vmatmul.mubr.bf16.gmra.mrb[0].mxu0 %v4334
        %v4449 = vpop.f32.mrb[0].mxu0
        %v4450 = vadd.f32 %v4385, %v4449
        %v4451 = vpop.f32.mrb[0].mxu0
        %v4452 = vpop.f32.mrb[0].mxu0
        %v4453 = vadd.f32 %v4388, %v4452
        %v4454 = vpop.f32.mrb[0].mxu0
        %4455 = vmatprep.mubr.bf16.mxu0 0
        %4456 = vmatmul.mubr.bf16.gmra.mrb[0].mxu0 %v4337
        %v4457 = vpop.f32.mrb[0].mxu0
        %v4458 = vadd.f32 %v4393, %v4457
        %v4459 = vpop.f32.mrb[0].mxu0
        %v4460 = vpop.f32.mrb[0].mxu0
        %v4461 = vadd.f32 %v4396, %v4460
        %v4462 = vpop.f32.mrb[0].mxu0
        %4463 = vmatprep.mubr.bf16.mxu0 0
        %4464 = vmatmul.mubr.bf16.gmra.mrb[0].mxu0 %v4340
        %v4465 = vpop.f32.mrb[0].mxu0
        %v4466 = vadd.f32 %v4401, %v4465
        %v4467 = vpop.f32.mrb[0].mxu0
        %v4468 = vpop.f32.mrb[0].mxu0
        %v4469 = vadd.f32 %v4404, %v4468
        %v4470 = vpop.f32.mrb[0].mxu0
        %4471 = vdwg.mxu0
        %v4472 = vmax.f32 %v4442, 0.0
        %v4473 = vmax.f32 %v4445, 0.0
        %v4474 = vmax.f32 %v4450, 0.0
        %v4475 = vmax.f32 %v4453, 0.0
        %v4476 = vmax.f32 %v4458, 0.0
        %v4477 = vmax.f32 %v4461, 0.0
        %v4478 = vmax.f32 %v4466, 0.0
        %v4479 = vmax.f32 %v4469, 0.0
        %v4480 = vpack.c.bf16 %v4473, %v4472
        %v4481 = vpack.c.bf16 %v4475, %v4474
        %v4482 = vpack.c.bf16 %v4477, %v4476
        %v4483 = vpack.c.bf16 %v4479, %v4478
        %v4488 = vunpack.c.l.b16 %v4480
        %v4489 = vunpack.c.h.b16 %v4480
        %v4490 = vunpack.c.l.b16 %v4481
        %v4491 = vunpack.c.h.b16 %v4481
        %v4492 = vunpack.c.l.b16 %v4482
        %v4493 = vunpack.c.h.b16 %v4482
        %v4494 = vunpack.c.l.b16 %v4483
        %v4495 = vunpack.c.h.b16 %v4483
        %v4496 = vpack.c.b16 %v4488, %v4488
        %v4497 = vpack.c.b16 %v4489, %v4489
        %v4498 = vpack.c.b16 %v4490, %v4490
        %v4499 = vpack.c.b16 %v4491, %v4491
        %v4500 = vpack.c.b16 %v4492, %v4492
        %v4501 = vpack.c.b16 %v4493, %v4493
        %v4502 = vpack.c.b16 %v4494, %v4494
        %v4503 = vpack.c.b16 %v4495, %v4495
        %v4505 = vshrl.u32 %v4496, 16
        %v4507 = vrot.slane %v4505, 7
        %v4508 = vshll.u32 %v4496, 16
        %v4510 = vor.u32 %v4507, %v4508
        %v4511 = vrot.slane %v4507, 4
        %v4513 = vshrl.u32 %v4497, 16
        %v4515 = vrot.slane %v4513, 7
        %v4516 = vshll.u32 %v4497, 16
        %v4518 = vor.u32 %v4515, %v4516
        %v4519 = vrot.slane %v4515, 4
        %v4521 = vshrl.u32 %v4498, 16
        %v4523 = vrot.slane %v4521, 7
        %v4524 = vshll.u32 %v4498, 16
        %v4526 = vor.u32 %v4523, %v4524
        %v4527 = vrot.slane %v4523, 4
        %v4529 = vshrl.u32 %v4499, 16
        %v4531 = vrot.slane %v4529, 7
        %v4532 = vshll.u32 %v4499, 16
        %v4534 = vor.u32 %v4531, %v4532
        %v4535 = vrot.slane %v4531, 4
        %v4537 = vshrl.u32 %v4500, 16
        %v4539 = vrot.slane %v4537, 7
        %v4540 = vshll.u32 %v4500, 16
        %v4542 = vor.u32 %v4539, %v4540
        %v4543 = vrot.slane %v4539, 4
        %v4545 = vshrl.u32 %v4501, 16
        %v4547 = vrot.slane %v4545, 7
        %v4548 = vshll.u32 %v4501, 16
        %v4550 = vor.u32 %v4547, %v4548
        %v4551 = vrot.slane %v4547, 4
        %v4553 = vshrl.u32 %v4502, 16
        %v4555 = vrot.slane %v4553, 7
        %v4556 = vshll.u32 %v4502, 16
        %v4558 = vor.u32 %v4555, %v4556
        %v4559 = vrot.slane %v4555, 4
        %v4561 = vshrl.u32 %v4503, 16
        %v4563 = vrot.slane %v4561, 7
        %v4564 = vshll.u32 %v4503, 16
        %v4566 = vor.u32 %v4563, %v4564
        %v4567 = vrot.slane %v4563, 4
        %v4584 = vld [vmem:[%s619] sm:$0xf]
        %v4585 = vsel %vm621, %v4510, %v4584
        %4586 = vst [vmem:[%s619] sm:$0xf] %v4585
        %v4587 = vld [vmem:[%s619 + $0x4] sm:$0x1]
        %v4588 = vsel %vm459, %v4511, %v4587
        %4589 = vst [vmem:[%s619 + $0x4] sm:$0x1] %v4588
        %v4590 = vld [vmem:[%s619 + $0x8] sm:$0xf]
        %v4591 = vsel %vm621, %v4518, %v4590
        %4592 = vst [vmem:[%s619 + $0x8] sm:$0xf] %v4591
        %v4593 = vld [vmem:[%s619 + $0xc] sm:$0x1]
        %v4594 = vsel %vm459, %v4519, %v4593
        %4595 = vst [vmem:[%s619 + $0xc] sm:$0x1] %v4594
        %v4596 = vld [vmem:[%s619 + $0x10] sm:$0xf]
        %v4597 = vsel %vm621, %v4526, %v4596
        %4598 = vst [vmem:[%s619 + $0x10] sm:$0xf] %v4597
        %v4599 = vld [vmem:[%s619 + $0x14] sm:$0x1]
        %v4600 = vsel %vm459, %v4527, %v4599
        %4601 = vst [vmem:[%s619 + $0x14] sm:$0x1] %v4600
        %v4602 = vld [vmem:[%s619 + $0x18] sm:$0xf]
        %v4603 = vsel %vm621, %v4534, %v4602
        %4604 = vst [vmem:[%s619 + $0x18] sm:$0xf] %v4603
        %v4605 = vld [vmem:[%s619 + $0x1c] sm:$0x1]
        %v4606 = vsel %vm459, %v4535, %v4605
        %4607 = vst [vmem:[%s619 + $0x1c] sm:$0x1] %v4606
        %v4608 = vld [vmem:[%s619 + $0x20] sm:$0xf]
        %v4609 = vsel %vm621, %v4542, %v4608
        %4610 = vst [vmem:[%s619 + $0x20] sm:$0xf] %v4609
        %v4611 = vld [vmem:[%s619 + $0x24] sm:$0x1]
        %v4612 = vsel %vm459, %v4543, %v4611
        %4613 = vst [vmem:[%s619 + $0x24] sm:$0x1] %v4612
        %v4614 = vld [vmem:[%s619 + $0x28] sm:$0xf]
        %v4615 = vsel %vm621, %v4550, %v4614
        %4616 = vst [vmem:[%s619 + $0x28] sm:$0xf] %v4615
        %v4617 = vld [vmem:[%s619 + $0x2c] sm:$0x1]
        %v4618 = vsel %vm459, %v4551, %v4617
        %4619 = vst [vmem:[%s619 + $0x2c] sm:$0x1] %v4618
        %v4620 = vld [vmem:[%s619 + $0x30] sm:$0xf]
        %v4621 = vsel %vm621, %v4558, %v4620
        %4622 = vst [vmem:[%s619 + $0x30] sm:$0xf] %v4621
        %v4623 = vld [vmem:[%s619 + $0x34] sm:$0x1]
        %v4624 = vsel %vm459, %v4559, %v4623
        %4625 = vst [vmem:[%s619 + $0x34] sm:$0x1] %v4624
        %v4626 = vld [vmem:[%s619 + $0x38] sm:$0xf]
        %v4627 = vsel %vm621, %v4566, %v4626
        %4628 = vst [vmem:[%s619 + $0x38] sm:$0xf] %v4627
        %v4629 = vld [vmem:[%s619 + $0x3c] sm:$0x1]
        %v4630 = vsel %vm459, %v4567, %v4629
        %4631 = vst [vmem:[%s619 + $0x3c] sm:$0x1] %v4630
        %v4632 = vld [vmem:[#allocation2] sm:$0xf]
        %v4633 = vld [vmem:[#allocation2 + $0x8] sm:$0xf]
        %v4634 = vld [vmem:[#allocation2 + $0x10] sm:$0xf]
        %v4635 = vld [vmem:[#allocation2 + $0x18] sm:$0xf]
        %v4636 = vld [vmem:[#allocation2 + $0x20] sm:$0xf]
        %v4637 = vld [vmem:[#allocation2 + $0x28] sm:$0xf]
        %v4638 = vld [vmem:[#allocation2 + $0x30] sm:$0xf]
        %v4639 = vld [vmem:[#allocation2 + $0x38] sm:$0xf]
        %v4648 = vunpack.c.l.b16 %v4632
        %v4649 = vunpack.c.l.b16 %v4633
        %v4650 = vunpack.c.l.b16 %v4634
        %v4651 = vunpack.c.l.b16 %v4635
        %v4652 = vunpack.c.l.b16 %v4636
        %v4653 = vunpack.c.l.b16 %v4637
        %v4654 = vunpack.c.l.b16 %v4638
        %v4655 = vunpack.c.l.b16 %v4639
        %v4656 = vpack.c.b16 %v4649, %v4648
        %v4657 = vpack.c.b16 %v4651, %v4650
        %v4658 = vpack.c.b16 %v4653, %v4652
        %v4659 = vpack.c.b16 %v4655, %v4654
        %4664 = vst.msk [vmem:[#allocation3] sm:$0xff] %vm702, %v4656
        %4665 = vst.msk [vmem:[#allocation3 + $0x18] sm:$0xff] %vm702, %v4657
        %4666 = vst.msk [vmem:[#allocation3 + $0x30] sm:$0xff] %vm702, %v4658
        %4667 = vst.msk [vmem:[#allocation3 + $0x48] sm:$0xff] %vm702, %v4659
        %v4668 = vld [vmem:[#allocation2] sm:$0xf]
        %v4669 = vld [vmem:[#allocation2 + $0x4] sm:$0x1]
        %v4670 = vld [vmem:[#allocation2 + $0x8] sm:$0xf]
        %v4671 = vld [vmem:[#allocation2 + $0xc] sm:$0x1]
        %v4672 = vld [vmem:[#allocation2 + $0x10] sm:$0xf]
        %v4673 = vld [vmem:[#allocation2 + $0x14] sm:$0x1]
        %v4674 = vld [vmem:[#allocation2 + $0x18] sm:$0xf]
        %v4675 = vld [vmem:[#allocation2 + $0x1c] sm:$0x1]
        %v4676 = vld [vmem:[#allocation2 + $0x20] sm:$0xf]
        %v4677 = vld [vmem:[#allocation2 + $0x24] sm:$0x1]
        %v4678 = vld [vmem:[#allocation2 + $0x28] sm:$0xf]
        %v4679 = vld [vmem:[#allocation2 + $0x2c] sm:$0x1]
        %v4680 = vld [vmem:[#allocation2 + $0x30] sm:$0xf]
        %v4681 = vld [vmem:[#allocation2 + $0x34] sm:$0x1]
        %v4682 = vld [vmem:[#allocation2 + $0x38] sm:$0xf]
        %v4683 = vld [vmem:[#allocation2 + $0x3c] sm:$0x1]
        %v4685 = vshrl.u32 %v4668, 16
        %v4687 = vrot.slane %v4685, 4
        %v4688 = vshll.u32 %v4668, 16
        %v4690 = vrot.slane %v4688, 5
        %v4691 = vor.u32 %v4687, %v4690
        %v4692 = vrot.slane %v4691, 4
        %v4694 = vshll.u32 %v4669, 16
        %v4696 = vrot.slane %v4694, 5
        %v4697 = vsel %vm725, %v4692, %v4696
        %v4699 = vshrl.u32 %v4670, 16
        %v4701 = vrot.slane %v4699, 4
        %v4702 = vshll.u32 %v4670, 16
        %v4704 = vrot.slane %v4702, 5
        %v4705 = vor.u32 %v4701, %v4704
        %v4706 = vrot.slane %v4705, 4
        %v4708 = vshll.u32 %v4671, 16
        %v4710 = vrot.slane %v4708, 5
        %v4711 = vsel %vm725, %v4706, %v4710
        %v4713 = vshrl.u32 %v4672, 16
        %v4715 = vrot.slane %v4713, 4
        %v4716 = vshll.u32 %v4672, 16
        %v4718 = vrot.slane %v4716, 5
        %v4719 = vor.u32 %v4715, %v4718
        %v4720 = vrot.slane %v4719, 4
        %v4722 = vshll.u32 %v4673, 16
        %v4724 = vrot.slane %v4722, 5
        %v4725 = vsel %vm725, %v4720, %v4724
        %v4727 = vshrl.u32 %v4674, 16
        %v4729 = vrot.slane %v4727, 4
        %v4730 = vshll.u32 %v4674, 16
        %v4732 = vrot.slane %v4730, 5
        %v4733 = vor.u32 %v4729, %v4732
        %v4734 = vrot.slane %v4733, 4
        %v4736 = vshll.u32 %v4675, 16
        %v4738 = vrot.slane %v4736, 5
        %v4739 = vsel %vm725, %v4734, %v4738
        %v4741 = vshrl.u32 %v4676, 16
        %v4743 = vrot.slane %v4741, 4
        %v4744 = vshll.u32 %v4676, 16
        %v4746 = vrot.slane %v4744, 5
        %v4747 = vor.u32 %v4743, %v4746
        %v4748 = vrot.slane %v4747, 4
        %v4750 = vshll.u32 %v4677, 16
        %v4752 = vrot.slane %v4750, 5
        %v4753 = vsel %vm725, %v4748, %v4752
        %v4755 = vshrl.u32 %v4678, 16
        %v4757 = vrot.slane %v4755, 4
        %v4758 = vshll.u32 %v4678, 16
        %v4760 = vrot.slane %v4758, 5
        %v4761 = vor.u32 %v4757, %v4760
        %v4762 = vrot.slane %v4761, 4
        %v4764 = vshll.u32 %v4679, 16
        %v4766 = vrot.slane %v4764, 5
        %v4767 = vsel %vm725, %v4762, %v4766
        %v4769 = vshrl.u32 %v4680, 16
        %v4771 = vrot.slane %v4769, 4
        %v4772 = vshll.u32 %v4680, 16
        %v4774 = vrot.slane %v4772, 5
        %v4775 = vor.u32 %v4771, %v4774
        %v4776 = vrot.slane %v4775, 4
        %v4778 = vshll.u32 %v4681, 16
        %v4780 = vrot.slane %v4778, 5
        %v4781 = vsel %vm725, %v4776, %v4780
        %v4783 = vshrl.u32 %v4682, 16
        %v4785 = vrot.slane %v4783, 4
        %v4786 = vshll.u32 %v4682, 16
        %v4788 = vrot.slane %v4786, 5
        %v4789 = vor.u32 %v4785, %v4788
        %v4790 = vrot.slane %v4789, 4
        %v4792 = vshll.u32 %v4683, 16
        %v4794 = vrot.slane %v4792, 5
        %v4795 = vsel %vm725, %v4790, %v4794
        %v4796 = vunpack.c.l.b16 %v4697
        %v4797 = vunpack.c.l.b16 %v4711
        %v4798 = vunpack.c.l.b16 %v4725
        %v4799 = vunpack.c.l.b16 %v4739
        %v4800 = vunpack.c.l.b16 %v4753
        %v4801 = vunpack.c.l.b16 %v4767
        %v4802 = vunpack.c.l.b16 %v4781
        %v4803 = vunpack.c.l.b16 %v4795
        %v4804 = vpack.c.b16 %v4797, %v4796
        %v4805 = vpack.c.b16 %v4799, %v4798
        %v4806 = vpack.c.b16 %v4801, %v4800
        %v4807 = vpack.c.b16 %v4803, %v4802
        %4808 = vrot.lane.b32.xlu0 %v4804, 32
        %v4809 = vpop.permute.xlu0 %4808
        %4810 = vrot.lane.b32.xlu0 %v4805, 32
        %v4811 = vpop.permute.xlu0 %4810
        %4812 = vrot.lane.b32.xlu0 %v4806, 32
        %v4813 = vpop.permute.xlu0 %4812
        %4814 = vrot.lane.b32.xlu0 %v4807, 32
        %v4815 = vpop.permute.xlu0 %4814
        %4820 = vst.msk [vmem:[#allocation3] sm:$0xff] %vm862, %v4809
        %4821 = vst.msk [vmem:[#allocation3 + $0x18] sm:$0xff] %vm862, %v4811
        %4822 = vst.msk [vmem:[#allocation3 + $0x30] sm:$0xff] %vm862, %v4813
        %4823 = vst.msk [vmem:[#allocation3 + $0x48] sm:$0xff] %vm862, %v4815
        %v4824 = vld [vmem:[#allocation2] sm:$0xe]
        %v4825 = vld [vmem:[#allocation2 + $0x4] sm:$0x1]
        %v4826 = vld [vmem:[#allocation2 + $0x8] sm:$0xe]
        %v4827 = vld [vmem:[#allocation2 + $0xc] sm:$0x1]
        %v4828 = vld [vmem:[#allocation2 + $0x10] sm:$0xe]
        %v4829 = vld [vmem:[#allocation2 + $0x14] sm:$0x1]
        %v4830 = vld [vmem:[#allocation2 + $0x18] sm:$0xe]
        %v4831 = vld [vmem:[#allocation2 + $0x1c] sm:$0x1]
        %v4832 = vld [vmem:[#allocation2 + $0x20] sm:$0xe]
        %v4833 = vld [vmem:[#allocation2 + $0x24] sm:$0x1]
        %v4834 = vld [vmem:[#allocation2 + $0x28] sm:$0xe]
        %v4835 = vld [vmem:[#allocation2 + $0x2c] sm:$0x1]
        %v4836 = vld [vmem:[#allocation2 + $0x30] sm:$0xe]
        %v4837 = vld [vmem:[#allocation2 + $0x34] sm:$0x1]
        %v4838 = vld [vmem:[#allocation2 + $0x38] sm:$0xe]
        %v4839 = vld [vmem:[#allocation2 + $0x3c] sm:$0x1]
        %v4856 = vrot.slane %v4824, 5
        %v4857 = vrot.slane %v4856, 4
        %v4858 = vrot.slane %v4825, 5
        %v4859 = vsel %vm901, %v4857, %v4858
        %v4860 = vrot.slane %v4826, 5
        %v4861 = vrot.slane %v4860, 4
        %v4862 = vrot.slane %v4827, 5
        %v4863 = vsel %vm901, %v4861, %v4862
        %v4864 = vrot.slane %v4828, 5
        %v4865 = vrot.slane %v4864, 4
        %v4866 = vrot.slane %v4829, 5
        %v4867 = vsel %vm901, %v4865, %v4866
        %v4868 = vrot.slane %v4830, 5
        %v4869 = vrot.slane %v4868, 4
        %v4870 = vrot.slane %v4831, 5
        %v4871 = vsel %vm901, %v4869, %v4870
        %v4872 = vrot.slane %v4832, 5
        %v4873 = vrot.slane %v4872, 4
        %v4874 = vrot.slane %v4833, 5
        %v4875 = vsel %vm901, %v4873, %v4874
        %v4876 = vrot.slane %v4834, 5
        %v4877 = vrot.slane %v4876, 4
        %v4878 = vrot.slane %v4835, 5
        %v4879 = vsel %vm901, %v4877, %v4878
        %v4880 = vrot.slane %v4836, 5
        %v4881 = vrot.slane %v4880, 4
        %v4882 = vrot.slane %v4837, 5
        %v4883 = vsel %vm901, %v4881, %v4882
        %v4884 = vrot.slane %v4838, 5
        %v4885 = vrot.slane %v4884, 4
        %v4886 = vrot.slane %v4839, 5
        %v4887 = vsel %vm901, %v4885, %v4886
        %v4888 = vunpack.c.l.b16 %v4859
        %v4889 = vunpack.c.l.b16 %v4863
        %v4890 = vunpack.c.l.b16 %v4867
        %v4891 = vunpack.c.l.b16 %v4871
        %v4892 = vunpack.c.l.b16 %v4875
        %v4893 = vunpack.c.l.b16 %v4879
        %v4894 = vunpack.c.l.b16 %v4883
        %v4895 = vunpack.c.l.b16 %v4887
        %v4896 = vpack.c.b16 %v4889, %v4888
        %v4897 = vpack.c.b16 %v4891, %v4890
        %v4898 = vpack.c.b16 %v4893, %v4892
        %v4899 = vpack.c.b16 %v4895, %v4894
        %4900 = vrot.lane.b32.xlu0 %v4896, 64
        %v4901 = vpop.permute.xlu0 %4900
        %4902 = vrot.lane.b32.xlu0 %v4897, 64
        %v4903 = vpop.permute.xlu0 %4902
        %4904 = vrot.lane.b32.xlu0 %v4898, 64
        %v4905 = vpop.permute.xlu0 %4904
        %4906 = vrot.lane.b32.xlu0 %v4899, 64
        %v4907 = vpop.permute.xlu0 %4906
        %4912 = vst.msk [vmem:[#allocation3] sm:$0xff] %vm958, %v4901
        %4913 = vst.msk [vmem:[#allocation3 + $0x18] sm:$0xff] %vm958, %v4903
        %4914 = vst.msk [vmem:[#allocation3 + $0x30] sm:$0xff] %vm958, %v4905
        %4915 = vst.msk [vmem:[#allocation3 + $0x48] sm:$0xff] %vm958, %v4907
        %v4916 = vld [vmem:[%s619] sm:$0xf]
        %v4917 = vld [vmem:[%s619 + $0x8] sm:$0xf]
        %v4918 = vld [vmem:[%s619 + $0x10] sm:$0xf]
        %v4919 = vld [vmem:[%s619 + $0x18] sm:$0xf]
        %v4920 = vld [vmem:[%s619 + $0x20] sm:$0xf]
        %v4921 = vld [vmem:[%s619 + $0x28] sm:$0xf]
        %v4922 = vld [vmem:[%s619 + $0x30] sm:$0xf]
        %v4923 = vld [vmem:[%s619 + $0x38] sm:$0xf]
        %v4932 = vunpack.c.l.b16 %v4916
        %v4933 = vunpack.c.l.b16 %v4917
        %v4934 = vunpack.c.l.b16 %v4918
        %v4935 = vunpack.c.l.b16 %v4919
        %v4936 = vunpack.c.l.b16 %v4920
        %v4937 = vunpack.c.l.b16 %v4921
        %v4938 = vunpack.c.l.b16 %v4922
        %v4939 = vunpack.c.l.b16 %v4923
        %v4940 = vpack.c.b16 %v4933, %v4932
        %v4941 = vpack.c.b16 %v4935, %v4934
        %v4942 = vpack.c.b16 %v4937, %v4936
        %v4943 = vpack.c.b16 %v4939, %v4938
        %4944 = vrot.lane.b32.xlu0 %v4940, 96
        %v4945 = vpop.permute.xlu0 %4944
        %4946 = vrot.lane.b32.xlu0 %v4941, 96
        %v4947 = vpop.permute.xlu0 %4946
        %4948 = vrot.lane.b32.xlu0 %v4942, 96
        %v4949 = vpop.permute.xlu0 %4948
        %4950 = vrot.lane.b32.xlu0 %v4943, 96
        %v4951 = vpop.permute.xlu0 %4950
        %4956 = vst.msk [vmem:[#allocation3] sm:$0xff] %vm1003, %v4945
        %4957 = vst.msk [vmem:[#allocation3 + $0x18] sm:$0xff] %vm1003, %v4947
        %4958 = vst.msk [vmem:[#allocation3 + $0x30] sm:$0xff] %vm1003, %v4949
        %4959 = vst.msk [vmem:[#allocation3 + $0x48] sm:$0xff] %vm1003, %v4951
        %v4960 = vld [vmem:[%s619] sm:$0xf]
        %v4961 = vld [vmem:[%s619 + $0x4] sm:$0x1]
        %v4962 = vld [vmem:[%s619 + $0x8] sm:$0xf]
        %v4963 = vld [vmem:[%s619 + $0xc] sm:$0x1]
        %v4964 = vld [vmem:[%s619 + $0x10] sm:$0xf]
        %v4965 = vld [vmem:[%s619 + $0x14] sm:$0x1]
        %v4966 = vld [vmem:[%s619 + $0x18] sm:$0xf]
        %v4967 = vld [vmem:[%s619 + $0x1c] sm:$0x1]
        %v4968 = vld [vmem:[%s619 + $0x20] sm:$0xf]
        %v4969 = vld [vmem:[%s619 + $0x24] sm:$0x1]
        %v4970 = vld [vmem:[%s619 + $0x28] sm:$0xf]
        %v4971 = vld [vmem:[%s619 + $0x2c] sm:$0x1]
        %v4972 = vld [vmem:[%s619 + $0x30] sm:$0xf]
        %v4973 = vld [vmem:[%s619 + $0x34] sm:$0x1]
        %v4974 = vld [vmem:[%s619 + $0x38] sm:$0xf]
        %v4975 = vld [vmem:[%s619 + $0x3c] sm:$0x1]
        %v4977 = vshrl.u32 %v4960, 16
        %v4979 = vrot.slane %v4977, 4
        %v4980 = vshll.u32 %v4960, 16
        %v4982 = vrot.slane %v4980, 5
        %v4983 = vor.u32 %v4979, %v4982
        %v4984 = vrot.slane %v4983, 4
        %v4986 = vshll.u32 %v4961, 16
        %v4988 = vrot.slane %v4986, 5
        %v4989 = vsel %vm725, %v4984, %v4988
        %v4991 = vshrl.u32 %v4962, 16
        %v4993 = vrot.slane %v4991, 4
        %v4994 = vshll.u32 %v4962, 16
        %v4996 = vrot.slane %v4994, 5
        %v4997 = vor.u32 %v4993, %v4996
        %v4998 = vrot.slane %v4997, 4
        %v5000 = vshll.u32 %v4963, 16
        %v5002 = vrot.slane %v5000, 5
        %v5003 = vsel %vm725, %v4998, %v5002
        %v5005 = vshrl.u32 %v4964, 16
        %v5007 = vrot.slane %v5005, 4
        %v5008 = vshll.u32 %v4964, 16
        %v5010 = vrot.slane %v5008, 5
        %v5011 = vor.u32 %v5007, %v5010
        %v5012 = vrot.slane %v5011, 4
        %v5014 = vshll.u32 %v4965, 16
        %v5016 = vrot.slane %v5014, 5
        %v5017 = vsel %vm725, %v5012, %v5016
        %v5019 = vshrl.u32 %v4966, 16
        %v5021 = vrot.slane %v5019, 4
        %v5022 = vshll.u32 %v4966, 16
        %v5024 = vrot.slane %v5022, 5
        %v5025 = vor.u32 %v5021, %v5024
        %v5026 = vrot.slane %v5025, 4
        %v5028 = vshll.u32 %v4967, 16
        %v5030 = vrot.slane %v5028, 5
        %v5031 = vsel %vm725, %v5026, %v5030
        %v5033 = vshrl.u32 %v4968, 16
        %v5035 = vrot.slane %v5033, 4
        %v5036 = vshll.u32 %v4968, 16
        %v5038 = vrot.slane %v5036, 5
        %v5039 = vor.u32 %v5035, %v5038
        %v5040 = vrot.slane %v5039, 4
        %v5042 = vshll.u32 %v4969, 16
        %v5044 = vrot.slane %v5042, 5
        %v5045 = vsel %vm725, %v5040, %v5044
        %v5047 = vshrl.u32 %v4970, 16
        %v5049 = vrot.slane %v5047, 4
        %v5050 = vshll.u32 %v4970, 16
        %v5052 = vrot.slane %v5050, 5
        %v5053 = vor.u32 %v5049, %v5052
        %v5054 = vrot.slane %v5053, 4
        %v5056 = vshll.u32 %v4971, 16
        %v5058 = vrot.slane %v5056, 5
        %v5059 = vsel %vm725, %v5054, %v5058
        %v5061 = vshrl.u32 %v4972, 16
        %v5063 = vrot.slane %v5061, 4
        %v5064 = vshll.u32 %v4972, 16
        %v5066 = vrot.slane %v5064, 5
        %v5067 = vor.u32 %v5063, %v5066
        %v5068 = vrot.slane %v5067, 4
        %v5070 = vshll.u32 %v4973, 16
        %v5072 = vrot.slane %v5070, 5
        %v5073 = vsel %vm725, %v5068, %v5072
        %v5075 = vshrl.u32 %v4974, 16
        %v5077 = vrot.slane %v5075, 4
        %v5078 = vshll.u32 %v4974, 16
        %v5080 = vrot.slane %v5078, 5
        %v5081 = vor.u32 %v5077, %v5080
        %v5082 = vrot.slane %v5081, 4
        %v5084 = vshll.u32 %v4975, 16
        %v5086 = vrot.slane %v5084, 5
        %v5087 = vsel %vm725, %v5082, %v5086
        %v5088 = vunpack.c.l.b16 %v4989
        %v5089 = vunpack.c.l.b16 %v5003
        %v5090 = vunpack.c.l.b16 %v5017
        %v5091 = vunpack.c.l.b16 %v5031
        %v5092 = vunpack.c.l.b16 %v5045
        %v5093 = vunpack.c.l.b16 %v5059
        %v5094 = vunpack.c.l.b16 %v5073
        %v5095 = vunpack.c.l.b16 %v5087
        %v5096 = vpack.c.b16 %v5089, %v5088
        %v5097 = vpack.c.b16 %v5091, %v5090
        %v5098 = vpack.c.b16 %v5093, %v5092
        %v5099 = vpack.c.b16 %v5095, %v5094
        %5104 = vst.msk [vmem:[#allocation3 + $0x8] sm:$0xff] %vm702, %v5096
        %5105 = vst.msk [vmem:[#allocation3 + $0x20] sm:$0xff] %vm702, %v5097
        %5106 = vst.msk [vmem:[#allocation3 + $0x38] sm:$0xff] %vm702, %v5098
        %5107 = vst.msk [vmem:[#allocation3 + $0x50] sm:$0xff] %vm702, %v5099
        %v5108 = vld [vmem:[%s619] sm:$0xe]
        %v5109 = vld [vmem:[%s619 + $0x4] sm:$0x1]
        %v5110 = vld [vmem:[%s619 + $0x8] sm:$0xe]
        %v5111 = vld [vmem:[%s619 + $0xc] sm:$0x1]
        %v5112 = vld [vmem:[%s619 + $0x10] sm:$0xe]
        %v5113 = vld [vmem:[%s619 + $0x14] sm:$0x1]
        %v5114 = vld [vmem:[%s619 + $0x18] sm:$0xe]
        %v5115 = vld [vmem:[%s619 + $0x1c] sm:$0x1]
        %v5116 = vld [vmem:[%s619 + $0x20] sm:$0xe]
        %v5117 = vld [vmem:[%s619 + $0x24] sm:$0x1]
        %v5118 = vld [vmem:[%s619 + $0x28] sm:$0xe]
        %v5119 = vld [vmem:[%s619 + $0x2c] sm:$0x1]
        %v5120 = vld [vmem:[%s619 + $0x30] sm:$0xe]
        %v5121 = vld [vmem:[%s619 + $0x34] sm:$0x1]
        %v5122 = vld [vmem:[%s619 + $0x38] sm:$0xe]
        %v5123 = vld [vmem:[%s619 + $0x3c] sm:$0x1]
        %v5140 = vrot.slane %v5108, 5
        %v5141 = vrot.slane %v5140, 4
        %v5142 = vrot.slane %v5109, 5
        %v5143 = vsel %vm901, %v5141, %v5142
        %v5144 = vrot.slane %v5110, 5
        %v5145 = vrot.slane %v5144, 4
        %v5146 = vrot.slane %v5111, 5
        %v5147 = vsel %vm901, %v5145, %v5146
        %v5148 = vrot.slane %v5112, 5
        %v5149 = vrot.slane %v5148, 4
        %v5150 = vrot.slane %v5113, 5
        %v5151 = vsel %vm901, %v5149, %v5150
        %v5152 = vrot.slane %v5114, 5
        %v5153 = vrot.slane %v5152, 4
        %v5154 = vrot.slane %v5115, 5
        %v5155 = vsel %vm901, %v5153, %v5154
        %v5156 = vrot.slane %v5116, 5
        %v5157 = vrot.slane %v5156, 4
        %v5158 = vrot.slane %v5117, 5
        %v5159 = vsel %vm901, %v5157, %v5158
        %v5160 = vrot.slane %v5118, 5
        %v5161 = vrot.slane %v5160, 4
        %v5162 = vrot.slane %v5119, 5
        %v5163 = vsel %vm901, %v5161, %v5162
        %v5164 = vrot.slane %v5120, 5
        %v5165 = vrot.slane %v5164, 4
        %v5166 = vrot.slane %v5121, 5
        %v5167 = vsel %vm901, %v5165, %v5166
        %v5168 = vrot.slane %v5122, 5
        %v5169 = vrot.slane %v5168, 4
        %v5170 = vrot.slane %v5123, 5
        %v5171 = vsel %vm901, %v5169, %v5170
        %v5172 = vunpack.c.l.b16 %v5143
        %v5173 = vunpack.c.l.b16 %v5147
        %v5174 = vunpack.c.l.b16 %v5151
        %v5175 = vunpack.c.l.b16 %v5155
        %v5176 = vunpack.c.l.b16 %v5159
        %v5177 = vunpack.c.l.b16 %v5163
        %v5178 = vunpack.c.l.b16 %v5167
        %v5179 = vunpack.c.l.b16 %v5171
        %v5180 = vpack.c.b16 %v5173, %v5172
        %v5181 = vpack.c.b16 %v5175, %v5174
        %v5182 = vpack.c.b16 %v5177, %v5176
        %v5183 = vpack.c.b16 %v5179, %v5178
        %5184 = vrot.lane.b32.xlu0 %v5180, 32
        %v5185 = vpop.permute.xlu0 %5184
        %5186 = vrot.lane.b32.xlu0 %v5181, 32
        %v5187 = vpop.permute.xlu0 %5186
        %5188 = vrot.lane.b32.xlu0 %v5182, 32
        %v5189 = vpop.permute.xlu0 %5188
        %5190 = vrot.lane.b32.xlu0 %v5183, 32
        %v5191 = vpop.permute.xlu0 %5190
        %5196 = vst.msk [vmem:[#allocation3 + $0x8] sm:$0xff] %vm862, %v5185
        %5197 = vst.msk [vmem:[#allocation3 + $0x20] sm:$0xff] %vm862, %v5187
        %5198 = vst.msk [vmem:[#allocation3 + $0x38] sm:$0xff] %vm862, %v5189
        %5199 = vst.msk [vmem:[#allocation3 + $0x50] sm:$0xff] %vm862, %v5191
        %v5200 = vld [vmem:[%s1248] sm:$0xf]
        %v5201 = vld [vmem:[%s1248 + $0x8] sm:$0xf]
        %v5202 = vld [vmem:[%s1248 + $0x10] sm:$0xf]
        %v5203 = vld [vmem:[%s1248 + $0x18] sm:$0xf]
        %v5204 = vld [vmem:[%s1248 + $0x20] sm:$0xf]
        %v5205 = vld [vmem:[%s1248 + $0x28] sm:$0xf]
        %v5206 = vld [vmem:[%s1248 + $0x30] sm:$0xf]
        %v5207 = vld [vmem:[%s1248 + $0x38] sm:$0xf]
        %v5216 = vunpack.c.l.b16 %v5200
        %v5217 = vunpack.c.l.b16 %v5201
        %v5218 = vunpack.c.l.b16 %v5202
        %v5219 = vunpack.c.l.b16 %v5203
        %v5220 = vunpack.c.l.b16 %v5204
        %v5221 = vunpack.c.l.b16 %v5205
        %v5222 = vunpack.c.l.b16 %v5206
        %v5223 = vunpack.c.l.b16 %v5207
        %v5224 = vpack.c.b16 %v5217, %v5216
        %v5225 = vpack.c.b16 %v5219, %v5218
        %v5226 = vpack.c.b16 %v5221, %v5220
        %v5227 = vpack.c.b16 %v5223, %v5222
        %5228 = vrot.lane.b32.xlu0 %v5224, 64
        %v5229 = vpop.permute.xlu0 %5228
        %5230 = vrot.lane.b32.xlu0 %v5225, 64
        %v5231 = vpop.permute.xlu0 %5230
        %5232 = vrot.lane.b32.xlu0 %v5226, 64
        %v5233 = vpop.permute.xlu0 %5232
        %5234 = vrot.lane.b32.xlu0 %v5227, 64
        %v5235 = vpop.permute.xlu0 %5234
        %5240 = vst.msk [vmem:[#allocation3 + $0x8] sm:$0xff] %vm958, %v5229
        %5241 = vst.msk [vmem:[#allocation3 + $0x20] sm:$0xff] %vm958, %v5231
        %5242 = vst.msk [vmem:[#allocation3 + $0x38] sm:$0xff] %vm958, %v5233
        %5243 = vst.msk [vmem:[#allocation3 + $0x50] sm:$0xff] %vm958, %v5235
        %v5244 = vld [vmem:[%s1248] sm:$0xf]
        %v5245 = vld [vmem:[%s1248 + $0x4] sm:$0x1]
        %v5246 = vld [vmem:[%s1248 + $0x8] sm:$0xf]
        %v5247 = vld [vmem:[%s1248 + $0xc] sm:$0x1]
        %v5248 = vld [vmem:[%s1248 + $0x10] sm:$0xf]
        %v5249 = vld [vmem:[%s1248 + $0x14] sm:$0x1]
        %v5250 = vld [vmem:[%s1248 + $0x18] sm:$0xf]
        %v5251 = vld [vmem:[%s1248 + $0x1c] sm:$0x1]
        %v5252 = vld [vmem:[%s1248 + $0x20] sm:$0xf]
        %v5253 = vld [vmem:[%s1248 + $0x24] sm:$0x1]
        %v5254 = vld [vmem:[%s1248 + $0x28] sm:$0xf]
        %v5255 = vld [vmem:[%s1248 + $0x2c] sm:$0x1]
        %v5256 = vld [vmem:[%s1248 + $0x30] sm:$0xf]
        %v5257 = vld [vmem:[%s1248 + $0x34] sm:$0x1]
        %v5258 = vld [vmem:[%s1248 + $0x38] sm:$0xf]
        %v5259 = vld [vmem:[%s1248 + $0x3c] sm:$0x1]
        %v5261 = vshrl.u32 %v5244, 16
        %v5263 = vrot.slane %v5261, 4
        %v5264 = vshll.u32 %v5244, 16
        %v5266 = vrot.slane %v5264, 5
        %v5267 = vor.u32 %v5263, %v5266
        %v5268 = vrot.slane %v5267, 4
        %v5270 = vshll.u32 %v5245, 16
        %v5272 = vrot.slane %v5270, 5
        %v5273 = vsel %vm725, %v5268, %v5272
        %v5275 = vshrl.u32 %v5246, 16
        %v5277 = vrot.slane %v5275, 4
        %v5278 = vshll.u32 %v5246, 16
        %v5280 = vrot.slane %v5278, 5
        %v5281 = vor.u32 %v5277, %v5280
        %v5282 = vrot.slane %v5281, 4
        %v5284 = vshll.u32 %v5247, 16
        %v5286 = vrot.slane %v5284, 5
        %v5287 = vsel %vm725, %v5282, %v5286
        %v5289 = vshrl.u32 %v5248, 16
        %v5291 = vrot.slane %v5289, 4
        %v5292 = vshll.u32 %v5248, 16
        %v5294 = vrot.slane %v5292, 5
        %v5295 = vor.u32 %v5291, %v5294
        %v5296 = vrot.slane %v5295, 4
        %v5298 = vshll.u32 %v5249, 16
        %v5300 = vrot.slane %v5298, 5
        %v5301 = vsel %vm725, %v5296, %v5300
        %v5303 = vshrl.u32 %v5250, 16
        %v5305 = vrot.slane %v5303, 4
        %v5306 = vshll.u32 %v5250, 16
        %v5308 = vrot.slane %v5306, 5
        %v5309 = vor.u32 %v5305, %v5308
        %v5310 = vrot.slane %v5309, 4
        %v5312 = vshll.u32 %v5251, 16
        %v5314 = vrot.slane %v5312, 5
        %v5315 = vsel %vm725, %v5310, %v5314
        %v5317 = vshrl.u32 %v5252, 16
        %v5319 = vrot.slane %v5317, 4
        %v5320 = vshll.u32 %v5252, 16
        %v5322 = vrot.slane %v5320, 5
        %v5323 = vor.u32 %v5319, %v5322
        %v5324 = vrot.slane %v5323, 4
        %v5326 = vshll.u32 %v5253, 16
        %v5328 = vrot.slane %v5326, 5
        %v5329 = vsel %vm725, %v5324, %v5328
        %v5331 = vshrl.u32 %v5254, 16
        %v5333 = vrot.slane %v5331, 4
        %v5334 = vshll.u32 %v5254, 16
        %v5336 = vrot.slane %v5334, 5
        %v5337 = vor.u32 %v5333, %v5336
        %v5338 = vrot.slane %v5337, 4
        %v5340 = vshll.u32 %v5255, 16
        %v5342 = vrot.slane %v5340, 5
        %v5343 = vsel %vm725, %v5338, %v5342
        %v5345 = vshrl.u32 %v5256, 16
        %v5347 = vrot.slane %v5345, 4
        %v5348 = vshll.u32 %v5256, 16
        %v5350 = vrot.slane %v5348, 5
        %v5351 = vor.u32 %v5347, %v5350
        %v5352 = vrot.slane %v5351, 4
        %v5354 = vshll.u32 %v5257, 16
        %v5356 = vrot.slane %v5354, 5
        %v5357 = vsel %vm725, %v5352, %v5356
        %v5359 = vshrl.u32 %v5258, 16
        %v5361 = vrot.slane %v5359, 4
        %v5362 = vshll.u32 %v5258, 16
        %v5364 = vrot.slane %v5362, 5
        %v5365 = vor.u32 %v5361, %v5364
        %v5366 = vrot.slane %v5365, 4
        %v5368 = vshll.u32 %v5259, 16
        %v5370 = vrot.slane %v5368, 5
        %v5371 = vsel %vm725, %v5366, %v5370
        %v5372 = vunpack.c.l.b16 %v5273
        %v5373 = vunpack.c.l.b16 %v5287
        %v5374 = vunpack.c.l.b16 %v5301
        %v5375 = vunpack.c.l.b16 %v5315
        %v5376 = vunpack.c.l.b16 %v5329
        %v5377 = vunpack.c.l.b16 %v5343
        %v5378 = vunpack.c.l.b16 %v5357
        %v5379 = vunpack.c.l.b16 %v5371
        %v5380 = vpack.c.b16 %v5373, %v5372
        %v5381 = vpack.c.b16 %v5375, %v5374
        %v5382 = vpack.c.b16 %v5377, %v5376
        %v5383 = vpack.c.b16 %v5379, %v5378
        %5384 = vrot.lane.b32.xlu0 %v5380, 96
        %v5385 = vpop.permute.xlu0 %5384
        %5386 = vrot.lane.b32.xlu0 %v5381, 96
        %v5387 = vpop.permute.xlu0 %5386
        %5388 = vrot.lane.b32.xlu0 %v5382, 96
        %v5389 = vpop.permute.xlu0 %5388
        %5390 = vrot.lane.b32.xlu0 %v5383, 96
        %v5391 = vpop.permute.xlu0 %5390
        %5396 = vst.msk [vmem:[#allocation3 + $0x8] sm:$0xff] %vm1003, %v5385
        %5397 = vst.msk [vmem:[#allocation3 + $0x20] sm:$0xff] %vm1003, %v5387
        %5398 = vst.msk [vmem:[#allocation3 + $0x38] sm:$0xff] %vm1003, %v5389
        %5399 = vst.msk [vmem:[#allocation3 + $0x50] sm:$0xff] %vm1003, %v5391
        %v5400 = vld [vmem:[%s1248] sm:$0xe]
        %v5401 = vld [vmem:[%s1248 + $0x4] sm:$0x1]
        %v5402 = vld [vmem:[%s1248 + $0x8] sm:$0xe]
        %v5403 = vld [vmem:[%s1248 + $0xc] sm:$0x1]
        %v5404 = vld [vmem:[%s1248 + $0x10] sm:$0xe]
        %v5405 = vld [vmem:[%s1248 + $0x14] sm:$0x1]
        %v5406 = vld [vmem:[%s1248 + $0x18] sm:$0xe]
        %v5407 = vld [vmem:[%s1248 + $0x1c] sm:$0x1]
        %v5408 = vld [vmem:[%s1248 + $0x20] sm:$0xe]
        %v5409 = vld [vmem:[%s1248 + $0x24] sm:$0x1]
        %v5410 = vld [vmem:[%s1248 + $0x28] sm:$0xe]
        %v5411 = vld [vmem:[%s1248 + $0x2c] sm:$0x1]
        %v5412 = vld [vmem:[%s1248 + $0x30] sm:$0xe]
        %v5413 = vld [vmem:[%s1248 + $0x34] sm:$0x1]
        %v5414 = vld [vmem:[%s1248 + $0x38] sm:$0xe]
        %v5415 = vld [vmem:[%s1248 + $0x3c] sm:$0x1]
        %v5432 = vrot.slane %v5400, 5
        %v5433 = vrot.slane %v5432, 4
        %v5434 = vrot.slane %v5401, 5
        %v5435 = vsel %vm901, %v5433, %v5434
        %v5436 = vrot.slane %v5402, 5
        %v5437 = vrot.slane %v5436, 4
        %v5438 = vrot.slane %v5403, 5
        %v5439 = vsel %vm901, %v5437, %v5438
        %v5440 = vrot.slane %v5404, 5
        %v5441 = vrot.slane %v5440, 4
        %v5442 = vrot.slane %v5405, 5
        %v5443 = vsel %vm901, %v5441, %v5442
        %v5444 = vrot.slane %v5406, 5
        %v5445 = vrot.slane %v5444, 4
        %v5446 = vrot.slane %v5407, 5
        %v5447 = vsel %vm901, %v5445, %v5446
        %v5448 = vrot.slane %v5408, 5
        %v5449 = vrot.slane %v5448, 4
        %v5450 = vrot.slane %v5409, 5
        %v5451 = vsel %vm901, %v5449, %v5450
        %v5452 = vrot.slane %v5410, 5
        %v5453 = vrot.slane %v5452, 4
        %v5454 = vrot.slane %v5411, 5
        %v5455 = vsel %vm901, %v5453, %v5454
        %v5456 = vrot.slane %v5412, 5
        %v5457 = vrot.slane %v5456, 4
        %v5458 = vrot.slane %v5413, 5
        %v5459 = vsel %vm901, %v5457, %v5458
        %v5460 = vrot.slane %v5414, 5
        %v5461 = vrot.slane %v5460, 4
        %v5462 = vrot.slane %v5415, 5
        %v5463 = vsel %vm901, %v5461, %v5462
        %v5464 = vunpack.c.l.b16 %v5435
        %v5465 = vunpack.c.l.b16 %v5439
        %v5466 = vunpack.c.l.b16 %v5443
        %v5467 = vunpack.c.l.b16 %v5447
        %v5468 = vunpack.c.l.b16 %v5451
        %v5469 = vunpack.c.l.b16 %v5455
        %v5470 = vunpack.c.l.b16 %v5459
        %v5471 = vunpack.c.l.b16 %v5463
        %v5472 = vpack.c.b16 %v5465, %v5464
        %v5473 = vpack.c.b16 %v5467, %v5466
        %v5474 = vpack.c.b16 %v5469, %v5468
        %v5475 = vpack.c.b16 %v5471, %v5470
        %5480 = vst.msk [vmem:[#allocation3 + $0x10] sm:$0xff] %vm702, %v5472
        %5481 = vst.msk [vmem:[#allocation3 + $0x28] sm:$0xff] %vm702, %v5473
        %5482 = vst.msk [vmem:[#allocation3 + $0x40] sm:$0xff] %vm702, %v5474
        %5483 = vst.msk [vmem:[#allocation3 + $0x58] sm:$0xff] %vm702, %v5475
        %v5484 = vld [vmem:[#allocation3] sm:$0xff]
        %v5485 = vld [vmem:[#allocation3 + $0x8] sm:$0xff]
        %v5486 = vld [vmem:[#allocation3 + $0x10] sm:$0xff]
        %v5487 = vld [vmem:[#allocation3 + $0x18] sm:$0xff]
        %v5488 = vld [vmem:[#allocation3 + $0x20] sm:$0xff]
        %v5489 = vld [vmem:[#allocation3 + $0x28] sm:$0xff]
        %v5490 = vld [vmem:[#allocation3 + $0x30] sm:$0xff]
        %v5491 = vld [vmem:[#allocation3 + $0x38] sm:$0xff]
        %v5492 = vld [vmem:[#allocation3 + $0x40] sm:$0xff]
        %v5493 = vld [vmem:[#allocation3 + $0x48] sm:$0xff]
        %v5494 = vld [vmem:[#allocation3 + $0x50] sm:$0xff]
        %v5495 = vld [vmem:[#allocation3 + $0x58] sm:$0xff]
        %v5496 = vld [vmem:[%s7] sm:$0xf]
        %v5497 = vld [vmem:[%s7 + $0x4] sm:$0xf]
        %v5498 = vld [vmem:[%s7 + $0x8] sm:$0xf]
        %v5499 = vld [vmem:[%s7 + $0xc] sm:$0xf]
        %v5500 = vld [vmem:[%s7 + $0x10] sm:$0xf]
        %v5501 = vld [vmem:[%s7 + $0x14] sm:$0xf]
        %v5502 = vld [vmem:[%s7 + $0x18] sm:$0xf]
        %v5503 = vld [vmem:[%s7 + $0x1c] sm:$0xf]
        %v5504 = vld [vmem:[%s7 + $0x20] sm:$0xf]
        %v5505 = vld [vmem:[%s7 + $0x24] sm:$0xf]
        %v5506 = vld [vmem:[%s7 + $0x28] sm:$0xf]
        %v5507 = vld [vmem:[%s7 + $0x2c] sm:$0xf]
        %v5508 = vld [vmem:[%s7 + $0x30] sm:$0xf]
        %v5509 = vld [vmem:[%s7 + $0x34] sm:$0xf]
        %v5510 = vld [vmem:[%s7 + $0x38] sm:$0xf]
        %v5511 = vld [vmem:[%s7 + $0x3c] sm:$0xf]
        %v5512 = vld [vmem:[%s7 + $0x40] sm:$0xf]
        %v5513 = vld [vmem:[%s7 + $0x44] sm:$0xf]
        %v5514 = vld [vmem:[%s7 + $0x48] sm:$0xf]
        %v5515 = vld [vmem:[%s7 + $0x4c] sm:$0xf]
        %v5516 = vld [vmem:[%s7 + $0x50] sm:$0xf]
        %v5517 = vld [vmem:[%s7 + $0x54] sm:$0xf]
        %v5518 = vld [vmem:[%s7 + $0x58] sm:$0xf]
        %v5519 = vld [vmem:[%s7 + $0x5c] sm:$0xf]
        %v5520 = vld [vmem:[%s7 + $0x60] sm:$0xf]
        %v5521 = vld [vmem:[%s7 + $0x64] sm:$0xf]
        %v5522 = vld [vmem:[%s7 + $0x68] sm:$0xf]
        %v5523 = vld [vmem:[%s7 + $0x6c] sm:$0xf]
        %v5524 = vld [vmem:[%s7 + $0x70] sm:$0xf]
        %v5525 = vld [vmem:[%s7 + $0x74] sm:$0xf]
        %v5526 = vld [vmem:[%s7 + $0x78] sm:$0xf]
        %v5527 = vld [vmem:[%s7 + $0x7c] sm:$0xf]
        %v5528 = vld [vmem:[%s7 + $0x80] sm:$0xf]
        %v5529 = vld [vmem:[%s7 + $0x84] sm:$0xf]
        %v5530 = vld [vmem:[%s7 + $0x88] sm:$0xf]
        %v5531 = vld [vmem:[%s7 + $0x8c] sm:$0xf]
        %v5532 = vld [vmem:[%s8] sm:$0x1]
        %v5534 = vlaneseq
        %v5535 = vshrl.u32 %v5534, 7
        %v5536 = vsub.s32 0, %v5535
        %v5537 = vrot.slane %v5532, %v5536
        %v5575 = vunpack.c.l.b16 %v5496
        %v5576 = vunpack.c.l.b16 %v5497
        %v5577 = vunpack.c.l.b16 %v5498
        %v5578 = vunpack.c.l.b16 %v5499
        %v5579 = vunpack.c.l.b16 %v5500
        %v5580 = vunpack.c.l.b16 %v5501
        %v5581 = vunpack.c.l.b16 %v5502
        %v5582 = vunpack.c.l.b16 %v5503
        %v5583 = vunpack.c.l.b16 %v5504
        %v5584 = vunpack.c.l.b16 %v5505
        %v5585 = vunpack.c.l.b16 %v5506
        %v5586 = vunpack.c.l.b16 %v5507
        %v5587 = vunpack.c.l.b16 %v5508
        %v5588 = vunpack.c.l.b16 %v5509
        %v5589 = vunpack.c.l.b16 %v5510
        %v5590 = vunpack.c.l.b16 %v5511
        %v5591 = vunpack.c.l.b16 %v5512
        %v5592 = vunpack.c.l.b16 %v5513
        %v5593 = vunpack.c.l.b16 %v5514
        %v5594 = vunpack.c.l.b16 %v5515
        %v5595 = vunpack.c.l.b16 %v5516
        %v5596 = vunpack.c.l.b16 %v5517
        %v5597 = vunpack.c.l.b16 %v5518
        %v5598 = vunpack.c.l.b16 %v5519
        %v5599 = vunpack.c.l.b16 %v5520
        %v5600 = vunpack.c.l.b16 %v5521
        %v5601 = vunpack.c.l.b16 %v5522
        %v5602 = vunpack.c.l.b16 %v5523
        %v5603 = vunpack.c.l.b16 %v5524
        %v5604 = vunpack.c.l.b16 %v5525
        %v5605 = vunpack.c.l.b16 %v5526
        %v5606 = vunpack.c.l.b16 %v5527
        %v5607 = vunpack.c.l.b16 %v5528
        %v5608 = vunpack.c.l.b16 %v5529
        %v5609 = vunpack.c.l.b16 %v5530
        %v5610 = vunpack.c.l.b16 %v5531
        %v5611 = vpack.c.b16 %v5576, %v5575
        %v5612 = vpack.c.b16 %v5578, %v5577
        %v5613 = vpack.c.b16 %v5580, %v5579
        %v5614 = vpack.c.b16 %v5582, %v5581
        %v5615 = vpack.c.b16 %v5584, %v5583
        %v5616 = vpack.c.b16 %v5586, %v5585
        %v5617 = vpack.c.b16 %v5588, %v5587
        %v5618 = vpack.c.b16 %v5590, %v5589
        %v5619 = vpack.c.b16 %v5592, %v5591
        %v5620 = vpack.c.b16 %v5594, %v5593
        %v5621 = vpack.c.b16 %v5596, %v5595
        %v5622 = vpack.c.b16 %v5598, %v5597
        %v5623 = vpack.c.b16 %v5600, %v5599
        %v5624 = vpack.c.b16 %v5602, %v5601
        %v5625 = vpack.c.b16 %v5604, %v5603
        %v5626 = vpack.c.b16 %v5606, %v5605
        %v5627 = vpack.c.b16 %v5608, %v5607
        %v5628 = vpack.c.b16 %v5610, %v5609
        %v5648 = vsel %vm702, %v5486, 0
        %v5651 = vsel %vm702, %v5489, 0
        %v5654 = vsel %vm702, %v5492, 0
        %v5657 = vsel %vm702, %v5495, 0
        %5659 = vmatprep.subr.bf16.mxu0 0
        %5660 = vmatpush1.bf16.msra.mxu0 %v5611
        %5661 = vmatprep.subr.bf16.mxu0 0
        %5662 = vmatpush1.bf16.msra.mxu0 %v5612
        %5663 = vmatprep.subr.bf16.mxu0 0
        %5664 = vmatpush1.bf16.msra.mxu0 %v5613
        %5665 = vmatprep.subr.bf16.mxu0 0
        %5666 = vmatpush1.bf16.msra.mxu0 %v5614
        %5667 = vmatprep.subr.bf16.mxu0 0
        %5668 = vmatpush1.bf16.msra.mxu0 %v5615
        %5669 = vmatprep.subr.bf16.mxu0 0
        %5670 = vmatpush1.bf16.msra.mxu0 %v5616
        %5671 = vmatprep.subr.bf16.mxu0 0
        %5672 = vmatpush1.bf16.msra.mxu0 %v5617
        %5673 = vmatprep.subr.bf16.mxu0 0
        %5674 = vmatpush1.bf16.msra.mxu0 %v5618
        %5675 = vmatprep.subr.bf16.mxu0 0
        %5676 = vmatpush1.bf16.msra.mxu0 %v5619
        %5677 = vmatprep.subr.bf16.mxu0 0
        %5678 = vmatpush1.bf16.msra.mxu0 %v5620
        %5679 = vmatprep.subr.bf16.mxu0 0
        %5680 = vmatpush1.bf16.msra.mxu0 %v5621
        %5681 = vmatprep.subr.bf16.mxu0 0
        %5682 = vmatpush1.bf16.msra.mxu0 %v5622
        %5683 = vmatprep.subr.bf16.mxu0 0
        %5684 = vmatpush1.bf16.msra.mxu0 %v5623
        %5685 = vmatprep.subr.bf16.mxu0 0
        %5686 = vmatpush1.bf16.msra.mxu0 %v5624
        %5687 = vmatprep.subr.bf16.mxu0 0
        %5688 = vmatpush1.bf16.msra.mxu0 %v5625
        %5689 = vmatprep.subr.bf16.mxu0 0
        %5690 = vmatpush1.bf16.msra.mxu0 %v5626
        %5691 = vmatprep.mubr.bf16.mxu0 %v5485
        %5692 = vmatmul.mubr.bf16.gmra.mrb[0].mxu0 %v5484
        %v5693 = vpop.f32.mrb[0].mxu0
        %v5694 = vadd.f32 %v5537, %v5693
        %v5695 = vpop.f32.mrb[0].mxu0
        %v5696 = vpop.f32.mrb[0].mxu0
        %v5697 = vadd.f32 %v5537, %v5696
        %v5698 = vpop.f32.mrb[0].mxu0
        %5699 = vmatprep.mubr.bf16.mxu0 %v5488
        %5700 = vmatmul.mubr.bf16.gmra.mrb[0].mxu0 %v5487
        %v5701 = vpop.f32.mrb[0].mxu0
        %v5702 = vadd.f32 %v5537, %v5701
        %v5703 = vpop.f32.mrb[0].mxu0
        %v5704 = vpop.f32.mrb[0].mxu0
        %v5705 = vadd.f32 %v5537, %v5704
        %v5706 = vpop.f32.mrb[0].mxu0
        %5707 = vmatprep.mubr.bf16.mxu0 %v5491
        %5708 = vmatmul.mubr.bf16.gmra.mrb[0].mxu0 %v5490
        %v5709 = vpop.f32.mrb[0].mxu0
        %v5710 = vadd.f32 %v5537, %v5709
        %v5711 = vpop.f32.mrb[0].mxu0
        %v5712 = vpop.f32.mrb[0].mxu0
        %v5713 = vadd.f32 %v5537, %v5712
        %v5714 = vpop.f32.mrb[0].mxu0
        %5715 = vmatprep.mubr.bf16.mxu0 %v5494
        %5716 = vmatmul.mubr.bf16.gmra.mrb[0].mxu0 %v5493
        %v5717 = vpop.f32.mrb[0].mxu0
        %v5718 = vadd.f32 %v5537, %v5717
        %v5719 = vpop.f32.mrb[0].mxu0
        %v5720 = vpop.f32.mrb[0].mxu0
        %v5721 = vadd.f32 %v5537, %v5720
        %v5722 = vpop.f32.mrb[0].mxu0
        %5723 = vdwg.mxu0
        %5724 = vmatprep.subr.bf16.mxu0 0
        %5725 = vmatpush1.bf16.msra.mxu0 %v5627
        %5726 = vmatprep.subr.bf16.mxu0 0
        %5727 = vmatpush1.bf16.msra.mxu0 %v5628
        %5728 = vmatprep.subr.bf16.mxu0 0
        %5729 = vmatpush1.bf16.msra.mxu0 0
        %5730 = vmatprep.subr.bf16.mxu0 0
        %5731 = vmatpush1.bf16.msra.mxu0 0
        %5732 = vmatprep.subr.bf16.mxu0 0
        %5733 = vmatpush1.bf16.msra.mxu0 0
        %5734 = vmatprep.subr.bf16.mxu0 0
        %5735 = vmatpush1.bf16.msra.mxu0 0
        %5736 = vmatprep.subr.bf16.mxu0 0
        %5737 = vmatpush1.bf16.msra.mxu0 0
        %5738 = vmatprep.subr.bf16.mxu0 0
        %5739 = vmatpush1.bf16.msra.mxu0 0
        %5740 = vmatprep.subr.bf16.mxu0 0
        %5741 = vmatpush1.bf16.msra.mxu0 0
        %5742 = vmatprep.subr.bf16.mxu0 0
        %5743 = vmatpush1.bf16.msra.mxu0 0
        %5744 = vmatprep.subr.bf16.mxu0 0
        %5745 = vmatpush1.bf16.msra.mxu0 0
        %5746 = vmatprep.subr.bf16.mxu0 0
        %5747 = vmatpush1.bf16.msra.mxu0 0
        %5748 = vmatprep.subr.bf16.mxu0 0
        %5749 = vmatpush1.bf16.msra.mxu0 0
        %5750 = vmatprep.subr.bf16.mxu0 0
        %5751 = vmatpush1.bf16.msra.mxu0 0
        %5752 = vmatprep.subr.bf16.mxu0 0
        %5753 = vmatpush1.bf16.msra.mxu0 0
        %5754 = vmatprep.subr.bf16.mxu0 0
        %5755 = vmatpush1.bf16.msra.mxu0 0
        %5756 = vmatprep.mubr.bf16.mxu0 0
        %5757 = vmatmul.mubr.bf16.gmra.mrb[0].mxu0 %v5648
        %v5758 = vpop.f32.mrb[0].mxu0
        %v5759 = vadd.f32 %v5694, %v5758
        %v5760 = vpop.f32.mrb[0].mxu0
        %v5761 = vpop.f32.mrb[0].mxu0
        %v5762 = vadd.f32 %v5697, %v5761
        %v5763 = vpop.f32.mrb[0].mxu0
        %5764 = vmatprep.mubr.bf16.mxu0 0
        %5765 = vmatmul.mubr.bf16.gmra.mrb[0].mxu0 %v5651
        %v5766 = vpop.f32.mrb[0].mxu0
        %v5767 = vadd.f32 %v5702, %v5766
        %v5768 = vpop.f32.mrb[0].mxu0
        %v5769 = vpop.f32.mrb[0].mxu0
        %v5770 = vadd.f32 %v5705, %v5769
        %v5771 = vpop.f32.mrb[0].mxu0
        %5772 = vmatprep.mubr.bf16.mxu0 0
        %5773 = vmatmul.mubr.bf16.gmra.mrb[0].mxu0 %v5654
        %v5774 = vpop.f32.mrb[0].mxu0
        %v5775 = vadd.f32 %v5710, %v5774
        %v5776 = vpop.f32.mrb[0].mxu0
        %v5777 = vpop.f32.mrb[0].mxu0
        %v5778 = vadd.f32 %v5713, %v5777
        %v5779 = vpop.f32.mrb[0].mxu0
        %5780 = vmatprep.mubr.bf16.mxu0 0
        %5781 = vmatmul.mubr.bf16.gmra.mrb[0].mxu0 %v5657
        %v5782 = vpop.f32.mrb[0].mxu0
        %v5783 = vadd.f32 %v5718, %v5782
        %v5784 = vpop.f32.mrb[0].mxu0
        %v5785 = vpop.f32.mrb[0].mxu0
        %v5786 = vadd.f32 %v5721, %v5785
        %v5787 = vpop.f32.mrb[0].mxu0
        %5788 = vdwg.mxu0
        %v5789 = vmax.f32 %v5759, 0.0
        %v5790 = vmax.f32 %v5762, 0.0
        %v5791 = vmax.f32 %v5767, 0.0
        %v5792 = vmax.f32 %v5770, 0.0
        %v5793 = vmax.f32 %v5775, 0.0
        %v5794 = vmax.f32 %v5778, 0.0
        %v5795 = vmax.f32 %v5783, 0.0
        %v5796 = vmax.f32 %v5786, 0.0
        %v5797 = vpack.c.bf16 %v5790, %v5789
        %v5798 = vpack.c.bf16 %v5792, %v5791
        %v5799 = vpack.c.bf16 %v5794, %v5793
        %v5800 = vpack.c.bf16 %v5796, %v5795
        %5801 = vst.msk [vmem:[#allocation4] sm:$0xff] %vm702, %v5797
        %5802 = vst.msk [vmem:[#allocation4 + $0x8] sm:$0xff] %vm702, %v5798
        %5803 = vst.msk [vmem:[#allocation4 + $0x10] sm:$0xff] %vm702, %v5799
        %5804 = vst.msk [vmem:[#allocation4 + $0x18] sm:$0xff] %vm702, %v5800
        %v5805 = vld [vmem:[#allocation4] sm:$0xff]
        %v5806 = vld [vmem:[#allocation4 + $0x8] sm:$0xff]
        %v5807 = vld [vmem:[#allocation4 + $0x10] sm:$0xff]
        %v5808 = vld [vmem:[#allocation4 + $0x18] sm:$0xff]
        %v5809 = vld [vmem:[%s9] sm:$0xf]
        %v5810 = vld [vmem:[%s9 + $0x4] sm:$0xf]
        %v5811 = vld [vmem:[%s9 + $0x8] sm:$0xf]
        %v5812 = vld [vmem:[%s9 + $0xc] sm:$0xf]
        %v5813 = vld [vmem:[%s10] sm:$0x1]
        %v5815 = vlaneseq
        %v5816 = vshrl.u32 %v5815, 7
        %v5817 = vsub.s32 0, %v5816
        %v5818 = vrot.slane %v5813, %v5817
        %v5824 = vunpack.c.l.b16 %v5809
        %v5825 = vunpack.c.l.b16 %v5810
        %v5826 = vunpack.c.l.b16 %v5811
        %v5827 = vunpack.c.l.b16 %v5812
        %v5828 = vpack.c.b16 %v5825, %v5824
        %v5829 = vpack.c.b16 %v5827, %v5826
        %v5833 = vsel %vm702, %v5805, 0
        %v5836 = vsel %vm702, %v5806, 0
        %v5839 = vsel %vm702, %v5807, 0
        %v5842 = vsel %vm702, %v5808, 0
        %5844 = vmatprep.subr.bf16.mxu0 0
        %5845 = vmatpush1.bf16.msra.mxu0 %v5828
        %5846 = vmatprep.subr.bf16.mxu0 0
        %5847 = vmatpush1.bf16.msra.mxu0 %v5829
        %5848 = vmatprep.subr.bf16.mxu0 0
        %5849 = vmatpush1.bf16.msra.mxu0 0
        %5850 = vmatprep.subr.bf16.mxu0 0
        %5851 = vmatpush1.bf16.msra.mxu0 0
        %5852 = vmatprep.subr.bf16.mxu0 0
        %5853 = vmatpush1.bf16.msra.mxu0 0
        %5854 = vmatprep.subr.bf16.mxu0 0
        %5855 = vmatpush1.bf16.msra.mxu0 0
        %5856 = vmatprep.subr.bf16.mxu0 0
        %5857 = vmatpush1.bf16.msra.mxu0 0
        %5858 = vmatprep.subr.bf16.mxu0 0
        %5859 = vmatpush1.bf16.msra.mxu0 0
        %5860 = vmatprep.subr.bf16.mxu0 0
        %5861 = vmatpush1.bf16.msra.mxu0 0
        %5862 = vmatprep.subr.bf16.mxu0 0
        %5863 = vmatpush1.bf16.msra.mxu0 0
        %5864 = vmatprep.subr.bf16.mxu0 0
        %5865 = vmatpush1.bf16.msra.mxu0 0
        %5866 = vmatprep.subr.bf16.mxu0 0
        %5867 = vmatpush1.bf16.msra.mxu0 0
        %5868 = vmatprep.subr.bf16.mxu0 0
        %5869 = vmatpush1.bf16.msra.mxu0 0
        %5870 = vmatprep.subr.bf16.mxu0 0
        %5871 = vmatpush1.bf16.msra.mxu0 0
        %5872 = vmatprep.subr.bf16.mxu0 0
        %5873 = vmatpush1.bf16.msra.mxu0 0
        %5874 = vmatprep.subr.bf16.mxu0 0
        %5875 = vmatpush1.bf16.msra.mxu0 0
        %5876 = vmatprep.mubr.bf16.mxu0 0
        %5877 = vmatmul.mubr.bf16.gmra.mrb[0].mxu0 %v5833
        %v5878 = vpop.f32.mrb[0].mxu0
        %v5879 = vadd.f32 %v5818, %v5878
        %v5880 = vpop.f32.mrb[0].mxu0
        %v5881 = vpop.f32.mrb[0].mxu0
        %v5882 = vadd.f32 %v5818, %v5881
        %v5883 = vpop.f32.mrb[0].mxu0
        %5884 = vmatprep.mubr.bf16.mxu0 0
        %5885 = vmatmul.mubr.bf16.gmra.mrb[0].mxu0 %v5836
        %v5886 = vpop.f32.mrb[0].mxu0
        %v5887 = vadd.f32 %v5818, %v5886
        %v5888 = vpop.f32.mrb[0].mxu0
        %v5889 = vpop.f32.mrb[0].mxu0
        %v5890 = vadd.f32 %v5818, %v5889
        %v5891 = vpop.f32.mrb[0].mxu0
        %5892 = vmatprep.mubr.bf16.mxu0 0
        %5893 = vmatmul.mubr.bf16.gmra.mrb[0].mxu0 %v5839
        %v5894 = vpop.f32.mrb[0].mxu0
        %v5895 = vadd.f32 %v5818, %v5894
        %v5896 = vpop.f32.mrb[0].mxu0
        %v5897 = vpop.f32.mrb[0].mxu0
        %v5898 = vadd.f32 %v5818, %v5897
        %v5899 = vpop.f32.mrb[0].mxu0
        %5900 = vmatprep.mubr.bf16.mxu0 0
        %5901 = vmatmul.mubr.bf16.gmra.mrb[0].mxu0 %v5842
        %v5902 = vpop.f32.mrb[0].mxu0
        %v5903 = vadd.f32 %v5818, %v5902
        %v5904 = vpop.f32.mrb[0].mxu0
        %v5905 = vpop.f32.mrb[0].mxu0
        %v5906 = vadd.f32 %v5818, %v5905
        %v5907 = vpop.f32.mrb[0].mxu0
        %5908 = vdwg.mxu0
        %v5909 = vmax.f32 %v5879, 0.0
        %v5910 = vmax.f32 %v5882, 0.0
        %v5911 = vmax.f32 %v5887, 0.0
        %v5912 = vmax.f32 %v5890, 0.0
        %v5913 = vmax.f32 %v5895, 0.0
        %v5914 = vmax.f32 %v5898, 0.0
        %v5915 = vmax.f32 %v5903, 0.0
        %v5916 = vmax.f32 %v5906, 0.0
        %v5917 = vpack.c.bf16 %v5910, %v5909
        %v5918 = vpack.c.bf16 %v5912, %v5911
        %v5919 = vpack.c.bf16 %v5914, %v5913
        %v5920 = vpack.c.bf16 %v5916, %v5915
        %v5921 = vld [vmem:[%s11] sm:$0xf]
        %v5922 = vld [vmem:[%s11 + $0x4] sm:$0xf]
        %v5923 = vld [vmem:[%s11 + $0x8] sm:$0xf]
        %v5924 = vld [vmem:[%s11 + $0xc] sm:$0xf]
        %v5925 = vld [vmem:[%s12] sm:$0x1]
        %v5927 = vlaneseq
        %v5928 = vshrl.u32 %v5927, 7
        %v5929 = vsub.s32 0, %v5928
        %v5930 = vrot.slane %v5925, %v5929
        %v5936 = vunpack.c.l.b16 %v5921
        %v5937 = vunpack.c.l.b16 %v5922
        %v5938 = vunpack.c.l.b16 %v5923
        %v5939 = vunpack.c.l.b16 %v5924
        %v5940 = vpack.c.b16 %v5937, %v5936
        %v5941 = vpack.c.b16 %v5939, %v5938
        %v5945 = vsel %vm702, %v5917, 0
        %v5948 = vsel %vm702, %v5918, 0
        %v5951 = vsel %vm702, %v5919, 0
        %v5954 = vsel %vm702, %v5920, 0
        %5956 = vmatprep.subr.bf16.mxu0 0
        %5957 = vmatpush1.bf16.msra.mxu0 %v5940
        %5958 = vmatprep.subr.bf16.mxu0 0
        %5959 = vmatpush1.bf16.msra.mxu0 %v5941
        %5960 = vmatprep.subr.bf16.mxu0 0
        %5961 = vmatpush1.bf16.msra.mxu0 0
        %5962 = vmatprep.subr.bf16.mxu0 0
        %5963 = vmatpush1.bf16.msra.mxu0 0
        %5964 = vmatprep.subr.bf16.mxu0 0
        %5965 = vmatpush1.bf16.msra.mxu0 0
        %5966 = vmatprep.subr.bf16.mxu0 0
        %5967 = vmatpush1.bf16.msra.mxu0 0
        %5968 = vmatprep.subr.bf16.mxu0 0
        %5969 = vmatpush1.bf16.msra.mxu0 0
        %5970 = vmatprep.subr.bf16.mxu0 0
        %5971 = vmatpush1.bf16.msra.mxu0 0
        %5972 = vmatprep.subr.bf16.mxu0 0
        %5973 = vmatpush1.bf16.msra.mxu0 0
        %5974 = vmatprep.subr.bf16.mxu0 0
        %5975 = vmatpush1.bf16.msra.mxu0 0
        %5976 = vmatprep.subr.bf16.mxu0 0
        %5977 = vmatpush1.bf16.msra.mxu0 0
        %5978 = vmatprep.subr.bf16.mxu0 0
        %5979 = vmatpush1.bf16.msra.mxu0 0
        %5980 = vmatprep.subr.bf16.mxu0 0
        %5981 = vmatpush1.bf16.msra.mxu0 0
        %5982 = vmatprep.subr.bf16.mxu0 0
        %5983 = vmatpush1.bf16.msra.mxu0 0
        %5984 = vmatprep.subr.bf16.mxu0 0
        %5985 = vmatpush1.bf16.msra.mxu0 0
        %5986 = vmatprep.subr.bf16.mxu0 0
        %5987 = vmatpush1.bf16.msra.mxu0 0
        %5988 = vmatprep.mubr.bf16.mxu0 0
        %5989 = vmatmul.mubr.bf16.gmra.mrb[0].mxu0 %v5945
        %v5990 = vpop.f32.mrb[0].mxu0
        %v5991 = vadd.f32 %v5930, %v5990
        %v5992 = vpop.f32.mrb[0].mxu0
        %v5993 = vpop.f32.mrb[0].mxu0
        %v5994 = vadd.f32 %v5930, %v5993
        %v5995 = vpop.f32.mrb[0].mxu0
        %5996 = vmatprep.mubr.bf16.mxu0 0
        %5997 = vmatmul.mubr.bf16.gmra.mrb[0].mxu0 %v5948
        %v5998 = vpop.f32.mrb[0].mxu0
        %v5999 = vadd.f32 %v5930, %v5998
        %v6000 = vpop.f32.mrb[0].mxu0
        %v6001 = vpop.f32.mrb[0].mxu0
        %v6002 = vadd.f32 %v5930, %v6001
        %v6003 = vpop.f32.mrb[0].mxu0
        %6004 = vmatprep.mubr.bf16.mxu0 0
        %6005 = vmatmul.mubr.bf16.gmra.mrb[0].mxu0 %v5951
        %v6006 = vpop.f32.mrb[0].mxu0
        %v6007 = vadd.f32 %v5930, %v6006
        %v6008 = vpop.f32.mrb[0].mxu0
        %v6009 = vpop.f32.mrb[0].mxu0
        %v6010 = vadd.f32 %v5930, %v6009
        %v6011 = vpop.f32.mrb[0].mxu0
        %6012 = vmatprep.mubr.bf16.mxu0 0
        %6013 = vmatmul.mubr.bf16.gmra.mrb[0].mxu0 %v5954
        %v6014 = vpop.f32.mrb[0].mxu0
        %v6015 = vadd.f32 %v5930, %v6014
        %v6016 = vpop.f32.mrb[0].mxu0
        %v6017 = vpop.f32.mrb[0].mxu0
        %v6018 = vadd.f32 %v5930, %v6017
        %v6019 = vpop.f32.mrb[0].mxu0
        %6020 = vdwg.mxu0
        %s6021 = smul.u32 %s523, 32
        %s6022 = smul.addr %s6021, 8
        %s6023 = scalar_lea.vmem %s447, %s6022
        %6024 = vst [vmem:[%s6023] sm:$0xff] %v5991
        %6025 = vst [vmem:[%s6023 + $0x20] sm:$0xff] %v5994
        %6026 = vst [vmem:[%s6023 + $0x40] sm:$0xff] %v5999
        %6027 = vst [vmem:[%s6023 + $0x60] sm:$0xff] %v6002
        %6028 = vst [vmem:[%s6023 + $0x80] sm:$0xff] %v6007
        %6029 = vst [vmem:[%s6023 + $0xa0] sm:$0xff] %v6010
        %6030 = vst [vmem:[%s6023 + $0xc0] sm:$0xff] %v6015
        %6031 = vst [vmem:[%s6023 + $0xe0] sm:$0xff] %v6018
        %v6032 = vld [vmem:[#allocation4] sm:$0xff]
        %v6033 = vld [vmem:[#allocation4 + $0x8] sm:$0xff]
        %v6034 = vld [vmem:[#allocation4 + $0x10] sm:$0xff]
        %v6035 = vld [vmem:[#allocation4 + $0x18] sm:$0xff]
        %s6036 = scalar_lea.vmem %s9, 16
        %v6037 = vld [vmem:[%s6036] sm:$0xf]
        %v6038 = vld [vmem:[%s6036 + $0x4] sm:$0xf]
        %v6039 = vld [vmem:[%s6036 + $0x8] sm:$0xf]
        %v6040 = vld [vmem:[%s6036 + $0xc] sm:$0xf]
        %v6041 = vld [vmem:[%s10] sm:$0x1]
        %v6043 = vlaneseq
        %v6044 = vshrl.u32 %v6043, 7
        %v6045 = vsub.s32 0, %v6044
        %v6046 = vrot.slane %v6041, %v6045
        %v6052 = vunpack.c.l.b16 %v6037
        %v6053 = vunpack.c.l.b16 %v6038
        %v6054 = vunpack.c.l.b16 %v6039
        %v6055 = vunpack.c.l.b16 %v6040
        %v6056 = vpack.c.b16 %v6053, %v6052
        %v6057 = vpack.c.b16 %v6055, %v6054
        %v6061 = vsel %vm702, %v6032, 0
        %v6064 = vsel %vm702, %v6033, 0
        %v6067 = vsel %vm702, %v6034, 0
        %v6070 = vsel %vm702, %v6035, 0
        %6072 = vmatprep.subr.bf16.mxu0 0
        %6073 = vmatpush1.bf16.msra.mxu0 %v6056
        %6074 = vmatprep.subr.bf16.mxu0 0
        %6075 = vmatpush1.bf16.msra.mxu0 %v6057
        %6076 = vmatprep.subr.bf16.mxu0 0
        %6077 = vmatpush1.bf16.msra.mxu0 0
        %6078 = vmatprep.subr.bf16.mxu0 0
        %6079 = vmatpush1.bf16.msra.mxu0 0
        %6080 = vmatprep.subr.bf16.mxu0 0
        %6081 = vmatpush1.bf16.msra.mxu0 0
        %6082 = vmatprep.subr.bf16.mxu0 0
        %6083 = vmatpush1.bf16.msra.mxu0 0
        %6084 = vmatprep.subr.bf16.mxu0 0
        %6085 = vmatpush1.bf16.msra.mxu0 0
        %6086 = vmatprep.subr.bf16.mxu0 0
        %6087 = vmatpush1.bf16.msra.mxu0 0
        %6088 = vmatprep.subr.bf16.mxu0 0
        %6089 = vmatpush1.bf16.msra.mxu0 0
        %6090 = vmatprep.subr.bf16.mxu0 0
        %6091 = vmatpush1.bf16.msra.mxu0 0
        %6092 = vmatprep.subr.bf16.mxu0 0
        %6093 = vmatpush1.bf16.msra.mxu0 0
        %6094 = vmatprep.subr.bf16.mxu0 0
        %6095 = vmatpush1.bf16.msra.mxu0 0
        %6096 = vmatprep.subr.bf16.mxu0 0
        %6097 = vmatpush1.bf16.msra.mxu0 0
        %6098 = vmatprep.subr.bf16.mxu0 0
        %6099 = vmatpush1.bf16.msra.mxu0 0
        %6100 = vmatprep.subr.bf16.mxu0 0
        %6101 = vmatpush1.bf16.msra.mxu0 0
        %6102 = vmatprep.subr.bf16.mxu0 0
        %6103 = vmatpush1.bf16.msra.mxu0 0
        %6104 = vmatprep.mubr.bf16.mxu0 0
        %6105 = vmatmul.mubr.bf16.gmra.mrb[0].mxu0 %v6061
        %v6106 = vpop.f32.mrb[0].mxu0
        %v6107 = vadd.f32 %v6046, %v6106
        %v6108 = vpop.f32.mrb[0].mxu0
        %v6109 = vpop.f32.mrb[0].mxu0
        %v6110 = vadd.f32 %v6046, %v6109
        %v6111 = vpop.f32.mrb[0].mxu0
        %6112 = vmatprep.mubr.bf16.mxu0 0
        %6113 = vmatmul.mubr.bf16.gmra.mrb[0].mxu0 %v6064
        %v6114 = vpop.f32.mrb[0].mxu0
        %v6115 = vadd.f32 %v6046, %v6114
        %v6116 = vpop.f32.mrb[0].mxu0
        %v6117 = vpop.f32.mrb[0].mxu0
        %v6118 = vadd.f32 %v6046, %v6117
        %v6119 = vpop.f32.mrb[0].mxu0
        %6120 = vmatprep.mubr.bf16.mxu0 0
        %6121 = vmatmul.mubr.bf16.gmra.mrb[0].mxu0 %v6067
        %v6122 = vpop.f32.mrb[0].mxu0
        %v6123 = vadd.f32 %v6046, %v6122
        %v6124 = vpop.f32.mrb[0].mxu0
        %v6125 = vpop.f32.mrb[0].mxu0
        %v6126 = vadd.f32 %v6046, %v6125
        %v6127 = vpop.f32.mrb[0].mxu0
        %6128 = vmatprep.mubr.bf16.mxu0 0
        %6129 = vmatmul.mubr.bf16.gmra.mrb[0].mxu0 %v6070
        %v6130 = vpop.f32.mrb[0].mxu0
        %v6131 = vadd.f32 %v6046, %v6130
        %v6132 = vpop.f32.mrb[0].mxu0
        %v6133 = vpop.f32.mrb[0].mxu0
        %v6134 = vadd.f32 %v6046, %v6133
        %v6135 = vpop.f32.mrb[0].mxu0
        %6136 = vdwg.mxu0
        %v6137 = vmax.f32 %v6107, 0.0
        %v6138 = vmax.f32 %v6110, 0.0
        %v6139 = vmax.f32 %v6115, 0.0
        %v6140 = vmax.f32 %v6118, 0.0
        %v6141 = vmax.f32 %v6123, 0.0
        %v6142 = vmax.f32 %v6126, 0.0
        %v6143 = vmax.f32 %v6131, 0.0
        %v6144 = vmax.f32 %v6134, 0.0
        %v6145 = vpack.c.bf16 %v6138, %v6137
        %v6146 = vpack.c.bf16 %v6140, %v6139
        %v6147 = vpack.c.bf16 %v6142, %v6141
        %v6148 = vpack.c.bf16 %v6144, %v6143
        %v6149 = vld [vmem:[%s11] sm:$0xf]
        %v6150 = vld [vmem:[%s11 + $0x4] sm:$0xf]
        %v6151 = vld [vmem:[%s11 + $0x8] sm:$0xf]
        %v6152 = vld [vmem:[%s11 + $0xc] sm:$0xf]
        %v6153 = vld [vmem:[%s12] sm:$0x1]
        %v6155 = vlaneseq
        %v6156 = vshrl.u32 %v6155, 7
        %v6157 = vsub.s32 0, %v6156
        %v6158 = vrot.slane %v6153, %v6157
        %v6164 = vunpack.c.l.b16 %v6149
        %v6165 = vunpack.c.l.b16 %v6150
        %v6166 = vunpack.c.l.b16 %v6151
        %v6167 = vunpack.c.l.b16 %v6152
        %v6168 = vpack.c.b16 %v6165, %v6164
        %v6169 = vpack.c.b16 %v6167, %v6166
        %v6173 = vsel %vm702, %v6145, 0
        %v6176 = vsel %vm702, %v6146, 0
        %v6179 = vsel %vm702, %v6147, 0
        %v6182 = vsel %vm702, %v6148, 0
        %6184 = vmatprep.subr.bf16.mxu0 0
        %6185 = vmatpush1.bf16.msra.mxu0 %v6168
        %6186 = vmatprep.subr.bf16.mxu0 0
        %6187 = vmatpush1.bf16.msra.mxu0 %v6169
        %6188 = vmatprep.subr.bf16.mxu0 0
        %6189 = vmatpush1.bf16.msra.mxu0 0
        %6190 = vmatprep.subr.bf16.mxu0 0
        %6191 = vmatpush1.bf16.msra.mxu0 0
        %6192 = vmatprep.subr.bf16.mxu0 0
        %6193 = vmatpush1.bf16.msra.mxu0 0
        %6194 = vmatprep.subr.bf16.mxu0 0
        %6195 = vmatpush1.bf16.msra.mxu0 0
        %6196 = vmatprep.subr.bf16.mxu0 0
        %6197 = vmatpush1.bf16.msra.mxu0 0
        %6198 = vmatprep.subr.bf16.mxu0 0
        %6199 = vmatpush1.bf16.msra.mxu0 0
        %6200 = vmatprep.subr.bf16.mxu0 0
        %6201 = vmatpush1.bf16.msra.mxu0 0
        %6202 = vmatprep.subr.bf16.mxu0 0
        %6203 = vmatpush1.bf16.msra.mxu0 0
        %6204 = vmatprep.subr.bf16.mxu0 0
        %6205 = vmatpush1.bf16.msra.mxu0 0
        %6206 = vmatprep.subr.bf16.mxu0 0
        %6207 = vmatpush1.bf16.msra.mxu0 0
        %6208 = vmatprep.subr.bf16.mxu0 0
        %6209 = vmatpush1.bf16.msra.mxu0 0
        %6210 = vmatprep.subr.bf16.mxu0 0
        %6211 = vmatpush1.bf16.msra.mxu0 0
        %6212 = vmatprep.subr.bf16.mxu0 0
        %6213 = vmatpush1.bf16.msra.mxu0 0
        %6214 = vmatprep.subr.bf16.mxu0 0
        %6215 = vmatpush1.bf16.msra.mxu0 0
        %6216 = vmatprep.mubr.bf16.mxu0 0
        %6217 = vmatmul.mubr.bf16.gmra.mrb[0].mxu0 %v6173
        %v6218 = vpop.f32.mrb[0].mxu0
        %v6219 = vadd.f32 %v6158, %v6218
        %v6220 = vpop.f32.mrb[0].mxu0
        %v6221 = vpop.f32.mrb[0].mxu0
        %v6222 = vadd.f32 %v6158, %v6221
        %v6223 = vpop.f32.mrb[0].mxu0
        %6224 = vmatprep.mubr.bf16.mxu0 0
        %6225 = vmatmul.mubr.bf16.gmra.mrb[0].mxu0 %v6176
        %v6226 = vpop.f32.mrb[0].mxu0
        %v6227 = vadd.f32 %v6158, %v6226
        %v6228 = vpop.f32.mrb[0].mxu0
        %v6229 = vpop.f32.mrb[0].mxu0
        %v6230 = vadd.f32 %v6158, %v6229
        %v6231 = vpop.f32.mrb[0].mxu0
        %6232 = vmatprep.mubr.bf16.mxu0 0
        %6233 = vmatmul.mubr.bf16.gmra.mrb[0].mxu0 %v6179
        %v6234 = vpop.f32.mrb[0].mxu0
        %v6235 = vadd.f32 %v6158, %v6234
        %v6236 = vpop.f32.mrb[0].mxu0
        %v6237 = vpop.f32.mrb[0].mxu0
        %v6238 = vadd.f32 %v6158, %v6237
        %v6239 = vpop.f32.mrb[0].mxu0
        %6240 = vmatprep.mubr.bf16.mxu0 0
        %6241 = vmatmul.mubr.bf16.gmra.mrb[0].mxu0 %v6182
        %v6242 = vpop.f32.mrb[0].mxu0
        %v6243 = vadd.f32 %v6158, %v6242
        %v6244 = vpop.f32.mrb[0].mxu0
        %v6245 = vpop.f32.mrb[0].mxu0
        %v6246 = vadd.f32 %v6158, %v6245
        %v6247 = vpop.f32.mrb[0].mxu0
        %6248 = vdwg.mxu0
        %6249 = vst [vmem:[%s6023 + $0x8] sm:$0xff] %v6219
        %6250 = vst [vmem:[%s6023 + $0x28] sm:$0xff] %v6222
        %6251 = vst [vmem:[%s6023 + $0x48] sm:$0xff] %v6227
        %6252 = vst [vmem:[%s6023 + $0x68] sm:$0xff] %v6230
        %6253 = vst [vmem:[%s6023 + $0x88] sm:$0xff] %v6235
        %6254 = vst [vmem:[%s6023 + $0xa8] sm:$0xff] %v6238
        %6255 = vst [vmem:[%s6023 + $0xc8] sm:$0xff] %v6243
        %6256 = vst [vmem:[%s6023 + $0xe8] sm:$0xff] %v6246
        %v6257 = vld [vmem:[#allocation4] sm:$0xff]
        %v6258 = vld [vmem:[#allocation4 + $0x8] sm:$0xff]
        %v6259 = vld [vmem:[#allocation4 + $0x10] sm:$0xff]
        %v6260 = vld [vmem:[#allocation4 + $0x18] sm:$0xff]
        %s6261 = scalar_lea.vmem %s9, 32
        %v6262 = vld [vmem:[%s6261] sm:$0xf]
        %v6263 = vld [vmem:[%s6261 + $0x4] sm:$0xf]
        %v6264 = vld [vmem:[%s6261 + $0x8] sm:$0xf]
        %v6265 = vld [vmem:[%s6261 + $0xc] sm:$0xf]
        %v6266 = vld [vmem:[%s10] sm:$0x1]
        %v6268 = vlaneseq
        %v6269 = vshrl.u32 %v6268, 7
        %v6270 = vsub.s32 0, %v6269
        %v6271 = vrot.slane %v6266, %v6270
        %v6277 = vunpack.c.l.b16 %v6262
        %v6278 = vunpack.c.l.b16 %v6263
        %v6279 = vunpack.c.l.b16 %v6264
        %v6280 = vunpack.c.l.b16 %v6265
        %v6281 = vpack.c.b16 %v6278, %v6277
        %v6282 = vpack.c.b16 %v6280, %v6279
        %v6286 = vsel %vm702, %v6257, 0
        %v6289 = vsel %vm702, %v6258, 0
        %v6292 = vsel %vm702, %v6259, 0
        %v6295 = vsel %vm702, %v6260, 0
        %6297 = vmatprep.subr.bf16.mxu0 0
        %6298 = vmatpush1.bf16.msra.mxu0 %v6281
        %6299 = vmatprep.subr.bf16.mxu0 0
        %6300 = vmatpush1.bf16.msra.mxu0 %v6282
        %6301 = vmatprep.subr.bf16.mxu0 0
        %6302 = vmatpush1.bf16.msra.mxu0 0
        %6303 = vmatprep.subr.bf16.mxu0 0
        %6304 = vmatpush1.bf16.msra.mxu0 0
        %6305 = vmatprep.subr.bf16.mxu0 0
        %6306 = vmatpush1.bf16.msra.mxu0 0
        %6307 = vmatprep.subr.bf16.mxu0 0
        %6308 = vmatpush1.bf16.msra.mxu0 0
        %6309 = vmatprep.subr.bf16.mxu0 0
        %6310 = vmatpush1.bf16.msra.mxu0 0
        %6311 = vmatprep.subr.bf16.mxu0 0
        %6312 = vmatpush1.bf16.msra.mxu0 0
        %6313 = vmatprep.subr.bf16.mxu0 0
        %6314 = vmatpush1.bf16.msra.mxu0 0
        %6315 = vmatprep.subr.bf16.mxu0 0
        %6316 = vmatpush1.bf16.msra.mxu0 0
        %6317 = vmatprep.subr.bf16.mxu0 0
        %6318 = vmatpush1.bf16.msra.mxu0 0
        %6319 = vmatprep.subr.bf16.mxu0 0
        %6320 = vmatpush1.bf16.msra.mxu0 0
        %6321 = vmatprep.subr.bf16.mxu0 0
        %6322 = vmatpush1.bf16.msra.mxu0 0
        %6323 = vmatprep.subr.bf16.mxu0 0
        %6324 = vmatpush1.bf16.msra.mxu0 0
        %6325 = vmatprep.subr.bf16.mxu0 0
        %6326 = vmatpush1.bf16.msra.mxu0 0
        %6327 = vmatprep.subr.bf16.mxu0 0
        %6328 = vmatpush1.bf16.msra.mxu0 0
        %6329 = vmatprep.mubr.bf16.mxu0 0
        %6330 = vmatmul.mubr.bf16.gmra.mrb[0].mxu0 %v6286
        %v6331 = vpop.f32.mrb[0].mxu0
        %v6332 = vadd.f32 %v6271, %v6331
        %v6333 = vpop.f32.mrb[0].mxu0
        %v6334 = vpop.f32.mrb[0].mxu0
        %v6335 = vadd.f32 %v6271, %v6334
        %v6336 = vpop.f32.mrb[0].mxu0
        %6337 = vmatprep.mubr.bf16.mxu0 0
        %6338 = vmatmul.mubr.bf16.gmra.mrb[0].mxu0 %v6289
        %v6339 = vpop.f32.mrb[0].mxu0
        %v6340 = vadd.f32 %v6271, %v6339
        %v6341 = vpop.f32.mrb[0].mxu0
        %v6342 = vpop.f32.mrb[0].mxu0
        %v6343 = vadd.f32 %v6271, %v6342
        %v6344 = vpop.f32.mrb[0].mxu0
        %6345 = vmatprep.mubr.bf16.mxu0 0
        %6346 = vmatmul.mubr.bf16.gmra.mrb[0].mxu0 %v6292
        %v6347 = vpop.f32.mrb[0].mxu0
        %v6348 = vadd.f32 %v6271, %v6347
        %v6349 = vpop.f32.mrb[0].mxu0
        %v6350 = vpop.f32.mrb[0].mxu0
        %v6351 = vadd.f32 %v6271, %v6350
        %v6352 = vpop.f32.mrb[0].mxu0
        %6353 = vmatprep.mubr.bf16.mxu0 0
        %6354 = vmatmul.mubr.bf16.gmra.mrb[0].mxu0 %v6295
        %v6355 = vpop.f32.mrb[0].mxu0
        %v6356 = vadd.f32 %v6271, %v6355
        %v6357 = vpop.f32.mrb[0].mxu0
        %v6358 = vpop.f32.mrb[0].mxu0
        %v6359 = vadd.f32 %v6271, %v6358
        %v6360 = vpop.f32.mrb[0].mxu0
        %6361 = vdwg.mxu0
        %v6362 = vmax.f32 %v6332, 0.0
        %v6363 = vmax.f32 %v6335, 0.0
        %v6364 = vmax.f32 %v6340, 0.0
        %v6365 = vmax.f32 %v6343, 0.0
        %v6366 = vmax.f32 %v6348, 0.0
        %v6367 = vmax.f32 %v6351, 0.0
        %v6368 = vmax.f32 %v6356, 0.0
        %v6369 = vmax.f32 %v6359, 0.0
        %v6370 = vpack.c.bf16 %v6363, %v6362
        %v6371 = vpack.c.bf16 %v6365, %v6364
        %v6372 = vpack.c.bf16 %v6367, %v6366
        %v6373 = vpack.c.bf16 %v6369, %v6368
        %v6374 = vld [vmem:[%s11] sm:$0xf]
        %v6375 = vld [vmem:[%s11 + $0x4] sm:$0xf]
        %v6376 = vld [vmem:[%s11 + $0x8] sm:$0xf]
        %v6377 = vld [vmem:[%s11 + $0xc] sm:$0xf]
        %v6378 = vld [vmem:[%s12] sm:$0x1]
        %v6380 = vlaneseq
        %v6381 = vshrl.u32 %v6380, 7
        %v6382 = vsub.s32 0, %v6381
        %v6383 = vrot.slane %v6378, %v6382
        %v6389 = vunpack.c.l.b16 %v6374
        %v6390 = vunpack.c.l.b16 %v6375
        %v6391 = vunpack.c.l.b16 %v6376
        %v6392 = vunpack.c.l.b16 %v6377
        %v6393 = vpack.c.b16 %v6390, %v6389
        %v6394 = vpack.c.b16 %v6392, %v6391
        %v6398 = vsel %vm702, %v6370, 0
        %v6401 = vsel %vm702, %v6371, 0
        %v6404 = vsel %vm702, %v6372, 0
        %v6407 = vsel %vm702, %v6373, 0
        %6409 = vmatprep.subr.bf16.mxu0 0
        %6410 = vmatpush1.bf16.msra.mxu0 %v6393
        %6411 = vmatprep.subr.bf16.mxu0 0
        %6412 = vmatpush1.bf16.msra.mxu0 %v6394
        %6413 = vmatprep.subr.bf16.mxu0 0
        %6414 = vmatpush1.bf16.msra.mxu0 0
        %6415 = vmatprep.subr.bf16.mxu0 0
        %6416 = vmatpush1.bf16.msra.mxu0 0
        %6417 = vmatprep.subr.bf16.mxu0 0
        %6418 = vmatpush1.bf16.msra.mxu0 0
        %6419 = vmatprep.subr.bf16.mxu0 0
        %6420 = vmatpush1.bf16.msra.mxu0 0
        %6421 = vmatprep.subr.bf16.mxu0 0
        %6422 = vmatpush1.bf16.msra.mxu0 0
        %6423 = vmatprep.subr.bf16.mxu0 0
        %6424 = vmatpush1.bf16.msra.mxu0 0
        %6425 = vmatprep.subr.bf16.mxu0 0
        %6426 = vmatpush1.bf16.msra.mxu0 0
        %6427 = vmatprep.subr.bf16.mxu0 0
        %6428 = vmatpush1.bf16.msra.mxu0 0
        %6429 = vmatprep.subr.bf16.mxu0 0
        %6430 = vmatpush1.bf16.msra.mxu0 0
        %6431 = vmatprep.subr.bf16.mxu0 0
        %6432 = vmatpush1.bf16.msra.mxu0 0
        %6433 = vmatprep.subr.bf16.mxu0 0
        %6434 = vmatpush1.bf16.msra.mxu0 0
        %6435 = vmatprep.subr.bf16.mxu0 0
        %6436 = vmatpush1.bf16.msra.mxu0 0
        %6437 = vmatprep.subr.bf16.mxu0 0
        %6438 = vmatpush1.bf16.msra.mxu0 0
        %6439 = vmatprep.subr.bf16.mxu0 0
        %6440 = vmatpush1.bf16.msra.mxu0 0
        %6441 = vmatprep.mubr.bf16.mxu0 0
        %6442 = vmatmul.mubr.bf16.gmra.mrb[0].mxu0 %v6398
        %v6443 = vpop.f32.mrb[0].mxu0
        %v6444 = vadd.f32 %v6383, %v6443
        %v6445 = vpop.f32.mrb[0].mxu0
        %v6446 = vpop.f32.mrb[0].mxu0
        %v6447 = vadd.f32 %v6383, %v6446
        %v6448 = vpop.f32.mrb[0].mxu0
        %6449 = vmatprep.mubr.bf16.mxu0 0
        %6450 = vmatmul.mubr.bf16.gmra.mrb[0].mxu0 %v6401
        %v6451 = vpop.f32.mrb[0].mxu0
        %v6452 = vadd.f32 %v6383, %v6451
        %v6453 = vpop.f32.mrb[0].mxu0
        %v6454 = vpop.f32.mrb[0].mxu0
        %v6455 = vadd.f32 %v6383, %v6454
        %v6456 = vpop.f32.mrb[0].mxu0
        %6457 = vmatprep.mubr.bf16.mxu0 0
        %6458 = vmatmul.mubr.bf16.gmra.mrb[0].mxu0 %v6404
        %v6459 = vpop.f32.mrb[0].mxu0
        %v6460 = vadd.f32 %v6383, %v6459
        %v6461 = vpop.f32.mrb[0].mxu0
        %v6462 = vpop.f32.mrb[0].mxu0
        %v6463 = vadd.f32 %v6383, %v6462
        %v6464 = vpop.f32.mrb[0].mxu0
        %6465 = vmatprep.mubr.bf16.mxu0 0
        %6466 = vmatmul.mubr.bf16.gmra.mrb[0].mxu0 %v6407
        %v6467 = vpop.f32.mrb[0].mxu0
        %v6468 = vadd.f32 %v6383, %v6467
        %v6469 = vpop.f32.mrb[0].mxu0
        %v6470 = vpop.f32.mrb[0].mxu0
        %v6471 = vadd.f32 %v6383, %v6470
        %v6472 = vpop.f32.mrb[0].mxu0
        %6473 = vdwg.mxu0
        %s6474 = sadd.s32 2, %s6021
        %s6475 = smul.addr %s6474, 8
        %s6476 = scalar_lea.vmem %s447, %s6475
        %6477 = vst [vmem:[%s6476] sm:$0xff] %v6444
        %6478 = vst [vmem:[%s6476 + $0x20] sm:$0xff] %v6447
        %6479 = vst [vmem:[%s6476 + $0x40] sm:$0xff] %v6452
        %6480 = vst [vmem:[%s6476 + $0x60] sm:$0xff] %v6455
        %6481 = vst [vmem:[%s6476 + $0x80] sm:$0xff] %v6460
        %6482 = vst [vmem:[%s6476 + $0xa0] sm:$0xff] %v6463
        %6483 = vst [vmem:[%s6476 + $0xc0] sm:$0xff] %v6468
        %6484 = vst [vmem:[%s6476 + $0xe0] sm:$0xff] %v6471
        %v6485 = vld [vmem:[#allocation4] sm:$0xff]
        %v6486 = vld [vmem:[#allocation4 + $0x8] sm:$0xff]
        %v6487 = vld [vmem:[#allocation4 + $0x10] sm:$0xff]
        %v6488 = vld [vmem:[#allocation4 + $0x18] sm:$0xff]
        %s6489 = scalar_lea.vmem %s9, 48
        %v6490 = vld [vmem:[%s6489] sm:$0xf]
        %v6491 = vld [vmem:[%s6489 + $0x4] sm:$0xf]
        %v6492 = vld [vmem:[%s6489 + $0x8] sm:$0xf]
        %v6493 = vld [vmem:[%s6489 + $0xc] sm:$0xf]
        %v6494 = vld [vmem:[%s10] sm:$0x1]
        %v6496 = vlaneseq
        %v6497 = vshrl.u32 %v6496, 7
        %v6498 = vsub.s32 0, %v6497
        %v6499 = vrot.slane %v6494, %v6498
        %v6505 = vunpack.c.l.b16 %v6490
        %v6506 = vunpack.c.l.b16 %v6491
        %v6507 = vunpack.c.l.b16 %v6492
        %v6508 = vunpack.c.l.b16 %v6493
        %v6509 = vpack.c.b16 %v6506, %v6505
        %v6510 = vpack.c.b16 %v6508, %v6507
        %v6514 = vsel %vm702, %v6485, 0
        %v6517 = vsel %vm702, %v6486, 0
        %v6520 = vsel %vm702, %v6487, 0
        %v6523 = vsel %vm702, %v6488, 0
        %6525 = vmatprep.subr.bf16.mxu0 0
        %6526 = vmatpush1.bf16.msra.mxu0 %v6509
        %6527 = vmatprep.subr.bf16.mxu0 0
        %6528 = vmatpush1.bf16.msra.mxu0 %v6510
        %6529 = vmatprep.subr.bf16.mxu0 0
        %6530 = vmatpush1.bf16.msra.mxu0 0
        %6531 = vmatprep.subr.bf16.mxu0 0
        %6532 = vmatpush1.bf16.msra.mxu0 0
        %6533 = vmatprep.subr.bf16.mxu0 0
        %6534 = vmatpush1.bf16.msra.mxu0 0
        %6535 = vmatprep.subr.bf16.mxu0 0
        %6536 = vmatpush1.bf16.msra.mxu0 0
        %6537 = vmatprep.subr.bf16.mxu0 0
        %6538 = vmatpush1.bf16.msra.mxu0 0
        %6539 = vmatprep.subr.bf16.mxu0 0
        %6540 = vmatpush1.bf16.msra.mxu0 0
        %6541 = vmatprep.subr.bf16.mxu0 0
        %6542 = vmatpush1.bf16.msra.mxu0 0
        %6543 = vmatprep.subr.bf16.mxu0 0
        %6544 = vmatpush1.bf16.msra.mxu0 0
        %6545 = vmatprep.subr.bf16.mxu0 0
        %6546 = vmatpush1.bf16.msra.mxu0 0
        %6547 = vmatprep.subr.bf16.mxu0 0
        %6548 = vmatpush1.bf16.msra.mxu0 0
        %6549 = vmatprep.subr.bf16.mxu0 0
        %6550 = vmatpush1.bf16.msra.mxu0 0
        %6551 = vmatprep.subr.bf16.mxu0 0
        %6552 = vmatpush1.bf16.msra.mxu0 0
        %6553 = vmatprep.subr.bf16.mxu0 0
        %6554 = vmatpush1.bf16.msra.mxu0 0
        %6555 = vmatprep.subr.bf16.mxu0 0
        %6556 = vmatpush1.bf16.msra.mxu0 0
        %6557 = vmatprep.mubr.bf16.mxu0 0
        %6558 = vmatmul.mubr.bf16.gmra.mrb[0].mxu0 %v6514
        %v6559 = vpop.f32.mrb[0].mxu0
        %v6560 = vadd.f32 %v6499, %v6559
        %v6561 = vpop.f32.mrb[0].mxu0
        %v6562 = vpop.f32.mrb[0].mxu0
        %v6563 = vadd.f32 %v6499, %v6562
        %v6564 = vpop.f32.mrb[0].mxu0
        %6565 = vmatprep.mubr.bf16.mxu0 0
        %6566 = vmatmul.mubr.bf16.gmra.mrb[0].mxu0 %v6517
        %v6567 = vpop.f32.mrb[0].mxu0
        %v6568 = vadd.f32 %v6499, %v6567
        %v6569 = vpop.f32.mrb[0].mxu0
        %v6570 = vpop.f32.mrb[0].mxu0
        %v6571 = vadd.f32 %v6499, %v6570
        %v6572 = vpop.f32.mrb[0].mxu0
        %6573 = vmatprep.mubr.bf16.mxu0 0
        %6574 = vmatmul.mubr.bf16.gmra.mrb[0].mxu0 %v6520
        %v6575 = vpop.f32.mrb[0].mxu0
        %v6576 = vadd.f32 %v6499, %v6575
        %v6577 = vpop.f32.mrb[0].mxu0
        %v6578 = vpop.f32.mrb[0].mxu0
        %v6579 = vadd.f32 %v6499, %v6578
        %v6580 = vpop.f32.mrb[0].mxu0
        %6581 = vmatprep.mubr.bf16.mxu0 0
        %6582 = vmatmul.mubr.bf16.gmra.mrb[0].mxu0 %v6523
        %v6583 = vpop.f32.mrb[0].mxu0
        %v6584 = vadd.f32 %v6499, %v6583
        %v6585 = vpop.f32.mrb[0].mxu0
        %v6586 = vpop.f32.mrb[0].mxu0
        %v6587 = vadd.f32 %v6499, %v6586
        %v6588 = vpop.f32.mrb[0].mxu0
        %6589 = vdwg.mxu0
        %v6590 = vmax.f32 %v6560, 0.0
        %v6591 = vmax.f32 %v6563, 0.0
        %v6592 = vmax.f32 %v6568, 0.0
        %v6593 = vmax.f32 %v6571, 0.0
        %v6594 = vmax.f32 %v6576, 0.0
        %v6595 = vmax.f32 %v6579, 0.0
        %v6596 = vmax.f32 %v6584, 0.0
        %v6597 = vmax.f32 %v6587, 0.0
        %v6598 = vpack.c.bf16 %v6591, %v6590
        %v6599 = vpack.c.bf16 %v6593, %v6592
        %v6600 = vpack.c.bf16 %v6595, %v6594
        %v6601 = vpack.c.bf16 %v6597, %v6596
        %v6602 = vld [vmem:[%s11] sm:$0xf]
        %v6603 = vld [vmem:[%s11 + $0x4] sm:$0xf]
        %v6604 = vld [vmem:[%s11 + $0x8] sm:$0xf]
        %v6605 = vld [vmem:[%s11 + $0xc] sm:$0xf]
        %v6606 = vld [vmem:[%s12] sm:$0x1]
        %v6608 = vlaneseq
        %v6609 = vshrl.u32 %v6608, 7
        %v6610 = vsub.s32 0, %v6609
        %v6611 = vrot.slane %v6606, %v6610
        %v6617 = vunpack.c.l.b16 %v6602
        %v6618 = vunpack.c.l.b16 %v6603
        %v6619 = vunpack.c.l.b16 %v6604
        %v6620 = vunpack.c.l.b16 %v6605
        %v6621 = vpack.c.b16 %v6618, %v6617
        %v6622 = vpack.c.b16 %v6620, %v6619
        %v6626 = vsel %vm702, %v6598, 0
        %v6629 = vsel %vm702, %v6599, 0
        %v6632 = vsel %vm702, %v6600, 0
        %v6635 = vsel %vm702, %v6601, 0
        %6637 = vmatprep.subr.bf16.mxu0 0
        %6638 = vmatpush1.bf16.msra.mxu0 %v6621
        %6639 = vmatprep.subr.bf16.mxu0 0
        %6640 = vmatpush1.bf16.msra.mxu0 %v6622
        %6641 = vmatprep.subr.bf16.mxu0 0
        %6642 = vmatpush1.bf16.msra.mxu0 0
        %6643 = vmatprep.subr.bf16.mxu0 0
        %6644 = vmatpush1.bf16.msra.mxu0 0
        %6645 = vmatprep.subr.bf16.mxu0 0
        %6646 = vmatpush1.bf16.msra.mxu0 0
        %6647 = vmatprep.subr.bf16.mxu0 0
        %6648 = vmatpush1.bf16.msra.mxu0 0
        %6649 = vmatprep.subr.bf16.mxu0 0
        %6650 = vmatpush1.bf16.msra.mxu0 0
        %6651 = vmatprep.subr.bf16.mxu0 0
        %6652 = vmatpush1.bf16.msra.mxu0 0
        %6653 = vmatprep.subr.bf16.mxu0 0
        %6654 = vmatpush1.bf16.msra.mxu0 0
        %6655 = vmatprep.subr.bf16.mxu0 0
        %6656 = vmatpush1.bf16.msra.mxu0 0
        %6657 = vmatprep.subr.bf16.mxu0 0
        %6658 = vmatpush1.bf16.msra.mxu0 0
        %6659 = vmatprep.subr.bf16.mxu0 0
        %6660 = vmatpush1.bf16.msra.mxu0 0
        %6661 = vmatprep.subr.bf16.mxu0 0
        %6662 = vmatpush1.bf16.msra.mxu0 0
        %6663 = vmatprep.subr.bf16.mxu0 0
        %6664 = vmatpush1.bf16.msra.mxu0 0
        %6665 = vmatprep.subr.bf16.mxu0 0
        %6666 = vmatpush1.bf16.msra.mxu0 0
        %6667 = vmatprep.subr.bf16.mxu0 0
        %6668 = vmatpush1.bf16.msra.mxu0 0
        %6669 = vmatprep.mubr.bf16.mxu0 0
        %6670 = vmatmul.mubr.bf16.gmra.mrb[0].mxu0 %v6626
        %v6671 = vpop.f32.mrb[0].mxu0
        %v6672 = vadd.f32 %v6611, %v6671
        %v6673 = vpop.f32.mrb[0].mxu0
        %v6674 = vpop.f32.mrb[0].mxu0
        %v6675 = vadd.f32 %v6611, %v6674
        %v6676 = vpop.f32.mrb[0].mxu0
        %6677 = vmatprep.mubr.bf16.mxu0 0
        %6678 = vmatmul.mubr.bf16.gmra.mrb[0].mxu0 %v6629
        %v6679 = vpop.f32.mrb[0].mxu0
        %v6680 = vadd.f32 %v6611, %v6679
        %v6681 = vpop.f32.mrb[0].mxu0
        %v6682 = vpop.f32.mrb[0].mxu0
        %v6683 = vadd.f32 %v6611, %v6682
        %v6684 = vpop.f32.mrb[0].mxu0
        %6685 = vmatprep.mubr.bf16.mxu0 0
        %6686 = vmatmul.mubr.bf16.gmra.mrb[0].mxu0 %v6632
        %v6687 = vpop.f32.mrb[0].mxu0
        %v6688 = vadd.f32 %v6611, %v6687
        %v6689 = vpop.f32.mrb[0].mxu0
        %v6690 = vpop.f32.mrb[0].mxu0
        %v6691 = vadd.f32 %v6611, %v6690
        %v6692 = vpop.f32.mrb[0].mxu0
        %6693 = vmatprep.mubr.bf16.mxu0 0
        %6694 = vmatmul.mubr.bf16.gmra.mrb[0].mxu0 %v6635
        %v6695 = vpop.f32.mrb[0].mxu0
        %v6696 = vadd.f32 %v6611, %v6695
        %v6697 = vpop.f32.mrb[0].mxu0
        %v6698 = vpop.f32.mrb[0].mxu0
        %v6699 = vadd.f32 %v6611, %v6698
        %v6700 = vpop.f32.mrb[0].mxu0
        %6701 = vdwg.mxu0
        %6702 = vst [vmem:[%s6476 + $0x8] sm:$0xff] %v6672
        %6703 = vst [vmem:[%s6476 + $0x28] sm:$0xff] %v6675
        %6704 = vst [vmem:[%s6476 + $0x48] sm:$0xff] %v6680
        %6705 = vst [vmem:[%s6476 + $0x68] sm:$0xff] %v6683
        %6706 = vst [vmem:[%s6476 + $0x88] sm:$0xff] %v6688
        %6707 = vst [vmem:[%s6476 + $0xa8] sm:$0xff] %v6691
        %6708 = vst [vmem:[%s6476 + $0xc8] sm:$0xff] %v6696
        %6709 = vst [vmem:[%s6476 + $0xe8] sm:$0xff] %v6699
      $region77: #{fcn_mask_head_forward.1} parent=71 // loop_footer
        %s527 = sadd.s32 1, %s523
      $region78: #{fcn_mask_head_forward.1} parent=71 // loop_footer_branch
        %522 = sbr.rel target = $region74
      $region79: #{fcn_mask_head_forward.1} parent=71 // loop_exit
        _
      %s6710 = smul.u32 4, %s24
      %p6711 = scmp.lt.s32.totalorder %s6710, 7
      %s6712 = scalar_select %p6711, %s6710, 7
      %s6713 = smul.addr %s6712, 32
      %s6714 = smul.addr %s6713, 8
      %s6715 = scalar_lea.vmem %s13, %s6714
      // Predicated region
      $region80: #{fcn_mask_head_forward.1} parent=71 // pred_check
        %p6716 = pneg %p320
      $region81: #{fcn_mask_head_forward.1} parent=71 // pred_check_branch
        %6718 = sbr.rel (%p6716) target = $region83
      $region82: #{fcn_mask_head_forward.1} parent=71 // pred_region
        %s6719 = smul.u32 4, %s24
      $region83: #{fcn_mask_head_forward.1} parent=71 // pred_fallthru
        _
    $region72: #{fcn_mask_head_forward.1} parent=5 // pred_fallthru
      _
    %p6720 = scmp.le.s32.totalorder 2, %s19
    // Predicated region
    $region84: #{fcn_mask_head_forward.1} parent=5 // pred_check
      %p6721 = pneg %p6720
    $region85: #{fcn_mask_head_forward.1} parent=5 // pred_check_branch
      %6723 = sbr.rel (%p6721) target = $region87
    $region86: #{fcn_mask_head_forward.1} parent=5 // pred_region
      %s6724 = ssub.s32 %s19, 2
      // Predicated region
      $region88: #{fcn_mask_head_forward.1} parent=86 // pred_check
        %p6725 = pneg %p326
      $region89: #{fcn_mask_head_forward.1} parent=86 // pred_check_branch
        %6727 = sbr.rel (%p6725) target = $region91
      $region90: #{fcn_mask_head_forward.1} parent=86 // pred_region
        %s6728 = smul.u32 4, %s25
        %p6729 = scmp.lt.s32.totalorder %s6728, 7
        %s6730 = scalar_select %p6729, %s6728, 7
        %s6731 = smul.addr %s6730, 32
        %s6732 = smul.addr %s6731, 8
        %s6733 = scalar_lea.vmem %s13, %s6732
      $region91: #{fcn_mask_head_forward.1} parent=86 // pred_fallthru
        _
    $region87: #{fcn_mask_head_forward.1} parent=5 // pred_fallthru
      _
  $region6: #{fcn_mask_head_forward.1} parent=0 // loop_footer
    %s23 = sadd.s32 1, %s19
  $region7: #{fcn_mask_head_forward.1} parent=0 // loop_footer_branch
    %18 = sbr.rel target = $region3
  $region8: #{fcn_mask_head_forward.1} parent=0 // loop_exit
    _

</llo_original>
